<compile_context>
chip_gen: v7x
topology: tpu7x:2x2x1
jax: 0.10.0
libtpu: 0.0.40
codegen_flags: <defaults>
</compile_context>

<pallas_src>
import functools
import math

import jax
import jax.numpy as jnp
import numpy as np
from jax.experimental import pallas as pl
from jax.experimental.pallas import tpu as pltpu


# ---------------------------------------------------------------------------
# Fused identity-block kernel (one batch element per grid step)
# ---------------------------------------------------------------------------
def _identity_block_kernel(x_ref, tin_ref, w1_ref, w2_ref, bn_ref, tout_ref,
                           o_ref, xpad_ref, patch_ref, *, H, W, C, K):
    """out = relu( bn2(conv2( relu(bn1(conv1(x))) )) + x )  for one image."""
    p = (K - 1) // 2
    Hp, Wp = H + 2 * p, W + 2 * p
    HW = H * W

    # ---- zero ONLY the p-wide halo ring of the padded scratch --------------
    zrow = jnp.zeros((p, Wp, C), xpad_ref.dtype)
    zcol = jnp.zeros((Hp, p, C), xpad_ref.dtype)
    xpad_ref[0:p, :, :] = zrow
    xpad_ref[Hp - p:Hp, :, :] = zrow
    xpad_ref[:, 0:p, :] = zcol
    xpad_ref[:, Wp - p:Wp, :] = zcol

    x_chw = x_ref[...][0]                              # (C, HW) f32, NCHW-flat

    # ---- NCHW -> NHWC on the MXU (trans-rhs identity matmul, bf16) ---------
    x_hwc = jax.lax.dot_general(
        tin_ref[...], x_chw.astype(jnp.bfloat16),
        (((1,), (1,)), ((), ())),
        preferred_element_type=jnp.float32)            # (HW, C)
    xpad_ref[p:p + H, p:p + W, :] = x_hwc.reshape(H, W, C).astype(xpad_ref.dtype)

    def conv(w_ref):
        # in-VMEM im2col -> one (HW, K*K*C) x (K*K*C, C) MXU matmul (576 deep)
        for dy in range(K):
            for dx in range(K):
                t = dy * K + dx
                win = xpad_ref[dy:dy + H, dx:dx + W, :]          # (H, W, C) bf16
                patch_ref[:, t * C:(t + 1) * C] = win.reshape(HW, C)
        return jnp.dot(patch_ref[...], w_ref[...],
                       preferred_element_type=jnp.float32)       # (HW, C) f32

    bn = bn_ref[...]                                   # (4, C) f32
    s1, b1 = bn[0:1, :], bn[1:2, :]
    s2, b2 = bn[2:3, :], bn[3:4, :]

    # ---- conv1 + bn1 + relu; reuse the (still halo-zeroed) scratch ---------
    h1 = jnp.maximum(conv(w1_ref) * s1 + b1, 0.0)      # (HW, C) f32
    xpad_ref[p:p + H, p:p + W, :] = h1.reshape(H, W, C).astype(xpad_ref.dtype)

    # ---- conv2 + bn2 --------------------------------------------------------
    y = conv(w2_ref) * s2 + b2                         # (HW, C) f32

    # ---- NHWC -> NCHW on the MXU, + f32 residual straight from input, relu -
    y_chw = jax.lax.dot_general(
        tout_ref[...], y.astype(jnp.bfloat16),
        (((1,), (1,)), ((), ())),
        preferred_element_type=jnp.float32)            # (C, HW) f32
    o_ref[...] = jnp.maximum(y_chw + x_chw, 0.0).reshape(1, C, HW).astype(o_ref.dtype)


# ---------------------------------------------------------------------------
# Wrapper: NCHW (PyTorch) interface, BN folding, single pallas_call
# ---------------------------------------------------------------------------
def identity_block2_forward(x_nchw, w1, bn1, w2, bn2, *, eps=1e-5):
    """x_nchw: (N, C, H, W) f32, w: (C, C, K, K), bn = (gamma, beta, mean, var)."""
    N, C, H, W = x_nchw.shape
    cout, cin, K, K2 = w1.shape
    assert cin == C and cout == C and K == K2 and K % 2 == 1  # residual needs in==out
    HW = H * W
    p = (K - 1) // 2

    def fold(bn):
        gamma, beta, mean, var = bn
        scale = gamma / jnp.sqrt(var + eps)
        return scale, beta - mean * scale

    s1, b1 = fold(bn1)
    s2, b2 = fold(bn2)
    bn_tbl = jnp.stack([s1, b1, s2, b2]).astype(jnp.float32)        # (4, C)

    # torch (Cout, Cin, kh, kw) -> im2col weight (kh*kw*Cin, Cout), bf16
    def to_mat(w):
        return (jnp.transpose(w, (2, 3, 1, 0))
                   .reshape(K * K * C, C).astype(jnp.bfloat16))

    w1m, w2m = to_mat(w1), to_mat(w2)

    # Identity matrices: transpose NCHW<->NHWC on the MXU inside the kernel.
    # (For large H*W you would tile the grid over rows and size t_in per tile.)
    t_in = jnp.eye(HW, dtype=jnp.bfloat16)                          # (HW, HW)
    t_out = jnp.eye(C, dtype=jnp.bfloat16)                          # (C, C)

    x_flat = x_nchw.reshape(N, C, HW)                               # free (metadata)

    out = pl.pallas_call(
        functools.partial(_identity_block_kernel, H=H, W=W, C=C, K=K),
        out_shape=jax.ShapeDtypeStruct((N, C, HW), jnp.float32),
        grid=(N,),
        in_specs=[
            pl.BlockSpec((1, C, HW), lambda n: (n, 0, 0)),          # input image
            pl.BlockSpec((HW, HW), lambda n: (0, 0)),               # NCHW->NHWC eye
            pl.BlockSpec((K * K * C, C), lambda n: (0, 0)),         # conv1 weight
            pl.BlockSpec((K * K * C, C), lambda n: (0, 0)),         # conv2 weight
            pl.BlockSpec((4, C), lambda n: (0, 0)),                 # folded BN table
            pl.BlockSpec((C, C), lambda n: (0, 0)),                 # NHWC->NCHW eye
        ],
        out_specs=pl.BlockSpec((1, C, HW), lambda n: (n, 0, 0)),
        scratch_shapes=[
            pltpu.VMEM((H + 2 * p, W + 2 * p, C), jnp.bfloat16),    # padded conv in
            pltpu.VMEM((H * W, K * K * C), jnp.bfloat16),           # im2col patch
        ],
        compiler_params=pltpu.CompilerParams(
            dimension_semantics=("parallel",)),
    )(x_flat, t_in, w1m, w2m, bn_tbl, t_out)

    return out.reshape(N, C, H, W)                                  # free (metadata)


# ---------------------------------------------------------------------------
# Pure-JAX reference (f32, HIGHEST precision) for verification
# ---------------------------------------------------------------------------
def _reference_forward(x_nchw, w1, bn1, w2, bn2, *, eps=1e-5):
    def conv(x, w):
        return jax.lax.conv_general_dilated(
            x, w, window_strides=(1, 1), padding="SAME",
            dimension_numbers=("NCHW", "OIHW", "NCHW"),
            precision=jax.lax.Precision.HIGHEST)

    def bn(x, params):
        gamma, beta, mean, var = (t[None, :, None, None] for t in params)
        return (x - mean) / jnp.sqrt(var + eps) * gamma + beta

    h = jax.nn.relu(bn(conv(x_nchw, w1), bn1))
    return jax.nn.relu(bn(conv(h, w2), bn2) + x_nchw)


if __name__ == "__main__":
    # identity_block2(inplanes=64, outplanes=64, kernel_size=3), batch=2, 16x16 input.
    N, C, H, W, K = 2, 64, 16, 16, 3
    key = jax.random.PRNGKey(0)
    ks = jax.random.split(key, 5)

    x = jax.random.normal(ks[0], (N, C, H, W), jnp.float32)
    wstd = math.sqrt(2.0 / (C * K * K))
    w1 = jax.random.normal(ks[1], (C, C, K, K), jnp.float32) * wstd
    w2 = jax.random.normal(ks[2], (C, C, K, K), jnp.float32) * wstd

    def rand_bn(k):
        k1, k2, k3, k4 = jax.random.split(k, 4)
        gamma = 1.0 + 0.1 * jax.random.normal(k1, (C,), jnp.float32)
        beta = 0.1 * jax.random.normal(k2, (C,), jnp.float32)
        mean = 0.1 * jax.random.normal(k3, (C,), jnp.float32)
        var = 1.0 + 0.1 * jax.random.uniform(k4, (C,), jnp.float32)
        return gamma, beta, mean, var

    bn1 = rand_bn(ks[3])
    bn2 = rand_bn(ks[4])

    fwd = jax.jit(identity_block2_forward)
    out = jax.block_until_ready(fwd(x, w1, bn1, w2, bn2))
    assert out.shape == (N, C, H, W)

    ref = jax.block_until_ready(_reference_forward(x, w1, bn1, w2, bn2))
    np.testing.assert_allclose(np.asarray(out), np.asarray(ref),
                               rtol=5e-2, atol=1e-1)
    print("KERNEL_OK")
</pallas_src>

<mosaic_0001>
module attributes {stable_mosaic.version = 11 : i64} {
  func.func @_identity_block_kernel(%arg0: i32, %arg1: memref<1x64x256xf32, #tpu.memory_space<vmem>>, %arg2: memref<256x256xbf16, #tpu.memory_space<vmem>>, %arg3: memref<576x64xbf16, #tpu.memory_space<vmem>>, %arg4: memref<576x64xbf16, #tpu.memory_space<vmem>>, %arg5: memref<4x64xf32, #tpu.memory_space<vmem>>, %arg6: memref<64x64xbf16, #tpu.memory_space<vmem>>, %arg7: memref<1x64x256xf32, #tpu.memory_space<vmem>>, %arg8: memref<18x18x64xbf16, #tpu.memory_space<vmem>>, %arg9: memref<256x576xbf16, #tpu.memory_space<vmem>>) attributes {dimension_semantics = [#tpu.dimension_semantics<parallel>], iteration_bounds = array<i64: 2>, scalar_prefetch = 0 : i64, scratch_operands = 2 : i64, tpu.core_type = #tpu.core_type<tc>, window_params = [{transform_indices = @transform_0, window_bounds = array<i64: 1, 64, 256>}, {pipeline_mode = #tpu.pipeline_mode<synchronous>, transform_indices = @transform_1, window_bounds = array<i64: 256, 256>}, {pipeline_mode = #tpu.pipeline_mode<synchronous>, transform_indices = @transform_2, window_bounds = array<i64: 576, 64>}, {pipeline_mode = #tpu.pipeline_mode<synchronous>, transform_indices = @transform_3, window_bounds = array<i64: 576, 64>}, {pipeline_mode = #tpu.pipeline_mode<synchronous>, transform_indices = @transform_4, window_bounds = array<i64: 4, 64>}, {pipeline_mode = #tpu.pipeline_mode<synchronous>, transform_indices = @transform_5, window_bounds = array<i64: 64, 64>}, {transform_indices = @transform_6, window_bounds = array<i64: 1, 64, 256>}]} {
    %cst = arith.constant 0.000000e+00 : bf16
    %0 = vector.broadcast %cst : bf16 to vector<1x18x64xbf16>
    %cst_0 = arith.constant 0.000000e+00 : bf16
    %1 = vector.broadcast %cst_0 : bf16 to vector<18x1x64xbf16>
    %c0 = arith.constant 0 : index
    %c0_1 = arith.constant 0 : index
    %c0_2 = arith.constant 0 : index
    %2 = vector.load %arg8[%c0, %c0_1, %c0_2] : memref<18x18x64xbf16, #tpu.memory_space<vmem>>, vector<1x18x64xbf16>
    tpu.vector_store %arg8[%c0, %c0_1, %c0_2], %0 {strides = array<i32>} : memref<18x18x64xbf16, #tpu.memory_space<vmem>>, vector<1x18x64xbf16>,
    %c17 = arith.constant 17 : index
    %c0_3 = arith.constant 0 : index
    %c0_4 = arith.constant 0 : index
    %3 = vector.load %arg8[%c17, %c0_3, %c0_4] : memref<18x18x64xbf16, #tpu.memory_space<vmem>>, vector<1x18x64xbf16>
    tpu.vector_store %arg8[%c17, %c0_3, %c0_4], %0 {strides = array<i32>} : memref<18x18x64xbf16, #tpu.memory_space<vmem>>, vector<1x18x64xbf16>,
    %c0_5 = arith.constant 0 : index
    %c0_6 = arith.constant 0 : index
    %c0_7 = arith.constant 0 : index
    %4 = vector.load %arg8[%c0_5, %c0_6, %c0_7] : memref<18x18x64xbf16, #tpu.memory_space<vmem>>, vector<18x1x64xbf16>
    tpu.vector_store %arg8[%c0_5, %c0_6, %c0_7], %1 {strides = array<i32>} : memref<18x18x64xbf16, #tpu.memory_space<vmem>>, vector<18x1x64xbf16>,
    %c0_8 = arith.constant 0 : index
    %c17_9 = arith.constant 17 : index
    %c0_10 = arith.constant 0 : index
    %5 = vector.load %arg8[%c0_8, %c17_9, %c0_10] : memref<18x18x64xbf16, #tpu.memory_space<vmem>>, vector<18x1x64xbf16>
    tpu.vector_store %arg8[%c0_8, %c17_9, %c0_10], %1 {strides = array<i32>} : memref<18x18x64xbf16, #tpu.memory_space<vmem>>, vector<18x1x64xbf16>,
    %c0_11 = arith.constant 0 : index
    %c0_12 = arith.constant 0 : index
    %c0_13 = arith.constant 0 : index
    %6 = vector.load %arg1[%c0_11, %c0_12, %c0_13] : memref<1x64x256xf32, #tpu.memory_space<vmem>>, vector<1x64x256xf32>
    %7 = vector.shape_cast %6 : vector<1x64x256xf32> to vector<64x256xf32>
    %c0_14 = arith.constant 0 : index
    %c0_15 = arith.constant 0 : index
    %8 = vector.load %arg2[%c0_14, %c0_15] : memref<256x256xbf16, #tpu.memory_space<vmem>>, vector<256x256xbf16>
    %9 = arith.truncf %7 : vector<64x256xf32> to vector<64x256xbf16>
    %cst_16 = arith.constant dense<0.000000e+00> : vector<256x64xf32>
    %10 = tpu.matmul %8, %9, %cst_16 {dimension_numbers = #tpu.dot_dimension_numbers<[1], [1], [0], [0], [0, 0, 1, 0], [], []>} : vector<256x256xbf16>, vector<64x256xbf16>, vector<256x64xf32> -> vector<256x64xf32>
    %11 = vector.shape_cast %10 : vector<256x64xf32> to vector<16x16x64xf32>
    %12 = arith.truncf %11 : vector<16x16x64xf32> to vector<16x16x64xbf16>
    %c1 = arith.constant 1 : index
    %c1_17 = arith.constant 1 : index
    %c0_18 = arith.constant 0 : index
    %13 = vector.load %arg8[%c1, %c1_17, %c0_18] : memref<18x18x64xbf16, #tpu.memory_space<vmem>>, vector<16x16x64xbf16>
    tpu.vector_store %arg8[%c1, %c1_17, %c0_18], %12 {strides = array<i32>} : memref<18x18x64xbf16, #tpu.memory_space<vmem>>, vector<16x16x64xbf16>,
    %c0_19 = arith.constant 0 : index
    %c0_20 = arith.constant 0 : index
    %14 = vector.load %arg5[%c0_19, %c0_20] : memref<4x64xf32, #tpu.memory_space<vmem>>, vector<4x64xf32>
    %15 = vector.extract_strided_slice %14 {offsets = [0, 0], sizes = [1, 64], strides = [1, 1]} : vector<4x64xf32> to vector<1x64xf32>
    %16 = vector.extract_strided_slice %14 {offsets = [1, 0], sizes = [1, 64], strides = [1, 1]} : vector<4x64xf32> to vector<1x64xf32>
    %17 = vector.extract_strided_slice %14 {offsets = [2, 0], sizes = [1, 64], strides = [1, 1]} : vector<4x64xf32> to vector<1x64xf32>
    %18 = vector.extract_strided_slice %14 {offsets = [3, 0], sizes = [1, 64], strides = [1, 1]} : vector<4x64xf32> to vector<1x64xf32>
    %c0_21 = arith.constant 0 : index
    %c0_22 = arith.constant 0 : index
    %c0_23 = arith.constant 0 : index
    %19 = vector.load %arg8[%c0_21, %c0_22, %c0_23] : memref<18x18x64xbf16, #tpu.memory_space<vmem>>, vector<16x16x64xbf16>
    %20 = vector.shape_cast %19 : vector<16x16x64xbf16> to vector<256x64xbf16>
    %c0_24 = arith.constant 0 : index
    %c0_25 = arith.constant 0 : index
    %21 = vector.load %arg9[%c0_24, %c0_25] : memref<256x576xbf16, #tpu.memory_space<vmem>>, vector<256x64xbf16>
    tpu.vector_store %arg9[%c0_24, %c0_25], %20 {strides = array<i32>} : memref<256x576xbf16, #tpu.memory_space<vmem>>, vector<256x64xbf16>,
    %c0_26 = arith.constant 0 : index
    %c1_27 = arith.constant 1 : index
    %c0_28 = arith.constant 0 : index
    %22 = vector.load %arg8[%c0_26, %c1_27, %c0_28] : memref<18x18x64xbf16, #tpu.memory_space<vmem>>, vector<16x16x64xbf16>
    %23 = vector.shape_cast %22 : vector<16x16x64xbf16> to vector<256x64xbf16>
    %c0_29 = arith.constant 0 : index
    %c64 = arith.constant 64 : index
    %24 = vector.load %arg9[%c0_29, %c64] : memref<256x576xbf16, #tpu.memory_space<vmem>>, vector<256x64xbf16>
    tpu.vector_store %arg9[%c0_29, %c64], %23 {strides = array<i32>} : memref<256x576xbf16, #tpu.memory_space<vmem>>, vector<256x64xbf16>,
    %c0_30 = arith.constant 0 : index
    %c2 = arith.constant 2 : index
    %c0_31 = arith.constant 0 : index
    %25 = vector.load %arg8[%c0_30, %c2, %c0_31] : memref<18x18x64xbf16, #tpu.memory_space<vmem>>, vector<16x16x64xbf16>
    %26 = vector.shape_cast %25 : vector<16x16x64xbf16> to vector<256x64xbf16>
    %c0_32 = arith.constant 0 : index
    %c128 = arith.constant 128 : index
    %27 = vector.load %arg9[%c0_32, %c128] : memref<256x576xbf16, #tpu.memory_space<vmem>>, vector<256x64xbf16>
    tpu.vector_store %arg9[%c0_32, %c128], %26 {strides = array<i32>} : memref<256x576xbf16, #tpu.memory_space<vmem>>, vector<256x64xbf16>,
    %c1_33 = arith.constant 1 : index
    %c0_34 = arith.constant 0 : index
    %c0_35 = arith.constant 0 : index
    %28 = vector.load %arg8[%c1_33, %c0_34, %c0_35] : memref<18x18x64xbf16, #tpu.memory_space<vmem>>, vector<16x16x64xbf16>
    %29 = vector.shape_cast %28 : vector<16x16x64xbf16> to vector<256x64xbf16>
    %c0_36 = arith.constant 0 : index
    %c192 = arith.constant 192 : index
    %30 = vector.load %arg9[%c0_36, %c192] : memref<256x576xbf16, #tpu.memory_space<vmem>>, vector<256x64xbf16>
    tpu.vector_store %arg9[%c0_36, %c192], %29 {strides = array<i32>} : memref<256x576xbf16, #tpu.memory_space<vmem>>, vector<256x64xbf16>,
    %c1_37 = arith.constant 1 : index
    %c1_38 = arith.constant 1 : index
    %c0_39 = arith.constant 0 : index
    %31 = vector.load %arg8[%c1_37, %c1_38, %c0_39] : memref<18x18x64xbf16, #tpu.memory_space<vmem>>, vector<16x16x64xbf16>
    %32 = vector.shape_cast %31 : vector<16x16x64xbf16> to vector<256x64xbf16>
    %c0_40 = arith.constant 0 : index
    %c256 = arith.constant 256 : index
    %33 = vector.load %arg9[%c0_40, %c256] : memref<256x576xbf16, #tpu.memory_space<vmem>>, vector<256x64xbf16>
    tpu.vector_store %arg9[%c0_40, %c256], %32 {strides = array<i32>} : memref<256x576xbf16, #tpu.memory_space<vmem>>, vector<256x64xbf16>,
    %c1_41 = arith.constant 1 : index
    %c2_42 = arith.constant 2 : index
    %c0_43 = arith.constant 0 : index
    %34 = vector.load %arg8[%c1_41, %c2_42, %c0_43] : memref<18x18x64xbf16, #tpu.memory_space<vmem>>, vector<16x16x64xbf16>
    %35 = vector.shape_cast %34 : vector<16x16x64xbf16> to vector<256x64xbf16>
    %c0_44 = arith.constant 0 : index
    %c320 = arith.constant 320 : index
    %36 = vector.load %arg9[%c0_44, %c320] : memref<256x576xbf16, #tpu.memory_space<vmem>>, vector<256x64xbf16>
    tpu.vector_store %arg9[%c0_44, %c320], %35 {strides = array<i32>} : memref<256x576xbf16, #tpu.memory_space<vmem>>, vector<256x64xbf16>,
    %c2_45 = arith.constant 2 : index
    %c0_46 = arith.constant 0 : index
    %c0_47 = arith.constant 0 : index
    %37 = vector.load %arg8[%c2_45, %c0_46, %c0_47] : memref<18x18x64xbf16, #tpu.memory_space<vmem>>, vector<16x16x64xbf16>
    %38 = vector.shape_cast %37 : vector<16x16x64xbf16> to vector<256x64xbf16>
    %c0_48 = arith.constant 0 : index
    %c384 = arith.constant 384 : index
    %39 = vector.load %arg9[%c0_48, %c384] : memref<256x576xbf16, #tpu.memory_space<vmem>>, vector<256x64xbf16>
    tpu.vector_store %arg9[%c0_48, %c384], %38 {strides = array<i32>} : memref<256x576xbf16, #tpu.memory_space<vmem>>, vector<256x64xbf16>,
    %c2_49 = arith.constant 2 : index
    %c1_50 = arith.constant 1 : index
    %c0_51 = arith.constant 0 : index
    %40 = vector.load %arg8[%c2_49, %c1_50, %c0_51] : memref<18x18x64xbf16, #tpu.memory_space<vmem>>, vector<16x16x64xbf16>
    %41 = vector.shape_cast %40 : vector<16x16x64xbf16> to vector<256x64xbf16>
    %c0_52 = arith.constant 0 : index
    %c448 = arith.constant 448 : index
    %42 = vector.load %arg9[%c0_52, %c448] : memref<256x576xbf16, #tpu.memory_space<vmem>>, vector<256x64xbf16>
    tpu.vector_store %arg9[%c0_52, %c448], %41 {strides = array<i32>} : memref<256x576xbf16, #tpu.memory_space<vmem>>, vector<256x64xbf16>,
    %c2_53 = arith.constant 2 : index
    %c2_54 = arith.constant 2 : index
    %c0_55 = arith.constant 0 : index
    %43 = vector.load %arg8[%c2_53, %c2_54, %c0_55] : memref<18x18x64xbf16, #tpu.memory_space<vmem>>, vector<16x16x64xbf16>
    %44 = vector.shape_cast %43 : vector<16x16x64xbf16> to vector<256x64xbf16>
    %c0_56 = arith.constant 0 : index
    %c512 = arith.constant 512 : index
    %45 = vector.load %arg9[%c0_56, %c512] : memref<256x576xbf16, #tpu.memory_space<vmem>>, vector<256x64xbf16>
    tpu.vector_store %arg9[%c0_56, %c512], %44 {strides = array<i32>} : memref<256x576xbf16, #tpu.memory_space<vmem>>, vector<256x64xbf16>,
    %c0_57 = arith.constant 0 : index
    %c0_58 = arith.constant 0 : index
    %46 = vector.load %arg9[%c0_57, %c0_58] : memref<256x576xbf16, #tpu.memory_space<vmem>>, vector<256x576xbf16>
    %c0_59 = arith.constant 0 : index
    %c0_60 = arith.constant 0 : index
    %47 = vector.load %arg3[%c0_59, %c0_60] : memref<576x64xbf16, #tpu.memory_space<vmem>>, vector<576x64xbf16>
    %cst_61 = arith.constant dense<0.000000e+00> : vector<256x64xf32>
    %48 = tpu.matmul %46, %47, %cst_61 {dimension_numbers = #tpu.dot_dimension_numbers<[1], [0], [0], [1], [0, 0, 1, 1], [], []>} : vector<256x576xbf16>, vector<576x64xbf16>, vector<256x64xf32> -> vector<256x64xf32>
    %49 = vector.broadcast %15 : vector<1x64xf32> to vector<256x64xf32>
    %50 = arith.mulf %48, %49 : vector<256x64xf32>
    %51 = vector.broadcast %16 : vector<1x64xf32> to vector<256x64xf32>
    %52 = arith.addf %50, %51 : vector<256x64xf32>
    %cst_62 = arith.constant 0.000000e+00 : f32
    %53 = vector.broadcast %cst_62 : f32 to vector<256x64xf32>
    %54 = arith.maximumf %52, %53 : vector<256x64xf32>
    %55 = vector.shape_cast %54 : vector<256x64xf32> to vector<16x16x64xf32>
    %56 = arith.truncf %55 : vector<16x16x64xf32> to vector<16x16x64xbf16>
    %c1_63 = arith.constant 1 : index
    %c1_64 = arith.constant 1 : index
    %c0_65 = arith.constant 0 : index
    %57 = vector.load %arg8[%c1_63, %c1_64, %c0_65] : memref<18x18x64xbf16, #tpu.memory_space<vmem>>, vector<16x16x64xbf16>
    tpu.vector_store %arg8[%c1_63, %c1_64, %c0_65], %56 {strides = array<i32>} : memref<18x18x64xbf16, #tpu.memory_space<vmem>>, vector<16x16x64xbf16>,
    %c0_66 = arith.constant 0 : index
    %c0_67 = arith.constant 0 : index
    %c0_68 = arith.constant 0 : index
    %58 = vector.load %arg8[%c0_66, %c0_67, %c0_68] : memref<18x18x64xbf16, #tpu.memory_space<vmem>>, vector<16x16x64xbf16>
    %59 = vector.shape_cast %58 : vector<16x16x64xbf16> to vector<256x64xbf16>
    %c0_69 = arith.constant 0 : index
    %c0_70 = arith.constant 0 : index
    %60 = vector.load %arg9[%c0_69, %c0_70] : memref<256x576xbf16, #tpu.memory_space<vmem>>, vector<256x64xbf16>
    tpu.vector_store %arg9[%c0_69, %c0_70], %59 {strides = array<i32>} : memref<256x576xbf16, #tpu.memory_space<vmem>>, vector<256x64xbf16>,
    %c0_71 = arith.constant 0 : index
    %c1_72 = arith.constant 1 : index
    %c0_73 = arith.constant 0 : index
    %61 = vector.load %arg8[%c0_71, %c1_72, %c0_73] : memref<18x18x64xbf16, #tpu.memory_space<vmem>>, vector<16x16x64xbf16>
    %62 = vector.shape_cast %61 : vector<16x16x64xbf16> to vector<256x64xbf16>
    %c0_74 = arith.constant 0 : index
    %c64_75 = arith.constant 64 : index
    %63 = vector.load %arg9[%c0_74, %c64_75] : memref<256x576xbf16, #tpu.memory_space<vmem>>, vector<256x64xbf16>
    tpu.vector_store %arg9[%c0_74, %c64_75], %62 {strides = array<i32>} : memref<256x576xbf16, #tpu.memory_space<vmem>>, vector<256x64xbf16>,
    %c0_76 = arith.constant 0 : index
    %c2_77 = arith.constant 2 : index
    %c0_78 = arith.constant 0 : index
    %64 = vector.load %arg8[%c0_76, %c2_77, %c0_78] : memref<18x18x64xbf16, #tpu.memory_space<vmem>>, vector<16x16x64xbf16>
    %65 = vector.shape_cast %64 : vector<16x16x64xbf16> to vector<256x64xbf16>
    %c0_79 = arith.constant 0 : index
    %c128_80 = arith.constant 128 : index
    %66 = vector.load %arg9[%c0_79, %c128_80] : memref<256x576xbf16, #tpu.memory_space<vmem>>, vector<256x64xbf16>
    tpu.vector_store %arg9[%c0_79, %c128_80], %65 {strides = array<i32>} : memref<256x576xbf16, #tpu.memory_space<vmem>>, vector<256x64xbf16>,
    %c1_81 = arith.constant 1 : index
    %c0_82 = arith.constant 0 : index
    %c0_83 = arith.constant 0 : index
    %67 = vector.load %arg8[%c1_81, %c0_82, %c0_83] : memref<18x18x64xbf16, #tpu.memory_space<vmem>>, vector<16x16x64xbf16>
    %68 = vector.shape_cast %67 : vector<16x16x64xbf16> to vector<256x64xbf16>
    %c0_84 = arith.constant 0 : index
    %c192_85 = arith.constant 192 : index
    %69 = vector.load %arg9[%c0_84, %c192_85] : memref<256x576xbf16, #tpu.memory_space<vmem>>, vector<256x64xbf16>
    tpu.vector_store %arg9[%c0_84, %c192_85], %68 {strides = array<i32>} : memref<256x576xbf16, #tpu.memory_space<vmem>>, vector<256x64xbf16>,
    %c1_86 = arith.constant 1 : index
    %c1_87 = arith.constant 1 : index
    %c0_88 = arith.constant 0 : index
    %70 = vector.load %arg8[%c1_86, %c1_87, %c0_88] : memref<18x18x64xbf16, #tpu.memory_space<vmem>>, vector<16x16x64xbf16>
    %71 = vector.shape_cast %70 : vector<16x16x64xbf16> to vector<256x64xbf16>
    %c0_89 = arith.constant 0 : index
    %c256_90 = arith.constant 256 : index
    %72 = vector.load %arg9[%c0_89, %c256_90] : memref<256x576xbf16, #tpu.memory_space<vmem>>, vector<256x64xbf16>
    tpu.vector_store %arg9[%c0_89, %c256_90], %71 {strides = array<i32>} : memref<256x576xbf16, #tpu.memory_space<vmem>>, vector<256x64xbf16>,
    %c1_91 = arith.constant 1 : index
    %c2_92 = arith.constant 2 : index
    %c0_93 = arith.constant 0 : index
    %73 = vector.load %arg8[%c1_91, %c2_92, %c0_93] : memref<18x18x64xbf16, #tpu.memory_space<vmem>>, vector<16x16x64xbf16>
    %74 = vector.shape_cast %73 : vector<16x16x64xbf16> to vector<256x64xbf16>
    %c0_94 = arith.constant 0 : index
    %c320_95 = arith.constant 320 : index
    %75 = vector.load %arg9[%c0_94, %c320_95] : memref<256x576xbf16, #tpu.memory_space<vmem>>, vector<256x64xbf16>
    tpu.vector_store %arg9[%c0_94, %c320_95], %74 {strides = array<i32>} : memref<256x576xbf16, #tpu.memory_space<vmem>>, vector<256x64xbf16>,
    %c2_96 = arith.constant 2 : index
    %c0_97 = arith.constant 0 : index
    %c0_98 = arith.constant 0 : index
    %76 = vector.load %arg8[%c2_96, %c0_97, %c0_98] : memref<18x18x64xbf16, #tpu.memory_space<vmem>>, vector<16x16x64xbf16>
    %77 = vector.shape_cast %76 : vector<16x16x64xbf16> to vector<256x64xbf16>
    %c0_99 = arith.constant 0 : index
    %c384_100 = arith.constant 384 : index
    %78 = vector.load %arg9[%c0_99, %c384_100] : memref<256x576xbf16, #tpu.memory_space<vmem>>, vector<256x64xbf16>
    tpu.vector_store %arg9[%c0_99, %c384_100], %77 {strides = array<i32>} : memref<256x576xbf16, #tpu.memory_space<vmem>>, vector<256x64xbf16>,
    %c2_101 = arith.constant 2 : index
    %c1_102 = arith.constant 1 : index
    %c0_103 = arith.constant 0 : index
    %79 = vector.load %arg8[%c2_101, %c1_102, %c0_103] : memref<18x18x64xbf16, #tpu.memory_space<vmem>>, vector<16x16x64xbf16>
    %80 = vector.shape_cast %79 : vector<16x16x64xbf16> to vector<256x64xbf16>
    %c0_104 = arith.constant 0 : index
    %c448_105 = arith.constant 448 : index
    %81 = vector.load %arg9[%c0_104, %c448_105] : memref<256x576xbf16, #tpu.memory_space<vmem>>, vector<256x64xbf16>
    tpu.vector_store %arg9[%c0_104, %c448_105], %80 {strides = array<i32>} : memref<256x576xbf16, #tpu.memory_space<vmem>>, vector<256x64xbf16>,
    %c2_106 = arith.constant 2 : index
    %c2_107 = arith.constant 2 : index
    %c0_108 = arith.constant 0 : index
    %82 = vector.load %arg8[%c2_106, %c2_107, %c0_108] : memref<18x18x64xbf16, #tpu.memory_space<vmem>>, vector<16x16x64xbf16>
    %83 = vector.shape_cast %82 : vector<16x16x64xbf16> to vector<256x64xbf16>
    %c0_109 = arith.constant 0 : index
    %c512_110 = arith.constant 512 : index
    %84 = vector.load %arg9[%c0_109, %c512_110] : memref<256x576xbf16, #tpu.memory_space<vmem>>, vector<256x64xbf16>
    tpu.vector_store %arg9[%c0_109, %c512_110], %83 {strides = array<i32>} : memref<256x576xbf16, #tpu.memory_space<vmem>>, vector<256x64xbf16>,
    %c0_111 = arith.constant 0 : index
    %c0_112 = arith.constant 0 : index
    %85 = vector.load %arg9[%c0_111, %c0_112] : memref<256x576xbf16, #tpu.memory_space<vmem>>, vector<256x576xbf16>
    %c0_113 = arith.constant 0 : index
    %c0_114 = arith.constant 0 : index
    %86 = vector.load %arg4[%c0_113, %c0_114] : memref<576x64xbf16, #tpu.memory_space<vmem>>, vector<576x64xbf16>
    %cst_115 = arith.constant dense<0.000000e+00> : vector<256x64xf32>
    %87 = tpu.matmul %85, %86, %cst_115 {dimension_numbers = #tpu.dot_dimension_numbers<[1], [0], [0], [1], [0, 0, 1, 1], [], []>} : vector<256x576xbf16>, vector<576x64xbf16>, vector<256x64xf32> -> vector<256x64xf32>
    %88 = vector.broadcast %17 : vector<1x64xf32> to vector<256x64xf32>
    %89 = arith.mulf %87, %88 : vector<256x64xf32>
    %90 = vector.broadcast %18 : vector<1x64xf32> to vector<256x64xf32>
    %91 = arith.addf %89, %90 : vector<256x64xf32>
    %c0_116 = arith.constant 0 : index
    %c0_117 = arith.constant 0 : index
    %92 = vector.load %arg6[%c0_116, %c0_117] : memref<64x64xbf16, #tpu.memory_space<vmem>>, vector<64x64xbf16>
    %93 = arith.truncf %91 : vector<256x64xf32> to vector<256x64xbf16>
    %cst_118 = arith.constant dense<0.000000e+00> : vector<64x256xf32>
    %94 = tpu.matmul %92, %93, %cst_118 {dimension_numbers = #tpu.dot_dimension_numbers<[1], [1], [0], [0], [0, 0, 1, 0], [], []>} : vector<64x64xbf16>, vector<256x64xbf16>, vector<64x256xf32> -> vector<64x256xf32>
    %95 = arith.addf %94, %7 : vector<64x256xf32>
    %cst_119 = arith.constant 0.000000e+00 : f32
    %96 = vector.broadcast %cst_119 : f32 to vector<64x256xf32>
    %97 = arith.maximumf %95, %96 : vector<64x256xf32>
    %98 = vector.shape_cast %97 : vector<64x256xf32> to vector<1x64x256xf32>
    %c0_120 = arith.constant 0 : index
    %c0_121 = arith.constant 0 : index
    %c0_122 = arith.constant 0 : index
    %99 = vector.load %arg7[%c0_120, %c0_121, %c0_122] : memref<1x64x256xf32, #tpu.memory_space<vmem>>, vector<1x64x256xf32>
    tpu.vector_store %arg7[%c0_120, %c0_121, %c0_122], %98 {strides = array<i32>} : memref<1x64x256xf32, #tpu.memory_space<vmem>>, vector<1x64x256xf32>,
    return
  }
  func.func @transform_0(%arg0: i32) -> (i32, i32, i32) {
    %c0_i32 = arith.constant 0 : i32
    %c0_i32_0 = arith.constant 0 : i32
    %c0_i32_1 = arith.constant 0 : i32
    return %arg0, %c0_i32, %c0_i32_0 : i32, i32, i32
  }
  func.func @transform_1(%arg0: i32) -> (i32, i32) {
    %c0_i32 = arith.constant 0 : i32
    %c0_i32_0 = arith.constant 0 : i32
    %c0_i32_1 = arith.constant 0 : i32
    return %c0_i32, %c0_i32_0 : i32, i32
  }
  func.func @transform_2(%arg0: i32) -> (i32, i32) {
    %c0_i32 = arith.constant 0 : i32
    %c0_i32_0 = arith.constant 0 : i32
    %c0_i32_1 = arith.constant 0 : i32
    return %c0_i32, %c0_i32_0 : i32, i32
  }
  func.func @transform_3(%arg0: i32) -> (i32, i32) {
    %c0_i32 = arith.constant 0 : i32
    %c0_i32_0 = arith.constant 0 : i32
    %c0_i32_1 = arith.constant 0 : i32
    return %c0_i32, %c0_i32_0 : i32, i32
  }
  func.func @transform_4(%arg0: i32) -> (i32, i32) {
    %c0_i32 = arith.constant 0 : i32
    %c0_i32_0 = arith.constant 0 : i32
    %c0_i32_1 = arith.constant 0 : i32
    return %c0_i32, %c0_i32_0 : i32, i32
  }
  func.func @transform_5(%arg0: i32) -> (i32, i32) {
    %c0_i32 = arith.constant 0 : i32
    %c0_i32_0 = arith.constant 0 : i32
    %c0_i32_1 = arith.constant 0 : i32
    return %c0_i32, %c0_i32_0 : i32, i32
  }
  func.func @transform_6(%arg0: i32) -> (i32, i32, i32) {
    %c0_i32 = arith.constant 0 : i32
    %c0_i32_0 = arith.constant 0 : i32
    %c0_i32_1 = arith.constant 0 : i32
    return %arg0, %c0_i32, %c0_i32_0 : i32, i32, i32
  }
}

</mosaic_0001>

<llo_original>
// kernel: identity_block2_forward.1
$region0: #{identity_block2_forward.1}
  #allocation0 [shape = 'u32[]', space=smem, size = 0x4, offset = 0x4, fixed_abs, tag = 'smem constant byte address 0x4 - core index']
  #allocation1 [shape = 'u32[144,128]{1,0:T(1,128)}', space=vmem, size = 0x12000, scoped, tag = 'internal scratch']
  #allocation2 [shape = 'bf16[18,18,64]{2,1,0:T(8,128)(2,1)}', space=vmem, size = 0x1b000, scoped, tag = 'scratch operand']
  #allocation3 [shape = 'bf16[256,576]{1,0:T(16,128)(2,1)}', space=vmem, size = 0x50000, scoped, tag = 'scratch operand']
  %s0 = inlined_call_operand.vmem [shape: f32[2,64,256], index: 0, kind: input, shape index: {}]
  %s1 = inlined_call_operand.vmem [shape: bf16[256,256], index: 1, kind: input, shape index: {}]
  %s2 = inlined_call_operand.vmem [shape: bf16[576,64], index: 2, kind: input, shape index: {}]
  %s3 = inlined_call_operand.vmem [shape: bf16[576,64], index: 3, kind: input, shape index: {}]
  %s4 = inlined_call_operand.vmem [shape: f32[4,64], index: 4, kind: input, shape index: {}]
  %s5 = inlined_call_operand.vmem [shape: bf16[64,64], index: 5, kind: input, shape index: {}]
  %s6 = inlined_call_operand.vmem [shape: f32[2,64,256], index: 6, kind: output, shape index: {}]
  %s7 = sld [smem:[#allocation0]]
  $region57: #{identity_block2_forward.1} parent=0
    _
  %s9 = ssub.s32 1, %s7
  %s10 = scalar_select 0, %s9, %s7
  loop: start=0, step=1, limit=4
  $region2: #{identity_block2_forward.1} parent=0 // loop_pre_header
    _
  $region3: #{identity_block2_forward.1} parent=0 // loop_header
    %s12 = sphi 0, %s16
    %p13 = scmp.ge.s32.totalorder %s12, 4
    %s22 = sphi 0, %s24
    %s25 = sphi 0, %s22
    %s26 = sphi 0, %s25
    %s42 = sphi 0, %s26
    %s46 = sphi 0, %s46
    %s48 = sphi 0, %s46
    %s49 = sphi 0, %s48
    %s63 = sphi 0, %s49
    %s67 = sphi 0, %s67
    %s69 = sphi 0, %s67
    %s70 = sphi 0, %s69
    %s84 = sphi 0, %s70
    %s88 = sphi 0, %s88
    %s90 = sphi 0, %s88
    %s91 = sphi 0, %s90
    %s105 = sphi 0, %s91
    %s109 = sphi 0, %s109
    %s111 = sphi 0, %s109
    %s112 = sphi 0, %s111
    %s126 = sphi 0, %s112
    %s130 = sphi 0, %s130
    %s132 = sphi 0, %s130
    %s133 = sphi 0, %s132
    %s147 = sphi 0, %s133
    %s153 = sphi 0, %s155
    %s156 = sphi 0, %s153
    %s157 = sphi 0, %s156
    %s173 = sphi 0, %s157
  $region4: #{identity_block2_forward.1} parent=0 // loop_header_branch
    %15 = sbr.rel (%p13) target = $region8
  $region5: #{identity_block2_forward.1} parent=0 // loop_body
    %s17 = ssub.s32 %s12, 1
    %s18 = ssub.s32 %s12, 2
    %s19 = sadd.s32 %s12, 1
    %s20 = ssub.s32 %s12, %s19
    %p21 = scmp.eq.s32.totalorder %s20, 0
    %s23 = sadd.s32 %s22, 1
    %s24 = scalar_select %p21, %s22, %s23
    %p27 = pneg %p21
    %p28 = scmp.eq.s32.totalorder %s12, 1
    %p29 = por %p27, %p28
    %p30 = scmp.ne.s32.totalorder %s22, %s25
    %p31 = scmp.eq.s32.totalorder %s12, 0
    %p32 = por %p30, %p31
    %p33 = scmp.ne.s32.totalorder %s22, %s25
    %p34 = scmp.eq.s32.totalorder %s17, 1
    %p35 = por %p33, %p34
    %p36 = scmp.ne.s32.totalorder %s25, %s26
    %p37 = scmp.eq.s32.totalorder %s17, 0
    %p38 = por %p36, %p37
    %p39 = scmp.ne.s32.totalorder %s25, %s26
    %p40 = scmp.eq.s32.totalorder %s18, 1
    %p41 = por %p39, %p40
    %p43 = scmp.ne.s32.totalorder %s26, %s42
    %p44 = scmp.eq.s32.totalorder %s18, 0
    %p45 = por %p43, %p44
    %s47 = sadd.s32 %s46, 1
    %p50 = scmp.eq.s32.totalorder %s12, 1
    %p51 = scmp.ne.s32.totalorder %s46, %s48
    %p52 = scmp.eq.s32.totalorder %s12, 0
    %p53 = por %p51, %p52
    %p54 = scmp.ne.s32.totalorder %s46, %s48
    %p55 = scmp.eq.s32.totalorder %s17, 1
    %p56 = por %p54, %p55
    %p57 = scmp.ne.s32.totalorder %s48, %s49
    %p58 = scmp.eq.s32.totalorder %s17, 0
    %p59 = por %p57, %p58
    %p60 = scmp.ne.s32.totalorder %s48, %s49
    %p61 = scmp.eq.s32.totalorder %s18, 1
    %p62 = por %p60, %p61
    %p64 = scmp.ne.s32.totalorder %s49, %s63
    %p65 = scmp.eq.s32.totalorder %s18, 0
    %p66 = por %p64, %p65
    %s68 = sadd.s32 %s67, 1
    %p71 = scmp.eq.s32.totalorder %s12, 1
    %p72 = scmp.ne.s32.totalorder %s67, %s69
    %p73 = scmp.eq.s32.totalorder %s12, 0
    %p74 = por %p72, %p73
    %p75 = scmp.ne.s32.totalorder %s67, %s69
    %p76 = scmp.eq.s32.totalorder %s17, 1
    %p77 = por %p75, %p76
    %p78 = scmp.ne.s32.totalorder %s69, %s70
    %p79 = scmp.eq.s32.totalorder %s17, 0
    %p80 = por %p78, %p79
    %p81 = scmp.ne.s32.totalorder %s69, %s70
    %p82 = scmp.eq.s32.totalorder %s18, 1
    %p83 = por %p81, %p82
    %p85 = scmp.ne.s32.totalorder %s70, %s84
    %p86 = scmp.eq.s32.totalorder %s18, 0
    %p87 = por %p85, %p86
    %s89 = sadd.s32 %s88, 1
    %p92 = scmp.eq.s32.totalorder %s12, 1
    %p93 = scmp.ne.s32.totalorder %s88, %s90
    %p94 = scmp.eq.s32.totalorder %s12, 0
    %p95 = por %p93, %p94
    %p96 = scmp.ne.s32.totalorder %s88, %s90
    %p97 = scmp.eq.s32.totalorder %s17, 1
    %p98 = por %p96, %p97
    %p99 = scmp.ne.s32.totalorder %s90, %s91
    %p100 = scmp.eq.s32.totalorder %s17, 0
    %p101 = por %p99, %p100
    %p102 = scmp.ne.s32.totalorder %s90, %s91
    %p103 = scmp.eq.s32.totalorder %s18, 1
    %p104 = por %p102, %p103
    %p106 = scmp.ne.s32.totalorder %s91, %s105
    %p107 = scmp.eq.s32.totalorder %s18, 0
    %p108 = por %p106, %p107
    %s110 = sadd.s32 %s109, 1
    %p113 = scmp.eq.s32.totalorder %s12, 1
    %p114 = scmp.ne.s32.totalorder %s109, %s111
    %p115 = scmp.eq.s32.totalorder %s12, 0
    %p116 = por %p114, %p115
    %p117 = scmp.ne.s32.totalorder %s109, %s111
    %p118 = scmp.eq.s32.totalorder %s17, 1
    %p119 = por %p117, %p118
    %p120 = scmp.ne.s32.totalorder %s111, %s112
    %p121 = scmp.eq.s32.totalorder %s17, 0
    %p122 = por %p120, %p121
    %p123 = scmp.ne.s32.totalorder %s111, %s112
    %p124 = scmp.eq.s32.totalorder %s18, 1
    %p125 = por %p123, %p124
    %p127 = scmp.ne.s32.totalorder %s112, %s126
    %p128 = scmp.eq.s32.totalorder %s18, 0
    %p129 = por %p127, %p128
    %s131 = sadd.s32 %s130, 1
    %p134 = scmp.eq.s32.totalorder %s12, 1
    %p135 = scmp.ne.s32.totalorder %s130, %s132
    %p136 = scmp.eq.s32.totalorder %s12, 0
    %p137 = por %p135, %p136
    %p138 = scmp.ne.s32.totalorder %s130, %s132
    %p139 = scmp.eq.s32.totalorder %s17, 1
    %p140 = por %p138, %p139
    %p141 = scmp.ne.s32.totalorder %s132, %s133
    %p142 = scmp.eq.s32.totalorder %s17, 0
    %p143 = por %p141, %p142
    %p144 = scmp.ne.s32.totalorder %s132, %s133
    %p145 = scmp.eq.s32.totalorder %s18, 1
    %p146 = por %p144, %p145
    %p148 = scmp.ne.s32.totalorder %s133, %s147
    %p149 = scmp.eq.s32.totalorder %s18, 0
    %p150 = por %p148, %p149
    %s151 = ssub.s32 %s12, %s19
    %p152 = scmp.eq.s32.totalorder %s151, 0
    %s154 = sadd.s32 %s153, 1
    %s155 = scalar_select %p152, %s153, %s154
    %p158 = pneg %p152
    %p159 = scmp.eq.s32.totalorder %s12, 1
    %p160 = por %p158, %p159
    %p161 = scmp.ne.s32.totalorder %s153, %s156
    %p162 = scmp.eq.s32.totalorder %s12, 0
    %p163 = por %p161, %p162
    %p164 = scmp.ne.s32.totalorder %s153, %s156
    %p165 = scmp.eq.s32.totalorder %s17, 1
    %p166 = por %p164, %p165
    %p167 = scmp.ne.s32.totalorder %s156, %s157
    %p168 = scmp.eq.s32.totalorder %s17, 0
    %p169 = por %p167, %p168
    %p170 = scmp.ne.s32.totalorder %s156, %s157
    %p171 = scmp.eq.s32.totalorder %s18, 1
    %p172 = por %p170, %p171
    %p174 = scmp.ne.s32.totalorder %s157, %s173
    %p175 = scmp.eq.s32.totalorder %s18, 0
    %p176 = por %p174, %p175
    %p177 = scmp.le.s32.totalorder 1, %s12
    %p178 = scmp.lt.s32.totalorder %s12, 3
    %p179 = pnand %p177, %p178
    %p180 = pneg %p179
    // Predicated region
    $region9: #{identity_block2_forward.1} parent=5 // pred_check
      _
    $region10: #{identity_block2_forward.1} parent=5 // pred_check_branch
      %182 = sbr.rel (%p179) target = $region12
    $region11: #{identity_block2_forward.1} parent=5 // pred_region
      %s183 = ssub.s32 %s12, 1
      // Predicated region
      $region13: #{identity_block2_forward.1} parent=11 // pred_check
        %p184 = pneg %p59
      $region14: #{identity_block2_forward.1} parent=11 // pred_check_branch
        %186 = sbr.rel (%p184) target = $region16
      $region15: #{identity_block2_forward.1} parent=11 // pred_region
        _
      $region16: #{identity_block2_forward.1} parent=11 // pred_fallthru
        _
      // Predicated region
      $region17: #{identity_block2_forward.1} parent=11 // pred_check
        %p187 = pneg %p80
      $region18: #{identity_block2_forward.1} parent=11 // pred_check_branch
        %189 = sbr.rel (%p187) target = $region20
      $region19: #{identity_block2_forward.1} parent=11 // pred_region
        _
      $region20: #{identity_block2_forward.1} parent=11 // pred_fallthru
        _
      // Predicated region
      $region21: #{identity_block2_forward.1} parent=11 // pred_check
        %p190 = pneg %p101
      $region22: #{identity_block2_forward.1} parent=11 // pred_check_branch
        %192 = sbr.rel (%p190) target = $region24
      $region23: #{identity_block2_forward.1} parent=11 // pred_region
        _
      $region24: #{identity_block2_forward.1} parent=11 // pred_fallthru
        _
      // Predicated region
      $region25: #{identity_block2_forward.1} parent=11 // pred_check
        %p193 = pneg %p122
      $region26: #{identity_block2_forward.1} parent=11 // pred_check_branch
        %195 = sbr.rel (%p193) target = $region28
      $region27: #{identity_block2_forward.1} parent=11 // pred_region
        _
      $region28: #{identity_block2_forward.1} parent=11 // pred_fallthru
        _
      // Predicated region
      $region29: #{identity_block2_forward.1} parent=11 // pred_check
        %p196 = pneg %p143
      $region30: #{identity_block2_forward.1} parent=11 // pred_check_branch
        %198 = sbr.rel (%p196) target = $region32
      $region31: #{identity_block2_forward.1} parent=11 // pred_region
        _
      $region32: #{identity_block2_forward.1} parent=11 // pred_fallthru
        _
    $region12: #{identity_block2_forward.1} parent=5 // pred_fallthru
      _
    %p199 = scmp.lt.s32.totalorder %s12, 2
    // Predicated region
    $region33: #{identity_block2_forward.1} parent=5 // pred_check
      %p200 = pneg %p199
    $region34: #{identity_block2_forward.1} parent=5 // pred_check_branch
      %202 = sbr.rel (%p200) target = $region36
    $region35: #{identity_block2_forward.1} parent=5 // pred_region
      // Predicated region
      $region37: #{identity_block2_forward.1} parent=35 // pred_check
        %p203 = pneg %p32
      $region38: #{identity_block2_forward.1} parent=35 // pred_check_branch
        %205 = sbr.rel (%p203) target = $region40
      $region39: #{identity_block2_forward.1} parent=35 // pred_region
        %p206 = scmp.lt.s32.totalorder %s12, 1
        %s207 = scalar_select %p206, %s12, 1
        %s208 = smul.addr %s207, 16
        %s209 = smul.addr %s208, 8
        %s210 = scalar_lea.vmem %s0, %s209
      $region40: #{identity_block2_forward.1} parent=35 // pred_fallthru
        _
    $region36: #{identity_block2_forward.1} parent=5 // pred_fallthru
      _
    %p211 = scmp.le.s32.totalorder 1, %s12
    %p212 = scmp.lt.s32.totalorder %s12, 3
    %p213 = pnand %p211, %p212
    %p214 = pneg %p213
    // Predicated region
    $region41: #{identity_block2_forward.1} parent=5 // pred_check
      _
    $region42: #{identity_block2_forward.1} parent=5 // pred_check_branch
      %216 = sbr.rel (%p213) target = $region44
    $region43: #{identity_block2_forward.1} parent=5 // pred_region
      %s217 = ssub.s32 %s12, 1
      %p218 = scmp.lt.s32.totalorder %s17, 1
      %s219 = scalar_select %p218, %s17, 1
      %s220 = smul.addr %s219, 16
      %s221 = smul.addr %s220, 8
      %s222 = scalar_lea.vmem %s0, %s221
      %p223 = pneg %p38
      %p224 = pneg %p35
      %p225 = pneg %p59
      %p226 = pneg %p56
      %p227 = pneg %p80
      %p228 = pneg %p77
      %p229 = pneg %p101
      %p230 = pneg %p98
      %p231 = pneg %p122
      %p232 = pneg %p119
      %p233 = pneg %p143
      %p234 = pneg %p140
      %p235 = pneg %p169
      %p236 = pneg %p166
      %p237 = scmp.lt.s32.totalorder %s17, 1
      %s238 = scalar_select %p237, %s17, 1
      %s239 = smul.addr %s238, 16
      %s240 = smul.addr %s239, 8
      %s241 = scalar_lea.vmem %s6, %s240
      %p242 = scmp.lt.s32.totalorder %s17, 1
      %s243 = scalar_select %p242, %s17, 1
      %s244 = smul.addr %s243, 16
      %s245 = smul.addr %s244, 8
      %s246 = scalar_lea.vmem %s0, %s245
      %p247 = scmp.lt.s32.totalorder %s17, 1
      %s248 = scalar_select %p247, %s17, 1
      %s249 = smul.addr %s248, 16
      %s250 = smul.addr %s249, 8
      %s251 = scalar_lea.vmem %s6, %s250
      %vm253 = vcmask 519168
      %254 = vst.msk [vmem:[#allocation2] sm:$0xf] %vm253, 0
      %255 = vst.msk [vmem:[#allocation2 + $0x4] sm:$0xf] %vm253, 0
      %vm256 = vcmask 516096
      %257 = vst.msk [vmem:[#allocation2 + $0x8] sm:$0x1] %vm256, 0
      %s258 = scalar_lea.vmem [#allocation2], 204
      %259 = vst.msk [vmem:[%s258] sm:$0xf] %vm253, 0
      %260 = vst.msk [vmem:[%s258 + $0x4] sm:$0xf] %vm253, 0
      %261 = vst.msk [vmem:[%s258 + $0x8] sm:$0x1] %vm256, 0
      %vm262 = vcmask 516096
      %vm263 = vsmask.f32 256
      %vm264 = vmand %vm262, %vm263
      %v265 = vld [vmem:[#allocation2] sm:$0x1]
      %v266 = vsel %vm264, 0, %v265
      %267 = vst [vmem:[#allocation2] sm:$0x1] %v266
      %v268 = vld [vmem:[#allocation2 + $0xc] sm:$0x1]
      %v269 = vsel %vm264, 0, %v268
      %270 = vst [vmem:[#allocation2 + $0xc] sm:$0x1] %v269
      %v271 = vld [vmem:[#allocation2 + $0x18] sm:$0x1]
      %v272 = vsel %vm264, 0, %v271
      %273 = vst [vmem:[#allocation2 + $0x18] sm:$0x1] %v272
      %v274 = vld [vmem:[#allocation2 + $0x24] sm:$0x1]
      %v275 = vsel %vm264, 0, %v274
      %276 = vst [vmem:[#allocation2 + $0x24] sm:$0x1] %v275
      %v277 = vld [vmem:[#allocation2 + $0x30] sm:$0x1]
      %v278 = vsel %vm264, 0, %v277
      %279 = vst [vmem:[#allocation2 + $0x30] sm:$0x1] %v278
      %v280 = vld [vmem:[#allocation2 + $0x3c] sm:$0x1]
      %v281 = vsel %vm264, 0, %v280
      %282 = vst [vmem:[#allocation2 + $0x3c] sm:$0x1] %v281
      %v283 = vld [vmem:[#allocation2 + $0x48] sm:$0x1]
      %v284 = vsel %vm264, 0, %v283
      %285 = vst [vmem:[#allocation2 + $0x48] sm:$0x1] %v284
      %v286 = vld [vmem:[#allocation2 + $0x54] sm:$0x1]
      %v287 = vsel %vm264, 0, %v286
      %288 = vst [vmem:[#allocation2 + $0x54] sm:$0x1] %v287
      %v289 = vld [vmem:[#allocation2 + $0x60] sm:$0x1]
      %v290 = vsel %vm264, 0, %v289
      %291 = vst [vmem:[#allocation2 + $0x60] sm:$0x1] %v290
      %v292 = vld [vmem:[#allocation2 + $0x6c] sm:$0x1]
      %v293 = vsel %vm264, 0, %v292
      %294 = vst [vmem:[#allocation2 + $0x6c] sm:$0x1] %v293
      %v295 = vld [vmem:[#allocation2 + $0x78] sm:$0x1]
      %v296 = vsel %vm264, 0, %v295
      %297 = vst [vmem:[#allocation2 + $0x78] sm:$0x1] %v296
      %v298 = vld [vmem:[#allocation2 + $0x84] sm:$0x1]
      %v299 = vsel %vm264, 0, %v298
      %300 = vst [vmem:[#allocation2 + $0x84] sm:$0x1] %v299
      %v301 = vld [vmem:[#allocation2 + $0x90] sm:$0x1]
      %v302 = vsel %vm264, 0, %v301
      %303 = vst [vmem:[#allocation2 + $0x90] sm:$0x1] %v302
      %v304 = vld [vmem:[#allocation2 + $0x9c] sm:$0x1]
      %v305 = vsel %vm264, 0, %v304
      %306 = vst [vmem:[#allocation2 + $0x9c] sm:$0x1] %v305
      %v307 = vld [vmem:[#allocation2 + $0xa8] sm:$0x1]
      %v308 = vsel %vm264, 0, %v307
      %309 = vst [vmem:[#allocation2 + $0xa8] sm:$0x1] %v308
      %v310 = vld [vmem:[#allocation2 + $0xb4] sm:$0x1]
      %v311 = vsel %vm264, 0, %v310
      %312 = vst [vmem:[#allocation2 + $0xb4] sm:$0x1] %v311
      %v313 = vld [vmem:[#allocation2 + $0xc0] sm:$0x1]
      %v314 = vsel %vm264, 0, %v313
      %315 = vst [vmem:[#allocation2 + $0xc0] sm:$0x1] %v314
      %v316 = vld [vmem:[#allocation2 + $0xcc] sm:$0x1]
      %v317 = vsel %vm264, 0, %v316
      %318 = vst [vmem:[#allocation2 + $0xcc] sm:$0x1] %v317
      %vm319 = vsmask.f32 7938
      %vm320 = vmand %vm262, %vm319
      %v321 = vld [vmem:[#allocation2 + $0x8] sm:$0x1]
      %v322 = vsel %vm320, 0, %v321
      %323 = vst [vmem:[#allocation2 + $0x8] sm:$0x1] %v322
      %v324 = vld [vmem:[#allocation2 + $0x14] sm:$0x1]
      %v325 = vsel %vm320, 0, %v324
      %326 = vst [vmem:[#allocation2 + $0x14] sm:$0x1] %v325
      %v327 = vld [vmem:[#allocation2 + $0x20] sm:$0x1]
      %v328 = vsel %vm320, 0, %v327
      %329 = vst [vmem:[#allocation2 + $0x20] sm:$0x1] %v328
      %v330 = vld [vmem:[#allocation2 + $0x2c] sm:$0x1]
      %v331 = vsel %vm320, 0, %v330
      %332 = vst [vmem:[#allocation2 + $0x2c] sm:$0x1] %v331
      %v333 = vld [vmem:[#allocation2 + $0x38] sm:$0x1]
      %v334 = vsel %vm320, 0, %v333
      %335 = vst [vmem:[#allocation2 + $0x38] sm:$0x1] %v334
      %v336 = vld [vmem:[#allocation2 + $0x44] sm:$0x1]
      %v337 = vsel %vm320, 0, %v336
      %338 = vst [vmem:[#allocation2 + $0x44] sm:$0x1] %v337
      %v339 = vld [vmem:[#allocation2 + $0x50] sm:$0x1]
      %v340 = vsel %vm320, 0, %v339
      %341 = vst [vmem:[#allocation2 + $0x50] sm:$0x1] %v340
      %v342 = vld [vmem:[#allocation2 + $0x5c] sm:$0x1]
      %v343 = vsel %vm320, 0, %v342
      %344 = vst [vmem:[#allocation2 + $0x5c] sm:$0x1] %v343
      %v345 = vld [vmem:[#allocation2 + $0x68] sm:$0x1]
      %v346 = vsel %vm320, 0, %v345
      %347 = vst [vmem:[#allocation2 + $0x68] sm:$0x1] %v346
      %v348 = vld [vmem:[#allocation2 + $0x74] sm:$0x1]
      %v349 = vsel %vm320, 0, %v348
      %350 = vst [vmem:[#allocation2 + $0x74] sm:$0x1] %v349
      %v351 = vld [vmem:[#allocation2 + $0x80] sm:$0x1]
      %v352 = vsel %vm320, 0, %v351
      %353 = vst [vmem:[#allocation2 + $0x80] sm:$0x1] %v352
      %v354 = vld [vmem:[#allocation2 + $0x8c] sm:$0x1]
      %v355 = vsel %vm320, 0, %v354
      %356 = vst [vmem:[#allocation2 + $0x8c] sm:$0x1] %v355
      %v357 = vld [vmem:[#allocation2 + $0x98] sm:$0x1]
      %v358 = vsel %vm320, 0, %v357
      %359 = vst [vmem:[#allocation2 + $0x98] sm:$0x1] %v358
      %v360 = vld [vmem:[#allocation2 + $0xa4] sm:$0x1]
      %v361 = vsel %vm320, 0, %v360
      %362 = vst [vmem:[#allocation2 + $0xa4] sm:$0x1] %v361
      %v363 = vld [vmem:[#allocation2 + $0xb0] sm:$0x1]
      %v364 = vsel %vm320, 0, %v363
      %365 = vst [vmem:[#allocation2 + $0xb0] sm:$0x1] %v364
      %v366 = vld [vmem:[#allocation2 + $0xbc] sm:$0x1]
      %v367 = vsel %vm320, 0, %v366
      %368 = vst [vmem:[#allocation2 + $0xbc] sm:$0x1] %v367
      %v369 = vld [vmem:[#allocation2 + $0xc8] sm:$0x1]
      %v370 = vsel %vm320, 0, %v369
      %371 = vst [vmem:[#allocation2 + $0xc8] sm:$0x1] %v370
      %v372 = vld [vmem:[#allocation2 + $0xd4] sm:$0x1]
      %v373 = vsel %vm320, 0, %v372
      %374 = vst [vmem:[#allocation2 + $0xd4] sm:$0x1] %v373
      %v375 = vld [vmem:[%s246] sm:$0xff]
      %v376 = vld [vmem:[%s246 + $0x8] sm:$0xff]
      %v377 = vld [vmem:[%s246 + $0x10] sm:$0xff]
      %v378 = vld [vmem:[%s246 + $0x18] sm:$0xff]
      %v379 = vld [vmem:[%s246 + $0x20] sm:$0xff]
      %v380 = vld [vmem:[%s246 + $0x28] sm:$0xff]
      %v381 = vld [vmem:[%s246 + $0x30] sm:$0xff]
      %v382 = vld [vmem:[%s246 + $0x38] sm:$0xff]
      %v383 = vld [vmem:[%s246 + $0x40] sm:$0xff]
      %v384 = vld [vmem:[%s246 + $0x48] sm:$0xff]
      %v385 = vld [vmem:[%s246 + $0x50] sm:$0xff]
      %v386 = vld [vmem:[%s246 + $0x58] sm:$0xff]
      %v387 = vld [vmem:[%s246 + $0x60] sm:$0xff]
      %v388 = vld [vmem:[%s246 + $0x68] sm:$0xff]
      %v389 = vld [vmem:[%s246 + $0x70] sm:$0xff]
      %v390 = vld [vmem:[%s246 + $0x78] sm:$0xff]
      %v391 = vld [vmem:[%s1] sm:$0xff]
      %v392 = vld [vmem:[%s1 + $0x8] sm:$0xff]
      %v393 = vld [vmem:[%s1 + $0x10] sm:$0xff]
      %v394 = vld [vmem:[%s1 + $0x18] sm:$0xff]
      %v395 = vld [vmem:[%s1 + $0x20] sm:$0xff]
      %v396 = vld [vmem:[%s1 + $0x28] sm:$0xff]
      %v397 = vld [vmem:[%s1 + $0x30] sm:$0xff]
      %v398 = vld [vmem:[%s1 + $0x38] sm:$0xff]
      %v399 = vld [vmem:[%s1 + $0x40] sm:$0xff]
      %v400 = vld [vmem:[%s1 + $0x48] sm:$0xff]
      %v401 = vld [vmem:[%s1 + $0x50] sm:$0xff]
      %v402 = vld [vmem:[%s1 + $0x58] sm:$0xff]
      %v403 = vld [vmem:[%s1 + $0x60] sm:$0xff]
      %v404 = vld [vmem:[%s1 + $0x68] sm:$0xff]
      %v405 = vld [vmem:[%s1 + $0x70] sm:$0xff]
      %v406 = vld [vmem:[%s1 + $0x78] sm:$0xff]
      %v407 = vld [vmem:[%s1 + $0x80] sm:$0xff]
      %v408 = vld [vmem:[%s1 + $0x88] sm:$0xff]
      %v409 = vld [vmem:[%s1 + $0x90] sm:$0xff]
      %v410 = vld [vmem:[%s1 + $0x98] sm:$0xff]
      %v411 = vld [vmem:[%s1 + $0xa0] sm:$0xff]
      %v412 = vld [vmem:[%s1 + $0xa8] sm:$0xff]
      %v413 = vld [vmem:[%s1 + $0xb0] sm:$0xff]
      %v414 = vld [vmem:[%s1 + $0xb8] sm:$0xff]
      %v415 = vld [vmem:[%s1 + $0xc0] sm:$0xff]
      %v416 = vld [vmem:[%s1 + $0xc8] sm:$0xff]
      %v417 = vld [vmem:[%s1 + $0xd0] sm:$0xff]
      %v418 = vld [vmem:[%s1 + $0xd8] sm:$0xff]
      %v419 = vld [vmem:[%s1 + $0xe0] sm:$0xff]
      %v420 = vld [vmem:[%s1 + $0xe8] sm:$0xff]
      %v421 = vld [vmem:[%s1 + $0xf0] sm:$0xff]
      %v422 = vld [vmem:[%s1 + $0xf8] sm:$0xff]
      %v423 = vpack.c.bf16 %v377, %v375
      %v424 = vpack.c.bf16 %v378, %v376
      %v425 = vpack.c.bf16 %v381, %v379
      %v426 = vpack.c.bf16 %v382, %v380
      %v427 = vpack.c.bf16 %v385, %v383
      %v428 = vpack.c.bf16 %v386, %v384
      %v429 = vpack.c.bf16 %v389, %v387
      %v430 = vpack.c.bf16 %v390, %v388
      %v463 = vunpack.c.l.b16 %v391
      %v464 = vunpack.c.h.b16 %v391
      %v465 = vunpack.c.l.b16 %v392
      %v466 = vunpack.c.h.b16 %v392
      %v467 = vunpack.c.l.b16 %v393
      %v468 = vunpack.c.h.b16 %v393
      %v469 = vunpack.c.l.b16 %v394
      %v470 = vunpack.c.h.b16 %v394
      %v471 = vunpack.c.l.b16 %v395
      %v472 = vunpack.c.h.b16 %v395
      %v473 = vunpack.c.l.b16 %v396
      %v474 = vunpack.c.h.b16 %v396
      %v475 = vunpack.c.l.b16 %v397
      %v476 = vunpack.c.h.b16 %v397
      %v477 = vunpack.c.l.b16 %v398
      %v478 = vunpack.c.h.b16 %v398
      %v479 = vunpack.c.l.b16 %v399
      %v480 = vunpack.c.h.b16 %v399
      %v481 = vunpack.c.l.b16 %v400
      %v482 = vunpack.c.h.b16 %v400
      %v483 = vunpack.c.l.b16 %v401
      %v484 = vunpack.c.h.b16 %v401
      %v485 = vunpack.c.l.b16 %v402
      %v486 = vunpack.c.h.b16 %v402
      %v487 = vunpack.c.l.b16 %v403
      %v488 = vunpack.c.h.b16 %v403
      %v489 = vunpack.c.l.b16 %v404
      %v490 = vunpack.c.h.b16 %v404
      %v491 = vunpack.c.l.b16 %v405
      %v492 = vunpack.c.h.b16 %v405
      %v493 = vunpack.c.l.b16 %v406
      %v494 = vunpack.c.h.b16 %v406
      %v495 = vunpack.c.l.b16 %v407
      %v496 = vunpack.c.h.b16 %v407
      %v497 = vunpack.c.l.b16 %v408
      %v498 = vunpack.c.h.b16 %v408
      %v499 = vunpack.c.l.b16 %v409
      %v500 = vunpack.c.h.b16 %v409
      %v501 = vunpack.c.l.b16 %v410
      %v502 = vunpack.c.h.b16 %v410
      %v503 = vunpack.c.l.b16 %v411
      %v504 = vunpack.c.h.b16 %v411
      %v505 = vunpack.c.l.b16 %v412
      %v506 = vunpack.c.h.b16 %v412
      %v507 = vunpack.c.l.b16 %v413
      %v508 = vunpack.c.h.b16 %v413
      %v509 = vunpack.c.l.b16 %v414
      %v510 = vunpack.c.h.b16 %v414
      %v511 = vunpack.c.l.b16 %v415
      %v512 = vunpack.c.h.b16 %v415
      %v513 = vunpack.c.l.b16 %v416
      %v514 = vunpack.c.h.b16 %v416
      %v515 = vunpack.c.l.b16 %v417
      %v516 = vunpack.c.h.b16 %v417
      %v517 = vunpack.c.l.b16 %v418
      %v518 = vunpack.c.h.b16 %v418
      %v519 = vunpack.c.l.b16 %v419
      %v520 = vunpack.c.h.b16 %v419
      %v521 = vunpack.c.l.b16 %v420
      %v522 = vunpack.c.h.b16 %v420
      %v523 = vunpack.c.l.b16 %v421
      %v524 = vunpack.c.h.b16 %v421
      %v525 = vunpack.c.l.b16 %v422
      %v526 = vunpack.c.h.b16 %v422
      %v527 = vpack.c.b16 %v465, %v463
      %v528 = vpack.c.b16 %v466, %v464
      %v529 = vpack.c.b16 %v469, %v467
      %v530 = vpack.c.b16 %v470, %v468
      %v531 = vpack.c.b16 %v473, %v471
      %v532 = vpack.c.b16 %v474, %v472
      %v533 = vpack.c.b16 %v477, %v475
      %v534 = vpack.c.b16 %v478, %v476
      %v535 = vpack.c.b16 %v481, %v479
      %v536 = vpack.c.b16 %v482, %v480
      %v537 = vpack.c.b16 %v485, %v483
      %v538 = vpack.c.b16 %v486, %v484
      %v539 = vpack.c.b16 %v489, %v487
      %v540 = vpack.c.b16 %v490, %v488
      %v541 = vpack.c.b16 %v493, %v491
      %v542 = vpack.c.b16 %v494, %v492
      %v543 = vpack.c.b16 %v497, %v495
      %v544 = vpack.c.b16 %v498, %v496
      %v545 = vpack.c.b16 %v501, %v499
      %v546 = vpack.c.b16 %v502, %v500
      %v547 = vpack.c.b16 %v505, %v503
      %v548 = vpack.c.b16 %v506, %v504
      %v549 = vpack.c.b16 %v509, %v507
      %v550 = vpack.c.b16 %v510, %v508
      %v551 = vpack.c.b16 %v513, %v511
      %v552 = vpack.c.b16 %v514, %v512
      %v553 = vpack.c.b16 %v517, %v515
      %v554 = vpack.c.b16 %v518, %v516
      %v555 = vpack.c.b16 %v521, %v519
      %v556 = vpack.c.b16 %v522, %v520
      %v557 = vpack.c.b16 %v525, %v523
      %v558 = vpack.c.b16 %v526, %v524
      %591 = vmatprep.subr.bf16.mxu0 %v424
      %592 = vmatpush1.bf16.xpose.msra.mxu0 %v423
      %593 = vmatprep.subr.bf16.mxu0 %v426
      %594 = vmatpush1.bf16.xpose.msra.mxu0 %v425
      %595 = vmatprep.subr.bf16.mxu0 %v428
      %596 = vmatpush1.bf16.xpose.msra.mxu0 %v427
      %597 = vmatprep.subr.bf16.mxu0 %v430
      %598 = vmatpush1.bf16.xpose.msra.mxu0 %v429
      %599 = vmatprep.subr.bf16.mxu0 0
      %600 = vmatpush1.bf16.xpose.msra.mxu0 0
      %601 = vmatprep.subr.bf16.mxu0 0
      %602 = vmatpush1.bf16.xpose.msra.mxu0 0
      %603 = vmatprep.subr.bf16.mxu0 0
      %604 = vmatpush1.bf16.xpose.msra.mxu0 0
      %605 = vmatprep.subr.bf16.mxu0 0
      %606 = vmatpush1.bf16.xpose.msra.mxu0 0
      %607 = vmatprep.subr.bf16.mxu0 0
      %608 = vmatpush1.bf16.xpose.msra.mxu0 0
      %609 = vmatprep.subr.bf16.mxu0 0
      %610 = vmatpush1.bf16.xpose.msra.mxu0 0
      %611 = vmatprep.subr.bf16.mxu0 0
      %612 = vmatpush1.bf16.xpose.msra.mxu0 0
      %613 = vmatprep.subr.bf16.mxu0 0
      %614 = vmatpush1.bf16.xpose.msra.mxu0 0
      %615 = vmatprep.subr.bf16.mxu0 0
      %616 = vmatpush1.bf16.xpose.msra.mxu0 0
      %617 = vmatprep.subr.bf16.mxu0 0
      %618 = vmatpush1.bf16.xpose.msra.mxu0 0
      %619 = vmatprep.subr.bf16.mxu0 0
      %620 = vmatpush1.bf16.xpose.msra.mxu0 0
      %621 = vmatprep.subr.bf16.mxu0 0
      %622 = vmatpush1.bf16.xpose.msra.mxu0 0
      %623 = vmatprep.mubr.bf16.mxu0 %v528
      %624 = vmatmul.mubr.bf16.gmra.mrb[0].mxu0 %v527
      %v625 = vpop.f32.mrb[0].mxu0
      %v626 = vadd.f32 0.0, %v625
      %v627 = vpop.f32.mrb[0].mxu0
      %v628 = vpop.f32.mrb[0].mxu0
      %v629 = vadd.f32 0.0, %v628
      %v630 = vpop.f32.mrb[0].mxu0
      %631 = vmatprep.mubr.bf16.mxu0 %v530
      %632 = vmatmul.mubr.bf16.gmra.mrb[0].mxu0 %v529
      %v633 = vpop.f32.mrb[0].mxu0
      %v634 = vadd.f32 0.0, %v633
      %v635 = vpop.f32.mrb[0].mxu0
      %v636 = vpop.f32.mrb[0].mxu0
      %v637 = vadd.f32 0.0, %v636
      %v638 = vpop.f32.mrb[0].mxu0
      %639 = vmatprep.mubr.bf16.mxu0 %v532
      %640 = vmatmul.mubr.bf16.gmra.mrb[0].mxu0 %v531
      %v641 = vpop.f32.mrb[0].mxu0
      %v642 = vadd.f32 0.0, %v641
      %v643 = vpop.f32.mrb[0].mxu0
      %v644 = vpop.f32.mrb[0].mxu0
      %v645 = vadd.f32 0.0, %v644
      %v646 = vpop.f32.mrb[0].mxu0
      %647 = vmatprep.mubr.bf16.mxu0 %v534
      %648 = vmatmul.mubr.bf16.gmra.mrb[0].mxu0 %v533
      %v649 = vpop.f32.mrb[0].mxu0
      %v650 = vadd.f32 0.0, %v649
      %v651 = vpop.f32.mrb[0].mxu0
      %v652 = vpop.f32.mrb[0].mxu0
      %v653 = vadd.f32 0.0, %v652
      %v654 = vpop.f32.mrb[0].mxu0
      %655 = vmatprep.mubr.bf16.mxu0 %v536
      %656 = vmatmul.mubr.bf16.gmra.mrb[0].mxu0 %v535
      %v657 = vpop.f32.mrb[0].mxu0
      %v658 = vadd.f32 0.0, %v657
      %v659 = vpop.f32.mrb[0].mxu0
      %v660 = vpop.f32.mrb[0].mxu0
      %v661 = vadd.f32 0.0, %v660
      %v662 = vpop.f32.mrb[0].mxu0
      %663 = vmatprep.mubr.bf16.mxu0 %v538
      %664 = vmatmul.mubr.bf16.gmra.mrb[0].mxu0 %v537
      %v665 = vpop.f32.mrb[0].mxu0
      %v666 = vadd.f32 0.0, %v665
      %v667 = vpop.f32.mrb[0].mxu0
      %v668 = vpop.f32.mrb[0].mxu0
      %v669 = vadd.f32 0.0, %v668
      %v670 = vpop.f32.mrb[0].mxu0
      %671 = vmatprep.mubr.bf16.mxu0 %v540
      %672 = vmatmul.mubr.bf16.gmra.mrb[0].mxu0 %v539
      %v673 = vpop.f32.mrb[0].mxu0
      %v674 = vadd.f32 0.0, %v673
      %v675 = vpop.f32.mrb[0].mxu0
      %v676 = vpop.f32.mrb[0].mxu0
      %v677 = vadd.f32 0.0, %v676
      %v678 = vpop.f32.mrb[0].mxu0
      %679 = vmatprep.mubr.bf16.mxu0 %v542
      %680 = vmatmul.mubr.bf16.gmra.mrb[0].mxu0 %v541
      %v681 = vpop.f32.mrb[0].mxu0
      %v682 = vadd.f32 0.0, %v681
      %v683 = vpop.f32.mrb[0].mxu0
      %v684 = vpop.f32.mrb[0].mxu0
      %v685 = vadd.f32 0.0, %v684
      %v686 = vpop.f32.mrb[0].mxu0
      %687 = vmatprep.mubr.bf16.mxu0 %v544
      %688 = vmatmul.mubr.bf16.gmra.mrb[0].mxu0 %v543
      %v689 = vpop.f32.mrb[0].mxu0
      %v690 = vadd.f32 0.0, %v689
      %v691 = vpop.f32.mrb[0].mxu0
      %v692 = vpop.f32.mrb[0].mxu0
      %v693 = vadd.f32 0.0, %v692
      %v694 = vpop.f32.mrb[0].mxu0
      %695 = vmatprep.mubr.bf16.mxu0 %v546
      %696 = vmatmul.mubr.bf16.gmra.mrb[0].mxu0 %v545
      %v697 = vpop.f32.mrb[0].mxu0
      %v698 = vadd.f32 0.0, %v697
      %v699 = vpop.f32.mrb[0].mxu0
      %v700 = vpop.f32.mrb[0].mxu0
      %v701 = vadd.f32 0.0, %v700
      %v702 = vpop.f32.mrb[0].mxu0
      %703 = vmatprep.mubr.bf16.mxu0 %v548
      %704 = vmatmul.mubr.bf16.gmra.mrb[0].mxu0 %v547
      %v705 = vpop.f32.mrb[0].mxu0
      %v706 = vadd.f32 0.0, %v705
      %v707 = vpop.f32.mrb[0].mxu0
      %v708 = vpop.f32.mrb[0].mxu0
      %v709 = vadd.f32 0.0, %v708
      %v710 = vpop.f32.mrb[0].mxu0
      %711 = vmatprep.mubr.bf16.mxu0 %v550
      %712 = vmatmul.mubr.bf16.gmra.mrb[0].mxu0 %v549
      %v713 = vpop.f32.mrb[0].mxu0
      %v714 = vadd.f32 0.0, %v713
      %v715 = vpop.f32.mrb[0].mxu0
      %v716 = vpop.f32.mrb[0].mxu0
      %v717 = vadd.f32 0.0, %v716
      %v718 = vpop.f32.mrb[0].mxu0
      %719 = vmatprep.mubr.bf16.mxu0 %v552
      %720 = vmatmul.mubr.bf16.gmra.mrb[0].mxu0 %v551
      %v721 = vpop.f32.mrb[0].mxu0
      %v722 = vadd.f32 0.0, %v721
      %v723 = vpop.f32.mrb[0].mxu0
      %v724 = vpop.f32.mrb[0].mxu0
      %v725 = vadd.f32 0.0, %v724
      %v726 = vpop.f32.mrb[0].mxu0
      %727 = vmatprep.mubr.bf16.mxu0 %v554
      %728 = vmatmul.mubr.bf16.gmra.mrb[0].mxu0 %v553
      %v729 = vpop.f32.mrb[0].mxu0
      %v730 = vadd.f32 0.0, %v729
      %v731 = vpop.f32.mrb[0].mxu0
      %v732 = vpop.f32.mrb[0].mxu0
      %v733 = vadd.f32 0.0, %v732
      %v734 = vpop.f32.mrb[0].mxu0
      %735 = vmatprep.mubr.bf16.mxu0 %v556
      %736 = vmatmul.mubr.bf16.gmra.mrb[0].mxu0 %v555
      %v737 = vpop.f32.mrb[0].mxu0
      %v738 = vadd.f32 0.0, %v737
      %v739 = vpop.f32.mrb[0].mxu0
      %v740 = vpop.f32.mrb[0].mxu0
      %v741 = vadd.f32 0.0, %v740
      %v742 = vpop.f32.mrb[0].mxu0
      %743 = vmatprep.mubr.bf16.mxu0 %v558
      %744 = vmatmul.mubr.bf16.gmra.mrb[0].mxu0 %v557
      %v745 = vpop.f32.mrb[0].mxu0
      %v746 = vadd.f32 0.0, %v745
      %v747 = vpop.f32.mrb[0].mxu0
      %v748 = vpop.f32.mrb[0].mxu0
      %v749 = vadd.f32 0.0, %v748
      %v750 = vpop.f32.mrb[0].mxu0
      %751 = vdwg.mxu0
      %v752 = vpack.c.bf16 %v629, %v626
      %v753 = vpack.c.bf16 %v637, %v634
      %v754 = vpack.c.bf16 %v645, %v642
      %v755 = vpack.c.bf16 %v653, %v650
      %v756 = vpack.c.bf16 %v661, %v658
      %v757 = vpack.c.bf16 %v669, %v666
      %v758 = vpack.c.bf16 %v677, %v674
      %v759 = vpack.c.bf16 %v685, %v682
      %v760 = vpack.c.bf16 %v693, %v690
      %v761 = vpack.c.bf16 %v701, %v698
      %v762 = vpack.c.bf16 %v709, %v706
      %v763 = vpack.c.bf16 %v717, %v714
      %v764 = vpack.c.bf16 %v725, %v722
      %v765 = vpack.c.bf16 %v733, %v730
      %v766 = vpack.c.bf16 %v741, %v738
      %v767 = vpack.c.bf16 %v749, %v746
      %v784 = vunpack.c.l.b16 %v752
      %v785 = vunpack.c.h.b16 %v752
      %v786 = vunpack.c.l.b16 %v753
      %v787 = vunpack.c.h.b16 %v753
      %v788 = vunpack.c.l.b16 %v754
      %v789 = vunpack.c.h.b16 %v754
      %v790 = vunpack.c.l.b16 %v755
      %v791 = vunpack.c.h.b16 %v755
      %v792 = vunpack.c.l.b16 %v756
      %v793 = vunpack.c.h.b16 %v756
      %v794 = vunpack.c.l.b16 %v757
      %v795 = vunpack.c.h.b16 %v757
      %v796 = vunpack.c.l.b16 %v758
      %v797 = vunpack.c.h.b16 %v758
      %v798 = vunpack.c.l.b16 %v759
      %v799 = vunpack.c.h.b16 %v759
      %v800 = vunpack.c.l.b16 %v760
      %v801 = vunpack.c.h.b16 %v760
      %v802 = vunpack.c.l.b16 %v761
      %v803 = vunpack.c.h.b16 %v761
      %v804 = vunpack.c.l.b16 %v762
      %v805 = vunpack.c.h.b16 %v762
      %v806 = vunpack.c.l.b16 %v763
      %v807 = vunpack.c.h.b16 %v763
      %v808 = vunpack.c.l.b16 %v764
      %v809 = vunpack.c.h.b16 %v764
      %v810 = vunpack.c.l.b16 %v765
      %v811 = vunpack.c.h.b16 %v765
      %v812 = vunpack.c.l.b16 %v766
      %v813 = vunpack.c.h.b16 %v766
      %v814 = vunpack.c.l.b16 %v767
      %v815 = vunpack.c.h.b16 %v767
      %v816 = vpack.c.b16 %v784, %v784
      %v817 = vpack.c.b16 %v785, %v785
      %v818 = vpack.c.b16 %v786, %v786
      %v819 = vpack.c.b16 %v787, %v787
      %v820 = vpack.c.b16 %v788, %v788
      %v821 = vpack.c.b16 %v789, %v789
      %v822 = vpack.c.b16 %v790, %v790
      %v823 = vpack.c.b16 %v791, %v791
      %v824 = vpack.c.b16 %v792, %v792
      %v825 = vpack.c.b16 %v793, %v793
      %v826 = vpack.c.b16 %v794, %v794
      %v827 = vpack.c.b16 %v795, %v795
      %v828 = vpack.c.b16 %v796, %v796
      %v829 = vpack.c.b16 %v797, %v797
      %v830 = vpack.c.b16 %v798, %v798
      %v831 = vpack.c.b16 %v799, %v799
      %v832 = vpack.c.b16 %v800, %v800
      %v833 = vpack.c.b16 %v801, %v801
      %v834 = vpack.c.b16 %v802, %v802
      %v835 = vpack.c.b16 %v803, %v803
      %v836 = vpack.c.b16 %v804, %v804
      %v837 = vpack.c.b16 %v805, %v805
      %v838 = vpack.c.b16 %v806, %v806
      %v839 = vpack.c.b16 %v807, %v807
      %v840 = vpack.c.b16 %v808, %v808
      %v841 = vpack.c.b16 %v809, %v809
      %v842 = vpack.c.b16 %v810, %v810
      %v843 = vpack.c.b16 %v811, %v811
      %v844 = vpack.c.b16 %v812, %v812
      %v845 = vpack.c.b16 %v813, %v813
      %v846 = vpack.c.b16 %v814, %v814
      %v847 = vpack.c.b16 %v815, %v815
      %vm848 = vsmask.f32 4368
      %vm849 = vmor %vm263, %vm848
      %v851 = vshrl.u32 %v816, 16
      %v853 = vrot.slane %v851, 7
      %v854 = vshll.u32 %v816, 16
      %v856 = vor.u32 %v853, %v854
      %v857 = vrot.slane %v853, 4
      %v859 = vshrl.u32 %v817, 16
      %v861 = vrot.slane %v859, 7
      %v862 = vshll.u32 %v817, 16
      %v864 = vor.u32 %v861, %v862
      %v865 = vsel %vm849, %v857, %v864
      %v866 = vrot.slane %v861, 4
      %v868 = vshrl.u32 %v818, 16
      %v870 = vrot.slane %v868, 7
      %v871 = vshll.u32 %v818, 16
      %v873 = vor.u32 %v870, %v871
      %v874 = vrot.slane %v870, 4
      %v876 = vshrl.u32 %v819, 16
      %v878 = vrot.slane %v876, 7
      %v879 = vshll.u32 %v819, 16
      %v881 = vor.u32 %v878, %v879
      %v882 = vsel %vm849, %v874, %v881
      %v883 = vrot.slane %v878, 4
      %v885 = vshrl.u32 %v820, 16
      %v887 = vrot.slane %v885, 7
      %v888 = vshll.u32 %v820, 16
      %v890 = vor.u32 %v887, %v888
      %v891 = vrot.slane %v887, 4
      %v893 = vshrl.u32 %v821, 16
      %v895 = vrot.slane %v893, 7
      %v896 = vshll.u32 %v821, 16
      %v898 = vor.u32 %v895, %v896
      %v899 = vsel %vm849, %v891, %v898
      %v900 = vrot.slane %v895, 4
      %v902 = vshrl.u32 %v822, 16
      %v904 = vrot.slane %v902, 7
      %v905 = vshll.u32 %v822, 16
      %v907 = vor.u32 %v904, %v905
      %v908 = vrot.slane %v904, 4
      %v910 = vshrl.u32 %v823, 16
      %v912 = vrot.slane %v910, 7
      %v913 = vshll.u32 %v823, 16
      %v915 = vor.u32 %v912, %v913
      %v916 = vsel %vm849, %v908, %v915
      %v917 = vrot.slane %v912, 4
      %v919 = vshrl.u32 %v824, 16
      %v921 = vrot.slane %v919, 7
      %v922 = vshll.u32 %v824, 16
      %v924 = vor.u32 %v921, %v922
      %v925 = vrot.slane %v921, 4
      %v927 = vshrl.u32 %v825, 16
      %v929 = vrot.slane %v927, 7
      %v930 = vshll.u32 %v825, 16
      %v932 = vor.u32 %v929, %v930
      %v933 = vsel %vm849, %v925, %v932
      %v934 = vrot.slane %v929, 4
      %v936 = vshrl.u32 %v826, 16
      %v938 = vrot.slane %v936, 7
      %v939 = vshll.u32 %v826, 16
      %v941 = vor.u32 %v938, %v939
      %v942 = vrot.slane %v938, 4
      %v944 = vshrl.u32 %v827, 16
      %v946 = vrot.slane %v944, 7
      %v947 = vshll.u32 %v827, 16
      %v949 = vor.u32 %v946, %v947
      %v950 = vsel %vm849, %v942, %v949
      %v951 = vrot.slane %v946, 4
      %v953 = vshrl.u32 %v828, 16
      %v955 = vrot.slane %v953, 7
      %v956 = vshll.u32 %v828, 16
      %v958 = vor.u32 %v955, %v956
      %v959 = vrot.slane %v955, 4
      %v961 = vshrl.u32 %v829, 16
      %v963 = vrot.slane %v961, 7
      %v964 = vshll.u32 %v829, 16
      %v966 = vor.u32 %v963, %v964
      %v967 = vsel %vm849, %v959, %v966
      %v968 = vrot.slane %v963, 4
      %v970 = vshrl.u32 %v830, 16
      %v972 = vrot.slane %v970, 7
      %v973 = vshll.u32 %v830, 16
      %v975 = vor.u32 %v972, %v973
      %v976 = vrot.slane %v972, 4
      %v978 = vshrl.u32 %v831, 16
      %v980 = vrot.slane %v978, 7
      %v981 = vshll.u32 %v831, 16
      %v983 = vor.u32 %v980, %v981
      %v984 = vsel %vm849, %v976, %v983
      %v985 = vrot.slane %v980, 4
      %v987 = vshrl.u32 %v832, 16
      %v989 = vrot.slane %v987, 7
      %v990 = vshll.u32 %v832, 16
      %v992 = vor.u32 %v989, %v990
      %v993 = vrot.slane %v989, 4
      %v995 = vshrl.u32 %v833, 16
      %v997 = vrot.slane %v995, 7
      %v998 = vshll.u32 %v833, 16
      %v1000 = vor.u32 %v997, %v998
      %v1001 = vsel %vm849, %v993, %v1000
      %v1002 = vrot.slane %v997, 4
      %v1004 = vshrl.u32 %v834, 16
      %v1006 = vrot.slane %v1004, 7
      %v1007 = vshll.u32 %v834, 16
      %v1009 = vor.u32 %v1006, %v1007
      %v1010 = vrot.slane %v1006, 4
      %v1012 = vshrl.u32 %v835, 16
      %v1014 = vrot.slane %v1012, 7
      %v1015 = vshll.u32 %v835, 16
      %v1017 = vor.u32 %v1014, %v1015
      %v1018 = vsel %vm849, %v1010, %v1017
      %v1019 = vrot.slane %v1014, 4
      %v1021 = vshrl.u32 %v836, 16
      %v1023 = vrot.slane %v1021, 7
      %v1024 = vshll.u32 %v836, 16
      %v1026 = vor.u32 %v1023, %v1024
      %v1027 = vrot.slane %v1023, 4
      %v1029 = vshrl.u32 %v837, 16
      %v1031 = vrot.slane %v1029, 7
      %v1032 = vshll.u32 %v837, 16
      %v1034 = vor.u32 %v1031, %v1032
      %v1035 = vsel %vm849, %v1027, %v1034
      %v1036 = vrot.slane %v1031, 4
      %v1038 = vshrl.u32 %v838, 16
      %v1040 = vrot.slane %v1038, 7
      %v1041 = vshll.u32 %v838, 16
      %v1043 = vor.u32 %v1040, %v1041
      %v1044 = vrot.slane %v1040, 4
      %v1046 = vshrl.u32 %v839, 16
      %v1048 = vrot.slane %v1046, 7
      %v1049 = vshll.u32 %v839, 16
      %v1051 = vor.u32 %v1048, %v1049
      %v1052 = vsel %vm849, %v1044, %v1051
      %v1053 = vrot.slane %v1048, 4
      %v1055 = vshrl.u32 %v840, 16
      %v1057 = vrot.slane %v1055, 7
      %v1058 = vshll.u32 %v840, 16
      %v1060 = vor.u32 %v1057, %v1058
      %v1061 = vrot.slane %v1057, 4
      %v1063 = vshrl.u32 %v841, 16
      %v1065 = vrot.slane %v1063, 7
      %v1066 = vshll.u32 %v841, 16
      %v1068 = vor.u32 %v1065, %v1066
      %v1069 = vsel %vm849, %v1061, %v1068
      %v1070 = vrot.slane %v1065, 4
      %v1072 = vshrl.u32 %v842, 16
      %v1074 = vrot.slane %v1072, 7
      %v1075 = vshll.u32 %v842, 16
      %v1077 = vor.u32 %v1074, %v1075
      %v1078 = vrot.slane %v1074, 4
      %v1080 = vshrl.u32 %v843, 16
      %v1082 = vrot.slane %v1080, 7
      %v1083 = vshll.u32 %v843, 16
      %v1085 = vor.u32 %v1082, %v1083
      %v1086 = vsel %vm849, %v1078, %v1085
      %v1087 = vrot.slane %v1082, 4
      %v1089 = vshrl.u32 %v844, 16
      %v1091 = vrot.slane %v1089, 7
      %v1092 = vshll.u32 %v844, 16
      %v1094 = vor.u32 %v1091, %v1092
      %v1095 = vrot.slane %v1091, 4
      %v1097 = vshrl.u32 %v845, 16
      %v1099 = vrot.slane %v1097, 7
      %v1100 = vshll.u32 %v845, 16
      %v1102 = vor.u32 %v1099, %v1100
      %v1103 = vsel %vm849, %v1095, %v1102
      %v1104 = vrot.slane %v1099, 4
      %v1106 = vshrl.u32 %v846, 16
      %v1108 = vrot.slane %v1106, 7
      %v1109 = vshll.u32 %v846, 16
      %v1111 = vor.u32 %v1108, %v1109
      %v1112 = vrot.slane %v1108, 4
      %v1114 = vshrl.u32 %v847, 16
      %v1116 = vrot.slane %v1114, 7
      %v1117 = vshll.u32 %v847, 16
      %v1119 = vor.u32 %v1116, %v1117
      %v1120 = vsel %vm849, %v1112, %v1119
      %v1121 = vrot.slane %v1116, 4
      %s1170 = scalar_lea.vmem [#allocation2], 12
      %vm1171 = vcmask 519168
      %vm1172 = vmand %vm1171, %vm319
      %v1173 = vld [vmem:[%s1170] sm:$0xf]
      %v1174 = vsel %vm1172, %v856, %v1173
      %1175 = vst [vmem:[%s1170] sm:$0xf] %v1174
      %1176 = vst.msk [vmem:[%s1170 + $0x4] sm:$0xf] %vm253, %v865
      %v1177 = vld [vmem:[%s1170 + $0x8] sm:$0x1]
      %v1178 = vsel %vm264, %v866, %v1177
      %1179 = vst [vmem:[%s1170 + $0x8] sm:$0x1] %v1178
      %v1180 = vld [vmem:[%s1170 + $0xc] sm:$0xf]
      %v1181 = vsel %vm1172, %v873, %v1180
      %1182 = vst [vmem:[%s1170 + $0xc] sm:$0xf] %v1181
      %1183 = vst.msk [vmem:[%s1170 + $0x10] sm:$0xf] %vm253, %v882
      %v1184 = vld [vmem:[%s1170 + $0x14] sm:$0x1]
      %v1185 = vsel %vm264, %v883, %v1184
      %1186 = vst [vmem:[%s1170 + $0x14] sm:$0x1] %v1185
      %v1187 = vld [vmem:[%s1170 + $0x18] sm:$0xf]
      %v1188 = vsel %vm1172, %v890, %v1187
      %1189 = vst [vmem:[%s1170 + $0x18] sm:$0xf] %v1188
      %1190 = vst.msk [vmem:[%s1170 + $0x1c] sm:$0xf] %vm253, %v899
      %v1191 = vld [vmem:[%s1170 + $0x20] sm:$0x1]
      %v1192 = vsel %vm264, %v900, %v1191
      %1193 = vst [vmem:[%s1170 + $0x20] sm:$0x1] %v1192
      %v1194 = vld [vmem:[%s1170 + $0x24] sm:$0xf]
      %v1195 = vsel %vm1172, %v907, %v1194
      %1196 = vst [vmem:[%s1170 + $0x24] sm:$0xf] %v1195
      %1197 = vst.msk [vmem:[%s1170 + $0x28] sm:$0xf] %vm253, %v916
      %v1198 = vld [vmem:[%s1170 + $0x2c] sm:$0x1]
      %v1199 = vsel %vm264, %v917, %v1198
      %1200 = vst [vmem:[%s1170 + $0x2c] sm:$0x1] %v1199
      %v1201 = vld [vmem:[%s1170 + $0x30] sm:$0xf]
      %v1202 = vsel %vm1172, %v924, %v1201
      %1203 = vst [vmem:[%s1170 + $0x30] sm:$0xf] %v1202
      %1204 = vst.msk [vmem:[%s1170 + $0x34] sm:$0xf] %vm253, %v933
      %v1205 = vld [vmem:[%s1170 + $0x38] sm:$0x1]
      %v1206 = vsel %vm264, %v934, %v1205
      %1207 = vst [vmem:[%s1170 + $0x38] sm:$0x1] %v1206
      %v1208 = vld [vmem:[%s1170 + $0x3c] sm:$0xf]
      %v1209 = vsel %vm1172, %v941, %v1208
      %1210 = vst [vmem:[%s1170 + $0x3c] sm:$0xf] %v1209
      %1211 = vst.msk [vmem:[%s1170 + $0x40] sm:$0xf] %vm253, %v950
      %v1212 = vld [vmem:[%s1170 + $0x44] sm:$0x1]
      %v1213 = vsel %vm264, %v951, %v1212
      %1214 = vst [vmem:[%s1170 + $0x44] sm:$0x1] %v1213
      %v1215 = vld [vmem:[%s1170 + $0x48] sm:$0xf]
      %v1216 = vsel %vm1172, %v958, %v1215
      %1217 = vst [vmem:[%s1170 + $0x48] sm:$0xf] %v1216
      %1218 = vst.msk [vmem:[%s1170 + $0x4c] sm:$0xf] %vm253, %v967
      %v1219 = vld [vmem:[%s1170 + $0x50] sm:$0x1]
      %v1220 = vsel %vm264, %v968, %v1219
      %1221 = vst [vmem:[%s1170 + $0x50] sm:$0x1] %v1220
      %v1222 = vld [vmem:[%s1170 + $0x54] sm:$0xf]
      %v1223 = vsel %vm1172, %v975, %v1222
      %1224 = vst [vmem:[%s1170 + $0x54] sm:$0xf] %v1223
      %1225 = vst.msk [vmem:[%s1170 + $0x58] sm:$0xf] %vm253, %v984
      %v1226 = vld [vmem:[%s1170 + $0x5c] sm:$0x1]
      %v1227 = vsel %vm264, %v985, %v1226
      %1228 = vst [vmem:[%s1170 + $0x5c] sm:$0x1] %v1227
      %v1229 = vld [vmem:[%s1170 + $0x60] sm:$0xf]
      %v1230 = vsel %vm1172, %v992, %v1229
      %1231 = vst [vmem:[%s1170 + $0x60] sm:$0xf] %v1230
      %1232 = vst.msk [vmem:[%s1170 + $0x64] sm:$0xf] %vm253, %v1001
      %v1233 = vld [vmem:[%s1170 + $0x68] sm:$0x1]
      %v1234 = vsel %vm264, %v1002, %v1233
      %1235 = vst [vmem:[%s1170 + $0x68] sm:$0x1] %v1234
      %v1236 = vld [vmem:[%s1170 + $0x6c] sm:$0xf]
      %v1237 = vsel %vm1172, %v1009, %v1236
      %1238 = vst [vmem:[%s1170 + $0x6c] sm:$0xf] %v1237
      %1239 = vst.msk [vmem:[%s1170 + $0x70] sm:$0xf] %vm253, %v1018
      %v1240 = vld [vmem:[%s1170 + $0x74] sm:$0x1]
      %v1241 = vsel %vm264, %v1019, %v1240
      %1242 = vst [vmem:[%s1170 + $0x74] sm:$0x1] %v1241
      %v1243 = vld [vmem:[%s1170 + $0x78] sm:$0xf]
      %v1244 = vsel %vm1172, %v1026, %v1243
      %1245 = vst [vmem:[%s1170 + $0x78] sm:$0xf] %v1244
      %1246 = vst.msk [vmem:[%s1170 + $0x7c] sm:$0xf] %vm253, %v1035
      %v1247 = vld [vmem:[%s1170 + $0x80] sm:$0x1]
      %v1248 = vsel %vm264, %v1036, %v1247
      %1249 = vst [vmem:[%s1170 + $0x80] sm:$0x1] %v1248
      %v1250 = vld [vmem:[%s1170 + $0x84] sm:$0xf]
      %v1251 = vsel %vm1172, %v1043, %v1250
      %1252 = vst [vmem:[%s1170 + $0x84] sm:$0xf] %v1251
      %1253 = vst.msk [vmem:[%s1170 + $0x88] sm:$0xf] %vm253, %v1052
      %v1254 = vld [vmem:[%s1170 + $0x8c] sm:$0x1]
      %v1255 = vsel %vm264, %v1053, %v1254
      %1256 = vst [vmem:[%s1170 + $0x8c] sm:$0x1] %v1255
      %v1257 = vld [vmem:[%s1170 + $0x90] sm:$0xf]
      %v1258 = vsel %vm1172, %v1060, %v1257
      %1259 = vst [vmem:[%s1170 + $0x90] sm:$0xf] %v1258
      %1260 = vst.msk [vmem:[%s1170 + $0x94] sm:$0xf] %vm253, %v1069
      %v1261 = vld [vmem:[%s1170 + $0x98] sm:$0x1]
      %v1262 = vsel %vm264, %v1070, %v1261
      %1263 = vst [vmem:[%s1170 + $0x98] sm:$0x1] %v1262
      %v1264 = vld [vmem:[%s1170 + $0x9c] sm:$0xf]
      %v1265 = vsel %vm1172, %v1077, %v1264
      %1266 = vst [vmem:[%s1170 + $0x9c] sm:$0xf] %v1265
      %1267 = vst.msk [vmem:[%s1170 + $0xa0] sm:$0xf] %vm253, %v1086
      %v1268 = vld [vmem:[%s1170 + $0xa4] sm:$0x1]
      %v1269 = vsel %vm264, %v1087, %v1268
      %1270 = vst [vmem:[%s1170 + $0xa4] sm:$0x1] %v1269
      %v1271 = vld [vmem:[%s1170 + $0xa8] sm:$0xf]
      %v1272 = vsel %vm1172, %v1094, %v1271
      %1273 = vst [vmem:[%s1170 + $0xa8] sm:$0xf] %v1272
      %1274 = vst.msk [vmem:[%s1170 + $0xac] sm:$0xf] %vm253, %v1103
      %v1275 = vld [vmem:[%s1170 + $0xb0] sm:$0x1]
      %v1276 = vsel %vm264, %v1104, %v1275
      %1277 = vst [vmem:[%s1170 + $0xb0] sm:$0x1] %v1276
      %v1278 = vld [vmem:[%s1170 + $0xb4] sm:$0xf]
      %v1279 = vsel %vm1172, %v1111, %v1278
      %1280 = vst [vmem:[%s1170 + $0xb4] sm:$0xf] %v1279
      %1281 = vst.msk [vmem:[%s1170 + $0xb8] sm:$0xf] %vm253, %v1120
      %v1282 = vld [vmem:[%s1170 + $0xbc] sm:$0x1]
      %v1283 = vsel %vm264, %v1121, %v1282
      %1284 = vst [vmem:[%s1170 + $0xbc] sm:$0x1] %v1283
      %v1285 = vld [vmem:[%s4] sm:$0xf]
      %v1286 = vld [vmem:[#allocation2] sm:$0xf]
      %v1287 = vld [vmem:[#allocation2 + $0x4] sm:$0xf]
      %v1288 = vld [vmem:[#allocation2 + $0xc] sm:$0xf]
      %v1289 = vld [vmem:[#allocation2 + $0x10] sm:$0xf]
      %v1290 = vld [vmem:[#allocation2 + $0x18] sm:$0xf]
      %v1291 = vld [vmem:[#allocation2 + $0x1c] sm:$0xf]
      %v1292 = vld [vmem:[#allocation2 + $0x24] sm:$0xf]
      %v1293 = vld [vmem:[#allocation2 + $0x28] sm:$0xf]
      %v1294 = vld [vmem:[#allocation2 + $0x30] sm:$0xf]
      %v1295 = vld [vmem:[#allocation2 + $0x34] sm:$0xf]
      %v1296 = vld [vmem:[#allocation2 + $0x3c] sm:$0xf]
      %v1297 = vld [vmem:[#allocation2 + $0x40] sm:$0xf]
      %v1298 = vld [vmem:[#allocation2 + $0x48] sm:$0xf]
      %v1299 = vld [vmem:[#allocation2 + $0x4c] sm:$0xf]
      %v1300 = vld [vmem:[#allocation2 + $0x54] sm:$0xf]
      %v1301 = vld [vmem:[#allocation2 + $0x58] sm:$0xf]
      %v1302 = vld [vmem:[#allocation2 + $0x60] sm:$0xf]
      %v1303 = vld [vmem:[#allocation2 + $0x64] sm:$0xf]
      %v1304 = vld [vmem:[#allocation2 + $0x6c] sm:$0xf]
      %v1305 = vld [vmem:[#allocation2 + $0x70] sm:$0xf]
      %v1306 = vld [vmem:[#allocation2 + $0x78] sm:$0xf]
      %v1307 = vld [vmem:[#allocation2 + $0x7c] sm:$0xf]
      %v1308 = vld [vmem:[#allocation2 + $0x84] sm:$0xf]
      %v1309 = vld [vmem:[#allocation2 + $0x88] sm:$0xf]
      %v1310 = vld [vmem:[#allocation2 + $0x90] sm:$0xf]
      %v1311 = vld [vmem:[#allocation2 + $0x94] sm:$0xf]
      %v1312 = vld [vmem:[#allocation2 + $0x9c] sm:$0xf]
      %v1313 = vld [vmem:[#allocation2 + $0xa0] sm:$0xf]
      %v1314 = vld [vmem:[#allocation2 + $0xa8] sm:$0xf]
      %v1315 = vld [vmem:[#allocation2 + $0xac] sm:$0xf]
      %v1316 = vld [vmem:[#allocation2 + $0xb4] sm:$0xf]
      %v1317 = vld [vmem:[#allocation2 + $0xb8] sm:$0xf]
      %v1350 = vunpack.c.l.b16 %v1286
      %v1351 = vunpack.c.l.b16 %v1287
      %v1352 = vunpack.c.l.b16 %v1288
      %v1353 = vunpack.c.l.b16 %v1289
      %v1354 = vunpack.c.l.b16 %v1290
      %v1355 = vunpack.c.l.b16 %v1291
      %v1356 = vunpack.c.l.b16 %v1292
      %v1357 = vunpack.c.l.b16 %v1293
      %v1358 = vunpack.c.l.b16 %v1294
      %v1359 = vunpack.c.l.b16 %v1295
      %v1360 = vunpack.c.l.b16 %v1296
      %v1361 = vunpack.c.l.b16 %v1297
      %v1362 = vunpack.c.l.b16 %v1298
      %v1363 = vunpack.c.l.b16 %v1299
      %v1364 = vunpack.c.l.b16 %v1300
      %v1365 = vunpack.c.l.b16 %v1301
      %v1366 = vunpack.c.l.b16 %v1302
      %v1367 = vunpack.c.l.b16 %v1303
      %v1368 = vunpack.c.l.b16 %v1304
      %v1369 = vunpack.c.l.b16 %v1305
      %v1370 = vunpack.c.l.b16 %v1306
      %v1371 = vunpack.c.l.b16 %v1307
      %v1372 = vunpack.c.l.b16 %v1308
      %v1373 = vunpack.c.l.b16 %v1309
      %v1374 = vunpack.c.l.b16 %v1310
      %v1375 = vunpack.c.l.b16 %v1311
      %v1376 = vunpack.c.l.b16 %v1312
      %v1377 = vunpack.c.l.b16 %v1313
      %v1378 = vunpack.c.l.b16 %v1314
      %v1379 = vunpack.c.l.b16 %v1315
      %v1380 = vunpack.c.l.b16 %v1316
      %v1381 = vunpack.c.l.b16 %v1317
      %v1382 = vpack.c.b16 %v1351, %v1350
      %v1383 = vpack.c.b16 %v1353, %v1352
      %v1384 = vpack.c.b16 %v1355, %v1354
      %v1385 = vpack.c.b16 %v1357, %v1356
      %v1386 = vpack.c.b16 %v1359, %v1358
      %v1387 = vpack.c.b16 %v1361, %v1360
      %v1388 = vpack.c.b16 %v1363, %v1362
      %v1389 = vpack.c.b16 %v1365, %v1364
      %v1390 = vpack.c.b16 %v1367, %v1366
      %v1391 = vpack.c.b16 %v1369, %v1368
      %v1392 = vpack.c.b16 %v1371, %v1370
      %v1393 = vpack.c.b16 %v1373, %v1372
      %v1394 = vpack.c.b16 %v1375, %v1374
      %v1395 = vpack.c.b16 %v1377, %v1376
      %v1396 = vpack.c.b16 %v1379, %v1378
      %v1397 = vpack.c.b16 %v1381, %v1380
      %vm1414 = vcmask 523264
      %1415 = vst.msk [vmem:[#allocation3] sm:$0xff] %vm1414, %v1382
      %1416 = vst.msk [vmem:[#allocation3 + $0x28] sm:$0xff] %vm1414, %v1383
      %1417 = vst.msk [vmem:[#allocation3 + $0x50] sm:$0xff] %vm1414, %v1384
      %1418 = vst.msk [vmem:[#allocation3 + $0x78] sm:$0xff] %vm1414, %v1385
      %1419 = vst.msk [vmem:[#allocation3 + $0xa0] sm:$0xff] %vm1414, %v1386
      %1420 = vst.msk [vmem:[#allocation3 + $0xc8] sm:$0xff] %vm1414, %v1387
      %1421 = vst.msk [vmem:[#allocation3 + $0xf0] sm:$0xff] %vm1414, %v1388
      %1422 = vst.msk [vmem:[#allocation3 + $0x118] sm:$0xff] %vm1414, %v1389
      %1423 = vst.msk [vmem:[#allocation3 + $0x140] sm:$0xff] %vm1414, %v1390
      %1424 = vst.msk [vmem:[#allocation3 + $0x168] sm:$0xff] %vm1414, %v1391
      %1425 = vst.msk [vmem:[#allocation3 + $0x190] sm:$0xff] %vm1414, %v1392
      %1426 = vst.msk [vmem:[#allocation3 + $0x1b8] sm:$0xff] %vm1414, %v1393
      %1427 = vst.msk [vmem:[#allocation3 + $0x1e0] sm:$0xff] %vm1414, %v1394
      %1428 = vst.msk [vmem:[#allocation3 + $0x208] sm:$0xff] %vm1414, %v1395
      %1429 = vst.msk [vmem:[#allocation3 + $0x230] sm:$0xff] %vm1414, %v1396
      %1430 = vst.msk [vmem:[#allocation3 + $0x258] sm:$0xff] %vm1414, %v1397
      %v1431 = vld [vmem:[#allocation2] sm:$0xf]
      %v1432 = vld [vmem:[#allocation2 + $0x4] sm:$0xf]
      %v1433 = vld [vmem:[#allocation2 + $0x8] sm:$0x1]
      %v1434 = vld [vmem:[#allocation2 + $0xc] sm:$0xf]
      %v1435 = vld [vmem:[#allocation2 + $0x10] sm:$0xf]
      %v1436 = vld [vmem:[#allocation2 + $0x14] sm:$0x1]
      %v1437 = vld [vmem:[#allocation2 + $0x18] sm:$0xf]
      %v1438 = vld [vmem:[#allocation2 + $0x1c] sm:$0xf]
      %v1439 = vld [vmem:[#allocation2 + $0x20] sm:$0x1]
      %v1440 = vld [vmem:[#allocation2 + $0x24] sm:$0xf]
      %v1441 = vld [vmem:[#allocation2 + $0x28] sm:$0xf]
      %v1442 = vld [vmem:[#allocation2 + $0x2c] sm:$0x1]
      %v1443 = vld [vmem:[#allocation2 + $0x30] sm:$0xf]
      %v1444 = vld [vmem:[#allocation2 + $0x34] sm:$0xf]
      %v1445 = vld [vmem:[#allocation2 + $0x38] sm:$0x1]
      %v1446 = vld [vmem:[#allocation2 + $0x3c] sm:$0xf]
      %v1447 = vld [vmem:[#allocation2 + $0x40] sm:$0xf]
      %v1448 = vld [vmem:[#allocation2 + $0x44] sm:$0x1]
      %v1449 = vld [vmem:[#allocation2 + $0x48] sm:$0xf]
      %v1450 = vld [vmem:[#allocation2 + $0x4c] sm:$0xf]
      %v1451 = vld [vmem:[#allocation2 + $0x50] sm:$0x1]
      %v1452 = vld [vmem:[#allocation2 + $0x54] sm:$0xf]
      %v1453 = vld [vmem:[#allocation2 + $0x58] sm:$0xf]
      %v1454 = vld [vmem:[#allocation2 + $0x5c] sm:$0x1]
      %v1455 = vld [vmem:[#allocation2 + $0x60] sm:$0xf]
      %v1456 = vld [vmem:[#allocation2 + $0x64] sm:$0xf]
      %v1457 = vld [vmem:[#allocation2 + $0x68] sm:$0x1]
      %v1458 = vld [vmem:[#allocation2 + $0x6c] sm:$0xf]
      %v1459 = vld [vmem:[#allocation2 + $0x70] sm:$0xf]
      %v1460 = vld [vmem:[#allocation2 + $0x74] sm:$0x1]
      %v1461 = vld [vmem:[#allocation2 + $0x78] sm:$0xf]
      %v1462 = vld [vmem:[#allocation2 + $0x7c] sm:$0xf]
      %v1463 = vld [vmem:[#allocation2 + $0x80] sm:$0x1]
      %v1464 = vld [vmem:[#allocation2 + $0x84] sm:$0xf]
      %v1465 = vld [vmem:[#allocation2 + $0x88] sm:$0xf]
      %v1466 = vld [vmem:[#allocation2 + $0x8c] sm:$0x1]
      %v1467 = vld [vmem:[#allocation2 + $0x90] sm:$0xf]
      %v1468 = vld [vmem:[#allocation2 + $0x94] sm:$0xf]
      %v1469 = vld [vmem:[#allocation2 + $0x98] sm:$0x1]
      %v1470 = vld [vmem:[#allocation2 + $0x9c] sm:$0xf]
      %v1471 = vld [vmem:[#allocation2 + $0xa0] sm:$0xf]
      %v1472 = vld [vmem:[#allocation2 + $0xa4] sm:$0x1]
      %v1473 = vld [vmem:[#allocation2 + $0xa8] sm:$0xf]
      %v1474 = vld [vmem:[#allocation2 + $0xac] sm:$0xf]
      %v1475 = vld [vmem:[#allocation2 + $0xb0] sm:$0x1]
      %v1476 = vld [vmem:[#allocation2 + $0xb4] sm:$0xf]
      %v1477 = vld [vmem:[#allocation2 + $0xb8] sm:$0xf]
      %v1478 = vld [vmem:[#allocation2 + $0xbc] sm:$0x1]
      %vm1479 = vsmask.f32 3328
      %vm1480 = vsmask.f32 7440
      %vm1481 = vmor %vm1479, %vm1480
      %v1483 = vshrl.u32 %v1431, 16
      %v1485 = vrot.slane %v1483, 4
      %v1486 = vshll.u32 %v1431, 16
      %v1488 = vrot.slane %v1486, 5
      %v1489 = vor.u32 %v1485, %v1488
      %v1490 = vrot.slane %v1489, 4
      %v1492 = vshll.u32 %v1432, 16
      %v1494 = vrot.slane %v1492, 5
      %v1495 = vsel %vm1481, %v1490, %v1494
      %v1496 = vshrl.u32 %v1432, 16
      %v1498 = vrot.slane %v1496, 4
      %v1499 = vor.u32 %v1498, %v1494
      %v1500 = vrot.slane %v1499, 4
      %v1502 = vshll.u32 %v1433, 16
      %v1504 = vrot.slane %v1502, 5
      %v1505 = vsel %vm1481, %v1500, %v1504
      %v1507 = vshrl.u32 %v1434, 16
      %v1509 = vrot.slane %v1507, 4
      %v1510 = vshll.u32 %v1434, 16
      %v1512 = vrot.slane %v1510, 5
      %v1513 = vor.u32 %v1509, %v1512
      %v1514 = vrot.slane %v1513, 4
      %v1516 = vshll.u32 %v1435, 16
      %v1518 = vrot.slane %v1516, 5
      %v1519 = vsel %vm1481, %v1514, %v1518
      %v1520 = vshrl.u32 %v1435, 16
      %v1522 = vrot.slane %v1520, 4
      %v1523 = vor.u32 %v1522, %v1518
      %v1524 = vrot.slane %v1523, 4
      %v1526 = vshll.u32 %v1436, 16
      %v1528 = vrot.slane %v1526, 5
      %v1529 = vsel %vm1481, %v1524, %v1528
      %v1531 = vshrl.u32 %v1437, 16
      %v1533 = vrot.slane %v1531, 4
      %v1534 = vshll.u32 %v1437, 16
      %v1536 = vrot.slane %v1534, 5
      %v1537 = vor.u32 %v1533, %v1536
      %v1538 = vrot.slane %v1537, 4
      %v1540 = vshll.u32 %v1438, 16
      %v1542 = vrot.slane %v1540, 5
      %v1543 = vsel %vm1481, %v1538, %v1542
      %v1544 = vshrl.u32 %v1438, 16
      %v1546 = vrot.slane %v1544, 4
      %v1547 = vor.u32 %v1546, %v1542
      %v1548 = vrot.slane %v1547, 4
      %v1550 = vshll.u32 %v1439, 16
      %v1552 = vrot.slane %v1550, 5
      %v1553 = vsel %vm1481, %v1548, %v1552
      %v1555 = vshrl.u32 %v1440, 16
      %v1557 = vrot.slane %v1555, 4
      %v1558 = vshll.u32 %v1440, 16
      %v1560 = vrot.slane %v1558, 5
      %v1561 = vor.u32 %v1557, %v1560
      %v1562 = vrot.slane %v1561, 4
      %v1564 = vshll.u32 %v1441, 16
      %v1566 = vrot.slane %v1564, 5
      %v1567 = vsel %vm1481, %v1562, %v1566
      %v1568 = vshrl.u32 %v1441, 16
      %v1570 = vrot.slane %v1568, 4
      %v1571 = vor.u32 %v1570, %v1566
      %v1572 = vrot.slane %v1571, 4
      %v1574 = vshll.u32 %v1442, 16
      %v1576 = vrot.slane %v1574, 5
      %v1577 = vsel %vm1481, %v1572, %v1576
      %v1579 = vshrl.u32 %v1443, 16
      %v1581 = vrot.slane %v1579, 4
      %v1582 = vshll.u32 %v1443, 16
      %v1584 = vrot.slane %v1582, 5
      %v1585 = vor.u32 %v1581, %v1584
      %v1586 = vrot.slane %v1585, 4
      %v1588 = vshll.u32 %v1444, 16
      %v1590 = vrot.slane %v1588, 5
      %v1591 = vsel %vm1481, %v1586, %v1590
      %v1592 = vshrl.u32 %v1444, 16
      %v1594 = vrot.slane %v1592, 4
      %v1595 = vor.u32 %v1594, %v1590
      %v1596 = vrot.slane %v1595, 4
      %v1598 = vshll.u32 %v1445, 16
      %v1600 = vrot.slane %v1598, 5
      %v1601 = vsel %vm1481, %v1596, %v1600
      %v1603 = vshrl.u32 %v1446, 16
      %v1605 = vrot.slane %v1603, 4
      %v1606 = vshll.u32 %v1446, 16
      %v1608 = vrot.slane %v1606, 5
      %v1609 = vor.u32 %v1605, %v1608
      %v1610 = vrot.slane %v1609, 4
      %v1612 = vshll.u32 %v1447, 16
      %v1614 = vrot.slane %v1612, 5
      %v1615 = vsel %vm1481, %v1610, %v1614
      %v1616 = vshrl.u32 %v1447, 16
      %v1618 = vrot.slane %v1616, 4
      %v1619 = vor.u32 %v1618, %v1614
      %v1620 = vrot.slane %v1619, 4
      %v1622 = vshll.u32 %v1448, 16
      %v1624 = vrot.slane %v1622, 5
      %v1625 = vsel %vm1481, %v1620, %v1624
      %v1627 = vshrl.u32 %v1449, 16
      %v1629 = vrot.slane %v1627, 4
      %v1630 = vshll.u32 %v1449, 16
      %v1632 = vrot.slane %v1630, 5
      %v1633 = vor.u32 %v1629, %v1632
      %v1634 = vrot.slane %v1633, 4
      %v1636 = vshll.u32 %v1450, 16
      %v1638 = vrot.slane %v1636, 5
      %v1639 = vsel %vm1481, %v1634, %v1638
      %v1640 = vshrl.u32 %v1450, 16
      %v1642 = vrot.slane %v1640, 4
      %v1643 = vor.u32 %v1642, %v1638
      %v1644 = vrot.slane %v1643, 4
      %v1646 = vshll.u32 %v1451, 16
      %v1648 = vrot.slane %v1646, 5
      %v1649 = vsel %vm1481, %v1644, %v1648
      %v1651 = vshrl.u32 %v1452, 16
      %v1653 = vrot.slane %v1651, 4
      %v1654 = vshll.u32 %v1452, 16
      %v1656 = vrot.slane %v1654, 5
      %v1657 = vor.u32 %v1653, %v1656
      %v1658 = vrot.slane %v1657, 4
      %v1660 = vshll.u32 %v1453, 16
      %v1662 = vrot.slane %v1660, 5
      %v1663 = vsel %vm1481, %v1658, %v1662
      %v1664 = vshrl.u32 %v1453, 16
      %v1666 = vrot.slane %v1664, 4
      %v1667 = vor.u32 %v1666, %v1662
      %v1668 = vrot.slane %v1667, 4
      %v1670 = vshll.u32 %v1454, 16
      %v1672 = vrot.slane %v1670, 5
      %v1673 = vsel %vm1481, %v1668, %v1672
      %v1675 = vshrl.u32 %v1455, 16
      %v1677 = vrot.slane %v1675, 4
      %v1678 = vshll.u32 %v1455, 16
      %v1680 = vrot.slane %v1678, 5
      %v1681 = vor.u32 %v1677, %v1680
      %v1682 = vrot.slane %v1681, 4
      %v1684 = vshll.u32 %v1456, 16
      %v1686 = vrot.slane %v1684, 5
      %v1687 = vsel %vm1481, %v1682, %v1686
      %v1688 = vshrl.u32 %v1456, 16
      %v1690 = vrot.slane %v1688, 4
      %v1691 = vor.u32 %v1690, %v1686
      %v1692 = vrot.slane %v1691, 4
      %v1694 = vshll.u32 %v1457, 16
      %v1696 = vrot.slane %v1694, 5
      %v1697 = vsel %vm1481, %v1692, %v1696
      %v1699 = vshrl.u32 %v1458, 16
      %v1701 = vrot.slane %v1699, 4
      %v1702 = vshll.u32 %v1458, 16
      %v1704 = vrot.slane %v1702, 5
      %v1705 = vor.u32 %v1701, %v1704
      %v1706 = vrot.slane %v1705, 4
      %v1708 = vshll.u32 %v1459, 16
      %v1710 = vrot.slane %v1708, 5
      %v1711 = vsel %vm1481, %v1706, %v1710
      %v1712 = vshrl.u32 %v1459, 16
      %v1714 = vrot.slane %v1712, 4
      %v1715 = vor.u32 %v1714, %v1710
      %v1716 = vrot.slane %v1715, 4
      %v1718 = vshll.u32 %v1460, 16
      %v1720 = vrot.slane %v1718, 5
      %v1721 = vsel %vm1481, %v1716, %v1720
      %v1723 = vshrl.u32 %v1461, 16
      %v1725 = vrot.slane %v1723, 4
      %v1726 = vshll.u32 %v1461, 16
      %v1728 = vrot.slane %v1726, 5
      %v1729 = vor.u32 %v1725, %v1728
      %v1730 = vrot.slane %v1729, 4
      %v1732 = vshll.u32 %v1462, 16
      %v1734 = vrot.slane %v1732, 5
      %v1735 = vsel %vm1481, %v1730, %v1734
      %v1736 = vshrl.u32 %v1462, 16
      %v1738 = vrot.slane %v1736, 4
      %v1739 = vor.u32 %v1738, %v1734
      %v1740 = vrot.slane %v1739, 4
      %v1742 = vshll.u32 %v1463, 16
      %v1744 = vrot.slane %v1742, 5
      %v1745 = vsel %vm1481, %v1740, %v1744
      %v1747 = vshrl.u32 %v1464, 16
      %v1749 = vrot.slane %v1747, 4
      %v1750 = vshll.u32 %v1464, 16
      %v1752 = vrot.slane %v1750, 5
      %v1753 = vor.u32 %v1749, %v1752
      %v1754 = vrot.slane %v1753, 4
      %v1756 = vshll.u32 %v1465, 16
      %v1758 = vrot.slane %v1756, 5
      %v1759 = vsel %vm1481, %v1754, %v1758
      %v1760 = vshrl.u32 %v1465, 16
      %v1762 = vrot.slane %v1760, 4
      %v1763 = vor.u32 %v1762, %v1758
      %v1764 = vrot.slane %v1763, 4
      %v1766 = vshll.u32 %v1466, 16
      %v1768 = vrot.slane %v1766, 5
      %v1769 = vsel %vm1481, %v1764, %v1768
      %v1771 = vshrl.u32 %v1467, 16
      %v1773 = vrot.slane %v1771, 4
      %v1774 = vshll.u32 %v1467, 16
      %v1776 = vrot.slane %v1774, 5
      %v1777 = vor.u32 %v1773, %v1776
      %v1778 = vrot.slane %v1777, 4
      %v1780 = vshll.u32 %v1468, 16
      %v1782 = vrot.slane %v1780, 5
      %v1783 = vsel %vm1481, %v1778, %v1782
      %v1784 = vshrl.u32 %v1468, 16
      %v1786 = vrot.slane %v1784, 4
      %v1787 = vor.u32 %v1786, %v1782
      %v1788 = vrot.slane %v1787, 4
      %v1790 = vshll.u32 %v1469, 16
      %v1792 = vrot.slane %v1790, 5
      %v1793 = vsel %vm1481, %v1788, %v1792
      %v1795 = vshrl.u32 %v1470, 16
      %v1797 = vrot.slane %v1795, 4
      %v1798 = vshll.u32 %v1470, 16
      %v1800 = vrot.slane %v1798, 5
      %v1801 = vor.u32 %v1797, %v1800
      %v1802 = vrot.slane %v1801, 4
      %v1804 = vshll.u32 %v1471, 16
      %v1806 = vrot.slane %v1804, 5
      %v1807 = vsel %vm1481, %v1802, %v1806
      %v1808 = vshrl.u32 %v1471, 16
      %v1810 = vrot.slane %v1808, 4
      %v1811 = vor.u32 %v1810, %v1806
      %v1812 = vrot.slane %v1811, 4
      %v1814 = vshll.u32 %v1472, 16
      %v1816 = vrot.slane %v1814, 5
      %v1817 = vsel %vm1481, %v1812, %v1816
      %v1819 = vshrl.u32 %v1473, 16
      %v1821 = vrot.slane %v1819, 4
      %v1822 = vshll.u32 %v1473, 16
      %v1824 = vrot.slane %v1822, 5
      %v1825 = vor.u32 %v1821, %v1824
      %v1826 = vrot.slane %v1825, 4
      %v1828 = vshll.u32 %v1474, 16
      %v1830 = vrot.slane %v1828, 5
      %v1831 = vsel %vm1481, %v1826, %v1830
      %v1832 = vshrl.u32 %v1474, 16
      %v1834 = vrot.slane %v1832, 4
      %v1835 = vor.u32 %v1834, %v1830
      %v1836 = vrot.slane %v1835, 4
      %v1838 = vshll.u32 %v1475, 16
      %v1840 = vrot.slane %v1838, 5
      %v1841 = vsel %vm1481, %v1836, %v1840
      %v1843 = vshrl.u32 %v1476, 16
      %v1845 = vrot.slane %v1843, 4
      %v1846 = vshll.u32 %v1476, 16
      %v1848 = vrot.slane %v1846, 5
      %v1849 = vor.u32 %v1845, %v1848
      %v1850 = vrot.slane %v1849, 4
      %v1852 = vshll.u32 %v1477, 16
      %v1854 = vrot.slane %v1852, 5
      %v1855 = vsel %vm1481, %v1850, %v1854
      %v1856 = vshrl.u32 %v1477, 16
      %v1858 = vrot.slane %v1856, 4
      %v1859 = vor.u32 %v1858, %v1854
      %v1860 = vrot.slane %v1859, 4
      %v1862 = vshll.u32 %v1478, 16
      %v1864 = vrot.slane %v1862, 5
      %v1865 = vsel %vm1481, %v1860, %v1864
      %v1866 = vunpack.c.l.b16 %v1495
      %v1867 = vunpack.c.l.b16 %v1505
      %v1868 = vunpack.c.l.b16 %v1519
      %v1869 = vunpack.c.l.b16 %v1529
      %v1870 = vunpack.c.l.b16 %v1543
      %v1871 = vunpack.c.l.b16 %v1553
      %v1872 = vunpack.c.l.b16 %v1567
      %v1873 = vunpack.c.l.b16 %v1577
      %v1874 = vunpack.c.l.b16 %v1591
      %v1875 = vunpack.c.l.b16 %v1601
      %v1876 = vunpack.c.l.b16 %v1615
      %v1877 = vunpack.c.l.b16 %v1625
      %v1878 = vunpack.c.l.b16 %v1639
      %v1879 = vunpack.c.l.b16 %v1649
      %v1880 = vunpack.c.l.b16 %v1663
      %v1881 = vunpack.c.l.b16 %v1673
      %v1882 = vunpack.c.l.b16 %v1687
      %v1883 = vunpack.c.l.b16 %v1697
      %v1884 = vunpack.c.l.b16 %v1711
      %v1885 = vunpack.c.l.b16 %v1721
      %v1886 = vunpack.c.l.b16 %v1735
      %v1887 = vunpack.c.l.b16 %v1745
      %v1888 = vunpack.c.l.b16 %v1759
      %v1889 = vunpack.c.l.b16 %v1769
      %v1890 = vunpack.c.l.b16 %v1783
      %v1891 = vunpack.c.l.b16 %v1793
      %v1892 = vunpack.c.l.b16 %v1807
      %v1893 = vunpack.c.l.b16 %v1817
      %v1894 = vunpack.c.l.b16 %v1831
      %v1895 = vunpack.c.l.b16 %v1841
      %v1896 = vunpack.c.l.b16 %v1855
      %v1897 = vunpack.c.l.b16 %v1865
      %v1898 = vpack.c.b16 %v1867, %v1866
      %v1899 = vpack.c.b16 %v1869, %v1868
      %v1900 = vpack.c.b16 %v1871, %v1870
      %v1901 = vpack.c.b16 %v1873, %v1872
      %v1902 = vpack.c.b16 %v1875, %v1874
      %v1903 = vpack.c.b16 %v1877, %v1876
      %v1904 = vpack.c.b16 %v1879, %v1878
      %v1905 = vpack.c.b16 %v1881, %v1880
      %v1906 = vpack.c.b16 %v1883, %v1882
      %v1907 = vpack.c.b16 %v1885, %v1884
      %v1908 = vpack.c.b16 %v1887, %v1886
      %v1909 = vpack.c.b16 %v1889, %v1888
      %v1910 = vpack.c.b16 %v1891, %v1890
      %v1911 = vpack.c.b16 %v1893, %v1892
      %v1912 = vpack.c.b16 %v1895, %v1894
      %v1913 = vpack.c.b16 %v1897, %v1896
      %1914 = vrot.lane.b32.xlu0 %v1898, 64
      %v1915 = vpop.permute.xlu0 %1914
      %1916 = vrot.lane.b32.xlu0 %v1899, 64
      %v1917 = vpop.permute.xlu0 %1916
      %1918 = vrot.lane.b32.xlu0 %v1900, 64
      %v1919 = vpop.permute.xlu0 %1918
      %1920 = vrot.lane.b32.xlu0 %v1901, 64
      %v1921 = vpop.permute.xlu0 %1920
      %1922 = vrot.lane.b32.xlu0 %v1902, 64
      %v1923 = vpop.permute.xlu0 %1922
      %1924 = vrot.lane.b32.xlu0 %v1903, 64
      %v1925 = vpop.permute.xlu0 %1924
      %1926 = vrot.lane.b32.xlu0 %v1904, 64
      %v1927 = vpop.permute.xlu0 %1926
      %1928 = vrot.lane.b32.xlu0 %v1905, 64
      %v1929 = vpop.permute.xlu0 %1928
      %1930 = vrot.lane.b32.xlu0 %v1906, 64
      %v1931 = vpop.permute.xlu0 %1930
      %1932 = vrot.lane.b32.xlu0 %v1907, 64
      %v1933 = vpop.permute.xlu0 %1932
      %1934 = vrot.lane.b32.xlu0 %v1908, 64
      %v1935 = vpop.permute.xlu0 %1934
      %1936 = vrot.lane.b32.xlu0 %v1909, 64
      %v1937 = vpop.permute.xlu0 %1936
      %1938 = vrot.lane.b32.xlu0 %v1910, 64
      %v1939 = vpop.permute.xlu0 %1938
      %1940 = vrot.lane.b32.xlu0 %v1911, 64
      %v1941 = vpop.permute.xlu0 %1940
      %1942 = vrot.lane.b32.xlu0 %v1912, 64
      %v1943 = vpop.permute.xlu0 %1942
      %1944 = vrot.lane.b32.xlu0 %v1913, 64
      %v1945 = vpop.permute.xlu0 %1944
      %vm1962 = vcmask 1048064
      %1963 = vst.msk [vmem:[#allocation3] sm:$0xff] %vm1962, %v1915
      %1964 = vst.msk [vmem:[#allocation3 + $0x28] sm:$0xff] %vm1962, %v1917
      %1965 = vst.msk [vmem:[#allocation3 + $0x50] sm:$0xff] %vm1962, %v1919
      %1966 = vst.msk [vmem:[#allocation3 + $0x78] sm:$0xff] %vm1962, %v1921
      %1967 = vst.msk [vmem:[#allocation3 + $0xa0] sm:$0xff] %vm1962, %v1923
      %1968 = vst.msk [vmem:[#allocation3 + $0xc8] sm:$0xff] %vm1962, %v1925
      %1969 = vst.msk [vmem:[#allocation3 + $0xf0] sm:$0xff] %vm1962, %v1927
      %1970 = vst.msk [vmem:[#allocation3 + $0x118] sm:$0xff] %vm1962, %v1929
      %1971 = vst.msk [vmem:[#allocation3 + $0x140] sm:$0xff] %vm1962, %v1931
      %1972 = vst.msk [vmem:[#allocation3 + $0x168] sm:$0xff] %vm1962, %v1933
      %1973 = vst.msk [vmem:[#allocation3 + $0x190] sm:$0xff] %vm1962, %v1935
      %1974 = vst.msk [vmem:[#allocation3 + $0x1b8] sm:$0xff] %vm1962, %v1937
      %1975 = vst.msk [vmem:[#allocation3 + $0x1e0] sm:$0xff] %vm1962, %v1939
      %1976 = vst.msk [vmem:[#allocation3 + $0x208] sm:$0xff] %vm1962, %v1941
      %1977 = vst.msk [vmem:[#allocation3 + $0x230] sm:$0xff] %vm1962, %v1943
      %1978 = vst.msk [vmem:[#allocation3 + $0x258] sm:$0xff] %vm1962, %v1945
      %v1979 = vld [vmem:[#allocation2] sm:$0xe]
      %v1980 = vld [vmem:[#allocation2 + $0x4] sm:$0xf]
      %v1981 = vld [vmem:[#allocation2 + $0x8] sm:$0x1]
      %v1982 = vld [vmem:[#allocation2 + $0xc] sm:$0xe]
      %v1983 = vld [vmem:[#allocation2 + $0x10] sm:$0xf]
      %v1984 = vld [vmem:[#allocation2 + $0x14] sm:$0x1]
      %v1985 = vld [vmem:[#allocation2 + $0x18] sm:$0xe]
      %v1986 = vld [vmem:[#allocation2 + $0x1c] sm:$0xf]
      %v1987 = vld [vmem:[#allocation2 + $0x20] sm:$0x1]
      %v1988 = vld [vmem:[#allocation2 + $0x24] sm:$0xe]
      %v1989 = vld [vmem:[#allocation2 + $0x28] sm:$0xf]
      %v1990 = vld [vmem:[#allocation2 + $0x2c] sm:$0x1]
      %v1991 = vld [vmem:[#allocation2 + $0x30] sm:$0xe]
      %v1992 = vld [vmem:[#allocation2 + $0x34] sm:$0xf]
      %v1993 = vld [vmem:[#allocation2 + $0x38] sm:$0x1]
      %v1994 = vld [vmem:[#allocation2 + $0x3c] sm:$0xe]
      %v1995 = vld [vmem:[#allocation2 + $0x40] sm:$0xf]
      %v1996 = vld [vmem:[#allocation2 + $0x44] sm:$0x1]
      %v1997 = vld [vmem:[#allocation2 + $0x48] sm:$0xe]
      %v1998 = vld [vmem:[#allocation2 + $0x4c] sm:$0xf]
      %v1999 = vld [vmem:[#allocation2 + $0x50] sm:$0x1]
      %v2000 = vld [vmem:[#allocation2 + $0x54] sm:$0xe]
      %v2001 = vld [vmem:[#allocation2 + $0x58] sm:$0xf]
      %v2002 = vld [vmem:[#allocation2 + $0x5c] sm:$0x1]
      %v2003 = vld [vmem:[#allocation2 + $0x60] sm:$0xe]
      %v2004 = vld [vmem:[#allocation2 + $0x64] sm:$0xf]
      %v2005 = vld [vmem:[#allocation2 + $0x68] sm:$0x1]
      %v2006 = vld [vmem:[#allocation2 + $0x6c] sm:$0xe]
      %v2007 = vld [vmem:[#allocation2 + $0x70] sm:$0xf]
      %v2008 = vld [vmem:[#allocation2 + $0x74] sm:$0x1]
      %v2009 = vld [vmem:[#allocation2 + $0x78] sm:$0xe]
      %v2010 = vld [vmem:[#allocation2 + $0x7c] sm:$0xf]
      %v2011 = vld [vmem:[#allocation2 + $0x80] sm:$0x1]
      %v2012 = vld [vmem:[#allocation2 + $0x84] sm:$0xe]
      %v2013 = vld [vmem:[#allocation2 + $0x88] sm:$0xf]
      %v2014 = vld [vmem:[#allocation2 + $0x8c] sm:$0x1]
      %v2015 = vld [vmem:[#allocation2 + $0x90] sm:$0xe]
      %v2016 = vld [vmem:[#allocation2 + $0x94] sm:$0xf]
      %v2017 = vld [vmem:[#allocation2 + $0x98] sm:$0x1]
      %v2018 = vld [vmem:[#allocation2 + $0x9c] sm:$0xe]
      %v2019 = vld [vmem:[#allocation2 + $0xa0] sm:$0xf]
      %v2020 = vld [vmem:[#allocation2 + $0xa4] sm:$0x1]
      %v2021 = vld [vmem:[#allocation2 + $0xa8] sm:$0xe]
      %v2022 = vld [vmem:[#allocation2 + $0xac] sm:$0xf]
      %v2023 = vld [vmem:[#allocation2 + $0xb0] sm:$0x1]
      %v2024 = vld [vmem:[#allocation2 + $0xb4] sm:$0xe]
      %v2025 = vld [vmem:[#allocation2 + $0xb8] sm:$0xf]
      %v2026 = vld [vmem:[#allocation2 + $0xbc] sm:$0x1]
      %vm2075 = vcmask 1042432
      %vm2076 = vcmask 1046532
      %vm2077 = vmor %vm2075, %vm2076
      %v2078 = vrot.slane %v1979, 5
      %v2079 = vrot.slane %v2078, 4
      %v2080 = vrot.slane %v1980, 5
      %v2081 = vsel %vm2077, %v2079, %v2080
      %v2082 = vrot.slane %v2080, 4
      %v2083 = vrot.slane %v1981, 5
      %v2084 = vsel %vm2077, %v2082, %v2083
      %v2085 = vrot.slane %v1982, 5
      %v2086 = vrot.slane %v2085, 4
      %v2087 = vrot.slane %v1983, 5
      %v2088 = vsel %vm2077, %v2086, %v2087
      %v2089 = vrot.slane %v2087, 4
      %v2090 = vrot.slane %v1984, 5
      %v2091 = vsel %vm2077, %v2089, %v2090
      %v2092 = vrot.slane %v1985, 5
      %v2093 = vrot.slane %v2092, 4
      %v2094 = vrot.slane %v1986, 5
      %v2095 = vsel %vm2077, %v2093, %v2094
      %v2096 = vrot.slane %v2094, 4
      %v2097 = vrot.slane %v1987, 5
      %v2098 = vsel %vm2077, %v2096, %v2097
      %v2099 = vrot.slane %v1988, 5
      %v2100 = vrot.slane %v2099, 4
      %v2101 = vrot.slane %v1989, 5
      %v2102 = vsel %vm2077, %v2100, %v2101
      %v2103 = vrot.slane %v2101, 4
      %v2104 = vrot.slane %v1990, 5
      %v2105 = vsel %vm2077, %v2103, %v2104
      %v2106 = vrot.slane %v1991, 5
      %v2107 = vrot.slane %v2106, 4
      %v2108 = vrot.slane %v1992, 5
      %v2109 = vsel %vm2077, %v2107, %v2108
      %v2110 = vrot.slane %v2108, 4
      %v2111 = vrot.slane %v1993, 5
      %v2112 = vsel %vm2077, %v2110, %v2111
      %v2113 = vrot.slane %v1994, 5
      %v2114 = vrot.slane %v2113, 4
      %v2115 = vrot.slane %v1995, 5
      %v2116 = vsel %vm2077, %v2114, %v2115
      %v2117 = vrot.slane %v2115, 4
      %v2118 = vrot.slane %v1996, 5
      %v2119 = vsel %vm2077, %v2117, %v2118
      %v2120 = vrot.slane %v1997, 5
      %v2121 = vrot.slane %v2120, 4
      %v2122 = vrot.slane %v1998, 5
      %v2123 = vsel %vm2077, %v2121, %v2122
      %v2124 = vrot.slane %v2122, 4
      %v2125 = vrot.slane %v1999, 5
      %v2126 = vsel %vm2077, %v2124, %v2125
      %v2127 = vrot.slane %v2000, 5
      %v2128 = vrot.slane %v2127, 4
      %v2129 = vrot.slane %v2001, 5
      %v2130 = vsel %vm2077, %v2128, %v2129
      %v2131 = vrot.slane %v2129, 4
      %v2132 = vrot.slane %v2002, 5
      %v2133 = vsel %vm2077, %v2131, %v2132
      %v2134 = vrot.slane %v2003, 5
      %v2135 = vrot.slane %v2134, 4
      %v2136 = vrot.slane %v2004, 5
      %v2137 = vsel %vm2077, %v2135, %v2136
      %v2138 = vrot.slane %v2136, 4
      %v2139 = vrot.slane %v2005, 5
      %v2140 = vsel %vm2077, %v2138, %v2139
      %v2141 = vrot.slane %v2006, 5
      %v2142 = vrot.slane %v2141, 4
      %v2143 = vrot.slane %v2007, 5
      %v2144 = vsel %vm2077, %v2142, %v2143
      %v2145 = vrot.slane %v2143, 4
      %v2146 = vrot.slane %v2008, 5
      %v2147 = vsel %vm2077, %v2145, %v2146
      %v2148 = vrot.slane %v2009, 5
      %v2149 = vrot.slane %v2148, 4
      %v2150 = vrot.slane %v2010, 5
      %v2151 = vsel %vm2077, %v2149, %v2150
      %v2152 = vrot.slane %v2150, 4
      %v2153 = vrot.slane %v2011, 5
      %v2154 = vsel %vm2077, %v2152, %v2153
      %v2155 = vrot.slane %v2012, 5
      %v2156 = vrot.slane %v2155, 4
      %v2157 = vrot.slane %v2013, 5
      %v2158 = vsel %vm2077, %v2156, %v2157
      %v2159 = vrot.slane %v2157, 4
      %v2160 = vrot.slane %v2014, 5
      %v2161 = vsel %vm2077, %v2159, %v2160
      %v2162 = vrot.slane %v2015, 5
      %v2163 = vrot.slane %v2162, 4
      %v2164 = vrot.slane %v2016, 5
      %v2165 = vsel %vm2077, %v2163, %v2164
      %v2166 = vrot.slane %v2164, 4
      %v2167 = vrot.slane %v2017, 5
      %v2168 = vsel %vm2077, %v2166, %v2167
      %v2169 = vrot.slane %v2018, 5
      %v2170 = vrot.slane %v2169, 4
      %v2171 = vrot.slane %v2019, 5
      %v2172 = vsel %vm2077, %v2170, %v2171
      %v2173 = vrot.slane %v2171, 4
      %v2174 = vrot.slane %v2020, 5
      %v2175 = vsel %vm2077, %v2173, %v2174
      %v2176 = vrot.slane %v2021, 5
      %v2177 = vrot.slane %v2176, 4
      %v2178 = vrot.slane %v2022, 5
      %v2179 = vsel %vm2077, %v2177, %v2178
      %v2180 = vrot.slane %v2178, 4
      %v2181 = vrot.slane %v2023, 5
      %v2182 = vsel %vm2077, %v2180, %v2181
      %v2183 = vrot.slane %v2024, 5
      %v2184 = vrot.slane %v2183, 4
      %v2185 = vrot.slane %v2025, 5
      %v2186 = vsel %vm2077, %v2184, %v2185
      %v2187 = vrot.slane %v2185, 4
      %v2188 = vrot.slane %v2026, 5
      %v2189 = vsel %vm2077, %v2187, %v2188
      %v2190 = vunpack.c.l.b16 %v2081
      %v2191 = vunpack.c.l.b16 %v2084
      %v2192 = vunpack.c.l.b16 %v2088
      %v2193 = vunpack.c.l.b16 %v2091
      %v2194 = vunpack.c.l.b16 %v2095
      %v2195 = vunpack.c.l.b16 %v2098
      %v2196 = vunpack.c.l.b16 %v2102
      %v2197 = vunpack.c.l.b16 %v2105
      %v2198 = vunpack.c.l.b16 %v2109
      %v2199 = vunpack.c.l.b16 %v2112
      %v2200 = vunpack.c.l.b16 %v2116
      %v2201 = vunpack.c.l.b16 %v2119
      %v2202 = vunpack.c.l.b16 %v2123
      %v2203 = vunpack.c.l.b16 %v2126
      %v2204 = vunpack.c.l.b16 %v2130
      %v2205 = vunpack.c.l.b16 %v2133
      %v2206 = vunpack.c.l.b16 %v2137
      %v2207 = vunpack.c.l.b16 %v2140
      %v2208 = vunpack.c.l.b16 %v2144
      %v2209 = vunpack.c.l.b16 %v2147
      %v2210 = vunpack.c.l.b16 %v2151
      %v2211 = vunpack.c.l.b16 %v2154
      %v2212 = vunpack.c.l.b16 %v2158
      %v2213 = vunpack.c.l.b16 %v2161
      %v2214 = vunpack.c.l.b16 %v2165
      %v2215 = vunpack.c.l.b16 %v2168
      %v2216 = vunpack.c.l.b16 %v2172
      %v2217 = vunpack.c.l.b16 %v2175
      %v2218 = vunpack.c.l.b16 %v2179
      %v2219 = vunpack.c.l.b16 %v2182
      %v2220 = vunpack.c.l.b16 %v2186
      %v2221 = vunpack.c.l.b16 %v2189
      %v2222 = vpack.c.b16 %v2191, %v2190
      %v2223 = vpack.c.b16 %v2193, %v2192
      %v2224 = vpack.c.b16 %v2195, %v2194
      %v2225 = vpack.c.b16 %v2197, %v2196
      %v2226 = vpack.c.b16 %v2199, %v2198
      %v2227 = vpack.c.b16 %v2201, %v2200
      %v2228 = vpack.c.b16 %v2203, %v2202
      %v2229 = vpack.c.b16 %v2205, %v2204
      %v2230 = vpack.c.b16 %v2207, %v2206
      %v2231 = vpack.c.b16 %v2209, %v2208
      %v2232 = vpack.c.b16 %v2211, %v2210
      %v2233 = vpack.c.b16 %v2213, %v2212
      %v2234 = vpack.c.b16 %v2215, %v2214
      %v2235 = vpack.c.b16 %v2217, %v2216
      %v2236 = vpack.c.b16 %v2219, %v2218
      %v2237 = vpack.c.b16 %v2221, %v2220
      %2254 = vst.msk [vmem:[#allocation3 + $0x8] sm:$0xff] %vm1414, %v2222
      %2255 = vst.msk [vmem:[#allocation3 + $0x30] sm:$0xff] %vm1414, %v2223
      %2256 = vst.msk [vmem:[#allocation3 + $0x58] sm:$0xff] %vm1414, %v2224
      %2257 = vst.msk [vmem:[#allocation3 + $0x80] sm:$0xff] %vm1414, %v2225
      %2258 = vst.msk [vmem:[#allocation3 + $0xa8] sm:$0xff] %vm1414, %v2226
      %2259 = vst.msk [vmem:[#allocation3 + $0xd0] sm:$0xff] %vm1414, %v2227
      %2260 = vst.msk [vmem:[#allocation3 + $0xf8] sm:$0xff] %vm1414, %v2228
      %2261 = vst.msk [vmem:[#allocation3 + $0x120] sm:$0xff] %vm1414, %v2229
      %2262 = vst.msk [vmem:[#allocation3 + $0x148] sm:$0xff] %vm1414, %v2230
      %2263 = vst.msk [vmem:[#allocation3 + $0x170] sm:$0xff] %vm1414, %v2231
      %2264 = vst.msk [vmem:[#allocation3 + $0x198] sm:$0xff] %vm1414, %v2232
      %2265 = vst.msk [vmem:[#allocation3 + $0x1c0] sm:$0xff] %vm1414, %v2233
      %2266 = vst.msk [vmem:[#allocation3 + $0x1e8] sm:$0xff] %vm1414, %v2234
      %2267 = vst.msk [vmem:[#allocation3 + $0x210] sm:$0xff] %vm1414, %v2235
      %2268 = vst.msk [vmem:[#allocation3 + $0x238] sm:$0xff] %vm1414, %v2236
      %2269 = vst.msk [vmem:[#allocation3 + $0x260] sm:$0xff] %vm1414, %v2237
      %v2270 = vld [vmem:[%s1170] sm:$0xf]
      %v2271 = vld [vmem:[%s1170 + $0x4] sm:$0xf]
      %v2272 = vld [vmem:[%s1170 + $0xc] sm:$0xf]
      %v2273 = vld [vmem:[%s1170 + $0x10] sm:$0xf]
      %v2274 = vld [vmem:[%s1170 + $0x18] sm:$0xf]
      %v2275 = vld [vmem:[%s1170 + $0x1c] sm:$0xf]
      %v2276 = vld [vmem:[%s1170 + $0x24] sm:$0xf]
      %v2277 = vld [vmem:[%s1170 + $0x28] sm:$0xf]
      %v2278 = vld [vmem:[%s1170 + $0x30] sm:$0xf]
      %v2279 = vld [vmem:[%s1170 + $0x34] sm:$0xf]
      %v2280 = vld [vmem:[%s1170 + $0x3c] sm:$0xf]
      %v2281 = vld [vmem:[%s1170 + $0x40] sm:$0xf]
      %v2282 = vld [vmem:[%s1170 + $0x48] sm:$0xf]
      %v2283 = vld [vmem:[%s1170 + $0x4c] sm:$0xf]
      %v2284 = vld [vmem:[%s1170 + $0x54] sm:$0xf]
      %v2285 = vld [vmem:[%s1170 + $0x58] sm:$0xf]
      %v2286 = vld [vmem:[%s1170 + $0x60] sm:$0xf]
      %v2287 = vld [vmem:[%s1170 + $0x64] sm:$0xf]
      %v2288 = vld [vmem:[%s1170 + $0x6c] sm:$0xf]
      %v2289 = vld [vmem:[%s1170 + $0x70] sm:$0xf]
      %v2290 = vld [vmem:[%s1170 + $0x78] sm:$0xf]
      %v2291 = vld [vmem:[%s1170 + $0x7c] sm:$0xf]
      %v2292 = vld [vmem:[%s1170 + $0x84] sm:$0xf]
      %v2293 = vld [vmem:[%s1170 + $0x88] sm:$0xf]
      %v2294 = vld [vmem:[%s1170 + $0x90] sm:$0xf]
      %v2295 = vld [vmem:[%s1170 + $0x94] sm:$0xf]
      %v2296 = vld [vmem:[%s1170 + $0x9c] sm:$0xf]
      %v2297 = vld [vmem:[%s1170 + $0xa0] sm:$0xf]
      %v2298 = vld [vmem:[%s1170 + $0xa8] sm:$0xf]
      %v2299 = vld [vmem:[%s1170 + $0xac] sm:$0xf]
      %v2300 = vld [vmem:[%s1170 + $0xb4] sm:$0xf]
      %v2301 = vld [vmem:[%s1170 + $0xb8] sm:$0xf]
      %v2334 = vunpack.c.l.b16 %v2270
      %v2335 = vunpack.c.l.b16 %v2271
      %v2336 = vunpack.c.l.b16 %v2272
      %v2337 = vunpack.c.l.b16 %v2273
      %v2338 = vunpack.c.l.b16 %v2274
      %v2339 = vunpack.c.l.b16 %v2275
      %v2340 = vunpack.c.l.b16 %v2276
      %v2341 = vunpack.c.l.b16 %v2277
      %v2342 = vunpack.c.l.b16 %v2278
      %v2343 = vunpack.c.l.b16 %v2279
      %v2344 = vunpack.c.l.b16 %v2280
      %v2345 = vunpack.c.l.b16 %v2281
      %v2346 = vunpack.c.l.b16 %v2282
      %v2347 = vunpack.c.l.b16 %v2283
      %v2348 = vunpack.c.l.b16 %v2284
      %v2349 = vunpack.c.l.b16 %v2285
      %v2350 = vunpack.c.l.b16 %v2286
      %v2351 = vunpack.c.l.b16 %v2287
      %v2352 = vunpack.c.l.b16 %v2288
      %v2353 = vunpack.c.l.b16 %v2289
      %v2354 = vunpack.c.l.b16 %v2290
      %v2355 = vunpack.c.l.b16 %v2291
      %v2356 = vunpack.c.l.b16 %v2292
      %v2357 = vunpack.c.l.b16 %v2293
      %v2358 = vunpack.c.l.b16 %v2294
      %v2359 = vunpack.c.l.b16 %v2295
      %v2360 = vunpack.c.l.b16 %v2296
      %v2361 = vunpack.c.l.b16 %v2297
      %v2362 = vunpack.c.l.b16 %v2298
      %v2363 = vunpack.c.l.b16 %v2299
      %v2364 = vunpack.c.l.b16 %v2300
      %v2365 = vunpack.c.l.b16 %v2301
      %v2366 = vpack.c.b16 %v2335, %v2334
      %v2367 = vpack.c.b16 %v2337, %v2336
      %v2368 = vpack.c.b16 %v2339, %v2338
      %v2369 = vpack.c.b16 %v2341, %v2340
      %v2370 = vpack.c.b16 %v2343, %v2342
      %v2371 = vpack.c.b16 %v2345, %v2344
      %v2372 = vpack.c.b16 %v2347, %v2346
      %v2373 = vpack.c.b16 %v2349, %v2348
      %v2374 = vpack.c.b16 %v2351, %v2350
      %v2375 = vpack.c.b16 %v2353, %v2352
      %v2376 = vpack.c.b16 %v2355, %v2354
      %v2377 = vpack.c.b16 %v2357, %v2356
      %v2378 = vpack.c.b16 %v2359, %v2358
      %v2379 = vpack.c.b16 %v2361, %v2360
      %v2380 = vpack.c.b16 %v2363, %v2362
      %v2381 = vpack.c.b16 %v2365, %v2364
      %2382 = vrot.lane.b32.xlu0 %v2366, 64
      %v2383 = vpop.permute.xlu0 %2382
      %2384 = vrot.lane.b32.xlu0 %v2367, 64
      %v2385 = vpop.permute.xlu0 %2384
      %2386 = vrot.lane.b32.xlu0 %v2368, 64
      %v2387 = vpop.permute.xlu0 %2386
      %2388 = vrot.lane.b32.xlu0 %v2369, 64
      %v2389 = vpop.permute.xlu0 %2388
      %2390 = vrot.lane.b32.xlu0 %v2370, 64
      %v2391 = vpop.permute.xlu0 %2390
      %2392 = vrot.lane.b32.xlu0 %v2371, 64
      %v2393 = vpop.permute.xlu0 %2392
      %2394 = vrot.lane.b32.xlu0 %v2372, 64
      %v2395 = vpop.permute.xlu0 %2394
      %2396 = vrot.lane.b32.xlu0 %v2373, 64
      %v2397 = vpop.permute.xlu0 %2396
      %2398 = vrot.lane.b32.xlu0 %v2374, 64
      %v2399 = vpop.permute.xlu0 %2398
      %2400 = vrot.lane.b32.xlu0 %v2375, 64
      %v2401 = vpop.permute.xlu0 %2400
      %2402 = vrot.lane.b32.xlu0 %v2376, 64
      %v2403 = vpop.permute.xlu0 %2402
      %2404 = vrot.lane.b32.xlu0 %v2377, 64
      %v2405 = vpop.permute.xlu0 %2404
      %2406 = vrot.lane.b32.xlu0 %v2378, 64
      %v2407 = vpop.permute.xlu0 %2406
      %2408 = vrot.lane.b32.xlu0 %v2379, 64
      %v2409 = vpop.permute.xlu0 %2408
      %2410 = vrot.lane.b32.xlu0 %v2380, 64
      %v2411 = vpop.permute.xlu0 %2410
      %2412 = vrot.lane.b32.xlu0 %v2381, 64
      %v2413 = vpop.permute.xlu0 %2412
      %2430 = vst.msk [vmem:[#allocation3 + $0x8] sm:$0xff] %vm1962, %v2383
      %2431 = vst.msk [vmem:[#allocation3 + $0x30] sm:$0xff] %vm1962, %v2385
      %2432 = vst.msk [vmem:[#allocation3 + $0x58] sm:$0xff] %vm1962, %v2387
      %2433 = vst.msk [vmem:[#allocation3 + $0x80] sm:$0xff] %vm1962, %v2389
      %2434 = vst.msk [vmem:[#allocation3 + $0xa8] sm:$0xff] %vm1962, %v2391
      %2435 = vst.msk [vmem:[#allocation3 + $0xd0] sm:$0xff] %vm1962, %v2393
      %2436 = vst.msk [vmem:[#allocation3 + $0xf8] sm:$0xff] %vm1962, %v2395
      %2437 = vst.msk [vmem:[#allocation3 + $0x120] sm:$0xff] %vm1962, %v2397
      %2438 = vst.msk [vmem:[#allocation3 + $0x148] sm:$0xff] %vm1962, %v2399
      %2439 = vst.msk [vmem:[#allocation3 + $0x170] sm:$0xff] %vm1962, %v2401
      %2440 = vst.msk [vmem:[#allocation3 + $0x198] sm:$0xff] %vm1962, %v2403
      %2441 = vst.msk [vmem:[#allocation3 + $0x1c0] sm:$0xff] %vm1962, %v2405
      %2442 = vst.msk [vmem:[#allocation3 + $0x1e8] sm:$0xff] %vm1962, %v2407
      %2443 = vst.msk [vmem:[#allocation3 + $0x210] sm:$0xff] %vm1962, %v2409
      %2444 = vst.msk [vmem:[#allocation3 + $0x238] sm:$0xff] %vm1962, %v2411
      %2445 = vst.msk [vmem:[#allocation3 + $0x260] sm:$0xff] %vm1962, %v2413
      %v2446 = vld [vmem:[%s1170] sm:$0xf]
      %v2447 = vld [vmem:[%s1170 + $0x4] sm:$0xf]
      %v2448 = vld [vmem:[%s1170 + $0x8] sm:$0x1]
      %v2449 = vld [vmem:[%s1170 + $0xc] sm:$0xf]
      %v2450 = vld [vmem:[%s1170 + $0x10] sm:$0xf]
      %v2451 = vld [vmem:[%s1170 + $0x14] sm:$0x1]
      %v2452 = vld [vmem:[%s1170 + $0x18] sm:$0xf]
      %v2453 = vld [vmem:[%s1170 + $0x1c] sm:$0xf]
      %v2454 = vld [vmem:[%s1170 + $0x20] sm:$0x1]
      %v2455 = vld [vmem:[%s1170 + $0x24] sm:$0xf]
      %v2456 = vld [vmem:[%s1170 + $0x28] sm:$0xf]
      %v2457 = vld [vmem:[%s1170 + $0x2c] sm:$0x1]
      %v2458 = vld [vmem:[%s1170 + $0x30] sm:$0xf]
      %v2459 = vld [vmem:[%s1170 + $0x34] sm:$0xf]
      %v2460 = vld [vmem:[%s1170 + $0x38] sm:$0x1]
      %v2461 = vld [vmem:[%s1170 + $0x3c] sm:$0xf]
      %v2462 = vld [vmem:[%s1170 + $0x40] sm:$0xf]
      %v2463 = vld [vmem:[%s1170 + $0x44] sm:$0x1]
      %v2464 = vld [vmem:[%s1170 + $0x48] sm:$0xf]
      %v2465 = vld [vmem:[%s1170 + $0x4c] sm:$0xf]
      %v2466 = vld [vmem:[%s1170 + $0x50] sm:$0x1]
      %v2467 = vld [vmem:[%s1170 + $0x54] sm:$0xf]
      %v2468 = vld [vmem:[%s1170 + $0x58] sm:$0xf]
      %v2469 = vld [vmem:[%s1170 + $0x5c] sm:$0x1]
      %v2470 = vld [vmem:[%s1170 + $0x60] sm:$0xf]
      %v2471 = vld [vmem:[%s1170 + $0x64] sm:$0xf]
      %v2472 = vld [vmem:[%s1170 + $0x68] sm:$0x1]
      %v2473 = vld [vmem:[%s1170 + $0x6c] sm:$0xf]
      %v2474 = vld [vmem:[%s1170 + $0x70] sm:$0xf]
      %v2475 = vld [vmem:[%s1170 + $0x74] sm:$0x1]
      %v2476 = vld [vmem:[%s1170 + $0x78] sm:$0xf]
      %v2477 = vld [vmem:[%s1170 + $0x7c] sm:$0xf]
      %v2478 = vld [vmem:[%s1170 + $0x80] sm:$0x1]
      %v2479 = vld [vmem:[%s1170 + $0x84] sm:$0xf]
      %v2480 = vld [vmem:[%s1170 + $0x88] sm:$0xf]
      %v2481 = vld [vmem:[%s1170 + $0x8c] sm:$0x1]
      %v2482 = vld [vmem:[%s1170 + $0x90] sm:$0xf]
      %v2483 = vld [vmem:[%s1170 + $0x94] sm:$0xf]
      %v2484 = vld [vmem:[%s1170 + $0x98] sm:$0x1]
      %v2485 = vld [vmem:[%s1170 + $0x9c] sm:$0xf]
      %v2486 = vld [vmem:[%s1170 + $0xa0] sm:$0xf]
      %v2487 = vld [vmem:[%s1170 + $0xa4] sm:$0x1]
      %v2488 = vld [vmem:[%s1170 + $0xa8] sm:$0xf]
      %v2489 = vld [vmem:[%s1170 + $0xac] sm:$0xf]
      %v2490 = vld [vmem:[%s1170 + $0xb0] sm:$0x1]
      %v2491 = vld [vmem:[%s1170 + $0xb4] sm:$0xf]
      %v2492 = vld [vmem:[%s1170 + $0xb8] sm:$0xf]
      %v2493 = vld [vmem:[%s1170 + $0xbc] sm:$0x1]
      %v2495 = vshrl.u32 %v2446, 16
      %v2497 = vrot.slane %v2495, 4
      %v2498 = vshll.u32 %v2446, 16
      %v2500 = vrot.slane %v2498, 5
      %v2501 = vor.u32 %v2497, %v2500
      %v2502 = vrot.slane %v2501, 4
      %v2504 = vshll.u32 %v2447, 16
      %v2506 = vrot.slane %v2504, 5
      %v2507 = vsel %vm1481, %v2502, %v2506
      %v2508 = vshrl.u32 %v2447, 16
      %v2510 = vrot.slane %v2508, 4
      %v2511 = vor.u32 %v2510, %v2506
      %v2512 = vrot.slane %v2511, 4
      %v2514 = vshll.u32 %v2448, 16
      %v2516 = vrot.slane %v2514, 5
      %v2517 = vsel %vm1481, %v2512, %v2516
      %v2519 = vshrl.u32 %v2449, 16
      %v2521 = vrot.slane %v2519, 4
      %v2522 = vshll.u32 %v2449, 16
      %v2524 = vrot.slane %v2522, 5
      %v2525 = vor.u32 %v2521, %v2524
      %v2526 = vrot.slane %v2525, 4
      %v2528 = vshll.u32 %v2450, 16
      %v2530 = vrot.slane %v2528, 5
      %v2531 = vsel %vm1481, %v2526, %v2530
      %v2532 = vshrl.u32 %v2450, 16
      %v2534 = vrot.slane %v2532, 4
      %v2535 = vor.u32 %v2534, %v2530
      %v2536 = vrot.slane %v2535, 4
      %v2538 = vshll.u32 %v2451, 16
      %v2540 = vrot.slane %v2538, 5
      %v2541 = vsel %vm1481, %v2536, %v2540
      %v2543 = vshrl.u32 %v2452, 16
      %v2545 = vrot.slane %v2543, 4
      %v2546 = vshll.u32 %v2452, 16
      %v2548 = vrot.slane %v2546, 5
      %v2549 = vor.u32 %v2545, %v2548
      %v2550 = vrot.slane %v2549, 4
      %v2552 = vshll.u32 %v2453, 16
      %v2554 = vrot.slane %v2552, 5
      %v2555 = vsel %vm1481, %v2550, %v2554
      %v2556 = vshrl.u32 %v2453, 16
      %v2558 = vrot.slane %v2556, 4
      %v2559 = vor.u32 %v2558, %v2554
      %v2560 = vrot.slane %v2559, 4
      %v2562 = vshll.u32 %v2454, 16
      %v2564 = vrot.slane %v2562, 5
      %v2565 = vsel %vm1481, %v2560, %v2564
      %v2567 = vshrl.u32 %v2455, 16
      %v2569 = vrot.slane %v2567, 4
      %v2570 = vshll.u32 %v2455, 16
      %v2572 = vrot.slane %v2570, 5
      %v2573 = vor.u32 %v2569, %v2572
      %v2574 = vrot.slane %v2573, 4
      %v2576 = vshll.u32 %v2456, 16
      %v2578 = vrot.slane %v2576, 5
      %v2579 = vsel %vm1481, %v2574, %v2578
      %v2580 = vshrl.u32 %v2456, 16
      %v2582 = vrot.slane %v2580, 4
      %v2583 = vor.u32 %v2582, %v2578
      %v2584 = vrot.slane %v2583, 4
      %v2586 = vshll.u32 %v2457, 16
      %v2588 = vrot.slane %v2586, 5
      %v2589 = vsel %vm1481, %v2584, %v2588
      %v2591 = vshrl.u32 %v2458, 16
      %v2593 = vrot.slane %v2591, 4
      %v2594 = vshll.u32 %v2458, 16
      %v2596 = vrot.slane %v2594, 5
      %v2597 = vor.u32 %v2593, %v2596
      %v2598 = vrot.slane %v2597, 4
      %v2600 = vshll.u32 %v2459, 16
      %v2602 = vrot.slane %v2600, 5
      %v2603 = vsel %vm1481, %v2598, %v2602
      %v2604 = vshrl.u32 %v2459, 16
      %v2606 = vrot.slane %v2604, 4
      %v2607 = vor.u32 %v2606, %v2602
      %v2608 = vrot.slane %v2607, 4
      %v2610 = vshll.u32 %v2460, 16
      %v2612 = vrot.slane %v2610, 5
      %v2613 = vsel %vm1481, %v2608, %v2612
      %v2615 = vshrl.u32 %v2461, 16
      %v2617 = vrot.slane %v2615, 4
      %v2618 = vshll.u32 %v2461, 16
      %v2620 = vrot.slane %v2618, 5
      %v2621 = vor.u32 %v2617, %v2620
      %v2622 = vrot.slane %v2621, 4
      %v2624 = vshll.u32 %v2462, 16
      %v2626 = vrot.slane %v2624, 5
      %v2627 = vsel %vm1481, %v2622, %v2626
      %v2628 = vshrl.u32 %v2462, 16
      %v2630 = vrot.slane %v2628, 4
      %v2631 = vor.u32 %v2630, %v2626
      %v2632 = vrot.slane %v2631, 4
      %v2634 = vshll.u32 %v2463, 16
      %v2636 = vrot.slane %v2634, 5
      %v2637 = vsel %vm1481, %v2632, %v2636
      %v2639 = vshrl.u32 %v2464, 16
      %v2641 = vrot.slane %v2639, 4
      %v2642 = vshll.u32 %v2464, 16
      %v2644 = vrot.slane %v2642, 5
      %v2645 = vor.u32 %v2641, %v2644
      %v2646 = vrot.slane %v2645, 4
      %v2648 = vshll.u32 %v2465, 16
      %v2650 = vrot.slane %v2648, 5
      %v2651 = vsel %vm1481, %v2646, %v2650
      %v2652 = vshrl.u32 %v2465, 16
      %v2654 = vrot.slane %v2652, 4
      %v2655 = vor.u32 %v2654, %v2650
      %v2656 = vrot.slane %v2655, 4
      %v2658 = vshll.u32 %v2466, 16
      %v2660 = vrot.slane %v2658, 5
      %v2661 = vsel %vm1481, %v2656, %v2660
      %v2663 = vshrl.u32 %v2467, 16
      %v2665 = vrot.slane %v2663, 4
      %v2666 = vshll.u32 %v2467, 16
      %v2668 = vrot.slane %v2666, 5
      %v2669 = vor.u32 %v2665, %v2668
      %v2670 = vrot.slane %v2669, 4
      %v2672 = vshll.u32 %v2468, 16
      %v2674 = vrot.slane %v2672, 5
      %v2675 = vsel %vm1481, %v2670, %v2674
      %v2676 = vshrl.u32 %v2468, 16
      %v2678 = vrot.slane %v2676, 4
      %v2679 = vor.u32 %v2678, %v2674
      %v2680 = vrot.slane %v2679, 4
      %v2682 = vshll.u32 %v2469, 16
      %v2684 = vrot.slane %v2682, 5
      %v2685 = vsel %vm1481, %v2680, %v2684
      %v2687 = vshrl.u32 %v2470, 16
      %v2689 = vrot.slane %v2687, 4
      %v2690 = vshll.u32 %v2470, 16
      %v2692 = vrot.slane %v2690, 5
      %v2693 = vor.u32 %v2689, %v2692
      %v2694 = vrot.slane %v2693, 4
      %v2696 = vshll.u32 %v2471, 16
      %v2698 = vrot.slane %v2696, 5
      %v2699 = vsel %vm1481, %v2694, %v2698
      %v2700 = vshrl.u32 %v2471, 16
      %v2702 = vrot.slane %v2700, 4
      %v2703 = vor.u32 %v2702, %v2698
      %v2704 = vrot.slane %v2703, 4
      %v2706 = vshll.u32 %v2472, 16
      %v2708 = vrot.slane %v2706, 5
      %v2709 = vsel %vm1481, %v2704, %v2708
      %v2711 = vshrl.u32 %v2473, 16
      %v2713 = vrot.slane %v2711, 4
      %v2714 = vshll.u32 %v2473, 16
      %v2716 = vrot.slane %v2714, 5
      %v2717 = vor.u32 %v2713, %v2716
      %v2718 = vrot.slane %v2717, 4
      %v2720 = vshll.u32 %v2474, 16
      %v2722 = vrot.slane %v2720, 5
      %v2723 = vsel %vm1481, %v2718, %v2722
      %v2724 = vshrl.u32 %v2474, 16
      %v2726 = vrot.slane %v2724, 4
      %v2727 = vor.u32 %v2726, %v2722
      %v2728 = vrot.slane %v2727, 4
      %v2730 = vshll.u32 %v2475, 16
      %v2732 = vrot.slane %v2730, 5
      %v2733 = vsel %vm1481, %v2728, %v2732
      %v2735 = vshrl.u32 %v2476, 16
      %v2737 = vrot.slane %v2735, 4
      %v2738 = vshll.u32 %v2476, 16
      %v2740 = vrot.slane %v2738, 5
      %v2741 = vor.u32 %v2737, %v2740
      %v2742 = vrot.slane %v2741, 4
      %v2744 = vshll.u32 %v2477, 16
      %v2746 = vrot.slane %v2744, 5
      %v2747 = vsel %vm1481, %v2742, %v2746
      %v2748 = vshrl.u32 %v2477, 16
      %v2750 = vrot.slane %v2748, 4
      %v2751 = vor.u32 %v2750, %v2746
      %v2752 = vrot.slane %v2751, 4
      %v2754 = vshll.u32 %v2478, 16
      %v2756 = vrot.slane %v2754, 5
      %v2757 = vsel %vm1481, %v2752, %v2756
      %v2759 = vshrl.u32 %v2479, 16
      %v2761 = vrot.slane %v2759, 4
      %v2762 = vshll.u32 %v2479, 16
      %v2764 = vrot.slane %v2762, 5
      %v2765 = vor.u32 %v2761, %v2764
      %v2766 = vrot.slane %v2765, 4
      %v2768 = vshll.u32 %v2480, 16
      %v2770 = vrot.slane %v2768, 5
      %v2771 = vsel %vm1481, %v2766, %v2770
      %v2772 = vshrl.u32 %v2480, 16
      %v2774 = vrot.slane %v2772, 4
      %v2775 = vor.u32 %v2774, %v2770
      %v2776 = vrot.slane %v2775, 4
      %v2778 = vshll.u32 %v2481, 16
      %v2780 = vrot.slane %v2778, 5
      %v2781 = vsel %vm1481, %v2776, %v2780
      %v2783 = vshrl.u32 %v2482, 16
      %v2785 = vrot.slane %v2783, 4
      %v2786 = vshll.u32 %v2482, 16
      %v2788 = vrot.slane %v2786, 5
      %v2789 = vor.u32 %v2785, %v2788
      %v2790 = vrot.slane %v2789, 4
      %v2792 = vshll.u32 %v2483, 16
      %v2794 = vrot.slane %v2792, 5
      %v2795 = vsel %vm1481, %v2790, %v2794
      %v2796 = vshrl.u32 %v2483, 16
      %v2798 = vrot.slane %v2796, 4
      %v2799 = vor.u32 %v2798, %v2794
      %v2800 = vrot.slane %v2799, 4
      %v2802 = vshll.u32 %v2484, 16
      %v2804 = vrot.slane %v2802, 5
      %v2805 = vsel %vm1481, %v2800, %v2804
      %v2807 = vshrl.u32 %v2485, 16
      %v2809 = vrot.slane %v2807, 4
      %v2810 = vshll.u32 %v2485, 16
      %v2812 = vrot.slane %v2810, 5
      %v2813 = vor.u32 %v2809, %v2812
      %v2814 = vrot.slane %v2813, 4
      %v2816 = vshll.u32 %v2486, 16
      %v2818 = vrot.slane %v2816, 5
      %v2819 = vsel %vm1481, %v2814, %v2818
      %v2820 = vshrl.u32 %v2486, 16
      %v2822 = vrot.slane %v2820, 4
      %v2823 = vor.u32 %v2822, %v2818
      %v2824 = vrot.slane %v2823, 4
      %v2826 = vshll.u32 %v2487, 16
      %v2828 = vrot.slane %v2826, 5
      %v2829 = vsel %vm1481, %v2824, %v2828
      %v2831 = vshrl.u32 %v2488, 16
      %v2833 = vrot.slane %v2831, 4
      %v2834 = vshll.u32 %v2488, 16
      %v2836 = vrot.slane %v2834, 5
      %v2837 = vor.u32 %v2833, %v2836
      %v2838 = vrot.slane %v2837, 4
      %v2840 = vshll.u32 %v2489, 16
      %v2842 = vrot.slane %v2840, 5
      %v2843 = vsel %vm1481, %v2838, %v2842
      %v2844 = vshrl.u32 %v2489, 16
      %v2846 = vrot.slane %v2844, 4
      %v2847 = vor.u32 %v2846, %v2842
      %v2848 = vrot.slane %v2847, 4
      %v2850 = vshll.u32 %v2490, 16
      %v2852 = vrot.slane %v2850, 5
      %v2853 = vsel %vm1481, %v2848, %v2852
      %v2855 = vshrl.u32 %v2491, 16
      %v2857 = vrot.slane %v2855, 4
      %v2858 = vshll.u32 %v2491, 16
      %v2860 = vrot.slane %v2858, 5
      %v2861 = vor.u32 %v2857, %v2860
      %v2862 = vrot.slane %v2861, 4
      %v2864 = vshll.u32 %v2492, 16
      %v2866 = vrot.slane %v2864, 5
      %v2867 = vsel %vm1481, %v2862, %v2866
      %v2868 = vshrl.u32 %v2492, 16
      %v2870 = vrot.slane %v2868, 4
      %v2871 = vor.u32 %v2870, %v2866
      %v2872 = vrot.slane %v2871, 4
      %v2874 = vshll.u32 %v2493, 16
      %v2876 = vrot.slane %v2874, 5
      %v2877 = vsel %vm1481, %v2872, %v2876
      %v2878 = vunpack.c.l.b16 %v2507
      %v2879 = vunpack.c.l.b16 %v2517
      %v2880 = vunpack.c.l.b16 %v2531
      %v2881 = vunpack.c.l.b16 %v2541
      %v2882 = vunpack.c.l.b16 %v2555
      %v2883 = vunpack.c.l.b16 %v2565
      %v2884 = vunpack.c.l.b16 %v2579
      %v2885 = vunpack.c.l.b16 %v2589
      %v2886 = vunpack.c.l.b16 %v2603
      %v2887 = vunpack.c.l.b16 %v2613
      %v2888 = vunpack.c.l.b16 %v2627
      %v2889 = vunpack.c.l.b16 %v2637
      %v2890 = vunpack.c.l.b16 %v2651
      %v2891 = vunpack.c.l.b16 %v2661
      %v2892 = vunpack.c.l.b16 %v2675
      %v2893 = vunpack.c.l.b16 %v2685
      %v2894 = vunpack.c.l.b16 %v2699
      %v2895 = vunpack.c.l.b16 %v2709
      %v2896 = vunpack.c.l.b16 %v2723
      %v2897 = vunpack.c.l.b16 %v2733
      %v2898 = vunpack.c.l.b16 %v2747
      %v2899 = vunpack.c.l.b16 %v2757
      %v2900 = vunpack.c.l.b16 %v2771
      %v2901 = vunpack.c.l.b16 %v2781
      %v2902 = vunpack.c.l.b16 %v2795
      %v2903 = vunpack.c.l.b16 %v2805
      %v2904 = vunpack.c.l.b16 %v2819
      %v2905 = vunpack.c.l.b16 %v2829
      %v2906 = vunpack.c.l.b16 %v2843
      %v2907 = vunpack.c.l.b16 %v2853
      %v2908 = vunpack.c.l.b16 %v2867
      %v2909 = vunpack.c.l.b16 %v2877
      %v2910 = vpack.c.b16 %v2879, %v2878
      %v2911 = vpack.c.b16 %v2881, %v2880
      %v2912 = vpack.c.b16 %v2883, %v2882
      %v2913 = vpack.c.b16 %v2885, %v2884
      %v2914 = vpack.c.b16 %v2887, %v2886
      %v2915 = vpack.c.b16 %v2889, %v2888
      %v2916 = vpack.c.b16 %v2891, %v2890
      %v2917 = vpack.c.b16 %v2893, %v2892
      %v2918 = vpack.c.b16 %v2895, %v2894
      %v2919 = vpack.c.b16 %v2897, %v2896
      %v2920 = vpack.c.b16 %v2899, %v2898
      %v2921 = vpack.c.b16 %v2901, %v2900
      %v2922 = vpack.c.b16 %v2903, %v2902
      %v2923 = vpack.c.b16 %v2905, %v2904
      %v2924 = vpack.c.b16 %v2907, %v2906
      %v2925 = vpack.c.b16 %v2909, %v2908
      %2942 = vst.msk [vmem:[#allocation3 + $0x10] sm:$0xff] %vm1414, %v2910
      %2943 = vst.msk [vmem:[#allocation3 + $0x38] sm:$0xff] %vm1414, %v2911
      %2944 = vst.msk [vmem:[#allocation3 + $0x60] sm:$0xff] %vm1414, %v2912
      %2945 = vst.msk [vmem:[#allocation3 + $0x88] sm:$0xff] %vm1414, %v2913
      %2946 = vst.msk [vmem:[#allocation3 + $0xb0] sm:$0xff] %vm1414, %v2914
      %2947 = vst.msk [vmem:[#allocation3 + $0xd8] sm:$0xff] %vm1414, %v2915
      %2948 = vst.msk [vmem:[#allocation3 + $0x100] sm:$0xff] %vm1414, %v2916
      %2949 = vst.msk [vmem:[#allocation3 + $0x128] sm:$0xff] %vm1414, %v2917
      %2950 = vst.msk [vmem:[#allocation3 + $0x150] sm:$0xff] %vm1414, %v2918
      %2951 = vst.msk [vmem:[#allocation3 + $0x178] sm:$0xff] %vm1414, %v2919
      %2952 = vst.msk [vmem:[#allocation3 + $0x1a0] sm:$0xff] %vm1414, %v2920
      %2953 = vst.msk [vmem:[#allocation3 + $0x1c8] sm:$0xff] %vm1414, %v2921
      %2954 = vst.msk [vmem:[#allocation3 + $0x1f0] sm:$0xff] %vm1414, %v2922
      %2955 = vst.msk [vmem:[#allocation3 + $0x218] sm:$0xff] %vm1414, %v2923
      %2956 = vst.msk [vmem:[#allocation3 + $0x240] sm:$0xff] %vm1414, %v2924
      %2957 = vst.msk [vmem:[#allocation3 + $0x268] sm:$0xff] %vm1414, %v2925
      %v2958 = vld [vmem:[%s1170] sm:$0xe]
      %v2959 = vld [vmem:[%s1170 + $0x4] sm:$0xf]
      %v2960 = vld [vmem:[%s1170 + $0x8] sm:$0x1]
      %v2961 = vld [vmem:[%s1170 + $0xc] sm:$0xe]
      %v2962 = vld [vmem:[%s1170 + $0x10] sm:$0xf]
      %v2963 = vld [vmem:[%s1170 + $0x14] sm:$0x1]
      %v2964 = vld [vmem:[%s1170 + $0x18] sm:$0xe]
      %v2965 = vld [vmem:[%s1170 + $0x1c] sm:$0xf]
      %v2966 = vld [vmem:[%s1170 + $0x20] sm:$0x1]
      %v2967 = vld [vmem:[%s1170 + $0x24] sm:$0xe]
      %v2968 = vld [vmem:[%s1170 + $0x28] sm:$0xf]
      %v2969 = vld [vmem:[%s1170 + $0x2c] sm:$0x1]
      %v2970 = vld [vmem:[%s1170 + $0x30] sm:$0xe]
      %v2971 = vld [vmem:[%s1170 + $0x34] sm:$0xf]
      %v2972 = vld [vmem:[%s1170 + $0x38] sm:$0x1]
      %v2973 = vld [vmem:[%s1170 + $0x3c] sm:$0xe]
      %v2974 = vld [vmem:[%s1170 + $0x40] sm:$0xf]
      %v2975 = vld [vmem:[%s1170 + $0x44] sm:$0x1]
      %v2976 = vld [vmem:[%s1170 + $0x48] sm:$0xe]
      %v2977 = vld [vmem:[%s1170 + $0x4c] sm:$0xf]
      %v2978 = vld [vmem:[%s1170 + $0x50] sm:$0x1]
      %v2979 = vld [vmem:[%s1170 + $0x54] sm:$0xe]
      %v2980 = vld [vmem:[%s1170 + $0x58] sm:$0xf]
      %v2981 = vld [vmem:[%s1170 + $0x5c] sm:$0x1]
      %v2982 = vld [vmem:[%s1170 + $0x60] sm:$0xe]
      %v2983 = vld [vmem:[%s1170 + $0x64] sm:$0xf]
      %v2984 = vld [vmem:[%s1170 + $0x68] sm:$0x1]
      %v2985 = vld [vmem:[%s1170 + $0x6c] sm:$0xe]
      %v2986 = vld [vmem:[%s1170 + $0x70] sm:$0xf]
      %v2987 = vld [vmem:[%s1170 + $0x74] sm:$0x1]
      %v2988 = vld [vmem:[%s1170 + $0x78] sm:$0xe]
      %v2989 = vld [vmem:[%s1170 + $0x7c] sm:$0xf]
      %v2990 = vld [vmem:[%s1170 + $0x80] sm:$0x1]
      %v2991 = vld [vmem:[%s1170 + $0x84] sm:$0xe]
      %v2992 = vld [vmem:[%s1170 + $0x88] sm:$0xf]
      %v2993 = vld [vmem:[%s1170 + $0x8c] sm:$0x1]
      %v2994 = vld [vmem:[%s1170 + $0x90] sm:$0xe]
      %v2995 = vld [vmem:[%s1170 + $0x94] sm:$0xf]
      %v2996 = vld [vmem:[%s1170 + $0x98] sm:$0x1]
      %v2997 = vld [vmem:[%s1170 + $0x9c] sm:$0xe]
      %v2998 = vld [vmem:[%s1170 + $0xa0] sm:$0xf]
      %v2999 = vld [vmem:[%s1170 + $0xa4] sm:$0x1]
      %v3000 = vld [vmem:[%s1170 + $0xa8] sm:$0xe]
      %v3001 = vld [vmem:[%s1170 + $0xac] sm:$0xf]
      %v3002 = vld [vmem:[%s1170 + $0xb0] sm:$0x1]
      %v3003 = vld [vmem:[%s1170 + $0xb4] sm:$0xe]
      %v3004 = vld [vmem:[%s1170 + $0xb8] sm:$0xf]
      %v3005 = vld [vmem:[%s1170 + $0xbc] sm:$0x1]
      %v3054 = vrot.slane %v2958, 5
      %v3055 = vrot.slane %v3054, 4
      %v3056 = vrot.slane %v2959, 5
      %v3057 = vsel %vm2077, %v3055, %v3056
      %v3058 = vrot.slane %v3056, 4
      %v3059 = vrot.slane %v2960, 5
      %v3060 = vsel %vm2077, %v3058, %v3059
      %v3061 = vrot.slane %v2961, 5
      %v3062 = vrot.slane %v3061, 4
      %v3063 = vrot.slane %v2962, 5
      %v3064 = vsel %vm2077, %v3062, %v3063
      %v3065 = vrot.slane %v3063, 4
      %v3066 = vrot.slane %v2963, 5
      %v3067 = vsel %vm2077, %v3065, %v3066
      %v3068 = vrot.slane %v2964, 5
      %v3069 = vrot.slane %v3068, 4
      %v3070 = vrot.slane %v2965, 5
      %v3071 = vsel %vm2077, %v3069, %v3070
      %v3072 = vrot.slane %v3070, 4
      %v3073 = vrot.slane %v2966, 5
      %v3074 = vsel %vm2077, %v3072, %v3073
      %v3075 = vrot.slane %v2967, 5
      %v3076 = vrot.slane %v3075, 4
      %v3077 = vrot.slane %v2968, 5
      %v3078 = vsel %vm2077, %v3076, %v3077
      %v3079 = vrot.slane %v3077, 4
      %v3080 = vrot.slane %v2969, 5
      %v3081 = vsel %vm2077, %v3079, %v3080
      %v3082 = vrot.slane %v2970, 5
      %v3083 = vrot.slane %v3082, 4
      %v3084 = vrot.slane %v2971, 5
      %v3085 = vsel %vm2077, %v3083, %v3084
      %v3086 = vrot.slane %v3084, 4
      %v3087 = vrot.slane %v2972, 5
      %v3088 = vsel %vm2077, %v3086, %v3087
      %v3089 = vrot.slane %v2973, 5
      %v3090 = vrot.slane %v3089, 4
      %v3091 = vrot.slane %v2974, 5
      %v3092 = vsel %vm2077, %v3090, %v3091
      %v3093 = vrot.slane %v3091, 4
      %v3094 = vrot.slane %v2975, 5
      %v3095 = vsel %vm2077, %v3093, %v3094
      %v3096 = vrot.slane %v2976, 5
      %v3097 = vrot.slane %v3096, 4
      %v3098 = vrot.slane %v2977, 5
      %v3099 = vsel %vm2077, %v3097, %v3098
      %v3100 = vrot.slane %v3098, 4
      %v3101 = vrot.slane %v2978, 5
      %v3102 = vsel %vm2077, %v3100, %v3101
      %v3103 = vrot.slane %v2979, 5
      %v3104 = vrot.slane %v3103, 4
      %v3105 = vrot.slane %v2980, 5
      %v3106 = vsel %vm2077, %v3104, %v3105
      %v3107 = vrot.slane %v3105, 4
      %v3108 = vrot.slane %v2981, 5
      %v3109 = vsel %vm2077, %v3107, %v3108
      %v3110 = vrot.slane %v2982, 5
      %v3111 = vrot.slane %v3110, 4
      %v3112 = vrot.slane %v2983, 5
      %v3113 = vsel %vm2077, %v3111, %v3112
      %v3114 = vrot.slane %v3112, 4
      %v3115 = vrot.slane %v2984, 5
      %v3116 = vsel %vm2077, %v3114, %v3115
      %v3117 = vrot.slane %v2985, 5
      %v3118 = vrot.slane %v3117, 4
      %v3119 = vrot.slane %v2986, 5
      %v3120 = vsel %vm2077, %v3118, %v3119
      %v3121 = vrot.slane %v3119, 4
      %v3122 = vrot.slane %v2987, 5
      %v3123 = vsel %vm2077, %v3121, %v3122
      %v3124 = vrot.slane %v2988, 5
      %v3125 = vrot.slane %v3124, 4
      %v3126 = vrot.slane %v2989, 5
      %v3127 = vsel %vm2077, %v3125, %v3126
      %v3128 = vrot.slane %v3126, 4
      %v3129 = vrot.slane %v2990, 5
      %v3130 = vsel %vm2077, %v3128, %v3129
      %v3131 = vrot.slane %v2991, 5
      %v3132 = vrot.slane %v3131, 4
      %v3133 = vrot.slane %v2992, 5
      %v3134 = vsel %vm2077, %v3132, %v3133
      %v3135 = vrot.slane %v3133, 4
      %v3136 = vrot.slane %v2993, 5
      %v3137 = vsel %vm2077, %v3135, %v3136
      %v3138 = vrot.slane %v2994, 5
      %v3139 = vrot.slane %v3138, 4
      %v3140 = vrot.slane %v2995, 5
      %v3141 = vsel %vm2077, %v3139, %v3140
      %v3142 = vrot.slane %v3140, 4
      %v3143 = vrot.slane %v2996, 5
      %v3144 = vsel %vm2077, %v3142, %v3143
      %v3145 = vrot.slane %v2997, 5
      %v3146 = vrot.slane %v3145, 4
      %v3147 = vrot.slane %v2998, 5
      %v3148 = vsel %vm2077, %v3146, %v3147
      %v3149 = vrot.slane %v3147, 4
      %v3150 = vrot.slane %v2999, 5
      %v3151 = vsel %vm2077, %v3149, %v3150
      %v3152 = vrot.slane %v3000, 5
      %v3153 = vrot.slane %v3152, 4
      %v3154 = vrot.slane %v3001, 5
      %v3155 = vsel %vm2077, %v3153, %v3154
      %v3156 = vrot.slane %v3154, 4
      %v3157 = vrot.slane %v3002, 5
      %v3158 = vsel %vm2077, %v3156, %v3157
      %v3159 = vrot.slane %v3003, 5
      %v3160 = vrot.slane %v3159, 4
      %v3161 = vrot.slane %v3004, 5
      %v3162 = vsel %vm2077, %v3160, %v3161
      %v3163 = vrot.slane %v3161, 4
      %v3164 = vrot.slane %v3005, 5
      %v3165 = vsel %vm2077, %v3163, %v3164
      %v3166 = vunpack.c.l.b16 %v3057
      %v3167 = vunpack.c.l.b16 %v3060
      %v3168 = vunpack.c.l.b16 %v3064
      %v3169 = vunpack.c.l.b16 %v3067
      %v3170 = vunpack.c.l.b16 %v3071
      %v3171 = vunpack.c.l.b16 %v3074
      %v3172 = vunpack.c.l.b16 %v3078
      %v3173 = vunpack.c.l.b16 %v3081
      %v3174 = vunpack.c.l.b16 %v3085
      %v3175 = vunpack.c.l.b16 %v3088
      %v3176 = vunpack.c.l.b16 %v3092
      %v3177 = vunpack.c.l.b16 %v3095
      %v3178 = vunpack.c.l.b16 %v3099
      %v3179 = vunpack.c.l.b16 %v3102
      %v3180 = vunpack.c.l.b16 %v3106
      %v3181 = vunpack.c.l.b16 %v3109
      %v3182 = vunpack.c.l.b16 %v3113
      %v3183 = vunpack.c.l.b16 %v3116
      %v3184 = vunpack.c.l.b16 %v3120
      %v3185 = vunpack.c.l.b16 %v3123
      %v3186 = vunpack.c.l.b16 %v3127
      %v3187 = vunpack.c.l.b16 %v3130
      %v3188 = vunpack.c.l.b16 %v3134
      %v3189 = vunpack.c.l.b16 %v3137
      %v3190 = vunpack.c.l.b16 %v3141
      %v3191 = vunpack.c.l.b16 %v3144
      %v3192 = vunpack.c.l.b16 %v3148
      %v3193 = vunpack.c.l.b16 %v3151
      %v3194 = vunpack.c.l.b16 %v3155
      %v3195 = vunpack.c.l.b16 %v3158
      %v3196 = vunpack.c.l.b16 %v3162
      %v3197 = vunpack.c.l.b16 %v3165
      %v3198 = vpack.c.b16 %v3167, %v3166
      %v3199 = vpack.c.b16 %v3169, %v3168
      %v3200 = vpack.c.b16 %v3171, %v3170
      %v3201 = vpack.c.b16 %v3173, %v3172
      %v3202 = vpack.c.b16 %v3175, %v3174
      %v3203 = vpack.c.b16 %v3177, %v3176
      %v3204 = vpack.c.b16 %v3179, %v3178
      %v3205 = vpack.c.b16 %v3181, %v3180
      %v3206 = vpack.c.b16 %v3183, %v3182
      %v3207 = vpack.c.b16 %v3185, %v3184
      %v3208 = vpack.c.b16 %v3187, %v3186
      %v3209 = vpack.c.b16 %v3189, %v3188
      %v3210 = vpack.c.b16 %v3191, %v3190
      %v3211 = vpack.c.b16 %v3193, %v3192
      %v3212 = vpack.c.b16 %v3195, %v3194
      %v3213 = vpack.c.b16 %v3197, %v3196
      %3214 = vrot.lane.b32.xlu0 %v3198, 64
      %v3215 = vpop.permute.xlu0 %3214
      %3216 = vrot.lane.b32.xlu0 %v3199, 64
      %v3217 = vpop.permute.xlu0 %3216
      %3218 = vrot.lane.b32.xlu0 %v3200, 64
      %v3219 = vpop.permute.xlu0 %3218
      %3220 = vrot.lane.b32.xlu0 %v3201, 64
      %v3221 = vpop.permute.xlu0 %3220
      %3222 = vrot.lane.b32.xlu0 %v3202, 64
      %v3223 = vpop.permute.xlu0 %3222
      %3224 = vrot.lane.b32.xlu0 %v3203, 64
      %v3225 = vpop.permute.xlu0 %3224
      %3226 = vrot.lane.b32.xlu0 %v3204, 64
      %v3227 = vpop.permute.xlu0 %3226
      %3228 = vrot.lane.b32.xlu0 %v3205, 64
      %v3229 = vpop.permute.xlu0 %3228
      %3230 = vrot.lane.b32.xlu0 %v3206, 64
      %v3231 = vpop.permute.xlu0 %3230
      %3232 = vrot.lane.b32.xlu0 %v3207, 64
      %v3233 = vpop.permute.xlu0 %3232
      %3234 = vrot.lane.b32.xlu0 %v3208, 64
      %v3235 = vpop.permute.xlu0 %3234
      %3236 = vrot.lane.b32.xlu0 %v3209, 64
      %v3237 = vpop.permute.xlu0 %3236
      %3238 = vrot.lane.b32.xlu0 %v3210, 64
      %v3239 = vpop.permute.xlu0 %3238
      %3240 = vrot.lane.b32.xlu0 %v3211, 64
      %v3241 = vpop.permute.xlu0 %3240
      %3242 = vrot.lane.b32.xlu0 %v3212, 64
      %v3243 = vpop.permute.xlu0 %3242
      %3244 = vrot.lane.b32.xlu0 %v3213, 64
      %v3245 = vpop.permute.xlu0 %3244
      %3262 = vst.msk [vmem:[#allocation3 + $0x10] sm:$0xff] %vm1962, %v3215
      %3263 = vst.msk [vmem:[#allocation3 + $0x38] sm:$0xff] %vm1962, %v3217
      %3264 = vst.msk [vmem:[#allocation3 + $0x60] sm:$0xff] %vm1962, %v3219
      %3265 = vst.msk [vmem:[#allocation3 + $0x88] sm:$0xff] %vm1962, %v3221
      %3266 = vst.msk [vmem:[#allocation3 + $0xb0] sm:$0xff] %vm1962, %v3223
      %3267 = vst.msk [vmem:[#allocation3 + $0xd8] sm:$0xff] %vm1962, %v3225
      %3268 = vst.msk [vmem:[#allocation3 + $0x100] sm:$0xff] %vm1962, %v3227
      %3269 = vst.msk [vmem:[#allocation3 + $0x128] sm:$0xff] %vm1962, %v3229
      %3270 = vst.msk [vmem:[#allocation3 + $0x150] sm:$0xff] %vm1962, %v3231
      %3271 = vst.msk [vmem:[#allocation3 + $0x178] sm:$0xff] %vm1962, %v3233
      %3272 = vst.msk [vmem:[#allocation3 + $0x1a0] sm:$0xff] %vm1962, %v3235
      %3273 = vst.msk [vmem:[#allocation3 + $0x1c8] sm:$0xff] %vm1962, %v3237
      %3274 = vst.msk [vmem:[#allocation3 + $0x1f0] sm:$0xff] %vm1962, %v3239
      %3275 = vst.msk [vmem:[#allocation3 + $0x218] sm:$0xff] %vm1962, %v3241
      %3276 = vst.msk [vmem:[#allocation3 + $0x240] sm:$0xff] %vm1962, %v3243
      %3277 = vst.msk [vmem:[#allocation3 + $0x268] sm:$0xff] %vm1962, %v3245
      %s3278 = scalar_lea.vmem [#allocation2], 24
      %v3279 = vld [vmem:[%s3278] sm:$0xf]
      %v3280 = vld [vmem:[%s3278 + $0x4] sm:$0xf]
      %v3281 = vld [vmem:[%s3278 + $0xc] sm:$0xf]
      %v3282 = vld [vmem:[%s3278 + $0x10] sm:$0xf]
      %v3283 = vld [vmem:[%s3278 + $0x18] sm:$0xf]
      %v3284 = vld [vmem:[%s3278 + $0x1c] sm:$0xf]
      %v3285 = vld [vmem:[%s3278 + $0x24] sm:$0xf]
      %v3286 = vld [vmem:[%s3278 + $0x28] sm:$0xf]
      %v3287 = vld [vmem:[%s3278 + $0x30] sm:$0xf]
      %v3288 = vld [vmem:[%s3278 + $0x34] sm:$0xf]
      %v3289 = vld [vmem:[%s3278 + $0x3c] sm:$0xf]
      %v3290 = vld [vmem:[%s3278 + $0x40] sm:$0xf]
      %v3291 = vld [vmem:[%s3278 + $0x48] sm:$0xf]
      %v3292 = vld [vmem:[%s3278 + $0x4c] sm:$0xf]
      %v3293 = vld [vmem:[%s3278 + $0x54] sm:$0xf]
      %v3294 = vld [vmem:[%s3278 + $0x58] sm:$0xf]
      %v3295 = vld [vmem:[%s3278 + $0x60] sm:$0xf]
      %v3296 = vld [vmem:[%s3278 + $0x64] sm:$0xf]
      %v3297 = vld [vmem:[%s3278 + $0x6c] sm:$0xf]
      %v3298 = vld [vmem:[%s3278 + $0x70] sm:$0xf]
      %v3299 = vld [vmem:[%s3278 + $0x78] sm:$0xf]
      %v3300 = vld [vmem:[%s3278 + $0x7c] sm:$0xf]
      %v3301 = vld [vmem:[%s3278 + $0x84] sm:$0xf]
      %v3302 = vld [vmem:[%s3278 + $0x88] sm:$0xf]
      %v3303 = vld [vmem:[%s3278 + $0x90] sm:$0xf]
      %v3304 = vld [vmem:[%s3278 + $0x94] sm:$0xf]
      %v3305 = vld [vmem:[%s3278 + $0x9c] sm:$0xf]
      %v3306 = vld [vmem:[%s3278 + $0xa0] sm:$0xf]
      %v3307 = vld [vmem:[%s3278 + $0xa8] sm:$0xf]
      %v3308 = vld [vmem:[%s3278 + $0xac] sm:$0xf]
      %v3309 = vld [vmem:[%s3278 + $0xb4] sm:$0xf]
      %v3310 = vld [vmem:[%s3278 + $0xb8] sm:$0xf]
      %v3343 = vunpack.c.l.b16 %v3279
      %v3344 = vunpack.c.l.b16 %v3280
      %v3345 = vunpack.c.l.b16 %v3281
      %v3346 = vunpack.c.l.b16 %v3282
      %v3347 = vunpack.c.l.b16 %v3283
      %v3348 = vunpack.c.l.b16 %v3284
      %v3349 = vunpack.c.l.b16 %v3285
      %v3350 = vunpack.c.l.b16 %v3286
      %v3351 = vunpack.c.l.b16 %v3287
      %v3352 = vunpack.c.l.b16 %v3288
      %v3353 = vunpack.c.l.b16 %v3289
      %v3354 = vunpack.c.l.b16 %v3290
      %v3355 = vunpack.c.l.b16 %v3291
      %v3356 = vunpack.c.l.b16 %v3292
      %v3357 = vunpack.c.l.b16 %v3293
      %v3358 = vunpack.c.l.b16 %v3294
      %v3359 = vunpack.c.l.b16 %v3295
      %v3360 = vunpack.c.l.b16 %v3296
      %v3361 = vunpack.c.l.b16 %v3297
      %v3362 = vunpack.c.l.b16 %v3298
      %v3363 = vunpack.c.l.b16 %v3299
      %v3364 = vunpack.c.l.b16 %v3300
      %v3365 = vunpack.c.l.b16 %v3301
      %v3366 = vunpack.c.l.b16 %v3302
      %v3367 = vunpack.c.l.b16 %v3303
      %v3368 = vunpack.c.l.b16 %v3304
      %v3369 = vunpack.c.l.b16 %v3305
      %v3370 = vunpack.c.l.b16 %v3306
      %v3371 = vunpack.c.l.b16 %v3307
      %v3372 = vunpack.c.l.b16 %v3308
      %v3373 = vunpack.c.l.b16 %v3309
      %v3374 = vunpack.c.l.b16 %v3310
      %v3375 = vpack.c.b16 %v3344, %v3343
      %v3376 = vpack.c.b16 %v3346, %v3345
      %v3377 = vpack.c.b16 %v3348, %v3347
      %v3378 = vpack.c.b16 %v3350, %v3349
      %v3379 = vpack.c.b16 %v3352, %v3351
      %v3380 = vpack.c.b16 %v3354, %v3353
      %v3381 = vpack.c.b16 %v3356, %v3355
      %v3382 = vpack.c.b16 %v3358, %v3357
      %v3383 = vpack.c.b16 %v3360, %v3359
      %v3384 = vpack.c.b16 %v3362, %v3361
      %v3385 = vpack.c.b16 %v3364, %v3363
      %v3386 = vpack.c.b16 %v3366, %v3365
      %v3387 = vpack.c.b16 %v3368, %v3367
      %v3388 = vpack.c.b16 %v3370, %v3369
      %v3389 = vpack.c.b16 %v3372, %v3371
      %v3390 = vpack.c.b16 %v3374, %v3373
      %3407 = vst.msk [vmem:[#allocation3 + $0x18] sm:$0xff] %vm1414, %v3375
      %3408 = vst.msk [vmem:[#allocation3 + $0x40] sm:$0xff] %vm1414, %v3376
      %3409 = vst.msk [vmem:[#allocation3 + $0x68] sm:$0xff] %vm1414, %v3377
      %3410 = vst.msk [vmem:[#allocation3 + $0x90] sm:$0xff] %vm1414, %v3378
      %3411 = vst.msk [vmem:[#allocation3 + $0xb8] sm:$0xff] %vm1414, %v3379
      %3412 = vst.msk [vmem:[#allocation3 + $0xe0] sm:$0xff] %vm1414, %v3380
      %3413 = vst.msk [vmem:[#allocation3 + $0x108] sm:$0xff] %vm1414, %v3381
      %3414 = vst.msk [vmem:[#allocation3 + $0x130] sm:$0xff] %vm1414, %v3382
      %3415 = vst.msk [vmem:[#allocation3 + $0x158] sm:$0xff] %vm1414, %v3383
      %3416 = vst.msk [vmem:[#allocation3 + $0x180] sm:$0xff] %vm1414, %v3384
      %3417 = vst.msk [vmem:[#allocation3 + $0x1a8] sm:$0xff] %vm1414, %v3385
      %3418 = vst.msk [vmem:[#allocation3 + $0x1d0] sm:$0xff] %vm1414, %v3386
      %3419 = vst.msk [vmem:[#allocation3 + $0x1f8] sm:$0xff] %vm1414, %v3387
      %3420 = vst.msk [vmem:[#allocation3 + $0x220] sm:$0xff] %vm1414, %v3388
      %3421 = vst.msk [vmem:[#allocation3 + $0x248] sm:$0xff] %vm1414, %v3389
      %3422 = vst.msk [vmem:[#allocation3 + $0x270] sm:$0xff] %vm1414, %v3390
      %v3423 = vld [vmem:[%s3278] sm:$0xf]
      %v3424 = vld [vmem:[%s3278 + $0x4] sm:$0xf]
      %v3425 = vld [vmem:[%s3278 + $0x8] sm:$0x1]
      %v3426 = vld [vmem:[%s3278 + $0xc] sm:$0xf]
      %v3427 = vld [vmem:[%s3278 + $0x10] sm:$0xf]
      %v3428 = vld [vmem:[%s3278 + $0x14] sm:$0x1]
      %v3429 = vld [vmem:[%s3278 + $0x18] sm:$0xf]
      %v3430 = vld [vmem:[%s3278 + $0x1c] sm:$0xf]
      %v3431 = vld [vmem:[%s3278 + $0x20] sm:$0x1]
      %v3432 = vld [vmem:[%s3278 + $0x24] sm:$0xf]
      %v3433 = vld [vmem:[%s3278 + $0x28] sm:$0xf]
      %v3434 = vld [vmem:[%s3278 + $0x2c] sm:$0x1]
      %v3435 = vld [vmem:[%s3278 + $0x30] sm:$0xf]
      %v3436 = vld [vmem:[%s3278 + $0x34] sm:$0xf]
      %v3437 = vld [vmem:[%s3278 + $0x38] sm:$0x1]
      %v3438 = vld [vmem:[%s3278 + $0x3c] sm:$0xf]
      %v3439 = vld [vmem:[%s3278 + $0x40] sm:$0xf]
      %v3440 = vld [vmem:[%s3278 + $0x44] sm:$0x1]
      %v3441 = vld [vmem:[%s3278 + $0x48] sm:$0xf]
      %v3442 = vld [vmem:[%s3278 + $0x4c] sm:$0xf]
      %v3443 = vld [vmem:[%s3278 + $0x50] sm:$0x1]
      %v3444 = vld [vmem:[%s3278 + $0x54] sm:$0xf]
      %v3445 = vld [vmem:[%s3278 + $0x58] sm:$0xf]
      %v3446 = vld [vmem:[%s3278 + $0x5c] sm:$0x1]
      %v3447 = vld [vmem:[%s3278 + $0x60] sm:$0xf]
      %v3448 = vld [vmem:[%s3278 + $0x64] sm:$0xf]
      %v3449 = vld [vmem:[%s3278 + $0x68] sm:$0x1]
      %v3450 = vld [vmem:[%s3278 + $0x6c] sm:$0xf]
      %v3451 = vld [vmem:[%s3278 + $0x70] sm:$0xf]
      %v3452 = vld [vmem:[%s3278 + $0x74] sm:$0x1]
      %v3453 = vld [vmem:[%s3278 + $0x78] sm:$0xf]
      %v3454 = vld [vmem:[%s3278 + $0x7c] sm:$0xf]
      %v3455 = vld [vmem:[%s3278 + $0x80] sm:$0x1]
      %v3456 = vld [vmem:[%s3278 + $0x84] sm:$0xf]
      %v3457 = vld [vmem:[%s3278 + $0x88] sm:$0xf]
      %v3458 = vld [vmem:[%s3278 + $0x8c] sm:$0x1]
      %v3459 = vld [vmem:[%s3278 + $0x90] sm:$0xf]
      %v3460 = vld [vmem:[%s3278 + $0x94] sm:$0xf]
      %v3461 = vld [vmem:[%s3278 + $0x98] sm:$0x1]
      %v3462 = vld [vmem:[%s3278 + $0x9c] sm:$0xf]
      %v3463 = vld [vmem:[%s3278 + $0xa0] sm:$0xf]
      %v3464 = vld [vmem:[%s3278 + $0xa4] sm:$0x1]
      %v3465 = vld [vmem:[%s3278 + $0xa8] sm:$0xf]
      %v3466 = vld [vmem:[%s3278 + $0xac] sm:$0xf]
      %v3467 = vld [vmem:[%s3278 + $0xb0] sm:$0x1]
      %v3468 = vld [vmem:[%s3278 + $0xb4] sm:$0xf]
      %v3469 = vld [vmem:[%s3278 + $0xb8] sm:$0xf]
      %v3470 = vld [vmem:[%s3278 + $0xbc] sm:$0x1]
      %v3472 = vshrl.u32 %v3423, 16
      %v3474 = vrot.slane %v3472, 4
      %v3475 = vshll.u32 %v3423, 16
      %v3477 = vrot.slane %v3475, 5
      %v3478 = vor.u32 %v3474, %v3477
      %v3479 = vrot.slane %v3478, 4
      %v3481 = vshll.u32 %v3424, 16
      %v3483 = vrot.slane %v3481, 5
      %v3484 = vsel %vm1481, %v3479, %v3483
      %v3485 = vshrl.u32 %v3424, 16
      %v3487 = vrot.slane %v3485, 4
      %v3488 = vor.u32 %v3487, %v3483
      %v3489 = vrot.slane %v3488, 4
      %v3491 = vshll.u32 %v3425, 16
      %v3493 = vrot.slane %v3491, 5
      %v3494 = vsel %vm1481, %v3489, %v3493
      %v3496 = vshrl.u32 %v3426, 16
      %v3498 = vrot.slane %v3496, 4
      %v3499 = vshll.u32 %v3426, 16
      %v3501 = vrot.slane %v3499, 5
      %v3502 = vor.u32 %v3498, %v3501
      %v3503 = vrot.slane %v3502, 4
      %v3505 = vshll.u32 %v3427, 16
      %v3507 = vrot.slane %v3505, 5
      %v3508 = vsel %vm1481, %v3503, %v3507
      %v3509 = vshrl.u32 %v3427, 16
      %v3511 = vrot.slane %v3509, 4
      %v3512 = vor.u32 %v3511, %v3507
      %v3513 = vrot.slane %v3512, 4
      %v3515 = vshll.u32 %v3428, 16
      %v3517 = vrot.slane %v3515, 5
      %v3518 = vsel %vm1481, %v3513, %v3517
      %v3520 = vshrl.u32 %v3429, 16
      %v3522 = vrot.slane %v3520, 4
      %v3523 = vshll.u32 %v3429, 16
      %v3525 = vrot.slane %v3523, 5
      %v3526 = vor.u32 %v3522, %v3525
      %v3527 = vrot.slane %v3526, 4
      %v3529 = vshll.u32 %v3430, 16
      %v3531 = vrot.slane %v3529, 5
      %v3532 = vsel %vm1481, %v3527, %v3531
      %v3533 = vshrl.u32 %v3430, 16
      %v3535 = vrot.slane %v3533, 4
      %v3536 = vor.u32 %v3535, %v3531
      %v3537 = vrot.slane %v3536, 4
      %v3539 = vshll.u32 %v3431, 16
      %v3541 = vrot.slane %v3539, 5
      %v3542 = vsel %vm1481, %v3537, %v3541
      %v3544 = vshrl.u32 %v3432, 16
      %v3546 = vrot.slane %v3544, 4
      %v3547 = vshll.u32 %v3432, 16
      %v3549 = vrot.slane %v3547, 5
      %v3550 = vor.u32 %v3546, %v3549
      %v3551 = vrot.slane %v3550, 4
      %v3553 = vshll.u32 %v3433, 16
      %v3555 = vrot.slane %v3553, 5
      %v3556 = vsel %vm1481, %v3551, %v3555
      %v3557 = vshrl.u32 %v3433, 16
      %v3559 = vrot.slane %v3557, 4
      %v3560 = vor.u32 %v3559, %v3555
      %v3561 = vrot.slane %v3560, 4
      %v3563 = vshll.u32 %v3434, 16
      %v3565 = vrot.slane %v3563, 5
      %v3566 = vsel %vm1481, %v3561, %v3565
      %v3568 = vshrl.u32 %v3435, 16
      %v3570 = vrot.slane %v3568, 4
      %v3571 = vshll.u32 %v3435, 16
      %v3573 = vrot.slane %v3571, 5
      %v3574 = vor.u32 %v3570, %v3573
      %v3575 = vrot.slane %v3574, 4
      %v3577 = vshll.u32 %v3436, 16
      %v3579 = vrot.slane %v3577, 5
      %v3580 = vsel %vm1481, %v3575, %v3579
      %v3581 = vshrl.u32 %v3436, 16
      %v3583 = vrot.slane %v3581, 4
      %v3584 = vor.u32 %v3583, %v3579
      %v3585 = vrot.slane %v3584, 4
      %v3587 = vshll.u32 %v3437, 16
      %v3589 = vrot.slane %v3587, 5
      %v3590 = vsel %vm1481, %v3585, %v3589
      %v3592 = vshrl.u32 %v3438, 16
      %v3594 = vrot.slane %v3592, 4
      %v3595 = vshll.u32 %v3438, 16
      %v3597 = vrot.slane %v3595, 5
      %v3598 = vor.u32 %v3594, %v3597
      %v3599 = vrot.slane %v3598, 4
      %v3601 = vshll.u32 %v3439, 16
      %v3603 = vrot.slane %v3601, 5
      %v3604 = vsel %vm1481, %v3599, %v3603
      %v3605 = vshrl.u32 %v3439, 16
      %v3607 = vrot.slane %v3605, 4
      %v3608 = vor.u32 %v3607, %v3603
      %v3609 = vrot.slane %v3608, 4
      %v3611 = vshll.u32 %v3440, 16
      %v3613 = vrot.slane %v3611, 5
      %v3614 = vsel %vm1481, %v3609, %v3613
      %v3616 = vshrl.u32 %v3441, 16
      %v3618 = vrot.slane %v3616, 4
      %v3619 = vshll.u32 %v3441, 16
      %v3621 = vrot.slane %v3619, 5
      %v3622 = vor.u32 %v3618, %v3621
      %v3623 = vrot.slane %v3622, 4
      %v3625 = vshll.u32 %v3442, 16
      %v3627 = vrot.slane %v3625, 5
      %v3628 = vsel %vm1481, %v3623, %v3627
      %v3629 = vshrl.u32 %v3442, 16
      %v3631 = vrot.slane %v3629, 4
      %v3632 = vor.u32 %v3631, %v3627
      %v3633 = vrot.slane %v3632, 4
      %v3635 = vshll.u32 %v3443, 16
      %v3637 = vrot.slane %v3635, 5
      %v3638 = vsel %vm1481, %v3633, %v3637
      %v3640 = vshrl.u32 %v3444, 16
      %v3642 = vrot.slane %v3640, 4
      %v3643 = vshll.u32 %v3444, 16
      %v3645 = vrot.slane %v3643, 5
      %v3646 = vor.u32 %v3642, %v3645
      %v3647 = vrot.slane %v3646, 4
      %v3649 = vshll.u32 %v3445, 16
      %v3651 = vrot.slane %v3649, 5
      %v3652 = vsel %vm1481, %v3647, %v3651
      %v3653 = vshrl.u32 %v3445, 16
      %v3655 = vrot.slane %v3653, 4
      %v3656 = vor.u32 %v3655, %v3651
      %v3657 = vrot.slane %v3656, 4
      %v3659 = vshll.u32 %v3446, 16
      %v3661 = vrot.slane %v3659, 5
      %v3662 = vsel %vm1481, %v3657, %v3661
      %v3664 = vshrl.u32 %v3447, 16
      %v3666 = vrot.slane %v3664, 4
      %v3667 = vshll.u32 %v3447, 16
      %v3669 = vrot.slane %v3667, 5
      %v3670 = vor.u32 %v3666, %v3669
      %v3671 = vrot.slane %v3670, 4
      %v3673 = vshll.u32 %v3448, 16
      %v3675 = vrot.slane %v3673, 5
      %v3676 = vsel %vm1481, %v3671, %v3675
      %v3677 = vshrl.u32 %v3448, 16
      %v3679 = vrot.slane %v3677, 4
      %v3680 = vor.u32 %v3679, %v3675
      %v3681 = vrot.slane %v3680, 4
      %v3683 = vshll.u32 %v3449, 16
      %v3685 = vrot.slane %v3683, 5
      %v3686 = vsel %vm1481, %v3681, %v3685
      %v3688 = vshrl.u32 %v3450, 16
      %v3690 = vrot.slane %v3688, 4
      %v3691 = vshll.u32 %v3450, 16
      %v3693 = vrot.slane %v3691, 5
      %v3694 = vor.u32 %v3690, %v3693
      %v3695 = vrot.slane %v3694, 4
      %v3697 = vshll.u32 %v3451, 16
      %v3699 = vrot.slane %v3697, 5
      %v3700 = vsel %vm1481, %v3695, %v3699
      %v3701 = vshrl.u32 %v3451, 16
      %v3703 = vrot.slane %v3701, 4
      %v3704 = vor.u32 %v3703, %v3699
      %v3705 = vrot.slane %v3704, 4
      %v3707 = vshll.u32 %v3452, 16
      %v3709 = vrot.slane %v3707, 5
      %v3710 = vsel %vm1481, %v3705, %v3709
      %v3712 = vshrl.u32 %v3453, 16
      %v3714 = vrot.slane %v3712, 4
      %v3715 = vshll.u32 %v3453, 16
      %v3717 = vrot.slane %v3715, 5
      %v3718 = vor.u32 %v3714, %v3717
      %v3719 = vrot.slane %v3718, 4
      %v3721 = vshll.u32 %v3454, 16
      %v3723 = vrot.slane %v3721, 5
      %v3724 = vsel %vm1481, %v3719, %v3723
      %v3725 = vshrl.u32 %v3454, 16
      %v3727 = vrot.slane %v3725, 4
      %v3728 = vor.u32 %v3727, %v3723
      %v3729 = vrot.slane %v3728, 4
      %v3731 = vshll.u32 %v3455, 16
      %v3733 = vrot.slane %v3731, 5
      %v3734 = vsel %vm1481, %v3729, %v3733
      %v3736 = vshrl.u32 %v3456, 16
      %v3738 = vrot.slane %v3736, 4
      %v3739 = vshll.u32 %v3456, 16
      %v3741 = vrot.slane %v3739, 5
      %v3742 = vor.u32 %v3738, %v3741
      %v3743 = vrot.slane %v3742, 4
      %v3745 = vshll.u32 %v3457, 16
      %v3747 = vrot.slane %v3745, 5
      %v3748 = vsel %vm1481, %v3743, %v3747
      %v3749 = vshrl.u32 %v3457, 16
      %v3751 = vrot.slane %v3749, 4
      %v3752 = vor.u32 %v3751, %v3747
      %v3753 = vrot.slane %v3752, 4
      %v3755 = vshll.u32 %v3458, 16
      %v3757 = vrot.slane %v3755, 5
      %v3758 = vsel %vm1481, %v3753, %v3757
      %v3760 = vshrl.u32 %v3459, 16
      %v3762 = vrot.slane %v3760, 4
      %v3763 = vshll.u32 %v3459, 16
      %v3765 = vrot.slane %v3763, 5
      %v3766 = vor.u32 %v3762, %v3765
      %v3767 = vrot.slane %v3766, 4
      %v3769 = vshll.u32 %v3460, 16
      %v3771 = vrot.slane %v3769, 5
      %v3772 = vsel %vm1481, %v3767, %v3771
      %v3773 = vshrl.u32 %v3460, 16
      %v3775 = vrot.slane %v3773, 4
      %v3776 = vor.u32 %v3775, %v3771
      %v3777 = vrot.slane %v3776, 4
      %v3779 = vshll.u32 %v3461, 16
      %v3781 = vrot.slane %v3779, 5
      %v3782 = vsel %vm1481, %v3777, %v3781
      %v3784 = vshrl.u32 %v3462, 16
      %v3786 = vrot.slane %v3784, 4
      %v3787 = vshll.u32 %v3462, 16
      %v3789 = vrot.slane %v3787, 5
      %v3790 = vor.u32 %v3786, %v3789
      %v3791 = vrot.slane %v3790, 4
      %v3793 = vshll.u32 %v3463, 16
      %v3795 = vrot.slane %v3793, 5
      %v3796 = vsel %vm1481, %v3791, %v3795
      %v3797 = vshrl.u32 %v3463, 16
      %v3799 = vrot.slane %v3797, 4
      %v3800 = vor.u32 %v3799, %v3795
      %v3801 = vrot.slane %v3800, 4
      %v3803 = vshll.u32 %v3464, 16
      %v3805 = vrot.slane %v3803, 5
      %v3806 = vsel %vm1481, %v3801, %v3805
      %v3808 = vshrl.u32 %v3465, 16
      %v3810 = vrot.slane %v3808, 4
      %v3811 = vshll.u32 %v3465, 16
      %v3813 = vrot.slane %v3811, 5
      %v3814 = vor.u32 %v3810, %v3813
      %v3815 = vrot.slane %v3814, 4
      %v3817 = vshll.u32 %v3466, 16
      %v3819 = vrot.slane %v3817, 5
      %v3820 = vsel %vm1481, %v3815, %v3819
      %v3821 = vshrl.u32 %v3466, 16
      %v3823 = vrot.slane %v3821, 4
      %v3824 = vor.u32 %v3823, %v3819
      %v3825 = vrot.slane %v3824, 4
      %v3827 = vshll.u32 %v3467, 16
      %v3829 = vrot.slane %v3827, 5
      %v3830 = vsel %vm1481, %v3825, %v3829
      %v3832 = vshrl.u32 %v3468, 16
      %v3834 = vrot.slane %v3832, 4
      %v3835 = vshll.u32 %v3468, 16
      %v3837 = vrot.slane %v3835, 5
      %v3838 = vor.u32 %v3834, %v3837
      %v3839 = vrot.slane %v3838, 4
      %v3841 = vshll.u32 %v3469, 16
      %v3843 = vrot.slane %v3841, 5
      %v3844 = vsel %vm1481, %v3839, %v3843
      %v3845 = vshrl.u32 %v3469, 16
      %v3847 = vrot.slane %v3845, 4
      %v3848 = vor.u32 %v3847, %v3843
      %v3849 = vrot.slane %v3848, 4
      %v3851 = vshll.u32 %v3470, 16
      %v3853 = vrot.slane %v3851, 5
      %v3854 = vsel %vm1481, %v3849, %v3853
      %v3855 = vunpack.c.l.b16 %v3484
      %v3856 = vunpack.c.l.b16 %v3494
      %v3857 = vunpack.c.l.b16 %v3508
      %v3858 = vunpack.c.l.b16 %v3518
      %v3859 = vunpack.c.l.b16 %v3532
      %v3860 = vunpack.c.l.b16 %v3542
      %v3861 = vunpack.c.l.b16 %v3556
      %v3862 = vunpack.c.l.b16 %v3566
      %v3863 = vunpack.c.l.b16 %v3580
      %v3864 = vunpack.c.l.b16 %v3590
      %v3865 = vunpack.c.l.b16 %v3604
      %v3866 = vunpack.c.l.b16 %v3614
      %v3867 = vunpack.c.l.b16 %v3628
      %v3868 = vunpack.c.l.b16 %v3638
      %v3869 = vunpack.c.l.b16 %v3652
      %v3870 = vunpack.c.l.b16 %v3662
      %v3871 = vunpack.c.l.b16 %v3676
      %v3872 = vunpack.c.l.b16 %v3686
      %v3873 = vunpack.c.l.b16 %v3700
      %v3874 = vunpack.c.l.b16 %v3710
      %v3875 = vunpack.c.l.b16 %v3724
      %v3876 = vunpack.c.l.b16 %v3734
      %v3877 = vunpack.c.l.b16 %v3748
      %v3878 = vunpack.c.l.b16 %v3758
      %v3879 = vunpack.c.l.b16 %v3772
      %v3880 = vunpack.c.l.b16 %v3782
      %v3881 = vunpack.c.l.b16 %v3796
      %v3882 = vunpack.c.l.b16 %v3806
      %v3883 = vunpack.c.l.b16 %v3820
      %v3884 = vunpack.c.l.b16 %v3830
      %v3885 = vunpack.c.l.b16 %v3844
      %v3886 = vunpack.c.l.b16 %v3854
      %v3887 = vpack.c.b16 %v3856, %v3855
      %v3888 = vpack.c.b16 %v3858, %v3857
      %v3889 = vpack.c.b16 %v3860, %v3859
      %v3890 = vpack.c.b16 %v3862, %v3861
      %v3891 = vpack.c.b16 %v3864, %v3863
      %v3892 = vpack.c.b16 %v3866, %v3865
      %v3893 = vpack.c.b16 %v3868, %v3867
      %v3894 = vpack.c.b16 %v3870, %v3869
      %v3895 = vpack.c.b16 %v3872, %v3871
      %v3896 = vpack.c.b16 %v3874, %v3873
      %v3897 = vpack.c.b16 %v3876, %v3875
      %v3898 = vpack.c.b16 %v3878, %v3877
      %v3899 = vpack.c.b16 %v3880, %v3879
      %v3900 = vpack.c.b16 %v3882, %v3881
      %v3901 = vpack.c.b16 %v3884, %v3883
      %v3902 = vpack.c.b16 %v3886, %v3885
      %3903 = vrot.lane.b32.xlu0 %v3887, 64
      %v3904 = vpop.permute.xlu0 %3903
      %3905 = vrot.lane.b32.xlu0 %v3888, 64
      %v3906 = vpop.permute.xlu0 %3905
      %3907 = vrot.lane.b32.xlu0 %v3889, 64
      %v3908 = vpop.permute.xlu0 %3907
      %3909 = vrot.lane.b32.xlu0 %v3890, 64
      %v3910 = vpop.permute.xlu0 %3909
      %3911 = vrot.lane.b32.xlu0 %v3891, 64
      %v3912 = vpop.permute.xlu0 %3911
      %3913 = vrot.lane.b32.xlu0 %v3892, 64
      %v3914 = vpop.permute.xlu0 %3913
      %3915 = vrot.lane.b32.xlu0 %v3893, 64
      %v3916 = vpop.permute.xlu0 %3915
      %3917 = vrot.lane.b32.xlu0 %v3894, 64
      %v3918 = vpop.permute.xlu0 %3917
      %3919 = vrot.lane.b32.xlu0 %v3895, 64
      %v3920 = vpop.permute.xlu0 %3919
      %3921 = vrot.lane.b32.xlu0 %v3896, 64
      %v3922 = vpop.permute.xlu0 %3921
      %3923 = vrot.lane.b32.xlu0 %v3897, 64
      %v3924 = vpop.permute.xlu0 %3923
      %3925 = vrot.lane.b32.xlu0 %v3898, 64
      %v3926 = vpop.permute.xlu0 %3925
      %3927 = vrot.lane.b32.xlu0 %v3899, 64
      %v3928 = vpop.permute.xlu0 %3927
      %3929 = vrot.lane.b32.xlu0 %v3900, 64
      %v3930 = vpop.permute.xlu0 %3929
      %3931 = vrot.lane.b32.xlu0 %v3901, 64
      %v3932 = vpop.permute.xlu0 %3931
      %3933 = vrot.lane.b32.xlu0 %v3902, 64
      %v3934 = vpop.permute.xlu0 %3933
      %3951 = vst.msk [vmem:[#allocation3 + $0x18] sm:$0xff] %vm1962, %v3904
      %3952 = vst.msk [vmem:[#allocation3 + $0x40] sm:$0xff] %vm1962, %v3906
      %3953 = vst.msk [vmem:[#allocation3 + $0x68] sm:$0xff] %vm1962, %v3908
      %3954 = vst.msk [vmem:[#allocation3 + $0x90] sm:$0xff] %vm1962, %v3910
      %3955 = vst.msk [vmem:[#allocation3 + $0xb8] sm:$0xff] %vm1962, %v3912
      %3956 = vst.msk [vmem:[#allocation3 + $0xe0] sm:$0xff] %vm1962, %v3914
      %3957 = vst.msk [vmem:[#allocation3 + $0x108] sm:$0xff] %vm1962, %v3916
      %3958 = vst.msk [vmem:[#allocation3 + $0x130] sm:$0xff] %vm1962, %v3918
      %3959 = vst.msk [vmem:[#allocation3 + $0x158] sm:$0xff] %vm1962, %v3920
      %3960 = vst.msk [vmem:[#allocation3 + $0x180] sm:$0xff] %vm1962, %v3922
      %3961 = vst.msk [vmem:[#allocation3 + $0x1a8] sm:$0xff] %vm1962, %v3924
      %3962 = vst.msk [vmem:[#allocation3 + $0x1d0] sm:$0xff] %vm1962, %v3926
      %3963 = vst.msk [vmem:[#allocation3 + $0x1f8] sm:$0xff] %vm1962, %v3928
      %3964 = vst.msk [vmem:[#allocation3 + $0x220] sm:$0xff] %vm1962, %v3930
      %3965 = vst.msk [vmem:[#allocation3 + $0x248] sm:$0xff] %vm1962, %v3932
      %3966 = vst.msk [vmem:[#allocation3 + $0x270] sm:$0xff] %vm1962, %v3934
      %v3967 = vld [vmem:[%s3278] sm:$0xe]
      %v3968 = vld [vmem:[%s3278 + $0x4] sm:$0xf]
      %v3969 = vld [vmem:[%s3278 + $0x8] sm:$0x1]
      %v3970 = vld [vmem:[%s3278 + $0xc] sm:$0xe]
      %v3971 = vld [vmem:[%s3278 + $0x10] sm:$0xf]
      %v3972 = vld [vmem:[%s3278 + $0x14] sm:$0x1]
      %v3973 = vld [vmem:[%s3278 + $0x18] sm:$0xe]
      %v3974 = vld [vmem:[%s3278 + $0x1c] sm:$0xf]
      %v3975 = vld [vmem:[%s3278 + $0x20] sm:$0x1]
      %v3976 = vld [vmem:[%s3278 + $0x24] sm:$0xe]
      %v3977 = vld [vmem:[%s3278 + $0x28] sm:$0xf]
      %v3978 = vld [vmem:[%s3278 + $0x2c] sm:$0x1]
      %v3979 = vld [vmem:[%s3278 + $0x30] sm:$0xe]
      %v3980 = vld [vmem:[%s3278 + $0x34] sm:$0xf]
      %v3981 = vld [vmem:[%s3278 + $0x38] sm:$0x1]
      %v3982 = vld [vmem:[%s3278 + $0x3c] sm:$0xe]
      %v3983 = vld [vmem:[%s3278 + $0x40] sm:$0xf]
      %v3984 = vld [vmem:[%s3278 + $0x44] sm:$0x1]
      %v3985 = vld [vmem:[%s3278 + $0x48] sm:$0xe]
      %v3986 = vld [vmem:[%s3278 + $0x4c] sm:$0xf]
      %v3987 = vld [vmem:[%s3278 + $0x50] sm:$0x1]
      %v3988 = vld [vmem:[%s3278 + $0x54] sm:$0xe]
      %v3989 = vld [vmem:[%s3278 + $0x58] sm:$0xf]
      %v3990 = vld [vmem:[%s3278 + $0x5c] sm:$0x1]
      %v3991 = vld [vmem:[%s3278 + $0x60] sm:$0xe]
      %v3992 = vld [vmem:[%s3278 + $0x64] sm:$0xf]
      %v3993 = vld [vmem:[%s3278 + $0x68] sm:$0x1]
      %v3994 = vld [vmem:[%s3278 + $0x6c] sm:$0xe]
      %v3995 = vld [vmem:[%s3278 + $0x70] sm:$0xf]
      %v3996 = vld [vmem:[%s3278 + $0x74] sm:$0x1]
      %v3997 = vld [vmem:[%s3278 + $0x78] sm:$0xe]
      %v3998 = vld [vmem:[%s3278 + $0x7c] sm:$0xf]
      %v3999 = vld [vmem:[%s3278 + $0x80] sm:$0x1]
      %v4000 = vld [vmem:[%s3278 + $0x84] sm:$0xe]
      %v4001 = vld [vmem:[%s3278 + $0x88] sm:$0xf]
      %v4002 = vld [vmem:[%s3278 + $0x8c] sm:$0x1]
      %v4003 = vld [vmem:[%s3278 + $0x90] sm:$0xe]
      %v4004 = vld [vmem:[%s3278 + $0x94] sm:$0xf]
      %v4005 = vld [vmem:[%s3278 + $0x98] sm:$0x1]
      %v4006 = vld [vmem:[%s3278 + $0x9c] sm:$0xe]
      %v4007 = vld [vmem:[%s3278 + $0xa0] sm:$0xf]
      %v4008 = vld [vmem:[%s3278 + $0xa4] sm:$0x1]
      %v4009 = vld [vmem:[%s3278 + $0xa8] sm:$0xe]
      %v4010 = vld [vmem:[%s3278 + $0xac] sm:$0xf]
      %v4011 = vld [vmem:[%s3278 + $0xb0] sm:$0x1]
      %v4012 = vld [vmem:[%s3278 + $0xb4] sm:$0xe]
      %v4013 = vld [vmem:[%s3278 + $0xb8] sm:$0xf]
      %v4014 = vld [vmem:[%s3278 + $0xbc] sm:$0x1]
      %v4063 = vrot.slane %v3967, 5
      %v4064 = vrot.slane %v4063, 4
      %v4065 = vrot.slane %v3968, 5
      %v4066 = vsel %vm2077, %v4064, %v4065
      %v4067 = vrot.slane %v4065, 4
      %v4068 = vrot.slane %v3969, 5
      %v4069 = vsel %vm2077, %v4067, %v4068
      %v4070 = vrot.slane %v3970, 5
      %v4071 = vrot.slane %v4070, 4
      %v4072 = vrot.slane %v3971, 5
      %v4073 = vsel %vm2077, %v4071, %v4072
      %v4074 = vrot.slane %v4072, 4
      %v4075 = vrot.slane %v3972, 5
      %v4076 = vsel %vm2077, %v4074, %v4075
      %v4077 = vrot.slane %v3973, 5
      %v4078 = vrot.slane %v4077, 4
      %v4079 = vrot.slane %v3974, 5
      %v4080 = vsel %vm2077, %v4078, %v4079
      %v4081 = vrot.slane %v4079, 4
      %v4082 = vrot.slane %v3975, 5
      %v4083 = vsel %vm2077, %v4081, %v4082
      %v4084 = vrot.slane %v3976, 5
      %v4085 = vrot.slane %v4084, 4
      %v4086 = vrot.slane %v3977, 5
      %v4087 = vsel %vm2077, %v4085, %v4086
      %v4088 = vrot.slane %v4086, 4
      %v4089 = vrot.slane %v3978, 5
      %v4090 = vsel %vm2077, %v4088, %v4089
      %v4091 = vrot.slane %v3979, 5
      %v4092 = vrot.slane %v4091, 4
      %v4093 = vrot.slane %v3980, 5
      %v4094 = vsel %vm2077, %v4092, %v4093
      %v4095 = vrot.slane %v4093, 4
      %v4096 = vrot.slane %v3981, 5
      %v4097 = vsel %vm2077, %v4095, %v4096
      %v4098 = vrot.slane %v3982, 5
      %v4099 = vrot.slane %v4098, 4
      %v4100 = vrot.slane %v3983, 5
      %v4101 = vsel %vm2077, %v4099, %v4100
      %v4102 = vrot.slane %v4100, 4
      %v4103 = vrot.slane %v3984, 5
      %v4104 = vsel %vm2077, %v4102, %v4103
      %v4105 = vrot.slane %v3985, 5
      %v4106 = vrot.slane %v4105, 4
      %v4107 = vrot.slane %v3986, 5
      %v4108 = vsel %vm2077, %v4106, %v4107
      %v4109 = vrot.slane %v4107, 4
      %v4110 = vrot.slane %v3987, 5
      %v4111 = vsel %vm2077, %v4109, %v4110
      %v4112 = vrot.slane %v3988, 5
      %v4113 = vrot.slane %v4112, 4
      %v4114 = vrot.slane %v3989, 5
      %v4115 = vsel %vm2077, %v4113, %v4114
      %v4116 = vrot.slane %v4114, 4
      %v4117 = vrot.slane %v3990, 5
      %v4118 = vsel %vm2077, %v4116, %v4117
      %v4119 = vrot.slane %v3991, 5
      %v4120 = vrot.slane %v4119, 4
      %v4121 = vrot.slane %v3992, 5
      %v4122 = vsel %vm2077, %v4120, %v4121
      %v4123 = vrot.slane %v4121, 4
      %v4124 = vrot.slane %v3993, 5
      %v4125 = vsel %vm2077, %v4123, %v4124
      %v4126 = vrot.slane %v3994, 5
      %v4127 = vrot.slane %v4126, 4
      %v4128 = vrot.slane %v3995, 5
      %v4129 = vsel %vm2077, %v4127, %v4128
      %v4130 = vrot.slane %v4128, 4
      %v4131 = vrot.slane %v3996, 5
      %v4132 = vsel %vm2077, %v4130, %v4131
      %v4133 = vrot.slane %v3997, 5
      %v4134 = vrot.slane %v4133, 4
      %v4135 = vrot.slane %v3998, 5
      %v4136 = vsel %vm2077, %v4134, %v4135
      %v4137 = vrot.slane %v4135, 4
      %v4138 = vrot.slane %v3999, 5
      %v4139 = vsel %vm2077, %v4137, %v4138
      %v4140 = vrot.slane %v4000, 5
      %v4141 = vrot.slane %v4140, 4
      %v4142 = vrot.slane %v4001, 5
      %v4143 = vsel %vm2077, %v4141, %v4142
      %v4144 = vrot.slane %v4142, 4
      %v4145 = vrot.slane %v4002, 5
      %v4146 = vsel %vm2077, %v4144, %v4145
      %v4147 = vrot.slane %v4003, 5
      %v4148 = vrot.slane %v4147, 4
      %v4149 = vrot.slane %v4004, 5
      %v4150 = vsel %vm2077, %v4148, %v4149
      %v4151 = vrot.slane %v4149, 4
      %v4152 = vrot.slane %v4005, 5
      %v4153 = vsel %vm2077, %v4151, %v4152
      %v4154 = vrot.slane %v4006, 5
      %v4155 = vrot.slane %v4154, 4
      %v4156 = vrot.slane %v4007, 5
      %v4157 = vsel %vm2077, %v4155, %v4156
      %v4158 = vrot.slane %v4156, 4
      %v4159 = vrot.slane %v4008, 5
      %v4160 = vsel %vm2077, %v4158, %v4159
      %v4161 = vrot.slane %v4009, 5
      %v4162 = vrot.slane %v4161, 4
      %v4163 = vrot.slane %v4010, 5
      %v4164 = vsel %vm2077, %v4162, %v4163
      %v4165 = vrot.slane %v4163, 4
      %v4166 = vrot.slane %v4011, 5
      %v4167 = vsel %vm2077, %v4165, %v4166
      %v4168 = vrot.slane %v4012, 5
      %v4169 = vrot.slane %v4168, 4
      %v4170 = vrot.slane %v4013, 5
      %v4171 = vsel %vm2077, %v4169, %v4170
      %v4172 = vrot.slane %v4170, 4
      %v4173 = vrot.slane %v4014, 5
      %v4174 = vsel %vm2077, %v4172, %v4173
      %v4175 = vunpack.c.l.b16 %v4066
      %v4176 = vunpack.c.l.b16 %v4069
      %v4177 = vunpack.c.l.b16 %v4073
      %v4178 = vunpack.c.l.b16 %v4076
      %v4179 = vunpack.c.l.b16 %v4080
      %v4180 = vunpack.c.l.b16 %v4083
      %v4181 = vunpack.c.l.b16 %v4087
      %v4182 = vunpack.c.l.b16 %v4090
      %v4183 = vunpack.c.l.b16 %v4094
      %v4184 = vunpack.c.l.b16 %v4097
      %v4185 = vunpack.c.l.b16 %v4101
      %v4186 = vunpack.c.l.b16 %v4104
      %v4187 = vunpack.c.l.b16 %v4108
      %v4188 = vunpack.c.l.b16 %v4111
      %v4189 = vunpack.c.l.b16 %v4115
      %v4190 = vunpack.c.l.b16 %v4118
      %v4191 = vunpack.c.l.b16 %v4122
      %v4192 = vunpack.c.l.b16 %v4125
      %v4193 = vunpack.c.l.b16 %v4129
      %v4194 = vunpack.c.l.b16 %v4132
      %v4195 = vunpack.c.l.b16 %v4136
      %v4196 = vunpack.c.l.b16 %v4139
      %v4197 = vunpack.c.l.b16 %v4143
      %v4198 = vunpack.c.l.b16 %v4146
      %v4199 = vunpack.c.l.b16 %v4150
      %v4200 = vunpack.c.l.b16 %v4153
      %v4201 = vunpack.c.l.b16 %v4157
      %v4202 = vunpack.c.l.b16 %v4160
      %v4203 = vunpack.c.l.b16 %v4164
      %v4204 = vunpack.c.l.b16 %v4167
      %v4205 = vunpack.c.l.b16 %v4171
      %v4206 = vunpack.c.l.b16 %v4174
      %v4207 = vpack.c.b16 %v4176, %v4175
      %v4208 = vpack.c.b16 %v4178, %v4177
      %v4209 = vpack.c.b16 %v4180, %v4179
      %v4210 = vpack.c.b16 %v4182, %v4181
      %v4211 = vpack.c.b16 %v4184, %v4183
      %v4212 = vpack.c.b16 %v4186, %v4185
      %v4213 = vpack.c.b16 %v4188, %v4187
      %v4214 = vpack.c.b16 %v4190, %v4189
      %v4215 = vpack.c.b16 %v4192, %v4191
      %v4216 = vpack.c.b16 %v4194, %v4193
      %v4217 = vpack.c.b16 %v4196, %v4195
      %v4218 = vpack.c.b16 %v4198, %v4197
      %v4219 = vpack.c.b16 %v4200, %v4199
      %v4220 = vpack.c.b16 %v4202, %v4201
      %v4221 = vpack.c.b16 %v4204, %v4203
      %v4222 = vpack.c.b16 %v4206, %v4205
      %4239 = vst.msk [vmem:[#allocation3 + $0x20] sm:$0xff] %vm1414, %v4207
      %4240 = vst.msk [vmem:[#allocation3 + $0x48] sm:$0xff] %vm1414, %v4208
      %4241 = vst.msk [vmem:[#allocation3 + $0x70] sm:$0xff] %vm1414, %v4209
      %4242 = vst.msk [vmem:[#allocation3 + $0x98] sm:$0xff] %vm1414, %v4210
      %4243 = vst.msk [vmem:[#allocation3 + $0xc0] sm:$0xff] %vm1414, %v4211
      %4244 = vst.msk [vmem:[#allocation3 + $0xe8] sm:$0xff] %vm1414, %v4212
      %4245 = vst.msk [vmem:[#allocation3 + $0x110] sm:$0xff] %vm1414, %v4213
      %4246 = vst.msk [vmem:[#allocation3 + $0x138] sm:$0xff] %vm1414, %v4214
      %4247 = vst.msk [vmem:[#allocation3 + $0x160] sm:$0xff] %vm1414, %v4215
      %4248 = vst.msk [vmem:[#allocation3 + $0x188] sm:$0xff] %vm1414, %v4216
      %4249 = vst.msk [vmem:[#allocation3 + $0x1b0] sm:$0xff] %vm1414, %v4217
      %4250 = vst.msk [vmem:[#allocation3 + $0x1d8] sm:$0xff] %vm1414, %v4218
      %4251 = vst.msk [vmem:[#allocation3 + $0x200] sm:$0xff] %vm1414, %v4219
      %4252 = vst.msk [vmem:[#allocation3 + $0x228] sm:$0xff] %vm1414, %v4220
      %4253 = vst.msk [vmem:[#allocation3 + $0x250] sm:$0xff] %vm1414, %v4221
      %4254 = vst.msk [vmem:[#allocation3 + $0x278] sm:$0xff] %vm1414, %v4222
      %v4255 = vld [vmem:[#allocation3] sm:$0xff]
      %v4256 = vld [vmem:[#allocation3 + $0x8] sm:$0xff]
      %v4257 = vld [vmem:[#allocation3 + $0x10] sm:$0xff]
      %v4258 = vld [vmem:[#allocation3 + $0x18] sm:$0xff]
      %v4259 = vld [vmem:[#allocation3 + $0x20] sm:$0xff]
      %v4260 = vld [vmem:[#allocation3 + $0x28] sm:$0xff]
      %v4261 = vld [vmem:[#allocation3 + $0x30] sm:$0xff]
      %v4262 = vld [vmem:[#allocation3 + $0x38] sm:$0xff]
      %v4263 = vld [vmem:[#allocation3 + $0x40] sm:$0xff]
      %v4264 = vld [vmem:[#allocation3 + $0x48] sm:$0xff]
      %v4265 = vld [vmem:[#allocation3 + $0x50] sm:$0xff]
      %v4266 = vld [vmem:[#allocation3 + $0x58] sm:$0xff]
      %v4267 = vld [vmem:[#allocation3 + $0x60] sm:$0xff]
      %v4268 = vld [vmem:[#allocation3 + $0x68] sm:$0xff]
      %v4269 = vld [vmem:[#allocation3 + $0x70] sm:$0xff]
      %v4270 = vld [vmem:[#allocation3 + $0x78] sm:$0xff]
      %v4271 = vld [vmem:[#allocation3 + $0x80] sm:$0xff]
      %v4272 = vld [vmem:[#allocation3 + $0x88] sm:$0xff]
      %v4273 = vld [vmem:[#allocation3 + $0x90] sm:$0xff]
      %v4274 = vld [vmem:[#allocation3 + $0x98] sm:$0xff]
      %v4275 = vld [vmem:[#allocation3 + $0xa0] sm:$0xff]
      %v4276 = vld [vmem:[#allocation3 + $0xa8] sm:$0xff]
      %v4277 = vld [vmem:[#allocation3 + $0xb0] sm:$0xff]
      %v4278 = vld [vmem:[#allocation3 + $0xb8] sm:$0xff]
      %v4279 = vld [vmem:[#allocation3 + $0xc0] sm:$0xff]
      %v4280 = vld [vmem:[#allocation3 + $0xc8] sm:$0xff]
      %v4281 = vld [vmem:[#allocation3 + $0xd0] sm:$0xff]
      %v4282 = vld [vmem:[#allocation3 + $0xd8] sm:$0xff]
      %v4283 = vld [vmem:[#allocation3 + $0xe0] sm:$0xff]
      %v4284 = vld [vmem:[#allocation3 + $0xe8] sm:$0xff]
      %v4285 = vld [vmem:[#allocation3 + $0xf0] sm:$0xff]
      %v4286 = vld [vmem:[#allocation3 + $0xf8] sm:$0xff]
      %v4287 = vld [vmem:[#allocation3 + $0x100] sm:$0xff]
      %v4288 = vld [vmem:[#allocation3 + $0x108] sm:$0xff]
      %v4289 = vld [vmem:[#allocation3 + $0x110] sm:$0xff]
      %v4290 = vld [vmem:[#allocation3 + $0x118] sm:$0xff]
      %v4291 = vld [vmem:[#allocation3 + $0x120] sm:$0xff]
      %v4292 = vld [vmem:[#allocation3 + $0x128] sm:$0xff]
      %v4293 = vld [vmem:[#allocation3 + $0x130] sm:$0xff]
      %v4294 = vld [vmem:[#allocation3 + $0x138] sm:$0xff]
      %v4295 = vld [vmem:[#allocation3 + $0x140] sm:$0xff]
      %v4296 = vld [vmem:[#allocation3 + $0x148] sm:$0xff]
      %v4297 = vld [vmem:[#allocation3 + $0x150] sm:$0xff]
      %v4298 = vld [vmem:[#allocation3 + $0x158] sm:$0xff]
      %v4299 = vld [vmem:[#allocation3 + $0x160] sm:$0xff]
      %v4300 = vld [vmem:[#allocation3 + $0x168] sm:$0xff]
      %v4301 = vld [vmem:[#allocation3 + $0x170] sm:$0xff]
      %v4302 = vld [vmem:[#allocation3 + $0x178] sm:$0xff]
      %v4303 = vld [vmem:[#allocation3 + $0x180] sm:$0xff]
      %v4304 = vld [vmem:[#allocation3 + $0x188] sm:$0xff]
      %v4305 = vld [vmem:[#allocation3 + $0x190] sm:$0xff]
      %v4306 = vld [vmem:[#allocation3 + $0x198] sm:$0xff]
      %v4307 = vld [vmem:[#allocation3 + $0x1a0] sm:$0xff]
      %v4308 = vld [vmem:[#allocation3 + $0x1a8] sm:$0xff]
      %v4309 = vld [vmem:[#allocation3 + $0x1b0] sm:$0xff]
      %v4310 = vld [vmem:[#allocation3 + $0x1b8] sm:$0xff]
      %v4311 = vld [vmem:[#allocation3 + $0x1c0] sm:$0xff]
      %v4312 = vld [vmem:[#allocation3 + $0x1c8] sm:$0xff]
      %v4313 = vld [vmem:[#allocation3 + $0x1d0] sm:$0xff]
      %v4314 = vld [vmem:[#allocation3 + $0x1d8] sm:$0xff]
      %v4315 = vld [vmem:[#allocation3 + $0x1e0] sm:$0xff]
      %v4316 = vld [vmem:[#allocation3 + $0x1e8] sm:$0xff]
      %v4317 = vld [vmem:[#allocation3 + $0x1f0] sm:$0xff]
      %v4318 = vld [vmem:[#allocation3 + $0x1f8] sm:$0xff]
      %v4319 = vld [vmem:[#allocation3 + $0x200] sm:$0xff]
      %v4320 = vld [vmem:[#allocation3 + $0x208] sm:$0xff]
      %v4321 = vld [vmem:[#allocation3 + $0x210] sm:$0xff]
      %v4322 = vld [vmem:[#allocation3 + $0x218] sm:$0xff]
      %v4323 = vld [vmem:[#allocation3 + $0x220] sm:$0xff]
      %v4324 = vld [vmem:[#allocation3 + $0x228] sm:$0xff]
      %v4325 = vld [vmem:[#allocation3 + $0x230] sm:$0xff]
      %v4326 = vld [vmem:[#allocation3 + $0x238] sm:$0xff]
      %v4327 = vld [vmem:[#allocation3 + $0x240] sm:$0xff]
      %v4328 = vld [vmem:[#allocation3 + $0x248] sm:$0xff]
      %v4329 = vld [vmem:[#allocation3 + $0x250] sm:$0xff]
      %v4330 = vld [vmem:[#allocation3 + $0x258] sm:$0xff]
      %v4331 = vld [vmem:[#allocation3 + $0x260] sm:$0xff]
      %v4332 = vld [vmem:[#allocation3 + $0x268] sm:$0xff]
      %v4333 = vld [vmem:[#allocation3 + $0x270] sm:$0xff]
      %v4334 = vld [vmem:[#allocation3 + $0x278] sm:$0xff]
      %v4335 = vld [vmem:[%s2] sm:$0xf]
      %v4336 = vld [vmem:[%s2 + $0x4] sm:$0xf]
      %v4337 = vld [vmem:[%s2 + $0x8] sm:$0xf]
      %v4338 = vld [vmem:[%s2 + $0xc] sm:$0xf]
      %v4339 = vld [vmem:[%s2 + $0x10] sm:$0xf]
      %v4340 = vld [vmem:[%s2 + $0x14] sm:$0xf]
      %v4341 = vld [vmem:[%s2 + $0x18] sm:$0xf]
      %v4342 = vld [vmem:[%s2 + $0x1c] sm:$0xf]
      %v4343 = vld [vmem:[%s2 + $0x20] sm:$0xf]
      %v4344 = vld [vmem:[%s2 + $0x24] sm:$0xf]
      %v4345 = vld [vmem:[%s2 + $0x28] sm:$0xf]
      %v4346 = vld [vmem:[%s2 + $0x2c] sm:$0xf]
      %v4347 = vld [vmem:[%s2 + $0x30] sm:$0xf]
      %v4348 = vld [vmem:[%s2 + $0x34] sm:$0xf]
      %v4349 = vld [vmem:[%s2 + $0x38] sm:$0xf]
      %v4350 = vld [vmem:[%s2 + $0x3c] sm:$0xf]
      %v4351 = vld [vmem:[%s2 + $0x40] sm:$0xf]
      %v4352 = vld [vmem:[%s2 + $0x44] sm:$0xf]
      %v4353 = vld [vmem:[%s2 + $0x48] sm:$0xf]
      %v4354 = vld [vmem:[%s2 + $0x4c] sm:$0xf]
      %v4355 = vld [vmem:[%s2 + $0x50] sm:$0xf]
      %v4356 = vld [vmem:[%s2 + $0x54] sm:$0xf]
      %v4357 = vld [vmem:[%s2 + $0x58] sm:$0xf]
      %v4358 = vld [vmem:[%s2 + $0x5c] sm:$0xf]
      %v4359 = vld [vmem:[%s2 + $0x60] sm:$0xf]
      %v4360 = vld [vmem:[%s2 + $0x64] sm:$0xf]
      %v4361 = vld [vmem:[%s2 + $0x68] sm:$0xf]
      %v4362 = vld [vmem:[%s2 + $0x6c] sm:$0xf]
      %v4363 = vld [vmem:[%s2 + $0x70] sm:$0xf]
      %v4364 = vld [vmem:[%s2 + $0x74] sm:$0xf]
      %v4365 = vld [vmem:[%s2 + $0x78] sm:$0xf]
      %v4366 = vld [vmem:[%s2 + $0x7c] sm:$0xf]
      %v4367 = vld [vmem:[%s2 + $0x80] sm:$0xf]
      %v4368 = vld [vmem:[%s2 + $0x84] sm:$0xf]
      %v4369 = vld [vmem:[%s2 + $0x88] sm:$0xf]
      %v4370 = vld [vmem:[%s2 + $0x8c] sm:$0xf]
      %v4371 = vld [vmem:[%s2 + $0x90] sm:$0xf]
      %v4372 = vld [vmem:[%s2 + $0x94] sm:$0xf]
      %v4373 = vld [vmem:[%s2 + $0x98] sm:$0xf]
      %v4374 = vld [vmem:[%s2 + $0x9c] sm:$0xf]
      %v4375 = vld [vmem:[%s2 + $0xa0] sm:$0xf]
      %v4376 = vld [vmem:[%s2 + $0xa4] sm:$0xf]
      %v4377 = vld [vmem:[%s2 + $0xa8] sm:$0xf]
      %v4378 = vld [vmem:[%s2 + $0xac] sm:$0xf]
      %v4379 = vld [vmem:[%s2 + $0xb0] sm:$0xf]
      %v4380 = vld [vmem:[%s2 + $0xb4] sm:$0xf]
      %v4381 = vld [vmem:[%s2 + $0xb8] sm:$0xf]
      %v4382 = vld [vmem:[%s2 + $0xbc] sm:$0xf]
      %v4383 = vld [vmem:[%s2 + $0xc0] sm:$0xf]
      %v4384 = vld [vmem:[%s2 + $0xc4] sm:$0xf]
      %v4385 = vld [vmem:[%s2 + $0xc8] sm:$0xf]
      %v4386 = vld [vmem:[%s2 + $0xcc] sm:$0xf]
      %v4387 = vld [vmem:[%s2 + $0xd0] sm:$0xf]
      %v4388 = vld [vmem:[%s2 + $0xd4] sm:$0xf]
      %v4389 = vld [vmem:[%s2 + $0xd8] sm:$0xf]
      %v4390 = vld [vmem:[%s2 + $0xdc] sm:$0xf]
      %v4391 = vld [vmem:[%s2 + $0xe0] sm:$0xf]
      %v4392 = vld [vmem:[%s2 + $0xe4] sm:$0xf]
      %v4393 = vld [vmem:[%s2 + $0xe8] sm:$0xf]
      %v4394 = vld [vmem:[%s2 + $0xec] sm:$0xf]
      %v4395 = vld [vmem:[%s2 + $0xf0] sm:$0xf]
      %v4396 = vld [vmem:[%s2 + $0xf4] sm:$0xf]
      %v4397 = vld [vmem:[%s2 + $0xf8] sm:$0xf]
      %v4398 = vld [vmem:[%s2 + $0xfc] sm:$0xf]
      %v4399 = vld [vmem:[%s2 + $0x100] sm:$0xf]
      %v4400 = vld [vmem:[%s2 + $0x104] sm:$0xf]
      %v4401 = vld [vmem:[%s2 + $0x108] sm:$0xf]
      %v4402 = vld [vmem:[%s2 + $0x10c] sm:$0xf]
      %v4403 = vld [vmem:[%s2 + $0x110] sm:$0xf]
      %v4404 = vld [vmem:[%s2 + $0x114] sm:$0xf]
      %v4405 = vld [vmem:[%s2 + $0x118] sm:$0xf]
      %v4406 = vld [vmem:[%s2 + $0x11c] sm:$0xf]
      %v4479 = vunpack.c.l.b16 %v4335
      %v4480 = vunpack.c.l.b16 %v4336
      %v4481 = vunpack.c.l.b16 %v4337
      %v4482 = vunpack.c.l.b16 %v4338
      %v4483 = vunpack.c.l.b16 %v4339
      %v4484 = vunpack.c.l.b16 %v4340
      %v4485 = vunpack.c.l.b16 %v4341
      %v4486 = vunpack.c.l.b16 %v4342
      %v4487 = vunpack.c.l.b16 %v4343
      %v4488 = vunpack.c.l.b16 %v4344
      %v4489 = vunpack.c.l.b16 %v4345
      %v4490 = vunpack.c.l.b16 %v4346
      %v4491 = vunpack.c.l.b16 %v4347
      %v4492 = vunpack.c.l.b16 %v4348
      %v4493 = vunpack.c.l.b16 %v4349
      %v4494 = vunpack.c.l.b16 %v4350
      %v4495 = vunpack.c.l.b16 %v4351
      %v4496 = vunpack.c.l.b16 %v4352
      %v4497 = vunpack.c.l.b16 %v4353
      %v4498 = vunpack.c.l.b16 %v4354
      %v4499 = vunpack.c.l.b16 %v4355
      %v4500 = vunpack.c.l.b16 %v4356
      %v4501 = vunpack.c.l.b16 %v4357
      %v4502 = vunpack.c.l.b16 %v4358
      %v4503 = vunpack.c.l.b16 %v4359
      %v4504 = vunpack.c.l.b16 %v4360
      %v4505 = vunpack.c.l.b16 %v4361
      %v4506 = vunpack.c.l.b16 %v4362
      %v4507 = vunpack.c.l.b16 %v4363
      %v4508 = vunpack.c.l.b16 %v4364
      %v4509 = vunpack.c.l.b16 %v4365
      %v4510 = vunpack.c.l.b16 %v4366
      %v4511 = vunpack.c.l.b16 %v4367
      %v4512 = vunpack.c.l.b16 %v4368
      %v4513 = vunpack.c.l.b16 %v4369
      %v4514 = vunpack.c.l.b16 %v4370
      %v4515 = vunpack.c.l.b16 %v4371
      %v4516 = vunpack.c.l.b16 %v4372
      %v4517 = vunpack.c.l.b16 %v4373
      %v4518 = vunpack.c.l.b16 %v4374
      %v4519 = vunpack.c.l.b16 %v4375
      %v4520 = vunpack.c.l.b16 %v4376
      %v4521 = vunpack.c.l.b16 %v4377
      %v4522 = vunpack.c.l.b16 %v4378
      %v4523 = vunpack.c.l.b16 %v4379
      %v4524 = vunpack.c.l.b16 %v4380
      %v4525 = vunpack.c.l.b16 %v4381
      %v4526 = vunpack.c.l.b16 %v4382
      %v4527 = vunpack.c.l.b16 %v4383
      %v4528 = vunpack.c.l.b16 %v4384
      %v4529 = vunpack.c.l.b16 %v4385
      %v4530 = vunpack.c.l.b16 %v4386
      %v4531 = vunpack.c.l.b16 %v4387
      %v4532 = vunpack.c.l.b16 %v4388
      %v4533 = vunpack.c.l.b16 %v4389
      %v4534 = vunpack.c.l.b16 %v4390
      %v4535 = vunpack.c.l.b16 %v4391
      %v4536 = vunpack.c.l.b16 %v4392
      %v4537 = vunpack.c.l.b16 %v4393
      %v4538 = vunpack.c.l.b16 %v4394
      %v4539 = vunpack.c.l.b16 %v4395
      %v4540 = vunpack.c.l.b16 %v4396
      %v4541 = vunpack.c.l.b16 %v4397
      %v4542 = vunpack.c.l.b16 %v4398
      %v4543 = vunpack.c.l.b16 %v4399
      %v4544 = vunpack.c.l.b16 %v4400
      %v4545 = vunpack.c.l.b16 %v4401
      %v4546 = vunpack.c.l.b16 %v4402
      %v4547 = vunpack.c.l.b16 %v4403
      %v4548 = vunpack.c.l.b16 %v4404
      %v4549 = vunpack.c.l.b16 %v4405
      %v4550 = vunpack.c.l.b16 %v4406
      %v4551 = vpack.c.b16 %v4480, %v4479
      %v4552 = vpack.c.b16 %v4482, %v4481
      %v4553 = vpack.c.b16 %v4484, %v4483
      %v4554 = vpack.c.b16 %v4486, %v4485
      %v4555 = vpack.c.b16 %v4488, %v4487
      %v4556 = vpack.c.b16 %v4490, %v4489
      %v4557 = vpack.c.b16 %v4492, %v4491
      %v4558 = vpack.c.b16 %v4494, %v4493
      %v4559 = vpack.c.b16 %v4496, %v4495
      %v4560 = vpack.c.b16 %v4498, %v4497
      %v4561 = vpack.c.b16 %v4500, %v4499
      %v4562 = vpack.c.b16 %v4502, %v4501
      %v4563 = vpack.c.b16 %v4504, %v4503
      %v4564 = vpack.c.b16 %v4506, %v4505
      %v4565 = vpack.c.b16 %v4508, %v4507
      %v4566 = vpack.c.b16 %v4510, %v4509
      %v4567 = vpack.c.b16 %v4512, %v4511
      %v4568 = vpack.c.b16 %v4514, %v4513
      %v4569 = vpack.c.b16 %v4516, %v4515
      %v4570 = vpack.c.b16 %v4518, %v4517
      %v4571 = vpack.c.b16 %v4520, %v4519
      %v4572 = vpack.c.b16 %v4522, %v4521
      %v4573 = vpack.c.b16 %v4524, %v4523
      %v4574 = vpack.c.b16 %v4526, %v4525
      %v4575 = vpack.c.b16 %v4528, %v4527
      %v4576 = vpack.c.b16 %v4530, %v4529
      %v4577 = vpack.c.b16 %v4532, %v4531
      %v4578 = vpack.c.b16 %v4534, %v4533
      %v4579 = vpack.c.b16 %v4536, %v4535
      %v4580 = vpack.c.b16 %v4538, %v4537
      %v4581 = vpack.c.b16 %v4540, %v4539
      %v4582 = vpack.c.b16 %v4542, %v4541
      %v4583 = vpack.c.b16 %v4544, %v4543
      %v4584 = vpack.c.b16 %v4546, %v4545
      %v4585 = vpack.c.b16 %v4548, %v4547
      %v4586 = vpack.c.b16 %v4550, %v4549
      %v4624 = vsel %vm1414, %v4259, 0
      %v4627 = vsel %vm1414, %v4264, 0
      %v4630 = vsel %vm1414, %v4269, 0
      %v4633 = vsel %vm1414, %v4274, 0
      %v4636 = vsel %vm1414, %v4279, 0
      %v4639 = vsel %vm1414, %v4284, 0
      %v4642 = vsel %vm1414, %v4289, 0
      %v4645 = vsel %vm1414, %v4294, 0
      %v4648 = vsel %vm1414, %v4299, 0
      %v4651 = vsel %vm1414, %v4304, 0
      %v4654 = vsel %vm1414, %v4309, 0
      %v4657 = vsel %vm1414, %v4314, 0
      %v4660 = vsel %vm1414, %v4319, 0
      %v4663 = vsel %vm1414, %v4324, 0
      %v4666 = vsel %vm1414, %v4329, 0
      %v4669 = vsel %vm1414, %v4334, 0
      %4671 = vmatprep.subr.bf16.mxu0 0
      %4672 = vmatpush1.bf16.msra.mxu0 %v4551
      %4673 = vmatprep.subr.bf16.mxu0 0
      %4674 = vmatpush1.bf16.msra.mxu0 %v4552
      %4675 = vmatprep.subr.bf16.mxu0 0
      %4676 = vmatpush1.bf16.msra.mxu0 %v4553
      %4677 = vmatprep.subr.bf16.mxu0 0
      %4678 = vmatpush1.bf16.msra.mxu0 %v4554
      %4679 = vmatprep.subr.bf16.mxu0 0
      %4680 = vmatpush1.bf16.msra.mxu0 %v4555
      %4681 = vmatprep.subr.bf16.mxu0 0
      %4682 = vmatpush1.bf16.msra.mxu0 %v4556
      %4683 = vmatprep.subr.bf16.mxu0 0
      %4684 = vmatpush1.bf16.msra.mxu0 %v4557
      %4685 = vmatprep.subr.bf16.mxu0 0
      %4686 = vmatpush1.bf16.msra.mxu0 %v4558
      %4687 = vmatprep.subr.bf16.mxu0 0
      %4688 = vmatpush1.bf16.msra.mxu0 %v4559
      %4689 = vmatprep.subr.bf16.mxu0 0
      %4690 = vmatpush1.bf16.msra.mxu0 %v4560
      %4691 = vmatprep.subr.bf16.mxu0 0
      %4692 = vmatpush1.bf16.msra.mxu0 %v4561
      %4693 = vmatprep.subr.bf16.mxu0 0
      %4694 = vmatpush1.bf16.msra.mxu0 %v4562
      %4695 = vmatprep.subr.bf16.mxu0 0
      %4696 = vmatpush1.bf16.msra.mxu0 %v4563
      %4697 = vmatprep.subr.bf16.mxu0 0
      %4698 = vmatpush1.bf16.msra.mxu0 %v4564
      %4699 = vmatprep.subr.bf16.mxu0 0
      %4700 = vmatpush1.bf16.msra.mxu0 %v4565
      %4701 = vmatprep.subr.bf16.mxu0 0
      %4702 = vmatpush1.bf16.msra.mxu0 %v4566
      %4703 = vmatprep.mubr.bf16.mxu0 %v4256
      %4704 = vmatmul.mubr.bf16.gmra.mrb[0].mxu0 %v4255
      %v4705 = vpop.f32.mrb[0].mxu0
      %v4706 = vadd.f32 0.0, %v4705
      %v4707 = vpop.f32.mrb[0].mxu0
      %v4708 = vpop.f32.mrb[0].mxu0
      %v4709 = vadd.f32 0.0, %v4708
      %v4710 = vpop.f32.mrb[0].mxu0
      %4711 = vmatprep.mubr.bf16.mxu0 %v4261
      %4712 = vmatmul.mubr.bf16.gmra.mrb[0].mxu0 %v4260
      %v4713 = vpop.f32.mrb[0].mxu0
      %v4714 = vadd.f32 0.0, %v4713
      %v4715 = vpop.f32.mrb[0].mxu0
      %v4716 = vpop.f32.mrb[0].mxu0
      %v4717 = vadd.f32 0.0, %v4716
      %v4718 = vpop.f32.mrb[0].mxu0
      %4719 = vmatprep.mubr.bf16.mxu0 %v4266
      %4720 = vmatmul.mubr.bf16.gmra.mrb[0].mxu0 %v4265
      %v4721 = vpop.f32.mrb[0].mxu0
      %v4722 = vadd.f32 0.0, %v4721
      %v4723 = vpop.f32.mrb[0].mxu0
      %v4724 = vpop.f32.mrb[0].mxu0
      %v4725 = vadd.f32 0.0, %v4724
      %v4726 = vpop.f32.mrb[0].mxu0
      %4727 = vmatprep.mubr.bf16.mxu0 %v4271
      %4728 = vmatmul.mubr.bf16.gmra.mrb[0].mxu0 %v4270
      %v4729 = vpop.f32.mrb[0].mxu0
      %v4730 = vadd.f32 0.0, %v4729
      %v4731 = vpop.f32.mrb[0].mxu0
      %v4732 = vpop.f32.mrb[0].mxu0
      %v4733 = vadd.f32 0.0, %v4732
      %v4734 = vpop.f32.mrb[0].mxu0
      %4735 = vmatprep.mubr.bf16.mxu0 %v4276
      %4736 = vmatmul.mubr.bf16.gmra.mrb[0].mxu0 %v4275
      %v4737 = vpop.f32.mrb[0].mxu0
      %v4738 = vadd.f32 0.0, %v4737
      %v4739 = vpop.f32.mrb[0].mxu0
      %v4740 = vpop.f32.mrb[0].mxu0
      %v4741 = vadd.f32 0.0, %v4740
      %v4742 = vpop.f32.mrb[0].mxu0
      %4743 = vmatprep.mubr.bf16.mxu0 %v4281
      %4744 = vmatmul.mubr.bf16.gmra.mrb[0].mxu0 %v4280
      %v4745 = vpop.f32.mrb[0].mxu0
      %v4746 = vadd.f32 0.0, %v4745
      %v4747 = vpop.f32.mrb[0].mxu0
      %v4748 = vpop.f32.mrb[0].mxu0
      %v4749 = vadd.f32 0.0, %v4748
      %v4750 = vpop.f32.mrb[0].mxu0
      %4751 = vmatprep.mubr.bf16.mxu0 %v4286
      %4752 = vmatmul.mubr.bf16.gmra.mrb[0].mxu0 %v4285
      %v4753 = vpop.f32.mrb[0].mxu0
      %v4754 = vadd.f32 0.0, %v4753
      %v4755 = vpop.f32.mrb[0].mxu0
      %v4756 = vpop.f32.mrb[0].mxu0
      %v4757 = vadd.f32 0.0, %v4756
      %v4758 = vpop.f32.mrb[0].mxu0
      %4759 = vmatprep.mubr.bf16.mxu0 %v4291
      %4760 = vmatmul.mubr.bf16.gmra.mrb[0].mxu0 %v4290
      %v4761 = vpop.f32.mrb[0].mxu0
      %v4762 = vadd.f32 0.0, %v4761
      %v4763 = vpop.f32.mrb[0].mxu0
      %v4764 = vpop.f32.mrb[0].mxu0
      %v4765 = vadd.f32 0.0, %v4764
      %v4766 = vpop.f32.mrb[0].mxu0
      %4767 = vmatprep.mubr.bf16.mxu0 %v4296
      %4768 = vmatmul.mubr.bf16.gmra.mrb[0].mxu0 %v4295
      %v4769 = vpop.f32.mrb[0].mxu0
      %v4770 = vadd.f32 0.0, %v4769
      %v4771 = vpop.f32.mrb[0].mxu0
      %v4772 = vpop.f32.mrb[0].mxu0
      %v4773 = vadd.f32 0.0, %v4772
      %v4774 = vpop.f32.mrb[0].mxu0
      %4775 = vmatprep.mubr.bf16.mxu0 %v4301
      %4776 = vmatmul.mubr.bf16.gmra.mrb[0].mxu0 %v4300
      %v4777 = vpop.f32.mrb[0].mxu0
      %v4778 = vadd.f32 0.0, %v4777
      %v4779 = vpop.f32.mrb[0].mxu0
      %v4780 = vpop.f32.mrb[0].mxu0
      %v4781 = vadd.f32 0.0, %v4780
      %v4782 = vpop.f32.mrb[0].mxu0
      %4783 = vmatprep.mubr.bf16.mxu0 %v4306
      %4784 = vmatmul.mubr.bf16.gmra.mrb[0].mxu0 %v4305
      %v4785 = vpop.f32.mrb[0].mxu0
      %v4786 = vadd.f32 0.0, %v4785
      %v4787 = vpop.f32.mrb[0].mxu0
      %v4788 = vpop.f32.mrb[0].mxu0
      %v4789 = vadd.f32 0.0, %v4788
      %v4790 = vpop.f32.mrb[0].mxu0
      %4791 = vmatprep.mubr.bf16.mxu0 %v4311
      %4792 = vmatmul.mubr.bf16.gmra.mrb[0].mxu0 %v4310
      %v4793 = vpop.f32.mrb[0].mxu0
      %v4794 = vadd.f32 0.0, %v4793
      %v4795 = vpop.f32.mrb[0].mxu0
      %v4796 = vpop.f32.mrb[0].mxu0
      %v4797 = vadd.f32 0.0, %v4796
      %v4798 = vpop.f32.mrb[0].mxu0
      %4799 = vmatprep.mubr.bf16.mxu0 %v4316
      %4800 = vmatmul.mubr.bf16.gmra.mrb[0].mxu0 %v4315
      %v4801 = vpop.f32.mrb[0].mxu0
      %v4802 = vadd.f32 0.0, %v4801
      %v4803 = vpop.f32.mrb[0].mxu0
      %v4804 = vpop.f32.mrb[0].mxu0
      %v4805 = vadd.f32 0.0, %v4804
      %v4806 = vpop.f32.mrb[0].mxu0
      %4807 = vmatprep.mubr.bf16.mxu0 %v4321
      %4808 = vmatmul.mubr.bf16.gmra.mrb[0].mxu0 %v4320
      %v4809 = vpop.f32.mrb[0].mxu0
      %v4810 = vadd.f32 0.0, %v4809
      %v4811 = vpop.f32.mrb[0].mxu0
      %v4812 = vpop.f32.mrb[0].mxu0
      %v4813 = vadd.f32 0.0, %v4812
      %v4814 = vpop.f32.mrb[0].mxu0
      %4815 = vmatprep.mubr.bf16.mxu0 %v4326
      %4816 = vmatmul.mubr.bf16.gmra.mrb[0].mxu0 %v4325
      %v4817 = vpop.f32.mrb[0].mxu0
      %v4818 = vadd.f32 0.0, %v4817
      %v4819 = vpop.f32.mrb[0].mxu0
      %v4820 = vpop.f32.mrb[0].mxu0
      %v4821 = vadd.f32 0.0, %v4820
      %v4822 = vpop.f32.mrb[0].mxu0
      %4823 = vmatprep.mubr.bf16.mxu0 %v4331
      %4824 = vmatmul.mubr.bf16.gmra.mrb[0].mxu0 %v4330
      %v4825 = vpop.f32.mrb[0].mxu0
      %v4826 = vadd.f32 0.0, %v4825
      %v4827 = vpop.f32.mrb[0].mxu0
      %v4828 = vpop.f32.mrb[0].mxu0
      %v4829 = vadd.f32 0.0, %v4828
      %v4830 = vpop.f32.mrb[0].mxu0
      %4831 = vdwg.mxu0
      %4832 = vmatprep.subr.bf16.mxu0 0
      %4833 = vmatpush1.bf16.msra.mxu0 %v4567
      %4834 = vmatprep.subr.bf16.mxu0 0
      %4835 = vmatpush1.bf16.msra.mxu0 %v4568
      %4836 = vmatprep.subr.bf16.mxu0 0
      %4837 = vmatpush1.bf16.msra.mxu0 %v4569
      %4838 = vmatprep.subr.bf16.mxu0 0
      %4839 = vmatpush1.bf16.msra.mxu0 %v4570
      %4840 = vmatprep.subr.bf16.mxu0 0
      %4841 = vmatpush1.bf16.msra.mxu0 %v4571
      %4842 = vmatprep.subr.bf16.mxu0 0
      %4843 = vmatpush1.bf16.msra.mxu0 %v4572
      %4844 = vmatprep.subr.bf16.mxu0 0
      %4845 = vmatpush1.bf16.msra.mxu0 %v4573
      %4846 = vmatprep.subr.bf16.mxu0 0
      %4847 = vmatpush1.bf16.msra.mxu0 %v4574
      %4848 = vmatprep.subr.bf16.mxu0 0
      %4849 = vmatpush1.bf16.msra.mxu0 %v4575
      %4850 = vmatprep.subr.bf16.mxu0 0
      %4851 = vmatpush1.bf16.msra.mxu0 %v4576
      %4852 = vmatprep.subr.bf16.mxu0 0
      %4853 = vmatpush1.bf16.msra.mxu0 %v4577
      %4854 = vmatprep.subr.bf16.mxu0 0
      %4855 = vmatpush1.bf16.msra.mxu0 %v4578
      %4856 = vmatprep.subr.bf16.mxu0 0
      %4857 = vmatpush1.bf16.msra.mxu0 %v4579
      %4858 = vmatprep.subr.bf16.mxu0 0
      %4859 = vmatpush1.bf16.msra.mxu0 %v4580
      %4860 = vmatprep.subr.bf16.mxu0 0
      %4861 = vmatpush1.bf16.msra.mxu0 %v4581
      %4862 = vmatprep.subr.bf16.mxu0 0
      %4863 = vmatpush1.bf16.msra.mxu0 %v4582
      %4864 = vmatprep.mubr.bf16.mxu0 %v4258
      %4865 = vmatmul.mubr.bf16.gmra.mrb[0].mxu0 %v4257
      %v4866 = vpop.f32.mrb[0].mxu0
      %v4867 = vadd.f32 %v4706, %v4866
      %v4868 = vpop.f32.mrb[0].mxu0
      %v4869 = vpop.f32.mrb[0].mxu0
      %v4870 = vadd.f32 %v4709, %v4869
      %v4871 = vpop.f32.mrb[0].mxu0
      %4872 = vmatprep.mubr.bf16.mxu0 %v4263
      %4873 = vmatmul.mubr.bf16.gmra.mrb[0].mxu0 %v4262
      %v4874 = vpop.f32.mrb[0].mxu0
      %v4875 = vadd.f32 %v4714, %v4874
      %v4876 = vpop.f32.mrb[0].mxu0
      %v4877 = vpop.f32.mrb[0].mxu0
      %v4878 = vadd.f32 %v4717, %v4877
      %v4879 = vpop.f32.mrb[0].mxu0
      %4880 = vmatprep.mubr.bf16.mxu0 %v4268
      %4881 = vmatmul.mubr.bf16.gmra.mrb[0].mxu0 %v4267
      %v4882 = vpop.f32.mrb[0].mxu0
      %v4883 = vadd.f32 %v4722, %v4882
      %v4884 = vpop.f32.mrb[0].mxu0
      %v4885 = vpop.f32.mrb[0].mxu0
      %v4886 = vadd.f32 %v4725, %v4885
      %v4887 = vpop.f32.mrb[0].mxu0
      %4888 = vmatprep.mubr.bf16.mxu0 %v4273
      %4889 = vmatmul.mubr.bf16.gmra.mrb[0].mxu0 %v4272
      %v4890 = vpop.f32.mrb[0].mxu0
      %v4891 = vadd.f32 %v4730, %v4890
      %v4892 = vpop.f32.mrb[0].mxu0
      %v4893 = vpop.f32.mrb[0].mxu0
      %v4894 = vadd.f32 %v4733, %v4893
      %v4895 = vpop.f32.mrb[0].mxu0
      %4896 = vmatprep.mubr.bf16.mxu0 %v4278
      %4897 = vmatmul.mubr.bf16.gmra.mrb[0].mxu0 %v4277
      %v4898 = vpop.f32.mrb[0].mxu0
      %v4899 = vadd.f32 %v4738, %v4898
      %v4900 = vpop.f32.mrb[0].mxu0
      %v4901 = vpop.f32.mrb[0].mxu0
      %v4902 = vadd.f32 %v4741, %v4901
      %v4903 = vpop.f32.mrb[0].mxu0
      %4904 = vmatprep.mubr.bf16.mxu0 %v4283
      %4905 = vmatmul.mubr.bf16.gmra.mrb[0].mxu0 %v4282
      %v4906 = vpop.f32.mrb[0].mxu0
      %v4907 = vadd.f32 %v4746, %v4906
      %v4908 = vpop.f32.mrb[0].mxu0
      %v4909 = vpop.f32.mrb[0].mxu0
      %v4910 = vadd.f32 %v4749, %v4909
      %v4911 = vpop.f32.mrb[0].mxu0
      %4912 = vmatprep.mubr.bf16.mxu0 %v4288
      %4913 = vmatmul.mubr.bf16.gmra.mrb[0].mxu0 %v4287
      %v4914 = vpop.f32.mrb[0].mxu0
      %v4915 = vadd.f32 %v4754, %v4914
      %v4916 = vpop.f32.mrb[0].mxu0
      %v4917 = vpop.f32.mrb[0].mxu0
      %v4918 = vadd.f32 %v4757, %v4917
      %v4919 = vpop.f32.mrb[0].mxu0
      %4920 = vmatprep.mubr.bf16.mxu0 %v4293
      %4921 = vmatmul.mubr.bf16.gmra.mrb[0].mxu0 %v4292
      %v4922 = vpop.f32.mrb[0].mxu0
      %v4923 = vadd.f32 %v4762, %v4922
      %v4924 = vpop.f32.mrb[0].mxu0
      %v4925 = vpop.f32.mrb[0].mxu0
      %v4926 = vadd.f32 %v4765, %v4925
      %v4927 = vpop.f32.mrb[0].mxu0
      %4928 = vmatprep.mubr.bf16.mxu0 %v4298
      %4929 = vmatmul.mubr.bf16.gmra.mrb[0].mxu0 %v4297
      %v4930 = vpop.f32.mrb[0].mxu0
      %v4931 = vadd.f32 %v4770, %v4930
      %v4932 = vpop.f32.mrb[0].mxu0
      %v4933 = vpop.f32.mrb[0].mxu0
      %v4934 = vadd.f32 %v4773, %v4933
      %v4935 = vpop.f32.mrb[0].mxu0
      %4936 = vmatprep.mubr.bf16.mxu0 %v4303
      %4937 = vmatmul.mubr.bf16.gmra.mrb[0].mxu0 %v4302
      %v4938 = vpop.f32.mrb[0].mxu0
      %v4939 = vadd.f32 %v4778, %v4938
      %v4940 = vpop.f32.mrb[0].mxu0
      %v4941 = vpop.f32.mrb[0].mxu0
      %v4942 = vadd.f32 %v4781, %v4941
      %v4943 = vpop.f32.mrb[0].mxu0
      %4944 = vmatprep.mubr.bf16.mxu0 %v4308
      %4945 = vmatmul.mubr.bf16.gmra.mrb[0].mxu0 %v4307
      %v4946 = vpop.f32.mrb[0].mxu0
      %v4947 = vadd.f32 %v4786, %v4946
      %v4948 = vpop.f32.mrb[0].mxu0
      %v4949 = vpop.f32.mrb[0].mxu0
      %v4950 = vadd.f32 %v4789, %v4949
      %v4951 = vpop.f32.mrb[0].mxu0
      %4952 = vmatprep.mubr.bf16.mxu0 %v4313
      %4953 = vmatmul.mubr.bf16.gmra.mrb[0].mxu0 %v4312
      %v4954 = vpop.f32.mrb[0].mxu0
      %v4955 = vadd.f32 %v4794, %v4954
      %v4956 = vpop.f32.mrb[0].mxu0
      %v4957 = vpop.f32.mrb[0].mxu0
      %v4958 = vadd.f32 %v4797, %v4957
      %v4959 = vpop.f32.mrb[0].mxu0
      %4960 = vmatprep.mubr.bf16.mxu0 %v4318
      %4961 = vmatmul.mubr.bf16.gmra.mrb[0].mxu0 %v4317
      %v4962 = vpop.f32.mrb[0].mxu0
      %v4963 = vadd.f32 %v4802, %v4962
      %v4964 = vpop.f32.mrb[0].mxu0
      %v4965 = vpop.f32.mrb[0].mxu0
      %v4966 = vadd.f32 %v4805, %v4965
      %v4967 = vpop.f32.mrb[0].mxu0
      %4968 = vmatprep.mubr.bf16.mxu0 %v4323
      %4969 = vmatmul.mubr.bf16.gmra.mrb[0].mxu0 %v4322
      %v4970 = vpop.f32.mrb[0].mxu0
      %v4971 = vadd.f32 %v4810, %v4970
      %v4972 = vpop.f32.mrb[0].mxu0
      %v4973 = vpop.f32.mrb[0].mxu0
      %v4974 = vadd.f32 %v4813, %v4973
      %v4975 = vpop.f32.mrb[0].mxu0
      %4976 = vmatprep.mubr.bf16.mxu0 %v4328
      %4977 = vmatmul.mubr.bf16.gmra.mrb[0].mxu0 %v4327
      %v4978 = vpop.f32.mrb[0].mxu0
      %v4979 = vadd.f32 %v4818, %v4978
      %v4980 = vpop.f32.mrb[0].mxu0
      %v4981 = vpop.f32.mrb[0].mxu0
      %v4982 = vadd.f32 %v4821, %v4981
      %v4983 = vpop.f32.mrb[0].mxu0
      %4984 = vmatprep.mubr.bf16.mxu0 %v4333
      %4985 = vmatmul.mubr.bf16.gmra.mrb[0].mxu0 %v4332
      %v4986 = vpop.f32.mrb[0].mxu0
      %v4987 = vadd.f32 %v4826, %v4986
      %v4988 = vpop.f32.mrb[0].mxu0
      %v4989 = vpop.f32.mrb[0].mxu0
      %v4990 = vadd.f32 %v4829, %v4989
      %v4991 = vpop.f32.mrb[0].mxu0
      %4992 = vdwg.mxu0
      %4993 = vmatprep.subr.bf16.mxu0 0
      %4994 = vmatpush1.bf16.msra.mxu0 %v4583
      %4995 = vmatprep.subr.bf16.mxu0 0
      %4996 = vmatpush1.bf16.msra.mxu0 %v4584
      %4997 = vmatprep.subr.bf16.mxu0 0
      %4998 = vmatpush1.bf16.msra.mxu0 %v4585
      %4999 = vmatprep.subr.bf16.mxu0 0
      %5000 = vmatpush1.bf16.msra.mxu0 %v4586
      %5001 = vmatprep.subr.bf16.mxu0 0
      %5002 = vmatpush1.bf16.msra.mxu0 0
      %5003 = vmatprep.subr.bf16.mxu0 0
      %5004 = vmatpush1.bf16.msra.mxu0 0
      %5005 = vmatprep.subr.bf16.mxu0 0
      %5006 = vmatpush1.bf16.msra.mxu0 0
      %5007 = vmatprep.subr.bf16.mxu0 0
      %5008 = vmatpush1.bf16.msra.mxu0 0
      %5009 = vmatprep.subr.bf16.mxu0 0
      %5010 = vmatpush1.bf16.msra.mxu0 0
      %5011 = vmatprep.subr.bf16.mxu0 0
      %5012 = vmatpush1.bf16.msra.mxu0 0
      %5013 = vmatprep.subr.bf16.mxu0 0
      %5014 = vmatpush1.bf16.msra.mxu0 0
      %5015 = vmatprep.subr.bf16.mxu0 0
      %5016 = vmatpush1.bf16.msra.mxu0 0
      %5017 = vmatprep.subr.bf16.mxu0 0
      %5018 = vmatpush1.bf16.msra.mxu0 0
      %5019 = vmatprep.subr.bf16.mxu0 0
      %5020 = vmatpush1.bf16.msra.mxu0 0
      %5021 = vmatprep.subr.bf16.mxu0 0
      %5022 = vmatpush1.bf16.msra.mxu0 0
      %5023 = vmatprep.subr.bf16.mxu0 0
      %5024 = vmatpush1.bf16.msra.mxu0 0
      %5025 = vmatprep.mubr.bf16.mxu0 0
      %5026 = vmatmul.mubr.bf16.gmra.mrb[0].mxu0 %v4624
      %v5027 = vpop.f32.mrb[0].mxu0
      %v5028 = vadd.f32 %v4867, %v5027
      %v5029 = vpop.f32.mrb[0].mxu0
      %v5030 = vpop.f32.mrb[0].mxu0
      %v5031 = vadd.f32 %v4870, %v5030
      %v5032 = vpop.f32.mrb[0].mxu0
      %5033 = vmatprep.mubr.bf16.mxu0 0
      %5034 = vmatmul.mubr.bf16.gmra.mrb[0].mxu0 %v4627
      %v5035 = vpop.f32.mrb[0].mxu0
      %v5036 = vadd.f32 %v4875, %v5035
      %v5037 = vpop.f32.mrb[0].mxu0
      %v5038 = vpop.f32.mrb[0].mxu0
      %v5039 = vadd.f32 %v4878, %v5038
      %v5040 = vpop.f32.mrb[0].mxu0
      %5041 = vmatprep.mubr.bf16.mxu0 0
      %5042 = vmatmul.mubr.bf16.gmra.mrb[0].mxu0 %v4630
      %v5043 = vpop.f32.mrb[0].mxu0
      %v5044 = vadd.f32 %v4883, %v5043
      %v5045 = vpop.f32.mrb[0].mxu0
      %v5046 = vpop.f32.mrb[0].mxu0
      %v5047 = vadd.f32 %v4886, %v5046
      %v5048 = vpop.f32.mrb[0].mxu0
      %5049 = vmatprep.mubr.bf16.mxu0 0
      %5050 = vmatmul.mubr.bf16.gmra.mrb[0].mxu0 %v4633
      %v5051 = vpop.f32.mrb[0].mxu0
      %v5052 = vadd.f32 %v4891, %v5051
      %v5053 = vpop.f32.mrb[0].mxu0
      %v5054 = vpop.f32.mrb[0].mxu0
      %v5055 = vadd.f32 %v4894, %v5054
      %v5056 = vpop.f32.mrb[0].mxu0
      %5057 = vmatprep.mubr.bf16.mxu0 0
      %5058 = vmatmul.mubr.bf16.gmra.mrb[0].mxu0 %v4636
      %v5059 = vpop.f32.mrb[0].mxu0
      %v5060 = vadd.f32 %v4899, %v5059
      %v5061 = vpop.f32.mrb[0].mxu0
      %v5062 = vpop.f32.mrb[0].mxu0
      %v5063 = vadd.f32 %v4902, %v5062
      %v5064 = vpop.f32.mrb[0].mxu0
      %5065 = vmatprep.mubr.bf16.mxu0 0
      %5066 = vmatmul.mubr.bf16.gmra.mrb[0].mxu0 %v4639
      %v5067 = vpop.f32.mrb[0].mxu0
      %v5068 = vadd.f32 %v4907, %v5067
      %v5069 = vpop.f32.mrb[0].mxu0
      %v5070 = vpop.f32.mrb[0].mxu0
      %v5071 = vadd.f32 %v4910, %v5070
      %v5072 = vpop.f32.mrb[0].mxu0
      %5073 = vmatprep.mubr.bf16.mxu0 0
      %5074 = vmatmul.mubr.bf16.gmra.mrb[0].mxu0 %v4642
      %v5075 = vpop.f32.mrb[0].mxu0
      %v5076 = vadd.f32 %v4915, %v5075
      %v5077 = vpop.f32.mrb[0].mxu0
      %v5078 = vpop.f32.mrb[0].mxu0
      %v5079 = vadd.f32 %v4918, %v5078
      %v5080 = vpop.f32.mrb[0].mxu0
      %5081 = vmatprep.mubr.bf16.mxu0 0
      %5082 = vmatmul.mubr.bf16.gmra.mrb[0].mxu0 %v4645
      %v5083 = vpop.f32.mrb[0].mxu0
      %v5084 = vadd.f32 %v4923, %v5083
      %v5085 = vpop.f32.mrb[0].mxu0
      %v5086 = vpop.f32.mrb[0].mxu0
      %v5087 = vadd.f32 %v4926, %v5086
      %v5088 = vpop.f32.mrb[0].mxu0
      %5089 = vmatprep.mubr.bf16.mxu0 0
      %5090 = vmatmul.mubr.bf16.gmra.mrb[0].mxu0 %v4648
      %v5091 = vpop.f32.mrb[0].mxu0
      %v5092 = vadd.f32 %v4931, %v5091
      %v5093 = vpop.f32.mrb[0].mxu0
      %v5094 = vpop.f32.mrb[0].mxu0
      %v5095 = vadd.f32 %v4934, %v5094
      %v5096 = vpop.f32.mrb[0].mxu0
      %5097 = vmatprep.mubr.bf16.mxu0 0
      %5098 = vmatmul.mubr.bf16.gmra.mrb[0].mxu0 %v4651
      %v5099 = vpop.f32.mrb[0].mxu0
      %v5100 = vadd.f32 %v4939, %v5099
      %v5101 = vpop.f32.mrb[0].mxu0
      %v5102 = vpop.f32.mrb[0].mxu0
      %v5103 = vadd.f32 %v4942, %v5102
      %v5104 = vpop.f32.mrb[0].mxu0
      %5105 = vmatprep.mubr.bf16.mxu0 0
      %5106 = vmatmul.mubr.bf16.gmra.mrb[0].mxu0 %v4654
      %v5107 = vpop.f32.mrb[0].mxu0
      %v5108 = vadd.f32 %v4947, %v5107
      %v5109 = vpop.f32.mrb[0].mxu0
      %v5110 = vpop.f32.mrb[0].mxu0
      %v5111 = vadd.f32 %v4950, %v5110
      %v5112 = vpop.f32.mrb[0].mxu0
      %5113 = vmatprep.mubr.bf16.mxu0 0
      %5114 = vmatmul.mubr.bf16.gmra.mrb[0].mxu0 %v4657
      %v5115 = vpop.f32.mrb[0].mxu0
      %v5116 = vadd.f32 %v4955, %v5115
      %v5117 = vpop.f32.mrb[0].mxu0
      %v5118 = vpop.f32.mrb[0].mxu0
      %v5119 = vadd.f32 %v4958, %v5118
      %v5120 = vpop.f32.mrb[0].mxu0
      %5121 = vmatprep.mubr.bf16.mxu0 0
      %5122 = vmatmul.mubr.bf16.gmra.mrb[0].mxu0 %v4660
      %v5123 = vpop.f32.mrb[0].mxu0
      %v5124 = vadd.f32 %v4963, %v5123
      %v5125 = vpop.f32.mrb[0].mxu0
      %v5126 = vpop.f32.mrb[0].mxu0
      %v5127 = vadd.f32 %v4966, %v5126
      %v5128 = vpop.f32.mrb[0].mxu0
      %5129 = vmatprep.mubr.bf16.mxu0 0
      %5130 = vmatmul.mubr.bf16.gmra.mrb[0].mxu0 %v4663
      %v5131 = vpop.f32.mrb[0].mxu0
      %v5132 = vadd.f32 %v4971, %v5131
      %v5133 = vpop.f32.mrb[0].mxu0
      %v5134 = vpop.f32.mrb[0].mxu0
      %v5135 = vadd.f32 %v4974, %v5134
      %v5136 = vpop.f32.mrb[0].mxu0
      %5137 = vmatprep.mubr.bf16.mxu0 0
      %5138 = vmatmul.mubr.bf16.gmra.mrb[0].mxu0 %v4666
      %v5139 = vpop.f32.mrb[0].mxu0
      %v5140 = vadd.f32 %v4979, %v5139
      %v5141 = vpop.f32.mrb[0].mxu0
      %v5142 = vpop.f32.mrb[0].mxu0
      %v5143 = vadd.f32 %v4982, %v5142
      %v5144 = vpop.f32.mrb[0].mxu0
      %5145 = vmatprep.mubr.bf16.mxu0 0
      %5146 = vmatmul.mubr.bf16.gmra.mrb[0].mxu0 %v4669
      %v5147 = vpop.f32.mrb[0].mxu0
      %v5148 = vadd.f32 %v4987, %v5147
      %v5149 = vpop.f32.mrb[0].mxu0
      %v5150 = vpop.f32.mrb[0].mxu0
      %v5151 = vadd.f32 %v4990, %v5150
      %v5152 = vpop.f32.mrb[0].mxu0
      %5153 = vdwg.mxu0
      %v5154 = vlaneseq
      %v5155 = vshrl.u32 %v5154, 7
      %v5156 = vsub.s32 0, %v5155
      %v5157 = vrot.slane %v1285, %v5156
      %v5158 = vmul.f32 %v5028, %v5157
      %v5159 = vmul.f32 %v5031, %v5157
      %v5160 = vmul.f32 %v5036, %v5157
      %v5161 = vmul.f32 %v5039, %v5157
      %v5162 = vmul.f32 %v5044, %v5157
      %v5163 = vmul.f32 %v5047, %v5157
      %v5164 = vmul.f32 %v5052, %v5157
      %v5165 = vmul.f32 %v5055, %v5157
      %v5166 = vmul.f32 %v5060, %v5157
      %v5167 = vmul.f32 %v5063, %v5157
      %v5168 = vmul.f32 %v5068, %v5157
      %v5169 = vmul.f32 %v5071, %v5157
      %v5170 = vmul.f32 %v5076, %v5157
      %v5171 = vmul.f32 %v5079, %v5157
      %v5172 = vmul.f32 %v5084, %v5157
      %v5173 = vmul.f32 %v5087, %v5157
      %v5174 = vmul.f32 %v5092, %v5157
      %v5175 = vmul.f32 %v5095, %v5157
      %v5176 = vmul.f32 %v5100, %v5157
      %v5177 = vmul.f32 %v5103, %v5157
      %v5178 = vmul.f32 %v5108, %v5157
      %v5179 = vmul.f32 %v5111, %v5157
      %v5180 = vmul.f32 %v5116, %v5157
      %v5181 = vmul.f32 %v5119, %v5157
      %v5182 = vmul.f32 %v5124, %v5157
      %v5183 = vmul.f32 %v5127, %v5157
      %v5184 = vmul.f32 %v5132, %v5157
      %v5185 = vmul.f32 %v5135, %v5157
      %v5186 = vmul.f32 %v5140, %v5157
      %v5187 = vmul.f32 %v5143, %v5157
      %v5188 = vmul.f32 %v5148, %v5157
      %v5189 = vmul.f32 %v5151, %v5157
      %v5190 = vlaneseq
      %v5191 = vshrl.u32 %v5190, 7
      %v5192 = vsub.s32 1, %v5191
      %v5193 = vrot.slane %v1285, %v5192
      %v5194 = vadd.f32 %v5158, %v5193
      %v5195 = vadd.f32 %v5159, %v5193
      %v5196 = vadd.f32 %v5160, %v5193
      %v5197 = vadd.f32 %v5161, %v5193
      %v5198 = vadd.f32 %v5162, %v5193
      %v5199 = vadd.f32 %v5163, %v5193
      %v5200 = vadd.f32 %v5164, %v5193
      %v5201 = vadd.f32 %v5165, %v5193
      %v5202 = vadd.f32 %v5166, %v5193
      %v5203 = vadd.f32 %v5167, %v5193
      %v5204 = vadd.f32 %v5168, %v5193
      %v5205 = vadd.f32 %v5169, %v5193
      %v5206 = vadd.f32 %v5170, %v5193
      %v5207 = vadd.f32 %v5171, %v5193
      %v5208 = vadd.f32 %v5172, %v5193
      %v5209 = vadd.f32 %v5173, %v5193
      %v5210 = vadd.f32 %v5174, %v5193
      %v5211 = vadd.f32 %v5175, %v5193
      %v5212 = vadd.f32 %v5176, %v5193
      %v5213 = vadd.f32 %v5177, %v5193
      %v5214 = vadd.f32 %v5178, %v5193
      %v5215 = vadd.f32 %v5179, %v5193
      %v5216 = vadd.f32 %v5180, %v5193
      %v5217 = vadd.f32 %v5181, %v5193
      %v5218 = vadd.f32 %v5182, %v5193
      %v5219 = vadd.f32 %v5183, %v5193
      %v5220 = vadd.f32 %v5184, %v5193
      %v5221 = vadd.f32 %v5185, %v5193
      %v5222 = vadd.f32 %v5186, %v5193
      %v5223 = vadd.f32 %v5187, %v5193
      %v5224 = vadd.f32 %v5188, %v5193
      %v5225 = vadd.f32 %v5189, %v5193
      %v5226 = vmax.f32 %v5194, 0.0
      %v5227 = vmax.f32 %v5195, 0.0
      %v5228 = vmax.f32 %v5196, 0.0
      %v5229 = vmax.f32 %v5197, 0.0
      %v5230 = vmax.f32 %v5198, 0.0
      %v5231 = vmax.f32 %v5199, 0.0
      %v5232 = vmax.f32 %v5200, 0.0
      %v5233 = vmax.f32 %v5201, 0.0
      %v5234 = vmax.f32 %v5202, 0.0
      %v5235 = vmax.f32 %v5203, 0.0
      %v5236 = vmax.f32 %v5204, 0.0
      %v5237 = vmax.f32 %v5205, 0.0
      %v5238 = vmax.f32 %v5206, 0.0
      %v5239 = vmax.f32 %v5207, 0.0
      %v5240 = vmax.f32 %v5208, 0.0
      %v5241 = vmax.f32 %v5209, 0.0
      %v5242 = vmax.f32 %v5210, 0.0
      %v5243 = vmax.f32 %v5211, 0.0
      %v5244 = vmax.f32 %v5212, 0.0
      %v5245 = vmax.f32 %v5213, 0.0
      %v5246 = vmax.f32 %v5214, 0.0
      %v5247 = vmax.f32 %v5215, 0.0
      %v5248 = vmax.f32 %v5216, 0.0
      %v5249 = vmax.f32 %v5217, 0.0
      %v5250 = vmax.f32 %v5218, 0.0
      %v5251 = vmax.f32 %v5219, 0.0
      %v5252 = vmax.f32 %v5220, 0.0
      %v5253 = vmax.f32 %v5221, 0.0
      %v5254 = vmax.f32 %v5222, 0.0
      %v5255 = vmax.f32 %v5223, 0.0
      %v5256 = vmax.f32 %v5224, 0.0
      %v5257 = vmax.f32 %v5225, 0.0
      %v5258 = vpack.c.bf16 %v5227, %v5226
      %v5259 = vpack.c.bf16 %v5229, %v5228
      %v5260 = vpack.c.bf16 %v5231, %v5230
      %v5261 = vpack.c.bf16 %v5233, %v5232
      %v5262 = vpack.c.bf16 %v5235, %v5234
      %v5263 = vpack.c.bf16 %v5237, %v5236
      %v5264 = vpack.c.bf16 %v5239, %v5238
      %v5265 = vpack.c.bf16 %v5241, %v5240
      %v5266 = vpack.c.bf16 %v5243, %v5242
      %v5267 = vpack.c.bf16 %v5245, %v5244
      %v5268 = vpack.c.bf16 %v5247, %v5246
      %v5269 = vpack.c.bf16 %v5249, %v5248
      %v5270 = vpack.c.bf16 %v5251, %v5250
      %v5271 = vpack.c.bf16 %v5253, %v5252
      %v5272 = vpack.c.bf16 %v5255, %v5254
      %v5273 = vpack.c.bf16 %v5257, %v5256
      %v5290 = vunpack.c.l.b16 %v5258
      %v5291 = vunpack.c.h.b16 %v5258
      %v5292 = vunpack.c.l.b16 %v5259
      %v5293 = vunpack.c.h.b16 %v5259
      %v5294 = vunpack.c.l.b16 %v5260
      %v5295 = vunpack.c.h.b16 %v5260
      %v5296 = vunpack.c.l.b16 %v5261
      %v5297 = vunpack.c.h.b16 %v5261
      %v5298 = vunpack.c.l.b16 %v5262
      %v5299 = vunpack.c.h.b16 %v5262
      %v5300 = vunpack.c.l.b16 %v5263
      %v5301 = vunpack.c.h.b16 %v5263
      %v5302 = vunpack.c.l.b16 %v5264
      %v5303 = vunpack.c.h.b16 %v5264
      %v5304 = vunpack.c.l.b16 %v5265
      %v5305 = vunpack.c.h.b16 %v5265
      %v5306 = vunpack.c.l.b16 %v5266
      %v5307 = vunpack.c.h.b16 %v5266
      %v5308 = vunpack.c.l.b16 %v5267
      %v5309 = vunpack.c.h.b16 %v5267
      %v5310 = vunpack.c.l.b16 %v5268
      %v5311 = vunpack.c.h.b16 %v5268
      %v5312 = vunpack.c.l.b16 %v5269
      %v5313 = vunpack.c.h.b16 %v5269
      %v5314 = vunpack.c.l.b16 %v5270
      %v5315 = vunpack.c.h.b16 %v5270
      %v5316 = vunpack.c.l.b16 %v5271
      %v5317 = vunpack.c.h.b16 %v5271
      %v5318 = vunpack.c.l.b16 %v5272
      %v5319 = vunpack.c.h.b16 %v5272
      %v5320 = vunpack.c.l.b16 %v5273
      %v5321 = vunpack.c.h.b16 %v5273
      %v5322 = vpack.c.b16 %v5290, %v5290
      %v5323 = vpack.c.b16 %v5291, %v5291
      %v5324 = vpack.c.b16 %v5292, %v5292
      %v5325 = vpack.c.b16 %v5293, %v5293
      %v5326 = vpack.c.b16 %v5294, %v5294
      %v5327 = vpack.c.b16 %v5295, %v5295
      %v5328 = vpack.c.b16 %v5296, %v5296
      %v5329 = vpack.c.b16 %v5297, %v5297
      %v5330 = vpack.c.b16 %v5298, %v5298
      %v5331 = vpack.c.b16 %v5299, %v5299
      %v5332 = vpack.c.b16 %v5300, %v5300
      %v5333 = vpack.c.b16 %v5301, %v5301
      %v5334 = vpack.c.b16 %v5302, %v5302
      %v5335 = vpack.c.b16 %v5303, %v5303
      %v5336 = vpack.c.b16 %v5304, %v5304
      %v5337 = vpack.c.b16 %v5305, %v5305
      %v5338 = vpack.c.b16 %v5306, %v5306
      %v5339 = vpack.c.b16 %v5307, %v5307
      %v5340 = vpack.c.b16 %v5308, %v5308
      %v5341 = vpack.c.b16 %v5309, %v5309
      %v5342 = vpack.c.b16 %v5310, %v5310
      %v5343 = vpack.c.b16 %v5311, %v5311
      %v5344 = vpack.c.b16 %v5312, %v5312
      %v5345 = vpack.c.b16 %v5313, %v5313
      %v5346 = vpack.c.b16 %v5314, %v5314
      %v5347 = vpack.c.b16 %v5315, %v5315
      %v5348 = vpack.c.b16 %v5316, %v5316
      %v5349 = vpack.c.b16 %v5317, %v5317
      %v5350 = vpack.c.b16 %v5318, %v5318
      %v5351 = vpack.c.b16 %v5319, %v5319
      %v5352 = vpack.c.b16 %v5320, %v5320
      %v5353 = vpack.c.b16 %v5321, %v5321
      %v5355 = vshrl.u32 %v5322, 16
      %v5357 = vrot.slane %v5355, 7
      %v5358 = vshll.u32 %v5322, 16
      %v5360 = vor.u32 %v5357, %v5358
      %v5361 = vrot.slane %v5357, 4
      %v5363 = vshrl.u32 %v5323, 16
      %v5365 = vrot.slane %v5363, 7
      %v5366 = vshll.u32 %v5323, 16
      %v5368 = vor.u32 %v5365, %v5366
      %v5369 = vsel %vm849, %v5361, %v5368
      %v5370 = vrot.slane %v5365, 4
      %v5372 = vshrl.u32 %v5324, 16
      %v5374 = vrot.slane %v5372, 7
      %v5375 = vshll.u32 %v5324, 16
      %v5377 = vor.u32 %v5374, %v5375
      %v5378 = vrot.slane %v5374, 4
      %v5380 = vshrl.u32 %v5325, 16
      %v5382 = vrot.slane %v5380, 7
      %v5383 = vshll.u32 %v5325, 16
      %v5385 = vor.u32 %v5382, %v5383
      %v5386 = vsel %vm849, %v5378, %v5385
      %v5387 = vrot.slane %v5382, 4
      %v5389 = vshrl.u32 %v5326, 16
      %v5391 = vrot.slane %v5389, 7
      %v5392 = vshll.u32 %v5326, 16
      %v5394 = vor.u32 %v5391, %v5392
      %v5395 = vrot.slane %v5391, 4
      %v5397 = vshrl.u32 %v5327, 16
      %v5399 = vrot.slane %v5397, 7
      %v5400 = vshll.u32 %v5327, 16
      %v5402 = vor.u32 %v5399, %v5400
      %v5403 = vsel %vm849, %v5395, %v5402
      %v5404 = vrot.slane %v5399, 4
      %v5406 = vshrl.u32 %v5328, 16
      %v5408 = vrot.slane %v5406, 7
      %v5409 = vshll.u32 %v5328, 16
      %v5411 = vor.u32 %v5408, %v5409
      %v5412 = vrot.slane %v5408, 4
      %v5414 = vshrl.u32 %v5329, 16
      %v5416 = vrot.slane %v5414, 7
      %v5417 = vshll.u32 %v5329, 16
      %v5419 = vor.u32 %v5416, %v5417
      %v5420 = vsel %vm849, %v5412, %v5419
      %v5421 = vrot.slane %v5416, 4
      %v5423 = vshrl.u32 %v5330, 16
      %v5425 = vrot.slane %v5423, 7
      %v5426 = vshll.u32 %v5330, 16
      %v5428 = vor.u32 %v5425, %v5426
      %v5429 = vrot.slane %v5425, 4
      %v5431 = vshrl.u32 %v5331, 16
      %v5433 = vrot.slane %v5431, 7
      %v5434 = vshll.u32 %v5331, 16
      %v5436 = vor.u32 %v5433, %v5434
      %v5437 = vsel %vm849, %v5429, %v5436
      %v5438 = vrot.slane %v5433, 4
      %v5440 = vshrl.u32 %v5332, 16
      %v5442 = vrot.slane %v5440, 7
      %v5443 = vshll.u32 %v5332, 16
      %v5445 = vor.u32 %v5442, %v5443
      %v5446 = vrot.slane %v5442, 4
      %v5448 = vshrl.u32 %v5333, 16
      %v5450 = vrot.slane %v5448, 7
      %v5451 = vshll.u32 %v5333, 16
      %v5453 = vor.u32 %v5450, %v5451
      %v5454 = vsel %vm849, %v5446, %v5453
      %v5455 = vrot.slane %v5450, 4
      %v5457 = vshrl.u32 %v5334, 16
      %v5459 = vrot.slane %v5457, 7
      %v5460 = vshll.u32 %v5334, 16
      %v5462 = vor.u32 %v5459, %v5460
      %v5463 = vrot.slane %v5459, 4
      %v5465 = vshrl.u32 %v5335, 16
      %v5467 = vrot.slane %v5465, 7
      %v5468 = vshll.u32 %v5335, 16
      %v5470 = vor.u32 %v5467, %v5468
      %v5471 = vsel %vm849, %v5463, %v5470
      %v5472 = vrot.slane %v5467, 4
      %v5474 = vshrl.u32 %v5336, 16
      %v5476 = vrot.slane %v5474, 7
      %v5477 = vshll.u32 %v5336, 16
      %v5479 = vor.u32 %v5476, %v5477
      %v5480 = vrot.slane %v5476, 4
      %v5482 = vshrl.u32 %v5337, 16
      %v5484 = vrot.slane %v5482, 7
      %v5485 = vshll.u32 %v5337, 16
      %v5487 = vor.u32 %v5484, %v5485
      %v5488 = vsel %vm849, %v5480, %v5487
      %v5489 = vrot.slane %v5484, 4
      %v5491 = vshrl.u32 %v5338, 16
      %v5493 = vrot.slane %v5491, 7
      %v5494 = vshll.u32 %v5338, 16
      %v5496 = vor.u32 %v5493, %v5494
      %v5497 = vrot.slane %v5493, 4
      %v5499 = vshrl.u32 %v5339, 16
      %v5501 = vrot.slane %v5499, 7
      %v5502 = vshll.u32 %v5339, 16
      %v5504 = vor.u32 %v5501, %v5502
      %v5505 = vsel %vm849, %v5497, %v5504
      %v5506 = vrot.slane %v5501, 4
      %v5508 = vshrl.u32 %v5340, 16
      %v5510 = vrot.slane %v5508, 7
      %v5511 = vshll.u32 %v5340, 16
      %v5513 = vor.u32 %v5510, %v5511
      %v5514 = vrot.slane %v5510, 4
      %v5516 = vshrl.u32 %v5341, 16
      %v5518 = vrot.slane %v5516, 7
      %v5519 = vshll.u32 %v5341, 16
      %v5521 = vor.u32 %v5518, %v5519
      %v5522 = vsel %vm849, %v5514, %v5521
      %v5523 = vrot.slane %v5518, 4
      %v5525 = vshrl.u32 %v5342, 16
      %v5527 = vrot.slane %v5525, 7
      %v5528 = vshll.u32 %v5342, 16
      %v5530 = vor.u32 %v5527, %v5528
      %v5531 = vrot.slane %v5527, 4
      %v5533 = vshrl.u32 %v5343, 16
      %v5535 = vrot.slane %v5533, 7
      %v5536 = vshll.u32 %v5343, 16
      %v5538 = vor.u32 %v5535, %v5536
      %v5539 = vsel %vm849, %v5531, %v5538
      %v5540 = vrot.slane %v5535, 4
      %v5542 = vshrl.u32 %v5344, 16
      %v5544 = vrot.slane %v5542, 7
      %v5545 = vshll.u32 %v5344, 16
      %v5547 = vor.u32 %v5544, %v5545
      %v5548 = vrot.slane %v5544, 4
      %v5550 = vshrl.u32 %v5345, 16
      %v5552 = vrot.slane %v5550, 7
      %v5553 = vshll.u32 %v5345, 16
      %v5555 = vor.u32 %v5552, %v5553
      %v5556 = vsel %vm849, %v5548, %v5555
      %v5557 = vrot.slane %v5552, 4
      %v5559 = vshrl.u32 %v5346, 16
      %v5561 = vrot.slane %v5559, 7
      %v5562 = vshll.u32 %v5346, 16
      %v5564 = vor.u32 %v5561, %v5562
      %v5565 = vrot.slane %v5561, 4
      %v5567 = vshrl.u32 %v5347, 16
      %v5569 = vrot.slane %v5567, 7
      %v5570 = vshll.u32 %v5347, 16
      %v5572 = vor.u32 %v5569, %v5570
      %v5573 = vsel %vm849, %v5565, %v5572
      %v5574 = vrot.slane %v5569, 4
      %v5576 = vshrl.u32 %v5348, 16
      %v5578 = vrot.slane %v5576, 7
      %v5579 = vshll.u32 %v5348, 16
      %v5581 = vor.u32 %v5578, %v5579
      %v5582 = vrot.slane %v5578, 4
      %v5584 = vshrl.u32 %v5349, 16
      %v5586 = vrot.slane %v5584, 7
      %v5587 = vshll.u32 %v5349, 16
      %v5589 = vor.u32 %v5586, %v5587
      %v5590 = vsel %vm849, %v5582, %v5589
      %v5591 = vrot.slane %v5586, 4
      %v5593 = vshrl.u32 %v5350, 16
      %v5595 = vrot.slane %v5593, 7
      %v5596 = vshll.u32 %v5350, 16
      %v5598 = vor.u32 %v5595, %v5596
      %v5599 = vrot.slane %v5595, 4
      %v5601 = vshrl.u32 %v5351, 16
      %v5603 = vrot.slane %v5601, 7
      %v5604 = vshll.u32 %v5351, 16
      %v5606 = vor.u32 %v5603, %v5604
      %v5607 = vsel %vm849, %v5599, %v5606
      %v5608 = vrot.slane %v5603, 4
      %v5610 = vshrl.u32 %v5352, 16
      %v5612 = vrot.slane %v5610, 7
      %v5613 = vshll.u32 %v5352, 16
      %v5615 = vor.u32 %v5612, %v5613
      %v5616 = vrot.slane %v5612, 4
      %v5618 = vshrl.u32 %v5353, 16
      %v5620 = vrot.slane %v5618, 7
      %v5621 = vshll.u32 %v5353, 16
      %v5623 = vor.u32 %v5620, %v5621
      %v5624 = vsel %vm849, %v5616, %v5623
      %v5625 = vrot.slane %v5620, 4
      %v5674 = vld [vmem:[%s1170] sm:$0xf]
      %v5675 = vsel %vm1172, %v5360, %v5674
      %5676 = vst [vmem:[%s1170] sm:$0xf] %v5675
      %5677 = vst.msk [vmem:[%s1170 + $0x4] sm:$0xf] %vm253, %v5369
      %v5678 = vld [vmem:[%s1170 + $0x8] sm:$0x1]
      %v5679 = vsel %vm264, %v5370, %v5678
      %5680 = vst [vmem:[%s1170 + $0x8] sm:$0x1] %v5679
      %v5681 = vld [vmem:[%s1170 + $0xc] sm:$0xf]
      %v5682 = vsel %vm1172, %v5377, %v5681
      %5683 = vst [vmem:[%s1170 + $0xc] sm:$0xf] %v5682
      %5684 = vst.msk [vmem:[%s1170 + $0x10] sm:$0xf] %vm253, %v5386
      %v5685 = vld [vmem:[%s1170 + $0x14] sm:$0x1]
      %v5686 = vsel %vm264, %v5387, %v5685
      %5687 = vst [vmem:[%s1170 + $0x14] sm:$0x1] %v5686
      %v5688 = vld [vmem:[%s1170 + $0x18] sm:$0xf]
      %v5689 = vsel %vm1172, %v5394, %v5688
      %5690 = vst [vmem:[%s1170 + $0x18] sm:$0xf] %v5689
      %5691 = vst.msk [vmem:[%s1170 + $0x1c] sm:$0xf] %vm253, %v5403
      %v5692 = vld [vmem:[%s1170 + $0x20] sm:$0x1]
      %v5693 = vsel %vm264, %v5404, %v5692
      %5694 = vst [vmem:[%s1170 + $0x20] sm:$0x1] %v5693
      %v5695 = vld [vmem:[%s1170 + $0x24] sm:$0xf]
      %v5696 = vsel %vm1172, %v5411, %v5695
      %5697 = vst [vmem:[%s1170 + $0x24] sm:$0xf] %v5696
      %5698 = vst.msk [vmem:[%s1170 + $0x28] sm:$0xf] %vm253, %v5420
      %v5699 = vld [vmem:[%s1170 + $0x2c] sm:$0x1]
      %v5700 = vsel %vm264, %v5421, %v5699
      %5701 = vst [vmem:[%s1170 + $0x2c] sm:$0x1] %v5700
      %v5702 = vld [vmem:[%s1170 + $0x30] sm:$0xf]
      %v5703 = vsel %vm1172, %v5428, %v5702
      %5704 = vst [vmem:[%s1170 + $0x30] sm:$0xf] %v5703
      %5705 = vst.msk [vmem:[%s1170 + $0x34] sm:$0xf] %vm253, %v5437
      %v5706 = vld [vmem:[%s1170 + $0x38] sm:$0x1]
      %v5707 = vsel %vm264, %v5438, %v5706
      %5708 = vst [vmem:[%s1170 + $0x38] sm:$0x1] %v5707
      %v5709 = vld [vmem:[%s1170 + $0x3c] sm:$0xf]
      %v5710 = vsel %vm1172, %v5445, %v5709
      %5711 = vst [vmem:[%s1170 + $0x3c] sm:$0xf] %v5710
      %5712 = vst.msk [vmem:[%s1170 + $0x40] sm:$0xf] %vm253, %v5454
      %v5713 = vld [vmem:[%s1170 + $0x44] sm:$0x1]
      %v5714 = vsel %vm264, %v5455, %v5713
      %5715 = vst [vmem:[%s1170 + $0x44] sm:$0x1] %v5714
      %v5716 = vld [vmem:[%s1170 + $0x48] sm:$0xf]
      %v5717 = vsel %vm1172, %v5462, %v5716
      %5718 = vst [vmem:[%s1170 + $0x48] sm:$0xf] %v5717
      %5719 = vst.msk [vmem:[%s1170 + $0x4c] sm:$0xf] %vm253, %v5471
      %v5720 = vld [vmem:[%s1170 + $0x50] sm:$0x1]
      %v5721 = vsel %vm264, %v5472, %v5720
      %5722 = vst [vmem:[%s1170 + $0x50] sm:$0x1] %v5721
      %v5723 = vld [vmem:[%s1170 + $0x54] sm:$0xf]
      %v5724 = vsel %vm1172, %v5479, %v5723
      %5725 = vst [vmem:[%s1170 + $0x54] sm:$0xf] %v5724
      %5726 = vst.msk [vmem:[%s1170 + $0x58] sm:$0xf] %vm253, %v5488
      %v5727 = vld [vmem:[%s1170 + $0x5c] sm:$0x1]
      %v5728 = vsel %vm264, %v5489, %v5727
      %5729 = vst [vmem:[%s1170 + $0x5c] sm:$0x1] %v5728
      %v5730 = vld [vmem:[%s1170 + $0x60] sm:$0xf]
      %v5731 = vsel %vm1172, %v5496, %v5730
      %5732 = vst [vmem:[%s1170 + $0x60] sm:$0xf] %v5731
      %5733 = vst.msk [vmem:[%s1170 + $0x64] sm:$0xf] %vm253, %v5505
      %v5734 = vld [vmem:[%s1170 + $0x68] sm:$0x1]
      %v5735 = vsel %vm264, %v5506, %v5734
      %5736 = vst [vmem:[%s1170 + $0x68] sm:$0x1] %v5735
      %v5737 = vld [vmem:[%s1170 + $0x6c] sm:$0xf]
      %v5738 = vsel %vm1172, %v5513, %v5737
      %5739 = vst [vmem:[%s1170 + $0x6c] sm:$0xf] %v5738
      %5740 = vst.msk [vmem:[%s1170 + $0x70] sm:$0xf] %vm253, %v5522
      %v5741 = vld [vmem:[%s1170 + $0x74] sm:$0x1]
      %v5742 = vsel %vm264, %v5523, %v5741
      %5743 = vst [vmem:[%s1170 + $0x74] sm:$0x1] %v5742
      %v5744 = vld [vmem:[%s1170 + $0x78] sm:$0xf]
      %v5745 = vsel %vm1172, %v5530, %v5744
      %5746 = vst [vmem:[%s1170 + $0x78] sm:$0xf] %v5745
      %5747 = vst.msk [vmem:[%s1170 + $0x7c] sm:$0xf] %vm253, %v5539
      %v5748 = vld [vmem:[%s1170 + $0x80] sm:$0x1]
      %v5749 = vsel %vm264, %v5540, %v5748
      %5750 = vst [vmem:[%s1170 + $0x80] sm:$0x1] %v5749
      %v5751 = vld [vmem:[%s1170 + $0x84] sm:$0xf]
      %v5752 = vsel %vm1172, %v5547, %v5751
      %5753 = vst [vmem:[%s1170 + $0x84] sm:$0xf] %v5752
      %5754 = vst.msk [vmem:[%s1170 + $0x88] sm:$0xf] %vm253, %v5556
      %v5755 = vld [vmem:[%s1170 + $0x8c] sm:$0x1]
      %v5756 = vsel %vm264, %v5557, %v5755
      %5757 = vst [vmem:[%s1170 + $0x8c] sm:$0x1] %v5756
      %v5758 = vld [vmem:[%s1170 + $0x90] sm:$0xf]
      %v5759 = vsel %vm1172, %v5564, %v5758
      %5760 = vst [vmem:[%s1170 + $0x90] sm:$0xf] %v5759
      %5761 = vst.msk [vmem:[%s1170 + $0x94] sm:$0xf] %vm253, %v5573
      %v5762 = vld [vmem:[%s1170 + $0x98] sm:$0x1]
      %v5763 = vsel %vm264, %v5574, %v5762
      %5764 = vst [vmem:[%s1170 + $0x98] sm:$0x1] %v5763
      %v5765 = vld [vmem:[%s1170 + $0x9c] sm:$0xf]
      %v5766 = vsel %vm1172, %v5581, %v5765
      %5767 = vst [vmem:[%s1170 + $0x9c] sm:$0xf] %v5766
      %5768 = vst.msk [vmem:[%s1170 + $0xa0] sm:$0xf] %vm253, %v5590
      %v5769 = vld [vmem:[%s1170 + $0xa4] sm:$0x1]
      %v5770 = vsel %vm264, %v5591, %v5769
      %5771 = vst [vmem:[%s1170 + $0xa4] sm:$0x1] %v5770
      %v5772 = vld [vmem:[%s1170 + $0xa8] sm:$0xf]
      %v5773 = vsel %vm1172, %v5598, %v5772
      %5774 = vst [vmem:[%s1170 + $0xa8] sm:$0xf] %v5773
      %5775 = vst.msk [vmem:[%s1170 + $0xac] sm:$0xf] %vm253, %v5607
      %v5776 = vld [vmem:[%s1170 + $0xb0] sm:$0x1]
      %v5777 = vsel %vm264, %v5608, %v5776
      %5778 = vst [vmem:[%s1170 + $0xb0] sm:$0x1] %v5777
      %v5779 = vld [vmem:[%s1170 + $0xb4] sm:$0xf]
      %v5780 = vsel %vm1172, %v5615, %v5779
      %5781 = vst [vmem:[%s1170 + $0xb4] sm:$0xf] %v5780
      %5782 = vst.msk [vmem:[%s1170 + $0xb8] sm:$0xf] %vm253, %v5624
      %v5783 = vld [vmem:[%s1170 + $0xbc] sm:$0x1]
      %v5784 = vsel %vm264, %v5625, %v5783
      %5785 = vst [vmem:[%s1170 + $0xbc] sm:$0x1] %v5784
      %v5786 = vld [vmem:[#allocation2] sm:$0xf]
      %v5787 = vld [vmem:[#allocation2 + $0x4] sm:$0xf]
      %v5788 = vld [vmem:[#allocation2 + $0xc] sm:$0xf]
      %v5789 = vld [vmem:[#allocation2 + $0x10] sm:$0xf]
      %v5790 = vld [vmem:[#allocation2 + $0x18] sm:$0xf]
      %v5791 = vld [vmem:[#allocation2 + $0x1c] sm:$0xf]
      %v5792 = vld [vmem:[#allocation2 + $0x24] sm:$0xf]
      %v5793 = vld [vmem:[#allocation2 + $0x28] sm:$0xf]
      %v5794 = vld [vmem:[#allocation2 + $0x30] sm:$0xf]
      %v5795 = vld [vmem:[#allocation2 + $0x34] sm:$0xf]
      %v5796 = vld [vmem:[#allocation2 + $0x3c] sm:$0xf]
      %v5797 = vld [vmem:[#allocation2 + $0x40] sm:$0xf]
      %v5798 = vld [vmem:[#allocation2 + $0x48] sm:$0xf]
      %v5799 = vld [vmem:[#allocation2 + $0x4c] sm:$0xf]
      %v5800 = vld [vmem:[#allocation2 + $0x54] sm:$0xf]
      %v5801 = vld [vmem:[#allocation2 + $0x58] sm:$0xf]
      %v5802 = vld [vmem:[#allocation2 + $0x60] sm:$0xf]
      %v5803 = vld [vmem:[#allocation2 + $0x64] sm:$0xf]
      %v5804 = vld [vmem:[#allocation2 + $0x6c] sm:$0xf]
      %v5805 = vld [vmem:[#allocation2 + $0x70] sm:$0xf]
      %v5806 = vld [vmem:[#allocation2 + $0x78] sm:$0xf]
      %v5807 = vld [vmem:[#allocation2 + $0x7c] sm:$0xf]
      %v5808 = vld [vmem:[#allocation2 + $0x84] sm:$0xf]
      %v5809 = vld [vmem:[#allocation2 + $0x88] sm:$0xf]
      %v5810 = vld [vmem:[#allocation2 + $0x90] sm:$0xf]
      %v5811 = vld [vmem:[#allocation2 + $0x94] sm:$0xf]
      %v5812 = vld [vmem:[#allocation2 + $0x9c] sm:$0xf]
      %v5813 = vld [vmem:[#allocation2 + $0xa0] sm:$0xf]
      %v5814 = vld [vmem:[#allocation2 + $0xa8] sm:$0xf]
      %v5815 = vld [vmem:[#allocation2 + $0xac] sm:$0xf]
      %v5816 = vld [vmem:[#allocation2 + $0xb4] sm:$0xf]
      %v5817 = vld [vmem:[#allocation2 + $0xb8] sm:$0xf]
      %v5850 = vunpack.c.l.b16 %v5786
      %v5851 = vunpack.c.l.b16 %v5787
      %v5852 = vunpack.c.l.b16 %v5788
      %v5853 = vunpack.c.l.b16 %v5789
      %v5854 = vunpack.c.l.b16 %v5790
      %v5855 = vunpack.c.l.b16 %v5791
      %v5856 = vunpack.c.l.b16 %v5792
      %v5857 = vunpack.c.l.b16 %v5793
      %v5858 = vunpack.c.l.b16 %v5794
      %v5859 = vunpack.c.l.b16 %v5795
      %v5860 = vunpack.c.l.b16 %v5796
      %v5861 = vunpack.c.l.b16 %v5797
      %v5862 = vunpack.c.l.b16 %v5798
      %v5863 = vunpack.c.l.b16 %v5799
      %v5864 = vunpack.c.l.b16 %v5800
      %v5865 = vunpack.c.l.b16 %v5801
      %v5866 = vunpack.c.l.b16 %v5802
      %v5867 = vunpack.c.l.b16 %v5803
      %v5868 = vunpack.c.l.b16 %v5804
      %v5869 = vunpack.c.l.b16 %v5805
      %v5870 = vunpack.c.l.b16 %v5806
      %v5871 = vunpack.c.l.b16 %v5807
      %v5872 = vunpack.c.l.b16 %v5808
      %v5873 = vunpack.c.l.b16 %v5809
      %v5874 = vunpack.c.l.b16 %v5810
      %v5875 = vunpack.c.l.b16 %v5811
      %v5876 = vunpack.c.l.b16 %v5812
      %v5877 = vunpack.c.l.b16 %v5813
      %v5878 = vunpack.c.l.b16 %v5814
      %v5879 = vunpack.c.l.b16 %v5815
      %v5880 = vunpack.c.l.b16 %v5816
      %v5881 = vunpack.c.l.b16 %v5817
      %v5882 = vpack.c.b16 %v5851, %v5850
      %v5883 = vpack.c.b16 %v5853, %v5852
      %v5884 = vpack.c.b16 %v5855, %v5854
      %v5885 = vpack.c.b16 %v5857, %v5856
      %v5886 = vpack.c.b16 %v5859, %v5858
      %v5887 = vpack.c.b16 %v5861, %v5860
      %v5888 = vpack.c.b16 %v5863, %v5862
      %v5889 = vpack.c.b16 %v5865, %v5864
      %v5890 = vpack.c.b16 %v5867, %v5866
      %v5891 = vpack.c.b16 %v5869, %v5868
      %v5892 = vpack.c.b16 %v5871, %v5870
      %v5893 = vpack.c.b16 %v5873, %v5872
      %v5894 = vpack.c.b16 %v5875, %v5874
      %v5895 = vpack.c.b16 %v5877, %v5876
      %v5896 = vpack.c.b16 %v5879, %v5878
      %v5897 = vpack.c.b16 %v5881, %v5880
      %5914 = vst.msk [vmem:[#allocation3] sm:$0xff] %vm1414, %v5882
      %5915 = vst.msk [vmem:[#allocation3 + $0x28] sm:$0xff] %vm1414, %v5883
      %5916 = vst.msk [vmem:[#allocation3 + $0x50] sm:$0xff] %vm1414, %v5884
      %5917 = vst.msk [vmem:[#allocation3 + $0x78] sm:$0xff] %vm1414, %v5885
      %5918 = vst.msk [vmem:[#allocation3 + $0xa0] sm:$0xff] %vm1414, %v5886
      %5919 = vst.msk [vmem:[#allocation3 + $0xc8] sm:$0xff] %vm1414, %v5887
      %5920 = vst.msk [vmem:[#allocation3 + $0xf0] sm:$0xff] %vm1414, %v5888
      %5921 = vst.msk [vmem:[#allocation3 + $0x118] sm:$0xff] %vm1414, %v5889
      %5922 = vst.msk [vmem:[#allocation3 + $0x140] sm:$0xff] %vm1414, %v5890
      %5923 = vst.msk [vmem:[#allocation3 + $0x168] sm:$0xff] %vm1414, %v5891
      %5924 = vst.msk [vmem:[#allocation3 + $0x190] sm:$0xff] %vm1414, %v5892
      %5925 = vst.msk [vmem:[#allocation3 + $0x1b8] sm:$0xff] %vm1414, %v5893
      %5926 = vst.msk [vmem:[#allocation3 + $0x1e0] sm:$0xff] %vm1414, %v5894
      %5927 = vst.msk [vmem:[#allocation3 + $0x208] sm:$0xff] %vm1414, %v5895
      %5928 = vst.msk [vmem:[#allocation3 + $0x230] sm:$0xff] %vm1414, %v5896
      %5929 = vst.msk [vmem:[#allocation3 + $0x258] sm:$0xff] %vm1414, %v5897
      %v5930 = vld [vmem:[#allocation2] sm:$0xf]
      %v5931 = vld [vmem:[#allocation2 + $0x4] sm:$0xf]
      %v5932 = vld [vmem:[#allocation2 + $0x8] sm:$0x1]
      %v5933 = vld [vmem:[#allocation2 + $0xc] sm:$0xf]
      %v5934 = vld [vmem:[#allocation2 + $0x10] sm:$0xf]
      %v5935 = vld [vmem:[#allocation2 + $0x14] sm:$0x1]
      %v5936 = vld [vmem:[#allocation2 + $0x18] sm:$0xf]
      %v5937 = vld [vmem:[#allocation2 + $0x1c] sm:$0xf]
      %v5938 = vld [vmem:[#allocation2 + $0x20] sm:$0x1]
      %v5939 = vld [vmem:[#allocation2 + $0x24] sm:$0xf]
      %v5940 = vld [vmem:[#allocation2 + $0x28] sm:$0xf]
      %v5941 = vld [vmem:[#allocation2 + $0x2c] sm:$0x1]
      %v5942 = vld [vmem:[#allocation2 + $0x30] sm:$0xf]
      %v5943 = vld [vmem:[#allocation2 + $0x34] sm:$0xf]
      %v5944 = vld [vmem:[#allocation2 + $0x38] sm:$0x1]
      %v5945 = vld [vmem:[#allocation2 + $0x3c] sm:$0xf]
      %v5946 = vld [vmem:[#allocation2 + $0x40] sm:$0xf]
      %v5947 = vld [vmem:[#allocation2 + $0x44] sm:$0x1]
      %v5948 = vld [vmem:[#allocation2 + $0x48] sm:$0xf]
      %v5949 = vld [vmem:[#allocation2 + $0x4c] sm:$0xf]
      %v5950 = vld [vmem:[#allocation2 + $0x50] sm:$0x1]
      %v5951 = vld [vmem:[#allocation2 + $0x54] sm:$0xf]
      %v5952 = vld [vmem:[#allocation2 + $0x58] sm:$0xf]
      %v5953 = vld [vmem:[#allocation2 + $0x5c] sm:$0x1]
      %v5954 = vld [vmem:[#allocation2 + $0x60] sm:$0xf]
      %v5955 = vld [vmem:[#allocation2 + $0x64] sm:$0xf]
      %v5956 = vld [vmem:[#allocation2 + $0x68] sm:$0x1]
      %v5957 = vld [vmem:[#allocation2 + $0x6c] sm:$0xf]
      %v5958 = vld [vmem:[#allocation2 + $0x70] sm:$0xf]
      %v5959 = vld [vmem:[#allocation2 + $0x74] sm:$0x1]
      %v5960 = vld [vmem:[#allocation2 + $0x78] sm:$0xf]
      %v5961 = vld [vmem:[#allocation2 + $0x7c] sm:$0xf]
      %v5962 = vld [vmem:[#allocation2 + $0x80] sm:$0x1]
      %v5963 = vld [vmem:[#allocation2 + $0x84] sm:$0xf]
      %v5964 = vld [vmem:[#allocation2 + $0x88] sm:$0xf]
      %v5965 = vld [vmem:[#allocation2 + $0x8c] sm:$0x1]
      %v5966 = vld [vmem:[#allocation2 + $0x90] sm:$0xf]
      %v5967 = vld [vmem:[#allocation2 + $0x94] sm:$0xf]
      %v5968 = vld [vmem:[#allocation2 + $0x98] sm:$0x1]
      %v5969 = vld [vmem:[#allocation2 + $0x9c] sm:$0xf]
      %v5970 = vld [vmem:[#allocation2 + $0xa0] sm:$0xf]
      %v5971 = vld [vmem:[#allocation2 + $0xa4] sm:$0x1]
      %v5972 = vld [vmem:[#allocation2 + $0xa8] sm:$0xf]
      %v5973 = vld [vmem:[#allocation2 + $0xac] sm:$0xf]
      %v5974 = vld [vmem:[#allocation2 + $0xb0] sm:$0x1]
      %v5975 = vld [vmem:[#allocation2 + $0xb4] sm:$0xf]
      %v5976 = vld [vmem:[#allocation2 + $0xb8] sm:$0xf]
      %v5977 = vld [vmem:[#allocation2 + $0xbc] sm:$0x1]
      %v5979 = vshrl.u32 %v5930, 16
      %v5981 = vrot.slane %v5979, 4
      %v5982 = vshll.u32 %v5930, 16
      %v5984 = vrot.slane %v5982, 5
      %v5985 = vor.u32 %v5981, %v5984
      %v5986 = vrot.slane %v5985, 4
      %v5988 = vshll.u32 %v5931, 16
      %v5990 = vrot.slane %v5988, 5
      %v5991 = vsel %vm1481, %v5986, %v5990
      %v5992 = vshrl.u32 %v5931, 16
      %v5994 = vrot.slane %v5992, 4
      %v5995 = vor.u32 %v5994, %v5990
      %v5996 = vrot.slane %v5995, 4
      %v5998 = vshll.u32 %v5932, 16
      %v6000 = vrot.slane %v5998, 5
      %v6001 = vsel %vm1481, %v5996, %v6000
      %v6003 = vshrl.u32 %v5933, 16
      %v6005 = vrot.slane %v6003, 4
      %v6006 = vshll.u32 %v5933, 16
      %v6008 = vrot.slane %v6006, 5
      %v6009 = vor.u32 %v6005, %v6008
      %v6010 = vrot.slane %v6009, 4
      %v6012 = vshll.u32 %v5934, 16
      %v6014 = vrot.slane %v6012, 5
      %v6015 = vsel %vm1481, %v6010, %v6014
      %v6016 = vshrl.u32 %v5934, 16
      %v6018 = vrot.slane %v6016, 4
      %v6019 = vor.u32 %v6018, %v6014
      %v6020 = vrot.slane %v6019, 4
      %v6022 = vshll.u32 %v5935, 16
      %v6024 = vrot.slane %v6022, 5
      %v6025 = vsel %vm1481, %v6020, %v6024
      %v6027 = vshrl.u32 %v5936, 16
      %v6029 = vrot.slane %v6027, 4
      %v6030 = vshll.u32 %v5936, 16
      %v6032 = vrot.slane %v6030, 5
      %v6033 = vor.u32 %v6029, %v6032
      %v6034 = vrot.slane %v6033, 4
      %v6036 = vshll.u32 %v5937, 16
      %v6038 = vrot.slane %v6036, 5
      %v6039 = vsel %vm1481, %v6034, %v6038
      %v6040 = vshrl.u32 %v5937, 16
      %v6042 = vrot.slane %v6040, 4
      %v6043 = vor.u32 %v6042, %v6038
      %v6044 = vrot.slane %v6043, 4
      %v6046 = vshll.u32 %v5938, 16
      %v6048 = vrot.slane %v6046, 5
      %v6049 = vsel %vm1481, %v6044, %v6048
      %v6051 = vshrl.u32 %v5939, 16
      %v6053 = vrot.slane %v6051, 4
      %v6054 = vshll.u32 %v5939, 16
      %v6056 = vrot.slane %v6054, 5
      %v6057 = vor.u32 %v6053, %v6056
      %v6058 = vrot.slane %v6057, 4
      %v6060 = vshll.u32 %v5940, 16
      %v6062 = vrot.slane %v6060, 5
      %v6063 = vsel %vm1481, %v6058, %v6062
      %v6064 = vshrl.u32 %v5940, 16
      %v6066 = vrot.slane %v6064, 4
      %v6067 = vor.u32 %v6066, %v6062
      %v6068 = vrot.slane %v6067, 4
      %v6070 = vshll.u32 %v5941, 16
      %v6072 = vrot.slane %v6070, 5
      %v6073 = vsel %vm1481, %v6068, %v6072
      %v6075 = vshrl.u32 %v5942, 16
      %v6077 = vrot.slane %v6075, 4
      %v6078 = vshll.u32 %v5942, 16
      %v6080 = vrot.slane %v6078, 5
      %v6081 = vor.u32 %v6077, %v6080
      %v6082 = vrot.slane %v6081, 4
      %v6084 = vshll.u32 %v5943, 16
      %v6086 = vrot.slane %v6084, 5
      %v6087 = vsel %vm1481, %v6082, %v6086
      %v6088 = vshrl.u32 %v5943, 16
      %v6090 = vrot.slane %v6088, 4
      %v6091 = vor.u32 %v6090, %v6086
      %v6092 = vrot.slane %v6091, 4
      %v6094 = vshll.u32 %v5944, 16
      %v6096 = vrot.slane %v6094, 5
      %v6097 = vsel %vm1481, %v6092, %v6096
      %v6099 = vshrl.u32 %v5945, 16
      %v6101 = vrot.slane %v6099, 4
      %v6102 = vshll.u32 %v5945, 16
      %v6104 = vrot.slane %v6102, 5
      %v6105 = vor.u32 %v6101, %v6104
      %v6106 = vrot.slane %v6105, 4
      %v6108 = vshll.u32 %v5946, 16
      %v6110 = vrot.slane %v6108, 5
      %v6111 = vsel %vm1481, %v6106, %v6110
      %v6112 = vshrl.u32 %v5946, 16
      %v6114 = vrot.slane %v6112, 4
      %v6115 = vor.u32 %v6114, %v6110
      %v6116 = vrot.slane %v6115, 4
      %v6118 = vshll.u32 %v5947, 16
      %v6120 = vrot.slane %v6118, 5
      %v6121 = vsel %vm1481, %v6116, %v6120
      %v6123 = vshrl.u32 %v5948, 16
      %v6125 = vrot.slane %v6123, 4
      %v6126 = vshll.u32 %v5948, 16
      %v6128 = vrot.slane %v6126, 5
      %v6129 = vor.u32 %v6125, %v6128
      %v6130 = vrot.slane %v6129, 4
      %v6132 = vshll.u32 %v5949, 16
      %v6134 = vrot.slane %v6132, 5
      %v6135 = vsel %vm1481, %v6130, %v6134
      %v6136 = vshrl.u32 %v5949, 16
      %v6138 = vrot.slane %v6136, 4
      %v6139 = vor.u32 %v6138, %v6134
      %v6140 = vrot.slane %v6139, 4
      %v6142 = vshll.u32 %v5950, 16
      %v6144 = vrot.slane %v6142, 5
      %v6145 = vsel %vm1481, %v6140, %v6144
      %v6147 = vshrl.u32 %v5951, 16
      %v6149 = vrot.slane %v6147, 4
      %v6150 = vshll.u32 %v5951, 16
      %v6152 = vrot.slane %v6150, 5
      %v6153 = vor.u32 %v6149, %v6152
      %v6154 = vrot.slane %v6153, 4
      %v6156 = vshll.u32 %v5952, 16
      %v6158 = vrot.slane %v6156, 5
      %v6159 = vsel %vm1481, %v6154, %v6158
      %v6160 = vshrl.u32 %v5952, 16
      %v6162 = vrot.slane %v6160, 4
      %v6163 = vor.u32 %v6162, %v6158
      %v6164 = vrot.slane %v6163, 4
      %v6166 = vshll.u32 %v5953, 16
      %v6168 = vrot.slane %v6166, 5
      %v6169 = vsel %vm1481, %v6164, %v6168
      %v6171 = vshrl.u32 %v5954, 16
      %v6173 = vrot.slane %v6171, 4
      %v6174 = vshll.u32 %v5954, 16
      %v6176 = vrot.slane %v6174, 5
      %v6177 = vor.u32 %v6173, %v6176
      %v6178 = vrot.slane %v6177, 4
      %v6180 = vshll.u32 %v5955, 16
      %v6182 = vrot.slane %v6180, 5
      %v6183 = vsel %vm1481, %v6178, %v6182
      %v6184 = vshrl.u32 %v5955, 16
      %v6186 = vrot.slane %v6184, 4
      %v6187 = vor.u32 %v6186, %v6182
      %v6188 = vrot.slane %v6187, 4
      %v6190 = vshll.u32 %v5956, 16
      %v6192 = vrot.slane %v6190, 5
      %v6193 = vsel %vm1481, %v6188, %v6192
      %v6195 = vshrl.u32 %v5957, 16
      %v6197 = vrot.slane %v6195, 4
      %v6198 = vshll.u32 %v5957, 16
      %v6200 = vrot.slane %v6198, 5
      %v6201 = vor.u32 %v6197, %v6200
      %v6202 = vrot.slane %v6201, 4
      %v6204 = vshll.u32 %v5958, 16
      %v6206 = vrot.slane %v6204, 5
      %v6207 = vsel %vm1481, %v6202, %v6206
      %v6208 = vshrl.u32 %v5958, 16
      %v6210 = vrot.slane %v6208, 4
      %v6211 = vor.u32 %v6210, %v6206
      %v6212 = vrot.slane %v6211, 4
      %v6214 = vshll.u32 %v5959, 16
      %v6216 = vrot.slane %v6214, 5
      %v6217 = vsel %vm1481, %v6212, %v6216
      %v6219 = vshrl.u32 %v5960, 16
      %v6221 = vrot.slane %v6219, 4
      %v6222 = vshll.u32 %v5960, 16
      %v6224 = vrot.slane %v6222, 5
      %v6225 = vor.u32 %v6221, %v6224
      %v6226 = vrot.slane %v6225, 4
      %v6228 = vshll.u32 %v5961, 16
      %v6230 = vrot.slane %v6228, 5
      %v6231 = vsel %vm1481, %v6226, %v6230
      %v6232 = vshrl.u32 %v5961, 16
      %v6234 = vrot.slane %v6232, 4
      %v6235 = vor.u32 %v6234, %v6230
      %v6236 = vrot.slane %v6235, 4
      %v6238 = vshll.u32 %v5962, 16
      %v6240 = vrot.slane %v6238, 5
      %v6241 = vsel %vm1481, %v6236, %v6240
      %v6243 = vshrl.u32 %v5963, 16
      %v6245 = vrot.slane %v6243, 4
      %v6246 = vshll.u32 %v5963, 16
      %v6248 = vrot.slane %v6246, 5
      %v6249 = vor.u32 %v6245, %v6248
      %v6250 = vrot.slane %v6249, 4
      %v6252 = vshll.u32 %v5964, 16
      %v6254 = vrot.slane %v6252, 5
      %v6255 = vsel %vm1481, %v6250, %v6254
      %v6256 = vshrl.u32 %v5964, 16
      %v6258 = vrot.slane %v6256, 4
      %v6259 = vor.u32 %v6258, %v6254
      %v6260 = vrot.slane %v6259, 4
      %v6262 = vshll.u32 %v5965, 16
      %v6264 = vrot.slane %v6262, 5
      %v6265 = vsel %vm1481, %v6260, %v6264
      %v6267 = vshrl.u32 %v5966, 16
      %v6269 = vrot.slane %v6267, 4
      %v6270 = vshll.u32 %v5966, 16
      %v6272 = vrot.slane %v6270, 5
      %v6273 = vor.u32 %v6269, %v6272
      %v6274 = vrot.slane %v6273, 4
      %v6276 = vshll.u32 %v5967, 16
      %v6278 = vrot.slane %v6276, 5
      %v6279 = vsel %vm1481, %v6274, %v6278
      %v6280 = vshrl.u32 %v5967, 16
      %v6282 = vrot.slane %v6280, 4
      %v6283 = vor.u32 %v6282, %v6278
      %v6284 = vrot.slane %v6283, 4
      %v6286 = vshll.u32 %v5968, 16
      %v6288 = vrot.slane %v6286, 5
      %v6289 = vsel %vm1481, %v6284, %v6288
      %v6291 = vshrl.u32 %v5969, 16
      %v6293 = vrot.slane %v6291, 4
      %v6294 = vshll.u32 %v5969, 16
      %v6296 = vrot.slane %v6294, 5
      %v6297 = vor.u32 %v6293, %v6296
      %v6298 = vrot.slane %v6297, 4
      %v6300 = vshll.u32 %v5970, 16
      %v6302 = vrot.slane %v6300, 5
      %v6303 = vsel %vm1481, %v6298, %v6302
      %v6304 = vshrl.u32 %v5970, 16
      %v6306 = vrot.slane %v6304, 4
      %v6307 = vor.u32 %v6306, %v6302
      %v6308 = vrot.slane %v6307, 4
      %v6310 = vshll.u32 %v5971, 16
      %v6312 = vrot.slane %v6310, 5
      %v6313 = vsel %vm1481, %v6308, %v6312
      %v6315 = vshrl.u32 %v5972, 16
      %v6317 = vrot.slane %v6315, 4
      %v6318 = vshll.u32 %v5972, 16
      %v6320 = vrot.slane %v6318, 5
      %v6321 = vor.u32 %v6317, %v6320
      %v6322 = vrot.slane %v6321, 4
      %v6324 = vshll.u32 %v5973, 16
      %v6326 = vrot.slane %v6324, 5
      %v6327 = vsel %vm1481, %v6322, %v6326
      %v6328 = vshrl.u32 %v5973, 16
      %v6330 = vrot.slane %v6328, 4
      %v6331 = vor.u32 %v6330, %v6326
      %v6332 = vrot.slane %v6331, 4
      %v6334 = vshll.u32 %v5974, 16
      %v6336 = vrot.slane %v6334, 5
      %v6337 = vsel %vm1481, %v6332, %v6336
      %v6339 = vshrl.u32 %v5975, 16
      %v6341 = vrot.slane %v6339, 4
      %v6342 = vshll.u32 %v5975, 16
      %v6344 = vrot.slane %v6342, 5
      %v6345 = vor.u32 %v6341, %v6344
      %v6346 = vrot.slane %v6345, 4
      %v6348 = vshll.u32 %v5976, 16
      %v6350 = vrot.slane %v6348, 5
      %v6351 = vsel %vm1481, %v6346, %v6350
      %v6352 = vshrl.u32 %v5976, 16
      %v6354 = vrot.slane %v6352, 4
      %v6355 = vor.u32 %v6354, %v6350
      %v6356 = vrot.slane %v6355, 4
      %v6358 = vshll.u32 %v5977, 16
      %v6360 = vrot.slane %v6358, 5
      %v6361 = vsel %vm1481, %v6356, %v6360
      %v6362 = vunpack.c.l.b16 %v5991
      %v6363 = vunpack.c.l.b16 %v6001
      %v6364 = vunpack.c.l.b16 %v6015
      %v6365 = vunpack.c.l.b16 %v6025
      %v6366 = vunpack.c.l.b16 %v6039
      %v6367 = vunpack.c.l.b16 %v6049
      %v6368 = vunpack.c.l.b16 %v6063
      %v6369 = vunpack.c.l.b16 %v6073
      %v6370 = vunpack.c.l.b16 %v6087
      %v6371 = vunpack.c.l.b16 %v6097
      %v6372 = vunpack.c.l.b16 %v6111
      %v6373 = vunpack.c.l.b16 %v6121
      %v6374 = vunpack.c.l.b16 %v6135
      %v6375 = vunpack.c.l.b16 %v6145
      %v6376 = vunpack.c.l.b16 %v6159
      %v6377 = vunpack.c.l.b16 %v6169
      %v6378 = vunpack.c.l.b16 %v6183
      %v6379 = vunpack.c.l.b16 %v6193
      %v6380 = vunpack.c.l.b16 %v6207
      %v6381 = vunpack.c.l.b16 %v6217
      %v6382 = vunpack.c.l.b16 %v6231
      %v6383 = vunpack.c.l.b16 %v6241
      %v6384 = vunpack.c.l.b16 %v6255
      %v6385 = vunpack.c.l.b16 %v6265
      %v6386 = vunpack.c.l.b16 %v6279
      %v6387 = vunpack.c.l.b16 %v6289
      %v6388 = vunpack.c.l.b16 %v6303
      %v6389 = vunpack.c.l.b16 %v6313
      %v6390 = vunpack.c.l.b16 %v6327
      %v6391 = vunpack.c.l.b16 %v6337
      %v6392 = vunpack.c.l.b16 %v6351
      %v6393 = vunpack.c.l.b16 %v6361
      %v6394 = vpack.c.b16 %v6363, %v6362
      %v6395 = vpack.c.b16 %v6365, %v6364
      %v6396 = vpack.c.b16 %v6367, %v6366
      %v6397 = vpack.c.b16 %v6369, %v6368
      %v6398 = vpack.c.b16 %v6371, %v6370
      %v6399 = vpack.c.b16 %v6373, %v6372
      %v6400 = vpack.c.b16 %v6375, %v6374
      %v6401 = vpack.c.b16 %v6377, %v6376
      %v6402 = vpack.c.b16 %v6379, %v6378
      %v6403 = vpack.c.b16 %v6381, %v6380
      %v6404 = vpack.c.b16 %v6383, %v6382
      %v6405 = vpack.c.b16 %v6385, %v6384
      %v6406 = vpack.c.b16 %v6387, %v6386
      %v6407 = vpack.c.b16 %v6389, %v6388
      %v6408 = vpack.c.b16 %v6391, %v6390
      %v6409 = vpack.c.b16 %v6393, %v6392
      %6410 = vrot.lane.b32.xlu0 %v6394, 64
      %v6411 = vpop.permute.xlu0 %6410
      %6412 = vrot.lane.b32.xlu0 %v6395, 64
      %v6413 = vpop.permute.xlu0 %6412
      %6414 = vrot.lane.b32.xlu0 %v6396, 64
      %v6415 = vpop.permute.xlu0 %6414
      %6416 = vrot.lane.b32.xlu0 %v6397, 64
      %v6417 = vpop.permute.xlu0 %6416
      %6418 = vrot.lane.b32.xlu0 %v6398, 64
      %v6419 = vpop.permute.xlu0 %6418
      %6420 = vrot.lane.b32.xlu0 %v6399, 64
      %v6421 = vpop.permute.xlu0 %6420
      %6422 = vrot.lane.b32.xlu0 %v6400, 64
      %v6423 = vpop.permute.xlu0 %6422
      %6424 = vrot.lane.b32.xlu0 %v6401, 64
      %v6425 = vpop.permute.xlu0 %6424
      %6426 = vrot.lane.b32.xlu0 %v6402, 64
      %v6427 = vpop.permute.xlu0 %6426
      %6428 = vrot.lane.b32.xlu0 %v6403, 64
      %v6429 = vpop.permute.xlu0 %6428
      %6430 = vrot.lane.b32.xlu0 %v6404, 64
      %v6431 = vpop.permute.xlu0 %6430
      %6432 = vrot.lane.b32.xlu0 %v6405, 64
      %v6433 = vpop.permute.xlu0 %6432
      %6434 = vrot.lane.b32.xlu0 %v6406, 64
      %v6435 = vpop.permute.xlu0 %6434
      %6436 = vrot.lane.b32.xlu0 %v6407, 64
      %v6437 = vpop.permute.xlu0 %6436
      %6438 = vrot.lane.b32.xlu0 %v6408, 64
      %v6439 = vpop.permute.xlu0 %6438
      %6440 = vrot.lane.b32.xlu0 %v6409, 64
      %v6441 = vpop.permute.xlu0 %6440
      %6458 = vst.msk [vmem:[#allocation3] sm:$0xff] %vm1962, %v6411
      %6459 = vst.msk [vmem:[#allocation3 + $0x28] sm:$0xff] %vm1962, %v6413
      %6460 = vst.msk [vmem:[#allocation3 + $0x50] sm:$0xff] %vm1962, %v6415
      %6461 = vst.msk [vmem:[#allocation3 + $0x78] sm:$0xff] %vm1962, %v6417
      %6462 = vst.msk [vmem:[#allocation3 + $0xa0] sm:$0xff] %vm1962, %v6419
      %6463 = vst.msk [vmem:[#allocation3 + $0xc8] sm:$0xff] %vm1962, %v6421
      %6464 = vst.msk [vmem:[#allocation3 + $0xf0] sm:$0xff] %vm1962, %v6423
      %6465 = vst.msk [vmem:[#allocation3 + $0x118] sm:$0xff] %vm1962, %v6425
      %6466 = vst.msk [vmem:[#allocation3 + $0x140] sm:$0xff] %vm1962, %v6427
      %6467 = vst.msk [vmem:[#allocation3 + $0x168] sm:$0xff] %vm1962, %v6429
      %6468 = vst.msk [vmem:[#allocation3 + $0x190] sm:$0xff] %vm1962, %v6431
      %6469 = vst.msk [vmem:[#allocation3 + $0x1b8] sm:$0xff] %vm1962, %v6433
      %6470 = vst.msk [vmem:[#allocation3 + $0x1e0] sm:$0xff] %vm1962, %v6435
      %6471 = vst.msk [vmem:[#allocation3 + $0x208] sm:$0xff] %vm1962, %v6437
      %6472 = vst.msk [vmem:[#allocation3 + $0x230] sm:$0xff] %vm1962, %v6439
      %6473 = vst.msk [vmem:[#allocation3 + $0x258] sm:$0xff] %vm1962, %v6441
      %v6474 = vld [vmem:[#allocation2] sm:$0xe]
      %v6475 = vld [vmem:[#allocation2 + $0x4] sm:$0xf]
      %v6476 = vld [vmem:[#allocation2 + $0x8] sm:$0x1]
      %v6477 = vld [vmem:[#allocation2 + $0xc] sm:$0xe]
      %v6478 = vld [vmem:[#allocation2 + $0x10] sm:$0xf]
      %v6479 = vld [vmem:[#allocation2 + $0x14] sm:$0x1]
      %v6480 = vld [vmem:[#allocation2 + $0x18] sm:$0xe]
      %v6481 = vld [vmem:[#allocation2 + $0x1c] sm:$0xf]
      %v6482 = vld [vmem:[#allocation2 + $0x20] sm:$0x1]
      %v6483 = vld [vmem:[#allocation2 + $0x24] sm:$0xe]
      %v6484 = vld [vmem:[#allocation2 + $0x28] sm:$0xf]
      %v6485 = vld [vmem:[#allocation2 + $0x2c] sm:$0x1]
      %v6486 = vld [vmem:[#allocation2 + $0x30] sm:$0xe]
      %v6487 = vld [vmem:[#allocation2 + $0x34] sm:$0xf]
      %v6488 = vld [vmem:[#allocation2 + $0x38] sm:$0x1]
      %v6489 = vld [vmem:[#allocation2 + $0x3c] sm:$0xe]
      %v6490 = vld [vmem:[#allocation2 + $0x40] sm:$0xf]
      %v6491 = vld [vmem:[#allocation2 + $0x44] sm:$0x1]
      %v6492 = vld [vmem:[#allocation2 + $0x48] sm:$0xe]
      %v6493 = vld [vmem:[#allocation2 + $0x4c] sm:$0xf]
      %v6494 = vld [vmem:[#allocation2 + $0x50] sm:$0x1]
      %v6495 = vld [vmem:[#allocation2 + $0x54] sm:$0xe]
      %v6496 = vld [vmem:[#allocation2 + $0x58] sm:$0xf]
      %v6497 = vld [vmem:[#allocation2 + $0x5c] sm:$0x1]
      %v6498 = vld [vmem:[#allocation2 + $0x60] sm:$0xe]
      %v6499 = vld [vmem:[#allocation2 + $0x64] sm:$0xf]
      %v6500 = vld [vmem:[#allocation2 + $0x68] sm:$0x1]
      %v6501 = vld [vmem:[#allocation2 + $0x6c] sm:$0xe]
      %v6502 = vld [vmem:[#allocation2 + $0x70] sm:$0xf]
      %v6503 = vld [vmem:[#allocation2 + $0x74] sm:$0x1]
      %v6504 = vld [vmem:[#allocation2 + $0x78] sm:$0xe]
      %v6505 = vld [vmem:[#allocation2 + $0x7c] sm:$0xf]
      %v6506 = vld [vmem:[#allocation2 + $0x80] sm:$0x1]
      %v6507 = vld [vmem:[#allocation2 + $0x84] sm:$0xe]
      %v6508 = vld [vmem:[#allocation2 + $0x88] sm:$0xf]
      %v6509 = vld [vmem:[#allocation2 + $0x8c] sm:$0x1]
      %v6510 = vld [vmem:[#allocation2 + $0x90] sm:$0xe]
      %v6511 = vld [vmem:[#allocation2 + $0x94] sm:$0xf]
      %v6512 = vld [vmem:[#allocation2 + $0x98] sm:$0x1]
      %v6513 = vld [vmem:[#allocation2 + $0x9c] sm:$0xe]
      %v6514 = vld [vmem:[#allocation2 + $0xa0] sm:$0xf]
      %v6515 = vld [vmem:[#allocation2 + $0xa4] sm:$0x1]
      %v6516 = vld [vmem:[#allocation2 + $0xa8] sm:$0xe]
      %v6517 = vld [vmem:[#allocation2 + $0xac] sm:$0xf]
      %v6518 = vld [vmem:[#allocation2 + $0xb0] sm:$0x1]
      %v6519 = vld [vmem:[#allocation2 + $0xb4] sm:$0xe]
      %v6520 = vld [vmem:[#allocation2 + $0xb8] sm:$0xf]
      %v6521 = vld [vmem:[#allocation2 + $0xbc] sm:$0x1]
      %v6570 = vrot.slane %v6474, 5
      %v6571 = vrot.slane %v6570, 4
      %v6572 = vrot.slane %v6475, 5
      %v6573 = vsel %vm2077, %v6571, %v6572
      %v6574 = vrot.slane %v6572, 4
      %v6575 = vrot.slane %v6476, 5
      %v6576 = vsel %vm2077, %v6574, %v6575
      %v6577 = vrot.slane %v6477, 5
      %v6578 = vrot.slane %v6577, 4
      %v6579 = vrot.slane %v6478, 5
      %v6580 = vsel %vm2077, %v6578, %v6579
      %v6581 = vrot.slane %v6579, 4
      %v6582 = vrot.slane %v6479, 5
      %v6583 = vsel %vm2077, %v6581, %v6582
      %v6584 = vrot.slane %v6480, 5
      %v6585 = vrot.slane %v6584, 4
      %v6586 = vrot.slane %v6481, 5
      %v6587 = vsel %vm2077, %v6585, %v6586
      %v6588 = vrot.slane %v6586, 4
      %v6589 = vrot.slane %v6482, 5
      %v6590 = vsel %vm2077, %v6588, %v6589
      %v6591 = vrot.slane %v6483, 5
      %v6592 = vrot.slane %v6591, 4
      %v6593 = vrot.slane %v6484, 5
      %v6594 = vsel %vm2077, %v6592, %v6593
      %v6595 = vrot.slane %v6593, 4
      %v6596 = vrot.slane %v6485, 5
      %v6597 = vsel %vm2077, %v6595, %v6596
      %v6598 = vrot.slane %v6486, 5
      %v6599 = vrot.slane %v6598, 4
      %v6600 = vrot.slane %v6487, 5
      %v6601 = vsel %vm2077, %v6599, %v6600
      %v6602 = vrot.slane %v6600, 4
      %v6603 = vrot.slane %v6488, 5
      %v6604 = vsel %vm2077, %v6602, %v6603
      %v6605 = vrot.slane %v6489, 5
      %v6606 = vrot.slane %v6605, 4
      %v6607 = vrot.slane %v6490, 5
      %v6608 = vsel %vm2077, %v6606, %v6607
      %v6609 = vrot.slane %v6607, 4
      %v6610 = vrot.slane %v6491, 5
      %v6611 = vsel %vm2077, %v6609, %v6610
      %v6612 = vrot.slane %v6492, 5
      %v6613 = vrot.slane %v6612, 4
      %v6614 = vrot.slane %v6493, 5
      %v6615 = vsel %vm2077, %v6613, %v6614
      %v6616 = vrot.slane %v6614, 4
      %v6617 = vrot.slane %v6494, 5
      %v6618 = vsel %vm2077, %v6616, %v6617
      %v6619 = vrot.slane %v6495, 5
      %v6620 = vrot.slane %v6619, 4
      %v6621 = vrot.slane %v6496, 5
      %v6622 = vsel %vm2077, %v6620, %v6621
      %v6623 = vrot.slane %v6621, 4
      %v6624 = vrot.slane %v6497, 5
      %v6625 = vsel %vm2077, %v6623, %v6624
      %v6626 = vrot.slane %v6498, 5
      %v6627 = vrot.slane %v6626, 4
      %v6628 = vrot.slane %v6499, 5
      %v6629 = vsel %vm2077, %v6627, %v6628
      %v6630 = vrot.slane %v6628, 4
      %v6631 = vrot.slane %v6500, 5
      %v6632 = vsel %vm2077, %v6630, %v6631
      %v6633 = vrot.slane %v6501, 5
      %v6634 = vrot.slane %v6633, 4
      %v6635 = vrot.slane %v6502, 5
      %v6636 = vsel %vm2077, %v6634, %v6635
      %v6637 = vrot.slane %v6635, 4
      %v6638 = vrot.slane %v6503, 5
      %v6639 = vsel %vm2077, %v6637, %v6638
      %v6640 = vrot.slane %v6504, 5
      %v6641 = vrot.slane %v6640, 4
      %v6642 = vrot.slane %v6505, 5
      %v6643 = vsel %vm2077, %v6641, %v6642
      %v6644 = vrot.slane %v6642, 4
      %v6645 = vrot.slane %v6506, 5
      %v6646 = vsel %vm2077, %v6644, %v6645
      %v6647 = vrot.slane %v6507, 5
      %v6648 = vrot.slane %v6647, 4
      %v6649 = vrot.slane %v6508, 5
      %v6650 = vsel %vm2077, %v6648, %v6649
      %v6651 = vrot.slane %v6649, 4
      %v6652 = vrot.slane %v6509, 5
      %v6653 = vsel %vm2077, %v6651, %v6652
      %v6654 = vrot.slane %v6510, 5
      %v6655 = vrot.slane %v6654, 4
      %v6656 = vrot.slane %v6511, 5
      %v6657 = vsel %vm2077, %v6655, %v6656
      %v6658 = vrot.slane %v6656, 4
      %v6659 = vrot.slane %v6512, 5
      %v6660 = vsel %vm2077, %v6658, %v6659
      %v6661 = vrot.slane %v6513, 5
      %v6662 = vrot.slane %v6661, 4
      %v6663 = vrot.slane %v6514, 5
      %v6664 = vsel %vm2077, %v6662, %v6663
      %v6665 = vrot.slane %v6663, 4
      %v6666 = vrot.slane %v6515, 5
      %v6667 = vsel %vm2077, %v6665, %v6666
      %v6668 = vrot.slane %v6516, 5
      %v6669 = vrot.slane %v6668, 4
      %v6670 = vrot.slane %v6517, 5
      %v6671 = vsel %vm2077, %v6669, %v6670
      %v6672 = vrot.slane %v6670, 4
      %v6673 = vrot.slane %v6518, 5
      %v6674 = vsel %vm2077, %v6672, %v6673
      %v6675 = vrot.slane %v6519, 5
      %v6676 = vrot.slane %v6675, 4
      %v6677 = vrot.slane %v6520, 5
      %v6678 = vsel %vm2077, %v6676, %v6677
      %v6679 = vrot.slane %v6677, 4
      %v6680 = vrot.slane %v6521, 5
      %v6681 = vsel %vm2077, %v6679, %v6680
      %v6682 = vunpack.c.l.b16 %v6573
      %v6683 = vunpack.c.l.b16 %v6576
      %v6684 = vunpack.c.l.b16 %v6580
      %v6685 = vunpack.c.l.b16 %v6583
      %v6686 = vunpack.c.l.b16 %v6587
      %v6687 = vunpack.c.l.b16 %v6590
      %v6688 = vunpack.c.l.b16 %v6594
      %v6689 = vunpack.c.l.b16 %v6597
      %v6690 = vunpack.c.l.b16 %v6601
      %v6691 = vunpack.c.l.b16 %v6604
      %v6692 = vunpack.c.l.b16 %v6608
      %v6693 = vunpack.c.l.b16 %v6611
      %v6694 = vunpack.c.l.b16 %v6615
      %v6695 = vunpack.c.l.b16 %v6618
      %v6696 = vunpack.c.l.b16 %v6622
      %v6697 = vunpack.c.l.b16 %v6625
      %v6698 = vunpack.c.l.b16 %v6629
      %v6699 = vunpack.c.l.b16 %v6632
      %v6700 = vunpack.c.l.b16 %v6636
      %v6701 = vunpack.c.l.b16 %v6639
      %v6702 = vunpack.c.l.b16 %v6643
      %v6703 = vunpack.c.l.b16 %v6646
      %v6704 = vunpack.c.l.b16 %v6650
      %v6705 = vunpack.c.l.b16 %v6653
      %v6706 = vunpack.c.l.b16 %v6657
      %v6707 = vunpack.c.l.b16 %v6660
      %v6708 = vunpack.c.l.b16 %v6664
      %v6709 = vunpack.c.l.b16 %v6667
      %v6710 = vunpack.c.l.b16 %v6671
      %v6711 = vunpack.c.l.b16 %v6674
      %v6712 = vunpack.c.l.b16 %v6678
      %v6713 = vunpack.c.l.b16 %v6681
      %v6714 = vpack.c.b16 %v6683, %v6682
      %v6715 = vpack.c.b16 %v6685, %v6684
      %v6716 = vpack.c.b16 %v6687, %v6686
      %v6717 = vpack.c.b16 %v6689, %v6688
      %v6718 = vpack.c.b16 %v6691, %v6690
      %v6719 = vpack.c.b16 %v6693, %v6692
      %v6720 = vpack.c.b16 %v6695, %v6694
      %v6721 = vpack.c.b16 %v6697, %v6696
      %v6722 = vpack.c.b16 %v6699, %v6698
      %v6723 = vpack.c.b16 %v6701, %v6700
      %v6724 = vpack.c.b16 %v6703, %v6702
      %v6725 = vpack.c.b16 %v6705, %v6704
      %v6726 = vpack.c.b16 %v6707, %v6706
      %v6727 = vpack.c.b16 %v6709, %v6708
      %v6728 = vpack.c.b16 %v6711, %v6710
      %v6729 = vpack.c.b16 %v6713, %v6712
      %6746 = vst.msk [vmem:[#allocation3 + $0x8] sm:$0xff] %vm1414, %v6714
      %6747 = vst.msk [vmem:[#allocation3 + $0x30] sm:$0xff] %vm1414, %v6715
      %6748 = vst.msk [vmem:[#allocation3 + $0x58] sm:$0xff] %vm1414, %v6716
      %6749 = vst.msk [vmem:[#allocation3 + $0x80] sm:$0xff] %vm1414, %v6717
      %6750 = vst.msk [vmem:[#allocation3 + $0xa8] sm:$0xff] %vm1414, %v6718
      %6751 = vst.msk [vmem:[#allocation3 + $0xd0] sm:$0xff] %vm1414, %v6719
      %6752 = vst.msk [vmem:[#allocation3 + $0xf8] sm:$0xff] %vm1414, %v6720
      %6753 = vst.msk [vmem:[#allocation3 + $0x120] sm:$0xff] %vm1414, %v6721
      %6754 = vst.msk [vmem:[#allocation3 + $0x148] sm:$0xff] %vm1414, %v6722
      %6755 = vst.msk [vmem:[#allocation3 + $0x170] sm:$0xff] %vm1414, %v6723
      %6756 = vst.msk [vmem:[#allocation3 + $0x198] sm:$0xff] %vm1414, %v6724
      %6757 = vst.msk [vmem:[#allocation3 + $0x1c0] sm:$0xff] %vm1414, %v6725
      %6758 = vst.msk [vmem:[#allocation3 + $0x1e8] sm:$0xff] %vm1414, %v6726
      %6759 = vst.msk [vmem:[#allocation3 + $0x210] sm:$0xff] %vm1414, %v6727
      %6760 = vst.msk [vmem:[#allocation3 + $0x238] sm:$0xff] %vm1414, %v6728
      %6761 = vst.msk [vmem:[#allocation3 + $0x260] sm:$0xff] %vm1414, %v6729
      %v6762 = vld [vmem:[%s1170] sm:$0xf]
      %v6763 = vld [vmem:[%s1170 + $0x4] sm:$0xf]
      %v6764 = vld [vmem:[%s1170 + $0xc] sm:$0xf]
      %v6765 = vld [vmem:[%s1170 + $0x10] sm:$0xf]
      %v6766 = vld [vmem:[%s1170 + $0x18] sm:$0xf]
      %v6767 = vld [vmem:[%s1170 + $0x1c] sm:$0xf]
      %v6768 = vld [vmem:[%s1170 + $0x24] sm:$0xf]
      %v6769 = vld [vmem:[%s1170 + $0x28] sm:$0xf]
      %v6770 = vld [vmem:[%s1170 + $0x30] sm:$0xf]
      %v6771 = vld [vmem:[%s1170 + $0x34] sm:$0xf]
      %v6772 = vld [vmem:[%s1170 + $0x3c] sm:$0xf]
      %v6773 = vld [vmem:[%s1170 + $0x40] sm:$0xf]
      %v6774 = vld [vmem:[%s1170 + $0x48] sm:$0xf]
      %v6775 = vld [vmem:[%s1170 + $0x4c] sm:$0xf]
      %v6776 = vld [vmem:[%s1170 + $0x54] sm:$0xf]
      %v6777 = vld [vmem:[%s1170 + $0x58] sm:$0xf]
      %v6778 = vld [vmem:[%s1170 + $0x60] sm:$0xf]
      %v6779 = vld [vmem:[%s1170 + $0x64] sm:$0xf]
      %v6780 = vld [vmem:[%s1170 + $0x6c] sm:$0xf]
      %v6781 = vld [vmem:[%s1170 + $0x70] sm:$0xf]
      %v6782 = vld [vmem:[%s1170 + $0x78] sm:$0xf]
      %v6783 = vld [vmem:[%s1170 + $0x7c] sm:$0xf]
      %v6784 = vld [vmem:[%s1170 + $0x84] sm:$0xf]
      %v6785 = vld [vmem:[%s1170 + $0x88] sm:$0xf]
      %v6786 = vld [vmem:[%s1170 + $0x90] sm:$0xf]
      %v6787 = vld [vmem:[%s1170 + $0x94] sm:$0xf]
      %v6788 = vld [vmem:[%s1170 + $0x9c] sm:$0xf]
      %v6789 = vld [vmem:[%s1170 + $0xa0] sm:$0xf]
      %v6790 = vld [vmem:[%s1170 + $0xa8] sm:$0xf]
      %v6791 = vld [vmem:[%s1170 + $0xac] sm:$0xf]
      %v6792 = vld [vmem:[%s1170 + $0xb4] sm:$0xf]
      %v6793 = vld [vmem:[%s1170 + $0xb8] sm:$0xf]
      %v6826 = vunpack.c.l.b16 %v6762
      %v6827 = vunpack.c.l.b16 %v6763
      %v6828 = vunpack.c.l.b16 %v6764
      %v6829 = vunpack.c.l.b16 %v6765
      %v6830 = vunpack.c.l.b16 %v6766
      %v6831 = vunpack.c.l.b16 %v6767
      %v6832 = vunpack.c.l.b16 %v6768
      %v6833 = vunpack.c.l.b16 %v6769
      %v6834 = vunpack.c.l.b16 %v6770
      %v6835 = vunpack.c.l.b16 %v6771
      %v6836 = vunpack.c.l.b16 %v6772
      %v6837 = vunpack.c.l.b16 %v6773
      %v6838 = vunpack.c.l.b16 %v6774
      %v6839 = vunpack.c.l.b16 %v6775
      %v6840 = vunpack.c.l.b16 %v6776
      %v6841 = vunpack.c.l.b16 %v6777
      %v6842 = vunpack.c.l.b16 %v6778
      %v6843 = vunpack.c.l.b16 %v6779
      %v6844 = vunpack.c.l.b16 %v6780
      %v6845 = vunpack.c.l.b16 %v6781
      %v6846 = vunpack.c.l.b16 %v6782
      %v6847 = vunpack.c.l.b16 %v6783
      %v6848 = vunpack.c.l.b16 %v6784
      %v6849 = vunpack.c.l.b16 %v6785
      %v6850 = vunpack.c.l.b16 %v6786
      %v6851 = vunpack.c.l.b16 %v6787
      %v6852 = vunpack.c.l.b16 %v6788
      %v6853 = vunpack.c.l.b16 %v6789
      %v6854 = vunpack.c.l.b16 %v6790
      %v6855 = vunpack.c.l.b16 %v6791
      %v6856 = vunpack.c.l.b16 %v6792
      %v6857 = vunpack.c.l.b16 %v6793
      %v6858 = vpack.c.b16 %v6827, %v6826
      %v6859 = vpack.c.b16 %v6829, %v6828
      %v6860 = vpack.c.b16 %v6831, %v6830
      %v6861 = vpack.c.b16 %v6833, %v6832
      %v6862 = vpack.c.b16 %v6835, %v6834
      %v6863 = vpack.c.b16 %v6837, %v6836
      %v6864 = vpack.c.b16 %v6839, %v6838
      %v6865 = vpack.c.b16 %v6841, %v6840
      %v6866 = vpack.c.b16 %v6843, %v6842
      %v6867 = vpack.c.b16 %v6845, %v6844
      %v6868 = vpack.c.b16 %v6847, %v6846
      %v6869 = vpack.c.b16 %v6849, %v6848
      %v6870 = vpack.c.b16 %v6851, %v6850
      %v6871 = vpack.c.b16 %v6853, %v6852
      %v6872 = vpack.c.b16 %v6855, %v6854
      %v6873 = vpack.c.b16 %v6857, %v6856
      %6874 = vrot.lane.b32.xlu0 %v6858, 64
      %v6875 = vpop.permute.xlu0 %6874
      %6876 = vrot.lane.b32.xlu0 %v6859, 64
      %v6877 = vpop.permute.xlu0 %6876
      %6878 = vrot.lane.b32.xlu0 %v6860, 64
      %v6879 = vpop.permute.xlu0 %6878
      %6880 = vrot.lane.b32.xlu0 %v6861, 64
      %v6881 = vpop.permute.xlu0 %6880
      %6882 = vrot.lane.b32.xlu0 %v6862, 64
      %v6883 = vpop.permute.xlu0 %6882
      %6884 = vrot.lane.b32.xlu0 %v6863, 64
      %v6885 = vpop.permute.xlu0 %6884
      %6886 = vrot.lane.b32.xlu0 %v6864, 64
      %v6887 = vpop.permute.xlu0 %6886
      %6888 = vrot.lane.b32.xlu0 %v6865, 64
      %v6889 = vpop.permute.xlu0 %6888
      %6890 = vrot.lane.b32.xlu0 %v6866, 64
      %v6891 = vpop.permute.xlu0 %6890
      %6892 = vrot.lane.b32.xlu0 %v6867, 64
      %v6893 = vpop.permute.xlu0 %6892
      %6894 = vrot.lane.b32.xlu0 %v6868, 64
      %v6895 = vpop.permute.xlu0 %6894
      %6896 = vrot.lane.b32.xlu0 %v6869, 64
      %v6897 = vpop.permute.xlu0 %6896
      %6898 = vrot.lane.b32.xlu0 %v6870, 64
      %v6899 = vpop.permute.xlu0 %6898
      %6900 = vrot.lane.b32.xlu0 %v6871, 64
      %v6901 = vpop.permute.xlu0 %6900
      %6902 = vrot.lane.b32.xlu0 %v6872, 64
      %v6903 = vpop.permute.xlu0 %6902
      %6904 = vrot.lane.b32.xlu0 %v6873, 64
      %v6905 = vpop.permute.xlu0 %6904
      %6922 = vst.msk [vmem:[#allocation3 + $0x8] sm:$0xff] %vm1962, %v6875
      %6923 = vst.msk [vmem:[#allocation3 + $0x30] sm:$0xff] %vm1962, %v6877
      %6924 = vst.msk [vmem:[#allocation3 + $0x58] sm:$0xff] %vm1962, %v6879
      %6925 = vst.msk [vmem:[#allocation3 + $0x80] sm:$0xff] %vm1962, %v6881
      %6926 = vst.msk [vmem:[#allocation3 + $0xa8] sm:$0xff] %vm1962, %v6883
      %6927 = vst.msk [vmem:[#allocation3 + $0xd0] sm:$0xff] %vm1962, %v6885
      %6928 = vst.msk [vmem:[#allocation3 + $0xf8] sm:$0xff] %vm1962, %v6887
      %6929 = vst.msk [vmem:[#allocation3 + $0x120] sm:$0xff] %vm1962, %v6889
      %6930 = vst.msk [vmem:[#allocation3 + $0x148] sm:$0xff] %vm1962, %v6891
      %6931 = vst.msk [vmem:[#allocation3 + $0x170] sm:$0xff] %vm1962, %v6893
      %6932 = vst.msk [vmem:[#allocation3 + $0x198] sm:$0xff] %vm1962, %v6895
      %6933 = vst.msk [vmem:[#allocation3 + $0x1c0] sm:$0xff] %vm1962, %v6897
      %6934 = vst.msk [vmem:[#allocation3 + $0x1e8] sm:$0xff] %vm1962, %v6899
      %6935 = vst.msk [vmem:[#allocation3 + $0x210] sm:$0xff] %vm1962, %v6901
      %6936 = vst.msk [vmem:[#allocation3 + $0x238] sm:$0xff] %vm1962, %v6903
      %6937 = vst.msk [vmem:[#allocation3 + $0x260] sm:$0xff] %vm1962, %v6905
      %v6938 = vld [vmem:[%s1170] sm:$0xf]
      %v6939 = vld [vmem:[%s1170 + $0x4] sm:$0xf]
      %v6940 = vld [vmem:[%s1170 + $0x8] sm:$0x1]
      %v6941 = vld [vmem:[%s1170 + $0xc] sm:$0xf]
      %v6942 = vld [vmem:[%s1170 + $0x10] sm:$0xf]
      %v6943 = vld [vmem:[%s1170 + $0x14] sm:$0x1]
      %v6944 = vld [vmem:[%s1170 + $0x18] sm:$0xf]
      %v6945 = vld [vmem:[%s1170 + $0x1c] sm:$0xf]
      %v6946 = vld [vmem:[%s1170 + $0x20] sm:$0x1]
      %v6947 = vld [vmem:[%s1170 + $0x24] sm:$0xf]
      %v6948 = vld [vmem:[%s1170 + $0x28] sm:$0xf]
      %v6949 = vld [vmem:[%s1170 + $0x2c] sm:$0x1]
      %v6950 = vld [vmem:[%s1170 + $0x30] sm:$0xf]
      %v6951 = vld [vmem:[%s1170 + $0x34] sm:$0xf]
      %v6952 = vld [vmem:[%s1170 + $0x38] sm:$0x1]
      %v6953 = vld [vmem:[%s1170 + $0x3c] sm:$0xf]
      %v6954 = vld [vmem:[%s1170 + $0x40] sm:$0xf]
      %v6955 = vld [vmem:[%s1170 + $0x44] sm:$0x1]
      %v6956 = vld [vmem:[%s1170 + $0x48] sm:$0xf]
      %v6957 = vld [vmem:[%s1170 + $0x4c] sm:$0xf]
      %v6958 = vld [vmem:[%s1170 + $0x50] sm:$0x1]
      %v6959 = vld [vmem:[%s1170 + $0x54] sm:$0xf]
      %v6960 = vld [vmem:[%s1170 + $0x58] sm:$0xf]
      %v6961 = vld [vmem:[%s1170 + $0x5c] sm:$0x1]
      %v6962 = vld [vmem:[%s1170 + $0x60] sm:$0xf]
      %v6963 = vld [vmem:[%s1170 + $0x64] sm:$0xf]
      %v6964 = vld [vmem:[%s1170 + $0x68] sm:$0x1]
      %v6965 = vld [vmem:[%s1170 + $0x6c] sm:$0xf]
      %v6966 = vld [vmem:[%s1170 + $0x70] sm:$0xf]
      %v6967 = vld [vmem:[%s1170 + $0x74] sm:$0x1]
      %v6968 = vld [vmem:[%s1170 + $0x78] sm:$0xf]
      %v6969 = vld [vmem:[%s1170 + $0x7c] sm:$0xf]
      %v6970 = vld [vmem:[%s1170 + $0x80] sm:$0x1]
      %v6971 = vld [vmem:[%s1170 + $0x84] sm:$0xf]
      %v6972 = vld [vmem:[%s1170 + $0x88] sm:$0xf]
      %v6973 = vld [vmem:[%s1170 + $0x8c] sm:$0x1]
      %v6974 = vld [vmem:[%s1170 + $0x90] sm:$0xf]
      %v6975 = vld [vmem:[%s1170 + $0x94] sm:$0xf]
      %v6976 = vld [vmem:[%s1170 + $0x98] sm:$0x1]
      %v6977 = vld [vmem:[%s1170 + $0x9c] sm:$0xf]
      %v6978 = vld [vmem:[%s1170 + $0xa0] sm:$0xf]
      %v6979 = vld [vmem:[%s1170 + $0xa4] sm:$0x1]
      %v6980 = vld [vmem:[%s1170 + $0xa8] sm:$0xf]
      %v6981 = vld [vmem:[%s1170 + $0xac] sm:$0xf]
      %v6982 = vld [vmem:[%s1170 + $0xb0] sm:$0x1]
      %v6983 = vld [vmem:[%s1170 + $0xb4] sm:$0xf]
      %v6984 = vld [vmem:[%s1170 + $0xb8] sm:$0xf]
      %v6985 = vld [vmem:[%s1170 + $0xbc] sm:$0x1]
      %v6987 = vshrl.u32 %v6938, 16
      %v6989 = vrot.slane %v6987, 4
      %v6990 = vshll.u32 %v6938, 16
      %v6992 = vrot.slane %v6990, 5
      %v6993 = vor.u32 %v6989, %v6992
      %v6994 = vrot.slane %v6993, 4
      %v6996 = vshll.u32 %v6939, 16
      %v6998 = vrot.slane %v6996, 5
      %v6999 = vsel %vm1481, %v6994, %v6998
      %v7000 = vshrl.u32 %v6939, 16
      %v7002 = vrot.slane %v7000, 4
      %v7003 = vor.u32 %v7002, %v6998
      %v7004 = vrot.slane %v7003, 4
      %v7006 = vshll.u32 %v6940, 16
      %v7008 = vrot.slane %v7006, 5
      %v7009 = vsel %vm1481, %v7004, %v7008
      %v7011 = vshrl.u32 %v6941, 16
      %v7013 = vrot.slane %v7011, 4
      %v7014 = vshll.u32 %v6941, 16
      %v7016 = vrot.slane %v7014, 5
      %v7017 = vor.u32 %v7013, %v7016
      %v7018 = vrot.slane %v7017, 4
      %v7020 = vshll.u32 %v6942, 16
      %v7022 = vrot.slane %v7020, 5
      %v7023 = vsel %vm1481, %v7018, %v7022
      %v7024 = vshrl.u32 %v6942, 16
      %v7026 = vrot.slane %v7024, 4
      %v7027 = vor.u32 %v7026, %v7022
      %v7028 = vrot.slane %v7027, 4
      %v7030 = vshll.u32 %v6943, 16
      %v7032 = vrot.slane %v7030, 5
      %v7033 = vsel %vm1481, %v7028, %v7032
      %v7035 = vshrl.u32 %v6944, 16
      %v7037 = vrot.slane %v7035, 4
      %v7038 = vshll.u32 %v6944, 16
      %v7040 = vrot.slane %v7038, 5
      %v7041 = vor.u32 %v7037, %v7040
      %v7042 = vrot.slane %v7041, 4
      %v7044 = vshll.u32 %v6945, 16
      %v7046 = vrot.slane %v7044, 5
      %v7047 = vsel %vm1481, %v7042, %v7046
      %v7048 = vshrl.u32 %v6945, 16
      %v7050 = vrot.slane %v7048, 4
      %v7051 = vor.u32 %v7050, %v7046
      %v7052 = vrot.slane %v7051, 4
      %v7054 = vshll.u32 %v6946, 16
      %v7056 = vrot.slane %v7054, 5
      %v7057 = vsel %vm1481, %v7052, %v7056
      %v7059 = vshrl.u32 %v6947, 16
      %v7061 = vrot.slane %v7059, 4
      %v7062 = vshll.u32 %v6947, 16
      %v7064 = vrot.slane %v7062, 5
      %v7065 = vor.u32 %v7061, %v7064
      %v7066 = vrot.slane %v7065, 4
      %v7068 = vshll.u32 %v6948, 16
      %v7070 = vrot.slane %v7068, 5
      %v7071 = vsel %vm1481, %v7066, %v7070
      %v7072 = vshrl.u32 %v6948, 16
      %v7074 = vrot.slane %v7072, 4
      %v7075 = vor.u32 %v7074, %v7070
      %v7076 = vrot.slane %v7075, 4
      %v7078 = vshll.u32 %v6949, 16
      %v7080 = vrot.slane %v7078, 5
      %v7081 = vsel %vm1481, %v7076, %v7080
      %v7083 = vshrl.u32 %v6950, 16
      %v7085 = vrot.slane %v7083, 4
      %v7086 = vshll.u32 %v6950, 16
      %v7088 = vrot.slane %v7086, 5
      %v7089 = vor.u32 %v7085, %v7088
      %v7090 = vrot.slane %v7089, 4
      %v7092 = vshll.u32 %v6951, 16
      %v7094 = vrot.slane %v7092, 5
      %v7095 = vsel %vm1481, %v7090, %v7094
      %v7096 = vshrl.u32 %v6951, 16
      %v7098 = vrot.slane %v7096, 4
      %v7099 = vor.u32 %v7098, %v7094
      %v7100 = vrot.slane %v7099, 4
      %v7102 = vshll.u32 %v6952, 16
      %v7104 = vrot.slane %v7102, 5
      %v7105 = vsel %vm1481, %v7100, %v7104
      %v7107 = vshrl.u32 %v6953, 16
      %v7109 = vrot.slane %v7107, 4
      %v7110 = vshll.u32 %v6953, 16
      %v7112 = vrot.slane %v7110, 5
      %v7113 = vor.u32 %v7109, %v7112
      %v7114 = vrot.slane %v7113, 4
      %v7116 = vshll.u32 %v6954, 16
      %v7118 = vrot.slane %v7116, 5
      %v7119 = vsel %vm1481, %v7114, %v7118
      %v7120 = vshrl.u32 %v6954, 16
      %v7122 = vrot.slane %v7120, 4
      %v7123 = vor.u32 %v7122, %v7118
      %v7124 = vrot.slane %v7123, 4
      %v7126 = vshll.u32 %v6955, 16
      %v7128 = vrot.slane %v7126, 5
      %v7129 = vsel %vm1481, %v7124, %v7128
      %v7131 = vshrl.u32 %v6956, 16
      %v7133 = vrot.slane %v7131, 4
      %v7134 = vshll.u32 %v6956, 16
      %v7136 = vrot.slane %v7134, 5
      %v7137 = vor.u32 %v7133, %v7136
      %v7138 = vrot.slane %v7137, 4
      %v7140 = vshll.u32 %v6957, 16
      %v7142 = vrot.slane %v7140, 5
      %v7143 = vsel %vm1481, %v7138, %v7142
      %v7144 = vshrl.u32 %v6957, 16
      %v7146 = vrot.slane %v7144, 4
      %v7147 = vor.u32 %v7146, %v7142
      %v7148 = vrot.slane %v7147, 4
      %v7150 = vshll.u32 %v6958, 16
      %v7152 = vrot.slane %v7150, 5
      %v7153 = vsel %vm1481, %v7148, %v7152
      %v7155 = vshrl.u32 %v6959, 16
      %v7157 = vrot.slane %v7155, 4
      %v7158 = vshll.u32 %v6959, 16
      %v7160 = vrot.slane %v7158, 5
      %v7161 = vor.u32 %v7157, %v7160
      %v7162 = vrot.slane %v7161, 4
      %v7164 = vshll.u32 %v6960, 16
      %v7166 = vrot.slane %v7164, 5
      %v7167 = vsel %vm1481, %v7162, %v7166
      %v7168 = vshrl.u32 %v6960, 16
      %v7170 = vrot.slane %v7168, 4
      %v7171 = vor.u32 %v7170, %v7166
      %v7172 = vrot.slane %v7171, 4
      %v7174 = vshll.u32 %v6961, 16
      %v7176 = vrot.slane %v7174, 5
      %v7177 = vsel %vm1481, %v7172, %v7176
      %v7179 = vshrl.u32 %v6962, 16
      %v7181 = vrot.slane %v7179, 4
      %v7182 = vshll.u32 %v6962, 16
      %v7184 = vrot.slane %v7182, 5
      %v7185 = vor.u32 %v7181, %v7184
      %v7186 = vrot.slane %v7185, 4
      %v7188 = vshll.u32 %v6963, 16
      %v7190 = vrot.slane %v7188, 5
      %v7191 = vsel %vm1481, %v7186, %v7190
      %v7192 = vshrl.u32 %v6963, 16
      %v7194 = vrot.slane %v7192, 4
      %v7195 = vor.u32 %v7194, %v7190
      %v7196 = vrot.slane %v7195, 4
      %v7198 = vshll.u32 %v6964, 16
      %v7200 = vrot.slane %v7198, 5
      %v7201 = vsel %vm1481, %v7196, %v7200
      %v7203 = vshrl.u32 %v6965, 16
      %v7205 = vrot.slane %v7203, 4
      %v7206 = vshll.u32 %v6965, 16
      %v7208 = vrot.slane %v7206, 5
      %v7209 = vor.u32 %v7205, %v7208
      %v7210 = vrot.slane %v7209, 4
      %v7212 = vshll.u32 %v6966, 16
      %v7214 = vrot.slane %v7212, 5
      %v7215 = vsel %vm1481, %v7210, %v7214
      %v7216 = vshrl.u32 %v6966, 16
      %v7218 = vrot.slane %v7216, 4
      %v7219 = vor.u32 %v7218, %v7214
      %v7220 = vrot.slane %v7219, 4
      %v7222 = vshll.u32 %v6967, 16
      %v7224 = vrot.slane %v7222, 5
      %v7225 = vsel %vm1481, %v7220, %v7224
      %v7227 = vshrl.u32 %v6968, 16
      %v7229 = vrot.slane %v7227, 4
      %v7230 = vshll.u32 %v6968, 16
      %v7232 = vrot.slane %v7230, 5
      %v7233 = vor.u32 %v7229, %v7232
      %v7234 = vrot.slane %v7233, 4
      %v7236 = vshll.u32 %v6969, 16
      %v7238 = vrot.slane %v7236, 5
      %v7239 = vsel %vm1481, %v7234, %v7238
      %v7240 = vshrl.u32 %v6969, 16
      %v7242 = vrot.slane %v7240, 4
      %v7243 = vor.u32 %v7242, %v7238
      %v7244 = vrot.slane %v7243, 4
      %v7246 = vshll.u32 %v6970, 16
      %v7248 = vrot.slane %v7246, 5
      %v7249 = vsel %vm1481, %v7244, %v7248
      %v7251 = vshrl.u32 %v6971, 16
      %v7253 = vrot.slane %v7251, 4
      %v7254 = vshll.u32 %v6971, 16
      %v7256 = vrot.slane %v7254, 5
      %v7257 = vor.u32 %v7253, %v7256
      %v7258 = vrot.slane %v7257, 4
      %v7260 = vshll.u32 %v6972, 16
      %v7262 = vrot.slane %v7260, 5
      %v7263 = vsel %vm1481, %v7258, %v7262
      %v7264 = vshrl.u32 %v6972, 16
      %v7266 = vrot.slane %v7264, 4
      %v7267 = vor.u32 %v7266, %v7262
      %v7268 = vrot.slane %v7267, 4
      %v7270 = vshll.u32 %v6973, 16
      %v7272 = vrot.slane %v7270, 5
      %v7273 = vsel %vm1481, %v7268, %v7272
      %v7275 = vshrl.u32 %v6974, 16
      %v7277 = vrot.slane %v7275, 4
      %v7278 = vshll.u32 %v6974, 16
      %v7280 = vrot.slane %v7278, 5
      %v7281 = vor.u32 %v7277, %v7280
      %v7282 = vrot.slane %v7281, 4
      %v7284 = vshll.u32 %v6975, 16
      %v7286 = vrot.slane %v7284, 5
      %v7287 = vsel %vm1481, %v7282, %v7286
      %v7288 = vshrl.u32 %v6975, 16
      %v7290 = vrot.slane %v7288, 4
      %v7291 = vor.u32 %v7290, %v7286
      %v7292 = vrot.slane %v7291, 4
      %v7294 = vshll.u32 %v6976, 16
      %v7296 = vrot.slane %v7294, 5
      %v7297 = vsel %vm1481, %v7292, %v7296
      %v7299 = vshrl.u32 %v6977, 16
      %v7301 = vrot.slane %v7299, 4
      %v7302 = vshll.u32 %v6977, 16
      %v7304 = vrot.slane %v7302, 5
      %v7305 = vor.u32 %v7301, %v7304
      %v7306 = vrot.slane %v7305, 4
      %v7308 = vshll.u32 %v6978, 16
      %v7310 = vrot.slane %v7308, 5
      %v7311 = vsel %vm1481, %v7306, %v7310
      %v7312 = vshrl.u32 %v6978, 16
      %v7314 = vrot.slane %v7312, 4
      %v7315 = vor.u32 %v7314, %v7310
      %v7316 = vrot.slane %v7315, 4
      %v7318 = vshll.u32 %v6979, 16
      %v7320 = vrot.slane %v7318, 5
      %v7321 = vsel %vm1481, %v7316, %v7320
      %v7323 = vshrl.u32 %v6980, 16
      %v7325 = vrot.slane %v7323, 4
      %v7326 = vshll.u32 %v6980, 16
      %v7328 = vrot.slane %v7326, 5
      %v7329 = vor.u32 %v7325, %v7328
      %v7330 = vrot.slane %v7329, 4
      %v7332 = vshll.u32 %v6981, 16
      %v7334 = vrot.slane %v7332, 5
      %v7335 = vsel %vm1481, %v7330, %v7334
      %v7336 = vshrl.u32 %v6981, 16
      %v7338 = vrot.slane %v7336, 4
      %v7339 = vor.u32 %v7338, %v7334
      %v7340 = vrot.slane %v7339, 4
      %v7342 = vshll.u32 %v6982, 16
      %v7344 = vrot.slane %v7342, 5
      %v7345 = vsel %vm1481, %v7340, %v7344
      %v7347 = vshrl.u32 %v6983, 16
      %v7349 = vrot.slane %v7347, 4
      %v7350 = vshll.u32 %v6983, 16
      %v7352 = vrot.slane %v7350, 5
      %v7353 = vor.u32 %v7349, %v7352
      %v7354 = vrot.slane %v7353, 4
      %v7356 = vshll.u32 %v6984, 16
      %v7358 = vrot.slane %v7356, 5
      %v7359 = vsel %vm1481, %v7354, %v7358
      %v7360 = vshrl.u32 %v6984, 16
      %v7362 = vrot.slane %v7360, 4
      %v7363 = vor.u32 %v7362, %v7358
      %v7364 = vrot.slane %v7363, 4
      %v7366 = vshll.u32 %v6985, 16
      %v7368 = vrot.slane %v7366, 5
      %v7369 = vsel %vm1481, %v7364, %v7368
      %v7370 = vunpack.c.l.b16 %v6999
      %v7371 = vunpack.c.l.b16 %v7009
      %v7372 = vunpack.c.l.b16 %v7023
      %v7373 = vunpack.c.l.b16 %v7033
      %v7374 = vunpack.c.l.b16 %v7047
      %v7375 = vunpack.c.l.b16 %v7057
      %v7376 = vunpack.c.l.b16 %v7071
      %v7377 = vunpack.c.l.b16 %v7081
      %v7378 = vunpack.c.l.b16 %v7095
      %v7379 = vunpack.c.l.b16 %v7105
      %v7380 = vunpack.c.l.b16 %v7119
      %v7381 = vunpack.c.l.b16 %v7129
      %v7382 = vunpack.c.l.b16 %v7143
      %v7383 = vunpack.c.l.b16 %v7153
      %v7384 = vunpack.c.l.b16 %v7167
      %v7385 = vunpack.c.l.b16 %v7177
      %v7386 = vunpack.c.l.b16 %v7191
      %v7387 = vunpack.c.l.b16 %v7201
      %v7388 = vunpack.c.l.b16 %v7215
      %v7389 = vunpack.c.l.b16 %v7225
      %v7390 = vunpack.c.l.b16 %v7239
      %v7391 = vunpack.c.l.b16 %v7249
      %v7392 = vunpack.c.l.b16 %v7263
      %v7393 = vunpack.c.l.b16 %v7273
      %v7394 = vunpack.c.l.b16 %v7287
      %v7395 = vunpack.c.l.b16 %v7297
      %v7396 = vunpack.c.l.b16 %v7311
      %v7397 = vunpack.c.l.b16 %v7321
      %v7398 = vunpack.c.l.b16 %v7335
      %v7399 = vunpack.c.l.b16 %v7345
      %v7400 = vunpack.c.l.b16 %v7359
      %v7401 = vunpack.c.l.b16 %v7369
      %v7402 = vpack.c.b16 %v7371, %v7370
      %v7403 = vpack.c.b16 %v7373, %v7372
      %v7404 = vpack.c.b16 %v7375, %v7374
      %v7405 = vpack.c.b16 %v7377, %v7376
      %v7406 = vpack.c.b16 %v7379, %v7378
      %v7407 = vpack.c.b16 %v7381, %v7380
      %v7408 = vpack.c.b16 %v7383, %v7382
      %v7409 = vpack.c.b16 %v7385, %v7384
      %v7410 = vpack.c.b16 %v7387, %v7386
      %v7411 = vpack.c.b16 %v7389, %v7388
      %v7412 = vpack.c.b16 %v7391, %v7390
      %v7413 = vpack.c.b16 %v7393, %v7392
      %v7414 = vpack.c.b16 %v7395, %v7394
      %v7415 = vpack.c.b16 %v7397, %v7396
      %v7416 = vpack.c.b16 %v7399, %v7398
      %v7417 = vpack.c.b16 %v7401, %v7400
      %7434 = vst.msk [vmem:[#allocation3 + $0x10] sm:$0xff] %vm1414, %v7402
      %7435 = vst.msk [vmem:[#allocation3 + $0x38] sm:$0xff] %vm1414, %v7403
      %7436 = vst.msk [vmem:[#allocation3 + $0x60] sm:$0xff] %vm1414, %v7404
      %7437 = vst.msk [vmem:[#allocation3 + $0x88] sm:$0xff] %vm1414, %v7405
      %7438 = vst.msk [vmem:[#allocation3 + $0xb0] sm:$0xff] %vm1414, %v7406
      %7439 = vst.msk [vmem:[#allocation3 + $0xd8] sm:$0xff] %vm1414, %v7407
      %7440 = vst.msk [vmem:[#allocation3 + $0x100] sm:$0xff] %vm1414, %v7408
      %7441 = vst.msk [vmem:[#allocation3 + $0x128] sm:$0xff] %vm1414, %v7409
      %7442 = vst.msk [vmem:[#allocation3 + $0x150] sm:$0xff] %vm1414, %v7410
      %7443 = vst.msk [vmem:[#allocation3 + $0x178] sm:$0xff] %vm1414, %v7411
      %7444 = vst.msk [vmem:[#allocation3 + $0x1a0] sm:$0xff] %vm1414, %v7412
      %7445 = vst.msk [vmem:[#allocation3 + $0x1c8] sm:$0xff] %vm1414, %v7413
      %7446 = vst.msk [vmem:[#allocation3 + $0x1f0] sm:$0xff] %vm1414, %v7414
      %7447 = vst.msk [vmem:[#allocation3 + $0x218] sm:$0xff] %vm1414, %v7415
      %7448 = vst.msk [vmem:[#allocation3 + $0x240] sm:$0xff] %vm1414, %v7416
      %7449 = vst.msk [vmem:[#allocation3 + $0x268] sm:$0xff] %vm1414, %v7417
      %v7450 = vld [vmem:[%s1170] sm:$0xe]
      %v7451 = vld [vmem:[%s1170 + $0x4] sm:$0xf]
      %v7452 = vld [vmem:[%s1170 + $0x8] sm:$0x1]
      %v7453 = vld [vmem:[%s1170 + $0xc] sm:$0xe]
      %v7454 = vld [vmem:[%s1170 + $0x10] sm:$0xf]
      %v7455 = vld [vmem:[%s1170 + $0x14] sm:$0x1]
      %v7456 = vld [vmem:[%s1170 + $0x18] sm:$0xe]
      %v7457 = vld [vmem:[%s1170 + $0x1c] sm:$0xf]
      %v7458 = vld [vmem:[%s1170 + $0x20] sm:$0x1]
      %v7459 = vld [vmem:[%s1170 + $0x24] sm:$0xe]
      %v7460 = vld [vmem:[%s1170 + $0x28] sm:$0xf]
      %v7461 = vld [vmem:[%s1170 + $0x2c] sm:$0x1]
      %v7462 = vld [vmem:[%s1170 + $0x30] sm:$0xe]
      %v7463 = vld [vmem:[%s1170 + $0x34] sm:$0xf]
      %v7464 = vld [vmem:[%s1170 + $0x38] sm:$0x1]
      %v7465 = vld [vmem:[%s1170 + $0x3c] sm:$0xe]
      %v7466 = vld [vmem:[%s1170 + $0x40] sm:$0xf]
      %v7467 = vld [vmem:[%s1170 + $0x44] sm:$0x1]
      %v7468 = vld [vmem:[%s1170 + $0x48] sm:$0xe]
      %v7469 = vld [vmem:[%s1170 + $0x4c] sm:$0xf]
      %v7470 = vld [vmem:[%s1170 + $0x50] sm:$0x1]
      %v7471 = vld [vmem:[%s1170 + $0x54] sm:$0xe]
      %v7472 = vld [vmem:[%s1170 + $0x58] sm:$0xf]
      %v7473 = vld [vmem:[%s1170 + $0x5c] sm:$0x1]
      %v7474 = vld [vmem:[%s1170 + $0x60] sm:$0xe]
      %v7475 = vld [vmem:[%s1170 + $0x64] sm:$0xf]
      %v7476 = vld [vmem:[%s1170 + $0x68] sm:$0x1]
      %v7477 = vld [vmem:[%s1170 + $0x6c] sm:$0xe]
      %v7478 = vld [vmem:[%s1170 + $0x70] sm:$0xf]
      %v7479 = vld [vmem:[%s1170 + $0x74] sm:$0x1]
      %v7480 = vld [vmem:[%s1170 + $0x78] sm:$0xe]
      %v7481 = vld [vmem:[%s1170 + $0x7c] sm:$0xf]
      %v7482 = vld [vmem:[%s1170 + $0x80] sm:$0x1]
      %v7483 = vld [vmem:[%s1170 + $0x84] sm:$0xe]
      %v7484 = vld [vmem:[%s1170 + $0x88] sm:$0xf]
      %v7485 = vld [vmem:[%s1170 + $0x8c] sm:$0x1]
      %v7486 = vld [vmem:[%s1170 + $0x90] sm:$0xe]
      %v7487 = vld [vmem:[%s1170 + $0x94] sm:$0xf]
      %v7488 = vld [vmem:[%s1170 + $0x98] sm:$0x1]
      %v7489 = vld [vmem:[%s1170 + $0x9c] sm:$0xe]
      %v7490 = vld [vmem:[%s1170 + $0xa0] sm:$0xf]
      %v7491 = vld [vmem:[%s1170 + $0xa4] sm:$0x1]
      %v7492 = vld [vmem:[%s1170 + $0xa8] sm:$0xe]
      %v7493 = vld [vmem:[%s1170 + $0xac] sm:$0xf]
      %v7494 = vld [vmem:[%s1170 + $0xb0] sm:$0x1]
      %v7495 = vld [vmem:[%s1170 + $0xb4] sm:$0xe]
      %v7496 = vld [vmem:[%s1170 + $0xb8] sm:$0xf]
      %v7497 = vld [vmem:[%s1170 + $0xbc] sm:$0x1]
      %v7546 = vrot.slane %v7450, 5
      %v7547 = vrot.slane %v7546, 4
      %v7548 = vrot.slane %v7451, 5
      %v7549 = vsel %vm2077, %v7547, %v7548
      %v7550 = vrot.slane %v7548, 4
      %v7551 = vrot.slane %v7452, 5
      %v7552 = vsel %vm2077, %v7550, %v7551
      %v7553 = vrot.slane %v7453, 5
      %v7554 = vrot.slane %v7553, 4
      %v7555 = vrot.slane %v7454, 5
      %v7556 = vsel %vm2077, %v7554, %v7555
      %v7557 = vrot.slane %v7555, 4
      %v7558 = vrot.slane %v7455, 5
      %v7559 = vsel %vm2077, %v7557, %v7558
      %v7560 = vrot.slane %v7456, 5
      %v7561 = vrot.slane %v7560, 4
      %v7562 = vrot.slane %v7457, 5
      %v7563 = vsel %vm2077, %v7561, %v7562
      %v7564 = vrot.slane %v7562, 4
      %v7565 = vrot.slane %v7458, 5
      %v7566 = vsel %vm2077, %v7564, %v7565
      %v7567 = vrot.slane %v7459, 5
      %v7568 = vrot.slane %v7567, 4
      %v7569 = vrot.slane %v7460, 5
      %v7570 = vsel %vm2077, %v7568, %v7569
      %v7571 = vrot.slane %v7569, 4
      %v7572 = vrot.slane %v7461, 5
      %v7573 = vsel %vm2077, %v7571, %v7572
      %v7574 = vrot.slane %v7462, 5
      %v7575 = vrot.slane %v7574, 4
      %v7576 = vrot.slane %v7463, 5
      %v7577 = vsel %vm2077, %v7575, %v7576
      %v7578 = vrot.slane %v7576, 4
      %v7579 = vrot.slane %v7464, 5
      %v7580 = vsel %vm2077, %v7578, %v7579
      %v7581 = vrot.slane %v7465, 5
      %v7582 = vrot.slane %v7581, 4
      %v7583 = vrot.slane %v7466, 5
      %v7584 = vsel %vm2077, %v7582, %v7583
      %v7585 = vrot.slane %v7583, 4
      %v7586 = vrot.slane %v7467, 5
      %v7587 = vsel %vm2077, %v7585, %v7586
      %v7588 = vrot.slane %v7468, 5
      %v7589 = vrot.slane %v7588, 4
      %v7590 = vrot.slane %v7469, 5
      %v7591 = vsel %vm2077, %v7589, %v7590
      %v7592 = vrot.slane %v7590, 4
      %v7593 = vrot.slane %v7470, 5
      %v7594 = vsel %vm2077, %v7592, %v7593
      %v7595 = vrot.slane %v7471, 5
      %v7596 = vrot.slane %v7595, 4
      %v7597 = vrot.slane %v7472, 5
      %v7598 = vsel %vm2077, %v7596, %v7597
      %v7599 = vrot.slane %v7597, 4
      %v7600 = vrot.slane %v7473, 5
      %v7601 = vsel %vm2077, %v7599, %v7600
      %v7602 = vrot.slane %v7474, 5
      %v7603 = vrot.slane %v7602, 4
      %v7604 = vrot.slane %v7475, 5
      %v7605 = vsel %vm2077, %v7603, %v7604
      %v7606 = vrot.slane %v7604, 4
      %v7607 = vrot.slane %v7476, 5
      %v7608 = vsel %vm2077, %v7606, %v7607
      %v7609 = vrot.slane %v7477, 5
      %v7610 = vrot.slane %v7609, 4
      %v7611 = vrot.slane %v7478, 5
      %v7612 = vsel %vm2077, %v7610, %v7611
      %v7613 = vrot.slane %v7611, 4
      %v7614 = vrot.slane %v7479, 5
      %v7615 = vsel %vm2077, %v7613, %v7614
      %v7616 = vrot.slane %v7480, 5
      %v7617 = vrot.slane %v7616, 4
      %v7618 = vrot.slane %v7481, 5
      %v7619 = vsel %vm2077, %v7617, %v7618
      %v7620 = vrot.slane %v7618, 4
      %v7621 = vrot.slane %v7482, 5
      %v7622 = vsel %vm2077, %v7620, %v7621
      %v7623 = vrot.slane %v7483, 5
      %v7624 = vrot.slane %v7623, 4
      %v7625 = vrot.slane %v7484, 5
      %v7626 = vsel %vm2077, %v7624, %v7625
      %v7627 = vrot.slane %v7625, 4
      %v7628 = vrot.slane %v7485, 5
      %v7629 = vsel %vm2077, %v7627, %v7628
      %v7630 = vrot.slane %v7486, 5
      %v7631 = vrot.slane %v7630, 4
      %v7632 = vrot.slane %v7487, 5
      %v7633 = vsel %vm2077, %v7631, %v7632
      %v7634 = vrot.slane %v7632, 4
      %v7635 = vrot.slane %v7488, 5
      %v7636 = vsel %vm2077, %v7634, %v7635
      %v7637 = vrot.slane %v7489, 5
      %v7638 = vrot.slane %v7637, 4
      %v7639 = vrot.slane %v7490, 5
      %v7640 = vsel %vm2077, %v7638, %v7639
      %v7641 = vrot.slane %v7639, 4
      %v7642 = vrot.slane %v7491, 5
      %v7643 = vsel %vm2077, %v7641, %v7642
      %v7644 = vrot.slane %v7492, 5
      %v7645 = vrot.slane %v7644, 4
      %v7646 = vrot.slane %v7493, 5
      %v7647 = vsel %vm2077, %v7645, %v7646
      %v7648 = vrot.slane %v7646, 4
      %v7649 = vrot.slane %v7494, 5
      %v7650 = vsel %vm2077, %v7648, %v7649
      %v7651 = vrot.slane %v7495, 5
      %v7652 = vrot.slane %v7651, 4
      %v7653 = vrot.slane %v7496, 5
      %v7654 = vsel %vm2077, %v7652, %v7653
      %v7655 = vrot.slane %v7653, 4
      %v7656 = vrot.slane %v7497, 5
      %v7657 = vsel %vm2077, %v7655, %v7656
      %v7658 = vunpack.c.l.b16 %v7549
      %v7659 = vunpack.c.l.b16 %v7552
      %v7660 = vunpack.c.l.b16 %v7556
      %v7661 = vunpack.c.l.b16 %v7559
      %v7662 = vunpack.c.l.b16 %v7563
      %v7663 = vunpack.c.l.b16 %v7566
      %v7664 = vunpack.c.l.b16 %v7570
      %v7665 = vunpack.c.l.b16 %v7573
      %v7666 = vunpack.c.l.b16 %v7577
      %v7667 = vunpack.c.l.b16 %v7580
      %v7668 = vunpack.c.l.b16 %v7584
      %v7669 = vunpack.c.l.b16 %v7587
      %v7670 = vunpack.c.l.b16 %v7591
      %v7671 = vunpack.c.l.b16 %v7594
      %v7672 = vunpack.c.l.b16 %v7598
      %v7673 = vunpack.c.l.b16 %v7601
      %v7674 = vunpack.c.l.b16 %v7605
      %v7675 = vunpack.c.l.b16 %v7608
      %v7676 = vunpack.c.l.b16 %v7612
      %v7677 = vunpack.c.l.b16 %v7615
      %v7678 = vunpack.c.l.b16 %v7619
      %v7679 = vunpack.c.l.b16 %v7622
      %v7680 = vunpack.c.l.b16 %v7626
      %v7681 = vunpack.c.l.b16 %v7629
      %v7682 = vunpack.c.l.b16 %v7633
      %v7683 = vunpack.c.l.b16 %v7636
      %v7684 = vunpack.c.l.b16 %v7640
      %v7685 = vunpack.c.l.b16 %v7643
      %v7686 = vunpack.c.l.b16 %v7647
      %v7687 = vunpack.c.l.b16 %v7650
      %v7688 = vunpack.c.l.b16 %v7654
      %v7689 = vunpack.c.l.b16 %v7657
      %v7690 = vpack.c.b16 %v7659, %v7658
      %v7691 = vpack.c.b16 %v7661, %v7660
      %v7692 = vpack.c.b16 %v7663, %v7662
      %v7693 = vpack.c.b16 %v7665, %v7664
      %v7694 = vpack.c.b16 %v7667, %v7666
      %v7695 = vpack.c.b16 %v7669, %v7668
      %v7696 = vpack.c.b16 %v7671, %v7670
      %v7697 = vpack.c.b16 %v7673, %v7672
      %v7698 = vpack.c.b16 %v7675, %v7674
      %v7699 = vpack.c.b16 %v7677, %v7676
      %v7700 = vpack.c.b16 %v7679, %v7678
      %v7701 = vpack.c.b16 %v7681, %v7680
      %v7702 = vpack.c.b16 %v7683, %v7682
      %v7703 = vpack.c.b16 %v7685, %v7684
      %v7704 = vpack.c.b16 %v7687, %v7686
      %v7705 = vpack.c.b16 %v7689, %v7688
      %7706 = vrot.lane.b32.xlu0 %v7690, 64
      %v7707 = vpop.permute.xlu0 %7706
      %7708 = vrot.lane.b32.xlu0 %v7691, 64
      %v7709 = vpop.permute.xlu0 %7708
      %7710 = vrot.lane.b32.xlu0 %v7692, 64
      %v7711 = vpop.permute.xlu0 %7710
      %7712 = vrot.lane.b32.xlu0 %v7693, 64
      %v7713 = vpop.permute.xlu0 %7712
      %7714 = vrot.lane.b32.xlu0 %v7694, 64
      %v7715 = vpop.permute.xlu0 %7714
      %7716 = vrot.lane.b32.xlu0 %v7695, 64
      %v7717 = vpop.permute.xlu0 %7716
      %7718 = vrot.lane.b32.xlu0 %v7696, 64
      %v7719 = vpop.permute.xlu0 %7718
      %7720 = vrot.lane.b32.xlu0 %v7697, 64
      %v7721 = vpop.permute.xlu0 %7720
      %7722 = vrot.lane.b32.xlu0 %v7698, 64
      %v7723 = vpop.permute.xlu0 %7722
      %7724 = vrot.lane.b32.xlu0 %v7699, 64
      %v7725 = vpop.permute.xlu0 %7724
      %7726 = vrot.lane.b32.xlu0 %v7700, 64
      %v7727 = vpop.permute.xlu0 %7726
      %7728 = vrot.lane.b32.xlu0 %v7701, 64
      %v7729 = vpop.permute.xlu0 %7728
      %7730 = vrot.lane.b32.xlu0 %v7702, 64
      %v7731 = vpop.permute.xlu0 %7730
      %7732 = vrot.lane.b32.xlu0 %v7703, 64
      %v7733 = vpop.permute.xlu0 %7732
      %7734 = vrot.lane.b32.xlu0 %v7704, 64
      %v7735 = vpop.permute.xlu0 %7734
      %7736 = vrot.lane.b32.xlu0 %v7705, 64
      %v7737 = vpop.permute.xlu0 %7736
      %7754 = vst.msk [vmem:[#allocation3 + $0x10] sm:$0xff] %vm1962, %v7707
      %7755 = vst.msk [vmem:[#allocation3 + $0x38] sm:$0xff] %vm1962, %v7709
      %7756 = vst.msk [vmem:[#allocation3 + $0x60] sm:$0xff] %vm1962, %v7711
      %7757 = vst.msk [vmem:[#allocation3 + $0x88] sm:$0xff] %vm1962, %v7713
      %7758 = vst.msk [vmem:[#allocation3 + $0xb0] sm:$0xff] %vm1962, %v7715
      %7759 = vst.msk [vmem:[#allocation3 + $0xd8] sm:$0xff] %vm1962, %v7717
      %7760 = vst.msk [vmem:[#allocation3 + $0x100] sm:$0xff] %vm1962, %v7719
      %7761 = vst.msk [vmem:[#allocation3 + $0x128] sm:$0xff] %vm1962, %v7721
      %7762 = vst.msk [vmem:[#allocation3 + $0x150] sm:$0xff] %vm1962, %v7723
      %7763 = vst.msk [vmem:[#allocation3 + $0x178] sm:$0xff] %vm1962, %v7725
      %7764 = vst.msk [vmem:[#allocation3 + $0x1a0] sm:$0xff] %vm1962, %v7727
      %7765 = vst.msk [vmem:[#allocation3 + $0x1c8] sm:$0xff] %vm1962, %v7729
      %7766 = vst.msk [vmem:[#allocation3 + $0x1f0] sm:$0xff] %vm1962, %v7731
      %7767 = vst.msk [vmem:[#allocation3 + $0x218] sm:$0xff] %vm1962, %v7733
      %7768 = vst.msk [vmem:[#allocation3 + $0x240] sm:$0xff] %vm1962, %v7735
      %7769 = vst.msk [vmem:[#allocation3 + $0x268] sm:$0xff] %vm1962, %v7737
      %v7770 = vld [vmem:[%s3278] sm:$0xf]
      %v7771 = vld [vmem:[%s3278 + $0x4] sm:$0xf]
      %v7772 = vld [vmem:[%s3278 + $0xc] sm:$0xf]
      %v7773 = vld [vmem:[%s3278 + $0x10] sm:$0xf]
      %v7774 = vld [vmem:[%s3278 + $0x18] sm:$0xf]
      %v7775 = vld [vmem:[%s3278 + $0x1c] sm:$0xf]
      %v7776 = vld [vmem:[%s3278 + $0x24] sm:$0xf]
      %v7777 = vld [vmem:[%s3278 + $0x28] sm:$0xf]
      %v7778 = vld [vmem:[%s3278 + $0x30] sm:$0xf]
      %v7779 = vld [vmem:[%s3278 + $0x34] sm:$0xf]
      %v7780 = vld [vmem:[%s3278 + $0x3c] sm:$0xf]
      %v7781 = vld [vmem:[%s3278 + $0x40] sm:$0xf]
      %v7782 = vld [vmem:[%s3278 + $0x48] sm:$0xf]
      %v7783 = vld [vmem:[%s3278 + $0x4c] sm:$0xf]
      %v7784 = vld [vmem:[%s3278 + $0x54] sm:$0xf]
      %v7785 = vld [vmem:[%s3278 + $0x58] sm:$0xf]
      %v7786 = vld [vmem:[%s3278 + $0x60] sm:$0xf]
      %v7787 = vld [vmem:[%s3278 + $0x64] sm:$0xf]
      %v7788 = vld [vmem:[%s3278 + $0x6c] sm:$0xf]
      %v7789 = vld [vmem:[%s3278 + $0x70] sm:$0xf]
      %v7790 = vld [vmem:[%s3278 + $0x78] sm:$0xf]
      %v7791 = vld [vmem:[%s3278 + $0x7c] sm:$0xf]
      %v7792 = vld [vmem:[%s3278 + $0x84] sm:$0xf]
      %v7793 = vld [vmem:[%s3278 + $0x88] sm:$0xf]
      %v7794 = vld [vmem:[%s3278 + $0x90] sm:$0xf]
      %v7795 = vld [vmem:[%s3278 + $0x94] sm:$0xf]
      %v7796 = vld [vmem:[%s3278 + $0x9c] sm:$0xf]
      %v7797 = vld [vmem:[%s3278 + $0xa0] sm:$0xf]
      %v7798 = vld [vmem:[%s3278 + $0xa8] sm:$0xf]
      %v7799 = vld [vmem:[%s3278 + $0xac] sm:$0xf]
      %v7800 = vld [vmem:[%s3278 + $0xb4] sm:$0xf]
      %v7801 = vld [vmem:[%s3278 + $0xb8] sm:$0xf]
      %v7834 = vunpack.c.l.b16 %v7770
      %v7835 = vunpack.c.l.b16 %v7771
      %v7836 = vunpack.c.l.b16 %v7772
      %v7837 = vunpack.c.l.b16 %v7773
      %v7838 = vunpack.c.l.b16 %v7774
      %v7839 = vunpack.c.l.b16 %v7775
      %v7840 = vunpack.c.l.b16 %v7776
      %v7841 = vunpack.c.l.b16 %v7777
      %v7842 = vunpack.c.l.b16 %v7778
      %v7843 = vunpack.c.l.b16 %v7779
      %v7844 = vunpack.c.l.b16 %v7780
      %v7845 = vunpack.c.l.b16 %v7781
      %v7846 = vunpack.c.l.b16 %v7782
      %v7847 = vunpack.c.l.b16 %v7783
      %v7848 = vunpack.c.l.b16 %v7784
      %v7849 = vunpack.c.l.b16 %v7785
      %v7850 = vunpack.c.l.b16 %v7786
      %v7851 = vunpack.c.l.b16 %v7787
      %v7852 = vunpack.c.l.b16 %v7788
      %v7853 = vunpack.c.l.b16 %v7789
      %v7854 = vunpack.c.l.b16 %v7790
      %v7855 = vunpack.c.l.b16 %v7791
      %v7856 = vunpack.c.l.b16 %v7792
      %v7857 = vunpack.c.l.b16 %v7793
      %v7858 = vunpack.c.l.b16 %v7794
      %v7859 = vunpack.c.l.b16 %v7795
      %v7860 = vunpack.c.l.b16 %v7796
      %v7861 = vunpack.c.l.b16 %v7797
      %v7862 = vunpack.c.l.b16 %v7798
      %v7863 = vunpack.c.l.b16 %v7799
      %v7864 = vunpack.c.l.b16 %v7800
      %v7865 = vunpack.c.l.b16 %v7801
      %v7866 = vpack.c.b16 %v7835, %v7834
      %v7867 = vpack.c.b16 %v7837, %v7836
      %v7868 = vpack.c.b16 %v7839, %v7838
      %v7869 = vpack.c.b16 %v7841, %v7840
      %v7870 = vpack.c.b16 %v7843, %v7842
      %v7871 = vpack.c.b16 %v7845, %v7844
      %v7872 = vpack.c.b16 %v7847, %v7846
      %v7873 = vpack.c.b16 %v7849, %v7848
      %v7874 = vpack.c.b16 %v7851, %v7850
      %v7875 = vpack.c.b16 %v7853, %v7852
      %v7876 = vpack.c.b16 %v7855, %v7854
      %v7877 = vpack.c.b16 %v7857, %v7856
      %v7878 = vpack.c.b16 %v7859, %v7858
      %v7879 = vpack.c.b16 %v7861, %v7860
      %v7880 = vpack.c.b16 %v7863, %v7862
      %v7881 = vpack.c.b16 %v7865, %v7864
      %7898 = vst.msk [vmem:[#allocation3 + $0x18] sm:$0xff] %vm1414, %v7866
      %7899 = vst.msk [vmem:[#allocation3 + $0x40] sm:$0xff] %vm1414, %v7867
      %7900 = vst.msk [vmem:[#allocation3 + $0x68] sm:$0xff] %vm1414, %v7868
      %7901 = vst.msk [vmem:[#allocation3 + $0x90] sm:$0xff] %vm1414, %v7869
      %7902 = vst.msk [vmem:[#allocation3 + $0xb8] sm:$0xff] %vm1414, %v7870
      %7903 = vst.msk [vmem:[#allocation3 + $0xe0] sm:$0xff] %vm1414, %v7871
      %7904 = vst.msk [vmem:[#allocation3 + $0x108] sm:$0xff] %vm1414, %v7872
      %7905 = vst.msk [vmem:[#allocation3 + $0x130] sm:$0xff] %vm1414, %v7873
      %7906 = vst.msk [vmem:[#allocation3 + $0x158] sm:$0xff] %vm1414, %v7874
      %7907 = vst.msk [vmem:[#allocation3 + $0x180] sm:$0xff] %vm1414, %v7875
      %7908 = vst.msk [vmem:[#allocation3 + $0x1a8] sm:$0xff] %vm1414, %v7876
      %7909 = vst.msk [vmem:[#allocation3 + $0x1d0] sm:$0xff] %vm1414, %v7877
      %7910 = vst.msk [vmem:[#allocation3 + $0x1f8] sm:$0xff] %vm1414, %v7878
      %7911 = vst.msk [vmem:[#allocation3 + $0x220] sm:$0xff] %vm1414, %v7879
      %7912 = vst.msk [vmem:[#allocation3 + $0x248] sm:$0xff] %vm1414, %v7880
      %7913 = vst.msk [vmem:[#allocation3 + $0x270] sm:$0xff] %vm1414, %v7881
      %v7914 = vld [vmem:[%s3278] sm:$0xf]
      %v7915 = vld [vmem:[%s3278 + $0x4] sm:$0xf]
      %v7916 = vld [vmem:[%s3278 + $0x8] sm:$0x1]
      %v7917 = vld [vmem:[%s3278 + $0xc] sm:$0xf]
      %v7918 = vld [vmem:[%s3278 + $0x10] sm:$0xf]
      %v7919 = vld [vmem:[%s3278 + $0x14] sm:$0x1]
      %v7920 = vld [vmem:[%s3278 + $0x18] sm:$0xf]
      %v7921 = vld [vmem:[%s3278 + $0x1c] sm:$0xf]
      %v7922 = vld [vmem:[%s3278 + $0x20] sm:$0x1]
      %v7923 = vld [vmem:[%s3278 + $0x24] sm:$0xf]
      %v7924 = vld [vmem:[%s3278 + $0x28] sm:$0xf]
      %v7925 = vld [vmem:[%s3278 + $0x2c] sm:$0x1]
      %v7926 = vld [vmem:[%s3278 + $0x30] sm:$0xf]
      %v7927 = vld [vmem:[%s3278 + $0x34] sm:$0xf]
      %v7928 = vld [vmem:[%s3278 + $0x38] sm:$0x1]
      %v7929 = vld [vmem:[%s3278 + $0x3c] sm:$0xf]
      %v7930 = vld [vmem:[%s3278 + $0x40] sm:$0xf]
      %v7931 = vld [vmem:[%s3278 + $0x44] sm:$0x1]
      %v7932 = vld [vmem:[%s3278 + $0x48] sm:$0xf]
      %v7933 = vld [vmem:[%s3278 + $0x4c] sm:$0xf]
      %v7934 = vld [vmem:[%s3278 + $0x50] sm:$0x1]
      %v7935 = vld [vmem:[%s3278 + $0x54] sm:$0xf]
      %v7936 = vld [vmem:[%s3278 + $0x58] sm:$0xf]
      %v7937 = vld [vmem:[%s3278 + $0x5c] sm:$0x1]
      %v7938 = vld [vmem:[%s3278 + $0x60] sm:$0xf]
      %v7939 = vld [vmem:[%s3278 + $0x64] sm:$0xf]
      %v7940 = vld [vmem:[%s3278 + $0x68] sm:$0x1]
      %v7941 = vld [vmem:[%s3278 + $0x6c] sm:$0xf]
      %v7942 = vld [vmem:[%s3278 + $0x70] sm:$0xf]
      %v7943 = vld [vmem:[%s3278 + $0x74] sm:$0x1]
      %v7944 = vld [vmem:[%s3278 + $0x78] sm:$0xf]
      %v7945 = vld [vmem:[%s3278 + $0x7c] sm:$0xf]
      %v7946 = vld [vmem:[%s3278 + $0x80] sm:$0x1]
      %v7947 = vld [vmem:[%s3278 + $0x84] sm:$0xf]
      %v7948 = vld [vmem:[%s3278 + $0x88] sm:$0xf]
      %v7949 = vld [vmem:[%s3278 + $0x8c] sm:$0x1]
      %v7950 = vld [vmem:[%s3278 + $0x90] sm:$0xf]
      %v7951 = vld [vmem:[%s3278 + $0x94] sm:$0xf]
      %v7952 = vld [vmem:[%s3278 + $0x98] sm:$0x1]
      %v7953 = vld [vmem:[%s3278 + $0x9c] sm:$0xf]
      %v7954 = vld [vmem:[%s3278 + $0xa0] sm:$0xf]
      %v7955 = vld [vmem:[%s3278 + $0xa4] sm:$0x1]
      %v7956 = vld [vmem:[%s3278 + $0xa8] sm:$0xf]
      %v7957 = vld [vmem:[%s3278 + $0xac] sm:$0xf]
      %v7958 = vld [vmem:[%s3278 + $0xb0] sm:$0x1]
      %v7959 = vld [vmem:[%s3278 + $0xb4] sm:$0xf]
      %v7960 = vld [vmem:[%s3278 + $0xb8] sm:$0xf]
      %v7961 = vld [vmem:[%s3278 + $0xbc] sm:$0x1]
      %v7963 = vshrl.u32 %v7914, 16
      %v7965 = vrot.slane %v7963, 4
      %v7966 = vshll.u32 %v7914, 16
      %v7968 = vrot.slane %v7966, 5
      %v7969 = vor.u32 %v7965, %v7968
      %v7970 = vrot.slane %v7969, 4
      %v7972 = vshll.u32 %v7915, 16
      %v7974 = vrot.slane %v7972, 5
      %v7975 = vsel %vm1481, %v7970, %v7974
      %v7976 = vshrl.u32 %v7915, 16
      %v7978 = vrot.slane %v7976, 4
      %v7979 = vor.u32 %v7978, %v7974
      %v7980 = vrot.slane %v7979, 4
      %v7982 = vshll.u32 %v7916, 16
      %v7984 = vrot.slane %v7982, 5
      %v7985 = vsel %vm1481, %v7980, %v7984
      %v7987 = vshrl.u32 %v7917, 16
      %v7989 = vrot.slane %v7987, 4
      %v7990 = vshll.u32 %v7917, 16
      %v7992 = vrot.slane %v7990, 5
      %v7993 = vor.u32 %v7989, %v7992
      %v7994 = vrot.slane %v7993, 4
      %v7996 = vshll.u32 %v7918, 16
      %v7998 = vrot.slane %v7996, 5
      %v7999 = vsel %vm1481, %v7994, %v7998
      %v8000 = vshrl.u32 %v7918, 16
      %v8002 = vrot.slane %v8000, 4
      %v8003 = vor.u32 %v8002, %v7998
      %v8004 = vrot.slane %v8003, 4
      %v8006 = vshll.u32 %v7919, 16
      %v8008 = vrot.slane %v8006, 5
      %v8009 = vsel %vm1481, %v8004, %v8008
      %v8011 = vshrl.u32 %v7920, 16
      %v8013 = vrot.slane %v8011, 4
      %v8014 = vshll.u32 %v7920, 16
      %v8016 = vrot.slane %v8014, 5
      %v8017 = vor.u32 %v8013, %v8016
      %v8018 = vrot.slane %v8017, 4
      %v8020 = vshll.u32 %v7921, 16
      %v8022 = vrot.slane %v8020, 5
      %v8023 = vsel %vm1481, %v8018, %v8022
      %v8024 = vshrl.u32 %v7921, 16
      %v8026 = vrot.slane %v8024, 4
      %v8027 = vor.u32 %v8026, %v8022
      %v8028 = vrot.slane %v8027, 4
      %v8030 = vshll.u32 %v7922, 16
      %v8032 = vrot.slane %v8030, 5
      %v8033 = vsel %vm1481, %v8028, %v8032
      %v8035 = vshrl.u32 %v7923, 16
      %v8037 = vrot.slane %v8035, 4
      %v8038 = vshll.u32 %v7923, 16
      %v8040 = vrot.slane %v8038, 5
      %v8041 = vor.u32 %v8037, %v8040
      %v8042 = vrot.slane %v8041, 4
      %v8044 = vshll.u32 %v7924, 16
      %v8046 = vrot.slane %v8044, 5
      %v8047 = vsel %vm1481, %v8042, %v8046
      %v8048 = vshrl.u32 %v7924, 16
      %v8050 = vrot.slane %v8048, 4
      %v8051 = vor.u32 %v8050, %v8046
      %v8052 = vrot.slane %v8051, 4
      %v8054 = vshll.u32 %v7925, 16
      %v8056 = vrot.slane %v8054, 5
      %v8057 = vsel %vm1481, %v8052, %v8056
      %v8059 = vshrl.u32 %v7926, 16
      %v8061 = vrot.slane %v8059, 4
      %v8062 = vshll.u32 %v7926, 16
      %v8064 = vrot.slane %v8062, 5
      %v8065 = vor.u32 %v8061, %v8064
      %v8066 = vrot.slane %v8065, 4
      %v8068 = vshll.u32 %v7927, 16
      %v8070 = vrot.slane %v8068, 5
      %v8071 = vsel %vm1481, %v8066, %v8070
      %v8072 = vshrl.u32 %v7927, 16
      %v8074 = vrot.slane %v8072, 4
      %v8075 = vor.u32 %v8074, %v8070
      %v8076 = vrot.slane %v8075, 4
      %v8078 = vshll.u32 %v7928, 16
      %v8080 = vrot.slane %v8078, 5
      %v8081 = vsel %vm1481, %v8076, %v8080
      %v8083 = vshrl.u32 %v7929, 16
      %v8085 = vrot.slane %v8083, 4
      %v8086 = vshll.u32 %v7929, 16
      %v8088 = vrot.slane %v8086, 5
      %v8089 = vor.u32 %v8085, %v8088
      %v8090 = vrot.slane %v8089, 4
      %v8092 = vshll.u32 %v7930, 16
      %v8094 = vrot.slane %v8092, 5
      %v8095 = vsel %vm1481, %v8090, %v8094
      %v8096 = vshrl.u32 %v7930, 16
      %v8098 = vrot.slane %v8096, 4
      %v8099 = vor.u32 %v8098, %v8094
      %v8100 = vrot.slane %v8099, 4
      %v8102 = vshll.u32 %v7931, 16
      %v8104 = vrot.slane %v8102, 5
      %v8105 = vsel %vm1481, %v8100, %v8104
      %v8107 = vshrl.u32 %v7932, 16
      %v8109 = vrot.slane %v8107, 4
      %v8110 = vshll.u32 %v7932, 16
      %v8112 = vrot.slane %v8110, 5
      %v8113 = vor.u32 %v8109, %v8112
      %v8114 = vrot.slane %v8113, 4
      %v8116 = vshll.u32 %v7933, 16
      %v8118 = vrot.slane %v8116, 5
      %v8119 = vsel %vm1481, %v8114, %v8118
      %v8120 = vshrl.u32 %v7933, 16
      %v8122 = vrot.slane %v8120, 4
      %v8123 = vor.u32 %v8122, %v8118
      %v8124 = vrot.slane %v8123, 4
      %v8126 = vshll.u32 %v7934, 16
      %v8128 = vrot.slane %v8126, 5
      %v8129 = vsel %vm1481, %v8124, %v8128
      %v8131 = vshrl.u32 %v7935, 16
      %v8133 = vrot.slane %v8131, 4
      %v8134 = vshll.u32 %v7935, 16
      %v8136 = vrot.slane %v8134, 5
      %v8137 = vor.u32 %v8133, %v8136
      %v8138 = vrot.slane %v8137, 4
      %v8140 = vshll.u32 %v7936, 16
      %v8142 = vrot.slane %v8140, 5
      %v8143 = vsel %vm1481, %v8138, %v8142
      %v8144 = vshrl.u32 %v7936, 16
      %v8146 = vrot.slane %v8144, 4
      %v8147 = vor.u32 %v8146, %v8142
      %v8148 = vrot.slane %v8147, 4
      %v8150 = vshll.u32 %v7937, 16
      %v8152 = vrot.slane %v8150, 5
      %v8153 = vsel %vm1481, %v8148, %v8152
      %v8155 = vshrl.u32 %v7938, 16
      %v8157 = vrot.slane %v8155, 4
      %v8158 = vshll.u32 %v7938, 16
      %v8160 = vrot.slane %v8158, 5
      %v8161 = vor.u32 %v8157, %v8160
      %v8162 = vrot.slane %v8161, 4
      %v8164 = vshll.u32 %v7939, 16
      %v8166 = vrot.slane %v8164, 5
      %v8167 = vsel %vm1481, %v8162, %v8166
      %v8168 = vshrl.u32 %v7939, 16
      %v8170 = vrot.slane %v8168, 4
      %v8171 = vor.u32 %v8170, %v8166
      %v8172 = vrot.slane %v8171, 4
      %v8174 = vshll.u32 %v7940, 16
      %v8176 = vrot.slane %v8174, 5
      %v8177 = vsel %vm1481, %v8172, %v8176
      %v8179 = vshrl.u32 %v7941, 16
      %v8181 = vrot.slane %v8179, 4
      %v8182 = vshll.u32 %v7941, 16
      %v8184 = vrot.slane %v8182, 5
      %v8185 = vor.u32 %v8181, %v8184
      %v8186 = vrot.slane %v8185, 4
      %v8188 = vshll.u32 %v7942, 16
      %v8190 = vrot.slane %v8188, 5
      %v8191 = vsel %vm1481, %v8186, %v8190
      %v8192 = vshrl.u32 %v7942, 16
      %v8194 = vrot.slane %v8192, 4
      %v8195 = vor.u32 %v8194, %v8190
      %v8196 = vrot.slane %v8195, 4
      %v8198 = vshll.u32 %v7943, 16
      %v8200 = vrot.slane %v8198, 5
      %v8201 = vsel %vm1481, %v8196, %v8200
      %v8203 = vshrl.u32 %v7944, 16
      %v8205 = vrot.slane %v8203, 4
      %v8206 = vshll.u32 %v7944, 16
      %v8208 = vrot.slane %v8206, 5
      %v8209 = vor.u32 %v8205, %v8208
      %v8210 = vrot.slane %v8209, 4
      %v8212 = vshll.u32 %v7945, 16
      %v8214 = vrot.slane %v8212, 5
      %v8215 = vsel %vm1481, %v8210, %v8214
      %v8216 = vshrl.u32 %v7945, 16
      %v8218 = vrot.slane %v8216, 4
      %v8219 = vor.u32 %v8218, %v8214
      %v8220 = vrot.slane %v8219, 4
      %v8222 = vshll.u32 %v7946, 16
      %v8224 = vrot.slane %v8222, 5
      %v8225 = vsel %vm1481, %v8220, %v8224
      %v8227 = vshrl.u32 %v7947, 16
      %v8229 = vrot.slane %v8227, 4
      %v8230 = vshll.u32 %v7947, 16
      %v8232 = vrot.slane %v8230, 5
      %v8233 = vor.u32 %v8229, %v8232
      %v8234 = vrot.slane %v8233, 4
      %v8236 = vshll.u32 %v7948, 16
      %v8238 = vrot.slane %v8236, 5
      %v8239 = vsel %vm1481, %v8234, %v8238
      %v8240 = vshrl.u32 %v7948, 16
      %v8242 = vrot.slane %v8240, 4
      %v8243 = vor.u32 %v8242, %v8238
      %v8244 = vrot.slane %v8243, 4
      %v8246 = vshll.u32 %v7949, 16
      %v8248 = vrot.slane %v8246, 5
      %v8249 = vsel %vm1481, %v8244, %v8248
      %v8251 = vshrl.u32 %v7950, 16
      %v8253 = vrot.slane %v8251, 4
      %v8254 = vshll.u32 %v7950, 16
      %v8256 = vrot.slane %v8254, 5
      %v8257 = vor.u32 %v8253, %v8256
      %v8258 = vrot.slane %v8257, 4
      %v8260 = vshll.u32 %v7951, 16
      %v8262 = vrot.slane %v8260, 5
      %v8263 = vsel %vm1481, %v8258, %v8262
      %v8264 = vshrl.u32 %v7951, 16
      %v8266 = vrot.slane %v8264, 4
      %v8267 = vor.u32 %v8266, %v8262
      %v8268 = vrot.slane %v8267, 4
      %v8270 = vshll.u32 %v7952, 16
      %v8272 = vrot.slane %v8270, 5
      %v8273 = vsel %vm1481, %v8268, %v8272
      %v8275 = vshrl.u32 %v7953, 16
      %v8277 = vrot.slane %v8275, 4
      %v8278 = vshll.u32 %v7953, 16
      %v8280 = vrot.slane %v8278, 5
      %v8281 = vor.u32 %v8277, %v8280
      %v8282 = vrot.slane %v8281, 4
      %v8284 = vshll.u32 %v7954, 16
      %v8286 = vrot.slane %v8284, 5
      %v8287 = vsel %vm1481, %v8282, %v8286
      %v8288 = vshrl.u32 %v7954, 16
      %v8290 = vrot.slane %v8288, 4
      %v8291 = vor.u32 %v8290, %v8286
      %v8292 = vrot.slane %v8291, 4
      %v8294 = vshll.u32 %v7955, 16
      %v8296 = vrot.slane %v8294, 5
      %v8297 = vsel %vm1481, %v8292, %v8296
      %v8299 = vshrl.u32 %v7956, 16
      %v8301 = vrot.slane %v8299, 4
      %v8302 = vshll.u32 %v7956, 16
      %v8304 = vrot.slane %v8302, 5
      %v8305 = vor.u32 %v8301, %v8304
      %v8306 = vrot.slane %v8305, 4
      %v8308 = vshll.u32 %v7957, 16
      %v8310 = vrot.slane %v8308, 5
      %v8311 = vsel %vm1481, %v8306, %v8310
      %v8312 = vshrl.u32 %v7957, 16
      %v8314 = vrot.slane %v8312, 4
      %v8315 = vor.u32 %v8314, %v8310
      %v8316 = vrot.slane %v8315, 4
      %v8318 = vshll.u32 %v7958, 16
      %v8320 = vrot.slane %v8318, 5
      %v8321 = vsel %vm1481, %v8316, %v8320
      %v8323 = vshrl.u32 %v7959, 16
      %v8325 = vrot.slane %v8323, 4
      %v8326 = vshll.u32 %v7959, 16
      %v8328 = vrot.slane %v8326, 5
      %v8329 = vor.u32 %v8325, %v8328
      %v8330 = vrot.slane %v8329, 4
      %v8332 = vshll.u32 %v7960, 16
      %v8334 = vrot.slane %v8332, 5
      %v8335 = vsel %vm1481, %v8330, %v8334
      %v8336 = vshrl.u32 %v7960, 16
      %v8338 = vrot.slane %v8336, 4
      %v8339 = vor.u32 %v8338, %v8334
      %v8340 = vrot.slane %v8339, 4
      %v8342 = vshll.u32 %v7961, 16
      %v8344 = vrot.slane %v8342, 5
      %v8345 = vsel %vm1481, %v8340, %v8344
      %v8346 = vunpack.c.l.b16 %v7975
      %v8347 = vunpack.c.l.b16 %v7985
      %v8348 = vunpack.c.l.b16 %v7999
      %v8349 = vunpack.c.l.b16 %v8009
      %v8350 = vunpack.c.l.b16 %v8023
      %v8351 = vunpack.c.l.b16 %v8033
      %v8352 = vunpack.c.l.b16 %v8047
      %v8353 = vunpack.c.l.b16 %v8057
      %v8354 = vunpack.c.l.b16 %v8071
      %v8355 = vunpack.c.l.b16 %v8081
      %v8356 = vunpack.c.l.b16 %v8095
      %v8357 = vunpack.c.l.b16 %v8105
      %v8358 = vunpack.c.l.b16 %v8119
      %v8359 = vunpack.c.l.b16 %v8129
      %v8360 = vunpack.c.l.b16 %v8143
      %v8361 = vunpack.c.l.b16 %v8153
      %v8362 = vunpack.c.l.b16 %v8167
      %v8363 = vunpack.c.l.b16 %v8177
      %v8364 = vunpack.c.l.b16 %v8191
      %v8365 = vunpack.c.l.b16 %v8201
      %v8366 = vunpack.c.l.b16 %v8215
      %v8367 = vunpack.c.l.b16 %v8225
      %v8368 = vunpack.c.l.b16 %v8239
      %v8369 = vunpack.c.l.b16 %v8249
      %v8370 = vunpack.c.l.b16 %v8263
      %v8371 = vunpack.c.l.b16 %v8273
      %v8372 = vunpack.c.l.b16 %v8287
      %v8373 = vunpack.c.l.b16 %v8297
      %v8374 = vunpack.c.l.b16 %v8311
      %v8375 = vunpack.c.l.b16 %v8321
      %v8376 = vunpack.c.l.b16 %v8335
      %v8377 = vunpack.c.l.b16 %v8345
      %v8378 = vpack.c.b16 %v8347, %v8346
      %v8379 = vpack.c.b16 %v8349, %v8348
      %v8380 = vpack.c.b16 %v8351, %v8350
      %v8381 = vpack.c.b16 %v8353, %v8352
      %v8382 = vpack.c.b16 %v8355, %v8354
      %v8383 = vpack.c.b16 %v8357, %v8356
      %v8384 = vpack.c.b16 %v8359, %v8358
      %v8385 = vpack.c.b16 %v8361, %v8360
      %v8386 = vpack.c.b16 %v8363, %v8362
      %v8387 = vpack.c.b16 %v8365, %v8364
      %v8388 = vpack.c.b16 %v8367, %v8366
      %v8389 = vpack.c.b16 %v8369, %v8368
      %v8390 = vpack.c.b16 %v8371, %v8370
      %v8391 = vpack.c.b16 %v8373, %v8372
      %v8392 = vpack.c.b16 %v8375, %v8374
      %v8393 = vpack.c.b16 %v8377, %v8376
      %8394 = vrot.lane.b32.xlu0 %v8378, 64
      %v8395 = vpop.permute.xlu0 %8394
      %8396 = vrot.lane.b32.xlu0 %v8379, 64
      %v8397 = vpop.permute.xlu0 %8396
      %8398 = vrot.lane.b32.xlu0 %v8380, 64
      %v8399 = vpop.permute.xlu0 %8398
      %8400 = vrot.lane.b32.xlu0 %v8381, 64
      %v8401 = vpop.permute.xlu0 %8400
      %8402 = vrot.lane.b32.xlu0 %v8382, 64
      %v8403 = vpop.permute.xlu0 %8402
      %8404 = vrot.lane.b32.xlu0 %v8383, 64
      %v8405 = vpop.permute.xlu0 %8404
      %8406 = vrot.lane.b32.xlu0 %v8384, 64
      %v8407 = vpop.permute.xlu0 %8406
      %8408 = vrot.lane.b32.xlu0 %v8385, 64
      %v8409 = vpop.permute.xlu0 %8408
      %8410 = vrot.lane.b32.xlu0 %v8386, 64
      %v8411 = vpop.permute.xlu0 %8410
      %8412 = vrot.lane.b32.xlu0 %v8387, 64
      %v8413 = vpop.permute.xlu0 %8412
      %8414 = vrot.lane.b32.xlu0 %v8388, 64
      %v8415 = vpop.permute.xlu0 %8414
      %8416 = vrot.lane.b32.xlu0 %v8389, 64
      %v8417 = vpop.permute.xlu0 %8416
      %8418 = vrot.lane.b32.xlu0 %v8390, 64
      %v8419 = vpop.permute.xlu0 %8418
      %8420 = vrot.lane.b32.xlu0 %v8391, 64
      %v8421 = vpop.permute.xlu0 %8420
      %8422 = vrot.lane.b32.xlu0 %v8392, 64
      %v8423 = vpop.permute.xlu0 %8422
      %8424 = vrot.lane.b32.xlu0 %v8393, 64
      %v8425 = vpop.permute.xlu0 %8424
      %8442 = vst.msk [vmem:[#allocation3 + $0x18] sm:$0xff] %vm1962, %v8395
      %8443 = vst.msk [vmem:[#allocation3 + $0x40] sm:$0xff] %vm1962, %v8397
      %8444 = vst.msk [vmem:[#allocation3 + $0x68] sm:$0xff] %vm1962, %v8399
      %8445 = vst.msk [vmem:[#allocation3 + $0x90] sm:$0xff] %vm1962, %v8401
      %8446 = vst.msk [vmem:[#allocation3 + $0xb8] sm:$0xff] %vm1962, %v8403
      %8447 = vst.msk [vmem:[#allocation3 + $0xe0] sm:$0xff] %vm1962, %v8405
      %8448 = vst.msk [vmem:[#allocation3 + $0x108] sm:$0xff] %vm1962, %v8407
      %8449 = vst.msk [vmem:[#allocation3 + $0x130] sm:$0xff] %vm1962, %v8409
      %8450 = vst.msk [vmem:[#allocation3 + $0x158] sm:$0xff] %vm1962, %v8411
      %8451 = vst.msk [vmem:[#allocation3 + $0x180] sm:$0xff] %vm1962, %v8413
      %8452 = vst.msk [vmem:[#allocation3 + $0x1a8] sm:$0xff] %vm1962, %v8415
      %8453 = vst.msk [vmem:[#allocation3 + $0x1d0] sm:$0xff] %vm1962, %v8417
      %8454 = vst.msk [vmem:[#allocation3 + $0x1f8] sm:$0xff] %vm1962, %v8419
      %8455 = vst.msk [vmem:[#allocation3 + $0x220] sm:$0xff] %vm1962, %v8421
      %8456 = vst.msk [vmem:[#allocation3 + $0x248] sm:$0xff] %vm1962, %v8423
      %8457 = vst.msk [vmem:[#allocation3 + $0x270] sm:$0xff] %vm1962, %v8425
      %v8458 = vld [vmem:[%s3278] sm:$0xe]
      %v8459 = vld [vmem:[%s3278 + $0x4] sm:$0xf]
      %v8460 = vld [vmem:[%s3278 + $0x8] sm:$0x1]
      %v8461 = vld [vmem:[%s3278 + $0xc] sm:$0xe]
      %v8462 = vld [vmem:[%s3278 + $0x10] sm:$0xf]
      %v8463 = vld [vmem:[%s3278 + $0x14] sm:$0x1]
      %v8464 = vld [vmem:[%s3278 + $0x18] sm:$0xe]
      %v8465 = vld [vmem:[%s3278 + $0x1c] sm:$0xf]
      %v8466 = vld [vmem:[%s3278 + $0x20] sm:$0x1]
      %v8467 = vld [vmem:[%s3278 + $0x24] sm:$0xe]
      %v8468 = vld [vmem:[%s3278 + $0x28] sm:$0xf]
      %v8469 = vld [vmem:[%s3278 + $0x2c] sm:$0x1]
      %v8470 = vld [vmem:[%s3278 + $0x30] sm:$0xe]
      %v8471 = vld [vmem:[%s3278 + $0x34] sm:$0xf]
      %v8472 = vld [vmem:[%s3278 + $0x38] sm:$0x1]
      %v8473 = vld [vmem:[%s3278 + $0x3c] sm:$0xe]
      %v8474 = vld [vmem:[%s3278 + $0x40] sm:$0xf]
      %v8475 = vld [vmem:[%s3278 + $0x44] sm:$0x1]
      %v8476 = vld [vmem:[%s3278 + $0x48] sm:$0xe]
      %v8477 = vld [vmem:[%s3278 + $0x4c] sm:$0xf]
      %v8478 = vld [vmem:[%s3278 + $0x50] sm:$0x1]
      %v8479 = vld [vmem:[%s3278 + $0x54] sm:$0xe]
      %v8480 = vld [vmem:[%s3278 + $0x58] sm:$0xf]
      %v8481 = vld [vmem:[%s3278 + $0x5c] sm:$0x1]
      %v8482 = vld [vmem:[%s3278 + $0x60] sm:$0xe]
      %v8483 = vld [vmem:[%s3278 + $0x64] sm:$0xf]
      %v8484 = vld [vmem:[%s3278 + $0x68] sm:$0x1]
      %v8485 = vld [vmem:[%s3278 + $0x6c] sm:$0xe]
      %v8486 = vld [vmem:[%s3278 + $0x70] sm:$0xf]
      %v8487 = vld [vmem:[%s3278 + $0x74] sm:$0x1]
      %v8488 = vld [vmem:[%s3278 + $0x78] sm:$0xe]
      %v8489 = vld [vmem:[%s3278 + $0x7c] sm:$0xf]
      %v8490 = vld [vmem:[%s3278 + $0x80] sm:$0x1]
      %v8491 = vld [vmem:[%s3278 + $0x84] sm:$0xe]
      %v8492 = vld [vmem:[%s3278 + $0x88] sm:$0xf]
      %v8493 = vld [vmem:[%s3278 + $0x8c] sm:$0x1]
      %v8494 = vld [vmem:[%s3278 + $0x90] sm:$0xe]
      %v8495 = vld [vmem:[%s3278 + $0x94] sm:$0xf]
      %v8496 = vld [vmem:[%s3278 + $0x98] sm:$0x1]
      %v8497 = vld [vmem:[%s3278 + $0x9c] sm:$0xe]
      %v8498 = vld [vmem:[%s3278 + $0xa0] sm:$0xf]
      %v8499 = vld [vmem:[%s3278 + $0xa4] sm:$0x1]
      %v8500 = vld [vmem:[%s3278 + $0xa8] sm:$0xe]
      %v8501 = vld [vmem:[%s3278 + $0xac] sm:$0xf]
      %v8502 = vld [vmem:[%s3278 + $0xb0] sm:$0x1]
      %v8503 = vld [vmem:[%s3278 + $0xb4] sm:$0xe]
      %v8504 = vld [vmem:[%s3278 + $0xb8] sm:$0xf]
      %v8505 = vld [vmem:[%s3278 + $0xbc] sm:$0x1]
      %v8554 = vrot.slane %v8458, 5
      %v8555 = vrot.slane %v8554, 4
      %v8556 = vrot.slane %v8459, 5
      %v8557 = vsel %vm2077, %v8555, %v8556
      %v8558 = vrot.slane %v8556, 4
      %v8559 = vrot.slane %v8460, 5
      %v8560 = vsel %vm2077, %v8558, %v8559
      %v8561 = vrot.slane %v8461, 5
      %v8562 = vrot.slane %v8561, 4
      %v8563 = vrot.slane %v8462, 5
      %v8564 = vsel %vm2077, %v8562, %v8563
      %v8565 = vrot.slane %v8563, 4
      %v8566 = vrot.slane %v8463, 5
      %v8567 = vsel %vm2077, %v8565, %v8566
      %v8568 = vrot.slane %v8464, 5
      %v8569 = vrot.slane %v8568, 4
      %v8570 = vrot.slane %v8465, 5
      %v8571 = vsel %vm2077, %v8569, %v8570
      %v8572 = vrot.slane %v8570, 4
      %v8573 = vrot.slane %v8466, 5
      %v8574 = vsel %vm2077, %v8572, %v8573
      %v8575 = vrot.slane %v8467, 5
      %v8576 = vrot.slane %v8575, 4
      %v8577 = vrot.slane %v8468, 5
      %v8578 = vsel %vm2077, %v8576, %v8577
      %v8579 = vrot.slane %v8577, 4
      %v8580 = vrot.slane %v8469, 5
      %v8581 = vsel %vm2077, %v8579, %v8580
      %v8582 = vrot.slane %v8470, 5
      %v8583 = vrot.slane %v8582, 4
      %v8584 = vrot.slane %v8471, 5
      %v8585 = vsel %vm2077, %v8583, %v8584
      %v8586 = vrot.slane %v8584, 4
      %v8587 = vrot.slane %v8472, 5
      %v8588 = vsel %vm2077, %v8586, %v8587
      %v8589 = vrot.slane %v8473, 5
      %v8590 = vrot.slane %v8589, 4
      %v8591 = vrot.slane %v8474, 5
      %v8592 = vsel %vm2077, %v8590, %v8591
      %v8593 = vrot.slane %v8591, 4
      %v8594 = vrot.slane %v8475, 5
      %v8595 = vsel %vm2077, %v8593, %v8594
      %v8596 = vrot.slane %v8476, 5
      %v8597 = vrot.slane %v8596, 4
      %v8598 = vrot.slane %v8477, 5
      %v8599 = vsel %vm2077, %v8597, %v8598
      %v8600 = vrot.slane %v8598, 4
      %v8601 = vrot.slane %v8478, 5
      %v8602 = vsel %vm2077, %v8600, %v8601
      %v8603 = vrot.slane %v8479, 5
      %v8604 = vrot.slane %v8603, 4
      %v8605 = vrot.slane %v8480, 5
      %v8606 = vsel %vm2077, %v8604, %v8605
      %v8607 = vrot.slane %v8605, 4
      %v8608 = vrot.slane %v8481, 5
      %v8609 = vsel %vm2077, %v8607, %v8608
      %v8610 = vrot.slane %v8482, 5
      %v8611 = vrot.slane %v8610, 4
      %v8612 = vrot.slane %v8483, 5
      %v8613 = vsel %vm2077, %v8611, %v8612
      %v8614 = vrot.slane %v8612, 4
      %v8615 = vrot.slane %v8484, 5
      %v8616 = vsel %vm2077, %v8614, %v8615
      %v8617 = vrot.slane %v8485, 5
      %v8618 = vrot.slane %v8617, 4
      %v8619 = vrot.slane %v8486, 5
      %v8620 = vsel %vm2077, %v8618, %v8619
      %v8621 = vrot.slane %v8619, 4
      %v8622 = vrot.slane %v8487, 5
      %v8623 = vsel %vm2077, %v8621, %v8622
      %v8624 = vrot.slane %v8488, 5
      %v8625 = vrot.slane %v8624, 4
      %v8626 = vrot.slane %v8489, 5
      %v8627 = vsel %vm2077, %v8625, %v8626
      %v8628 = vrot.slane %v8626, 4
      %v8629 = vrot.slane %v8490, 5
      %v8630 = vsel %vm2077, %v8628, %v8629
      %v8631 = vrot.slane %v8491, 5
      %v8632 = vrot.slane %v8631, 4
      %v8633 = vrot.slane %v8492, 5
      %v8634 = vsel %vm2077, %v8632, %v8633
      %v8635 = vrot.slane %v8633, 4
      %v8636 = vrot.slane %v8493, 5
      %v8637 = vsel %vm2077, %v8635, %v8636
      %v8638 = vrot.slane %v8494, 5
      %v8639 = vrot.slane %v8638, 4
      %v8640 = vrot.slane %v8495, 5
      %v8641 = vsel %vm2077, %v8639, %v8640
      %v8642 = vrot.slane %v8640, 4
      %v8643 = vrot.slane %v8496, 5
      %v8644 = vsel %vm2077, %v8642, %v8643
      %v8645 = vrot.slane %v8497, 5
      %v8646 = vrot.slane %v8645, 4
      %v8647 = vrot.slane %v8498, 5
      %v8648 = vsel %vm2077, %v8646, %v8647
      %v8649 = vrot.slane %v8647, 4
      %v8650 = vrot.slane %v8499, 5
      %v8651 = vsel %vm2077, %v8649, %v8650
      %v8652 = vrot.slane %v8500, 5
      %v8653 = vrot.slane %v8652, 4
      %v8654 = vrot.slane %v8501, 5
      %v8655 = vsel %vm2077, %v8653, %v8654
      %v8656 = vrot.slane %v8654, 4
      %v8657 = vrot.slane %v8502, 5
      %v8658 = vsel %vm2077, %v8656, %v8657
      %v8659 = vrot.slane %v8503, 5
      %v8660 = vrot.slane %v8659, 4
      %v8661 = vrot.slane %v8504, 5
      %v8662 = vsel %vm2077, %v8660, %v8661
      %v8663 = vrot.slane %v8661, 4
      %v8664 = vrot.slane %v8505, 5
      %v8665 = vsel %vm2077, %v8663, %v8664
      %v8666 = vunpack.c.l.b16 %v8557
      %v8667 = vunpack.c.l.b16 %v8560
      %v8668 = vunpack.c.l.b16 %v8564
      %v8669 = vunpack.c.l.b16 %v8567
      %v8670 = vunpack.c.l.b16 %v8571
      %v8671 = vunpack.c.l.b16 %v8574
      %v8672 = vunpack.c.l.b16 %v8578
      %v8673 = vunpack.c.l.b16 %v8581
      %v8674 = vunpack.c.l.b16 %v8585
      %v8675 = vunpack.c.l.b16 %v8588
      %v8676 = vunpack.c.l.b16 %v8592
      %v8677 = vunpack.c.l.b16 %v8595
      %v8678 = vunpack.c.l.b16 %v8599
      %v8679 = vunpack.c.l.b16 %v8602
      %v8680 = vunpack.c.l.b16 %v8606
      %v8681 = vunpack.c.l.b16 %v8609
      %v8682 = vunpack.c.l.b16 %v8613
      %v8683 = vunpack.c.l.b16 %v8616
      %v8684 = vunpack.c.l.b16 %v8620
      %v8685 = vunpack.c.l.b16 %v8623
      %v8686 = vunpack.c.l.b16 %v8627
      %v8687 = vunpack.c.l.b16 %v8630
      %v8688 = vunpack.c.l.b16 %v8634
      %v8689 = vunpack.c.l.b16 %v8637
      %v8690 = vunpack.c.l.b16 %v8641
      %v8691 = vunpack.c.l.b16 %v8644
      %v8692 = vunpack.c.l.b16 %v8648
      %v8693 = vunpack.c.l.b16 %v8651
      %v8694 = vunpack.c.l.b16 %v8655
      %v8695 = vunpack.c.l.b16 %v8658
      %v8696 = vunpack.c.l.b16 %v8662
      %v8697 = vunpack.c.l.b16 %v8665
      %v8698 = vpack.c.b16 %v8667, %v8666
      %v8699 = vpack.c.b16 %v8669, %v8668
      %v8700 = vpack.c.b16 %v8671, %v8670
      %v8701 = vpack.c.b16 %v8673, %v8672
      %v8702 = vpack.c.b16 %v8675, %v8674
      %v8703 = vpack.c.b16 %v8677, %v8676
      %v8704 = vpack.c.b16 %v8679, %v8678
      %v8705 = vpack.c.b16 %v8681, %v8680
      %v8706 = vpack.c.b16 %v8683, %v8682
      %v8707 = vpack.c.b16 %v8685, %v8684
      %v8708 = vpack.c.b16 %v8687, %v8686
      %v8709 = vpack.c.b16 %v8689, %v8688
      %v8710 = vpack.c.b16 %v8691, %v8690
      %v8711 = vpack.c.b16 %v8693, %v8692
      %v8712 = vpack.c.b16 %v8695, %v8694
      %v8713 = vpack.c.b16 %v8697, %v8696
      %8730 = vst.msk [vmem:[#allocation3 + $0x20] sm:$0xff] %vm1414, %v8698
      %8731 = vst.msk [vmem:[#allocation3 + $0x48] sm:$0xff] %vm1414, %v8699
      %8732 = vst.msk [vmem:[#allocation3 + $0x70] sm:$0xff] %vm1414, %v8700
      %8733 = vst.msk [vmem:[#allocation3 + $0x98] sm:$0xff] %vm1414, %v8701
      %8734 = vst.msk [vmem:[#allocation3 + $0xc0] sm:$0xff] %vm1414, %v8702
      %8735 = vst.msk [vmem:[#allocation3 + $0xe8] sm:$0xff] %vm1414, %v8703
      %8736 = vst.msk [vmem:[#allocation3 + $0x110] sm:$0xff] %vm1414, %v8704
      %8737 = vst.msk [vmem:[#allocation3 + $0x138] sm:$0xff] %vm1414, %v8705
      %8738 = vst.msk [vmem:[#allocation3 + $0x160] sm:$0xff] %vm1414, %v8706
      %8739 = vst.msk [vmem:[#allocation3 + $0x188] sm:$0xff] %vm1414, %v8707
      %8740 = vst.msk [vmem:[#allocation3 + $0x1b0] sm:$0xff] %vm1414, %v8708
      %8741 = vst.msk [vmem:[#allocation3 + $0x1d8] sm:$0xff] %vm1414, %v8709
      %8742 = vst.msk [vmem:[#allocation3 + $0x200] sm:$0xff] %vm1414, %v8710
      %8743 = vst.msk [vmem:[#allocation3 + $0x228] sm:$0xff] %vm1414, %v8711
      %8744 = vst.msk [vmem:[#allocation3 + $0x250] sm:$0xff] %vm1414, %v8712
      %8745 = vst.msk [vmem:[#allocation3 + $0x278] sm:$0xff] %vm1414, %v8713
      %v8746 = vld [vmem:[#allocation3] sm:$0xff]
      %v8747 = vld [vmem:[#allocation3 + $0x8] sm:$0xff]
      %v8748 = vld [vmem:[#allocation3 + $0x10] sm:$0xff]
      %v8749 = vld [vmem:[#allocation3 + $0x18] sm:$0xff]
      %v8750 = vld [vmem:[#allocation3 + $0x20] sm:$0xff]
      %v8751 = vld [vmem:[#allocation3 + $0x28] sm:$0xff]
      %v8752 = vld [vmem:[#allocation3 + $0x30] sm:$0xff]
      %v8753 = vld [vmem:[#allocation3 + $0x38] sm:$0xff]
      %v8754 = vld [vmem:[#allocation3 + $0x40] sm:$0xff]
      %v8755 = vld [vmem:[#allocation3 + $0x48] sm:$0xff]
      %v8756 = vld [vmem:[#allocation3 + $0x50] sm:$0xff]
      %v8757 = vld [vmem:[#allocation3 + $0x58] sm:$0xff]
      %v8758 = vld [vmem:[#allocation3 + $0x60] sm:$0xff]
      %v8759 = vld [vmem:[#allocation3 + $0x68] sm:$0xff]
      %v8760 = vld [vmem:[#allocation3 + $0x70] sm:$0xff]
      %v8761 = vld [vmem:[#allocation3 + $0x78] sm:$0xff]
      %v8762 = vld [vmem:[#allocation3 + $0x80] sm:$0xff]
      %v8763 = vld [vmem:[#allocation3 + $0x88] sm:$0xff]
      %v8764 = vld [vmem:[#allocation3 + $0x90] sm:$0xff]
      %v8765 = vld [vmem:[#allocation3 + $0x98] sm:$0xff]
      %v8766 = vld [vmem:[#allocation3 + $0xa0] sm:$0xff]
      %v8767 = vld [vmem:[#allocation3 + $0xa8] sm:$0xff]
      %v8768 = vld [vmem:[#allocation3 + $0xb0] sm:$0xff]
      %v8769 = vld [vmem:[#allocation3 + $0xb8] sm:$0xff]
      %v8770 = vld [vmem:[#allocation3 + $0xc0] sm:$0xff]
      %v8771 = vld [vmem:[#allocation3 + $0xc8] sm:$0xff]
      %v8772 = vld [vmem:[#allocation3 + $0xd0] sm:$0xff]
      %v8773 = vld [vmem:[#allocation3 + $0xd8] sm:$0xff]
      %v8774 = vld [vmem:[#allocation3 + $0xe0] sm:$0xff]
      %v8775 = vld [vmem:[#allocation3 + $0xe8] sm:$0xff]
      %v8776 = vld [vmem:[#allocation3 + $0xf0] sm:$0xff]
      %v8777 = vld [vmem:[#allocation3 + $0xf8] sm:$0xff]
      %v8778 = vld [vmem:[#allocation3 + $0x100] sm:$0xff]
      %v8779 = vld [vmem:[#allocation3 + $0x108] sm:$0xff]
      %v8780 = vld [vmem:[#allocation3 + $0x110] sm:$0xff]
      %v8781 = vld [vmem:[#allocation3 + $0x118] sm:$0xff]
      %v8782 = vld [vmem:[#allocation3 + $0x120] sm:$0xff]
      %v8783 = vld [vmem:[#allocation3 + $0x128] sm:$0xff]
      %v8784 = vld [vmem:[#allocation3 + $0x130] sm:$0xff]
      %v8785 = vld [vmem:[#allocation3 + $0x138] sm:$0xff]
      %v8786 = vld [vmem:[#allocation3 + $0x140] sm:$0xff]
      %v8787 = vld [vmem:[#allocation3 + $0x148] sm:$0xff]
      %v8788 = vld [vmem:[#allocation3 + $0x150] sm:$0xff]
      %v8789 = vld [vmem:[#allocation3 + $0x158] sm:$0xff]
      %v8790 = vld [vmem:[#allocation3 + $0x160] sm:$0xff]
      %v8791 = vld [vmem:[#allocation3 + $0x168] sm:$0xff]
      %v8792 = vld [vmem:[#allocation3 + $0x170] sm:$0xff]
      %v8793 = vld [vmem:[#allocation3 + $0x178] sm:$0xff]
      %v8794 = vld [vmem:[#allocation3 + $0x180] sm:$0xff]
      %v8795 = vld [vmem:[#allocation3 + $0x188] sm:$0xff]
      %v8796 = vld [vmem:[#allocation3 + $0x190] sm:$0xff]
      %v8797 = vld [vmem:[#allocation3 + $0x198] sm:$0xff]
      %v8798 = vld [vmem:[#allocation3 + $0x1a0] sm:$0xff]
      %v8799 = vld [vmem:[#allocation3 + $0x1a8] sm:$0xff]
      %v8800 = vld [vmem:[#allocation3 + $0x1b0] sm:$0xff]
      %v8801 = vld [vmem:[#allocation3 + $0x1b8] sm:$0xff]
      %v8802 = vld [vmem:[#allocation3 + $0x1c0] sm:$0xff]
      %v8803 = vld [vmem:[#allocation3 + $0x1c8] sm:$0xff]
      %v8804 = vld [vmem:[#allocation3 + $0x1d0] sm:$0xff]
      %v8805 = vld [vmem:[#allocation3 + $0x1d8] sm:$0xff]
      %v8806 = vld [vmem:[#allocation3 + $0x1e0] sm:$0xff]
      %v8807 = vld [vmem:[#allocation3 + $0x1e8] sm:$0xff]
      %v8808 = vld [vmem:[#allocation3 + $0x1f0] sm:$0xff]
      %v8809 = vld [vmem:[#allocation3 + $0x1f8] sm:$0xff]
      %v8810 = vld [vmem:[#allocation3 + $0x200] sm:$0xff]
      %v8811 = vld [vmem:[#allocation3 + $0x208] sm:$0xff]
      %v8812 = vld [vmem:[#allocation3 + $0x210] sm:$0xff]
      %v8813 = vld [vmem:[#allocation3 + $0x218] sm:$0xff]
      %v8814 = vld [vmem:[#allocation3 + $0x220] sm:$0xff]
      %v8815 = vld [vmem:[#allocation3 + $0x228] sm:$0xff]
      %v8816 = vld [vmem:[#allocation3 + $0x230] sm:$0xff]
      %v8817 = vld [vmem:[#allocation3 + $0x238] sm:$0xff]
      %v8818 = vld [vmem:[#allocation3 + $0x240] sm:$0xff]
      %v8819 = vld [vmem:[#allocation3 + $0x248] sm:$0xff]
      %v8820 = vld [vmem:[#allocation3 + $0x250] sm:$0xff]
      %v8821 = vld [vmem:[#allocation3 + $0x258] sm:$0xff]
      %v8822 = vld [vmem:[#allocation3 + $0x260] sm:$0xff]
      %v8823 = vld [vmem:[#allocation3 + $0x268] sm:$0xff]
      %v8824 = vld [vmem:[#allocation3 + $0x270] sm:$0xff]
      %v8825 = vld [vmem:[#allocation3 + $0x278] sm:$0xff]
      %v8826 = vld [vmem:[%s3] sm:$0xf]
      %v8827 = vld [vmem:[%s3 + $0x4] sm:$0xf]
      %v8828 = vld [vmem:[%s3 + $0x8] sm:$0xf]
      %v8829 = vld [vmem:[%s3 + $0xc] sm:$0xf]
      %v8830 = vld [vmem:[%s3 + $0x10] sm:$0xf]
      %v8831 = vld [vmem:[%s3 + $0x14] sm:$0xf]
      %v8832 = vld [vmem:[%s3 + $0x18] sm:$0xf]
      %v8833 = vld [vmem:[%s3 + $0x1c] sm:$0xf]
      %v8834 = vld [vmem:[%s3 + $0x20] sm:$0xf]
      %v8835 = vld [vmem:[%s3 + $0x24] sm:$0xf]
      %v8836 = vld [vmem:[%s3 + $0x28] sm:$0xf]
      %v8837 = vld [vmem:[%s3 + $0x2c] sm:$0xf]
      %v8838 = vld [vmem:[%s3 + $0x30] sm:$0xf]
      %v8839 = vld [vmem:[%s3 + $0x34] sm:$0xf]
      %v8840 = vld [vmem:[%s3 + $0x38] sm:$0xf]
      %v8841 = vld [vmem:[%s3 + $0x3c] sm:$0xf]
      %v8842 = vld [vmem:[%s3 + $0x40] sm:$0xf]
      %v8843 = vld [vmem:[%s3 + $0x44] sm:$0xf]
      %v8844 = vld [vmem:[%s3 + $0x48] sm:$0xf]
      %v8845 = vld [vmem:[%s3 + $0x4c] sm:$0xf]
      %v8846 = vld [vmem:[%s3 + $0x50] sm:$0xf]
      %v8847 = vld [vmem:[%s3 + $0x54] sm:$0xf]
      %v8848 = vld [vmem:[%s3 + $0x58] sm:$0xf]
      %v8849 = vld [vmem:[%s3 + $0x5c] sm:$0xf]
      %v8850 = vld [vmem:[%s3 + $0x60] sm:$0xf]
      %v8851 = vld [vmem:[%s3 + $0x64] sm:$0xf]
      %v8852 = vld [vmem:[%s3 + $0x68] sm:$0xf]
      %v8853 = vld [vmem:[%s3 + $0x6c] sm:$0xf]
      %v8854 = vld [vmem:[%s3 + $0x70] sm:$0xf]
      %v8855 = vld [vmem:[%s3 + $0x74] sm:$0xf]
      %v8856 = vld [vmem:[%s3 + $0x78] sm:$0xf]
      %v8857 = vld [vmem:[%s3 + $0x7c] sm:$0xf]
      %v8858 = vld [vmem:[%s3 + $0x80] sm:$0xf]
      %v8859 = vld [vmem:[%s3 + $0x84] sm:$0xf]
      %v8860 = vld [vmem:[%s3 + $0x88] sm:$0xf]
      %v8861 = vld [vmem:[%s3 + $0x8c] sm:$0xf]
      %v8862 = vld [vmem:[%s3 + $0x90] sm:$0xf]
      %v8863 = vld [vmem:[%s3 + $0x94] sm:$0xf]
      %v8864 = vld [vmem:[%s3 + $0x98] sm:$0xf]
      %v8865 = vld [vmem:[%s3 + $0x9c] sm:$0xf]
      %v8866 = vld [vmem:[%s3 + $0xa0] sm:$0xf]
      %v8867 = vld [vmem:[%s3 + $0xa4] sm:$0xf]
      %v8868 = vld [vmem:[%s3 + $0xa8] sm:$0xf]
      %v8869 = vld [vmem:[%s3 + $0xac] sm:$0xf]
      %v8870 = vld [vmem:[%s3 + $0xb0] sm:$0xf]
      %v8871 = vld [vmem:[%s3 + $0xb4] sm:$0xf]
      %v8872 = vld [vmem:[%s3 + $0xb8] sm:$0xf]
      %v8873 = vld [vmem:[%s3 + $0xbc] sm:$0xf]
      %v8874 = vld [vmem:[%s3 + $0xc0] sm:$0xf]
      %v8875 = vld [vmem:[%s3 + $0xc4] sm:$0xf]
      %v8876 = vld [vmem:[%s3 + $0xc8] sm:$0xf]
      %v8877 = vld [vmem:[%s3 + $0xcc] sm:$0xf]
      %v8878 = vld [vmem:[%s3 + $0xd0] sm:$0xf]
      %v8879 = vld [vmem:[%s3 + $0xd4] sm:$0xf]
      %v8880 = vld [vmem:[%s3 + $0xd8] sm:$0xf]
      %v8881 = vld [vmem:[%s3 + $0xdc] sm:$0xf]
      %v8882 = vld [vmem:[%s3 + $0xe0] sm:$0xf]
      %v8883 = vld [vmem:[%s3 + $0xe4] sm:$0xf]
      %v8884 = vld [vmem:[%s3 + $0xe8] sm:$0xf]
      %v8885 = vld [vmem:[%s3 + $0xec] sm:$0xf]
      %v8886 = vld [vmem:[%s3 + $0xf0] sm:$0xf]
      %v8887 = vld [vmem:[%s3 + $0xf4] sm:$0xf]
      %v8888 = vld [vmem:[%s3 + $0xf8] sm:$0xf]
      %v8889 = vld [vmem:[%s3 + $0xfc] sm:$0xf]
      %v8890 = vld [vmem:[%s3 + $0x100] sm:$0xf]
      %v8891 = vld [vmem:[%s3 + $0x104] sm:$0xf]
      %v8892 = vld [vmem:[%s3 + $0x108] sm:$0xf]
      %v8893 = vld [vmem:[%s3 + $0x10c] sm:$0xf]
      %v8894 = vld [vmem:[%s3 + $0x110] sm:$0xf]
      %v8895 = vld [vmem:[%s3 + $0x114] sm:$0xf]
      %v8896 = vld [vmem:[%s3 + $0x118] sm:$0xf]
      %v8897 = vld [vmem:[%s3 + $0x11c] sm:$0xf]
      %v8970 = vunpack.c.l.b16 %v8826
      %v8971 = vunpack.c.l.b16 %v8827
      %v8972 = vunpack.c.l.b16 %v8828
      %v8973 = vunpack.c.l.b16 %v8829
      %v8974 = vunpack.c.l.b16 %v8830
      %v8975 = vunpack.c.l.b16 %v8831
      %v8976 = vunpack.c.l.b16 %v8832
      %v8977 = vunpack.c.l.b16 %v8833
      %v8978 = vunpack.c.l.b16 %v8834
      %v8979 = vunpack.c.l.b16 %v8835
      %v8980 = vunpack.c.l.b16 %v8836
      %v8981 = vunpack.c.l.b16 %v8837
      %v8982 = vunpack.c.l.b16 %v8838
      %v8983 = vunpack.c.l.b16 %v8839
      %v8984 = vunpack.c.l.b16 %v8840
      %v8985 = vunpack.c.l.b16 %v8841
      %v8986 = vunpack.c.l.b16 %v8842
      %v8987 = vunpack.c.l.b16 %v8843
      %v8988 = vunpack.c.l.b16 %v8844
      %v8989 = vunpack.c.l.b16 %v8845
      %v8990 = vunpack.c.l.b16 %v8846
      %v8991 = vunpack.c.l.b16 %v8847
      %v8992 = vunpack.c.l.b16 %v8848
      %v8993 = vunpack.c.l.b16 %v8849
      %v8994 = vunpack.c.l.b16 %v8850
      %v8995 = vunpack.c.l.b16 %v8851
      %v8996 = vunpack.c.l.b16 %v8852
      %v8997 = vunpack.c.l.b16 %v8853
      %v8998 = vunpack.c.l.b16 %v8854
      %v8999 = vunpack.c.l.b16 %v8855
      %v9000 = vunpack.c.l.b16 %v8856
      %v9001 = vunpack.c.l.b16 %v8857
      %v9002 = vunpack.c.l.b16 %v8858
      %v9003 = vunpack.c.l.b16 %v8859
      %v9004 = vunpack.c.l.b16 %v8860
      %v9005 = vunpack.c.l.b16 %v8861
      %v9006 = vunpack.c.l.b16 %v8862
      %v9007 = vunpack.c.l.b16 %v8863
      %v9008 = vunpack.c.l.b16 %v8864
      %v9009 = vunpack.c.l.b16 %v8865
      %v9010 = vunpack.c.l.b16 %v8866
      %v9011 = vunpack.c.l.b16 %v8867
      %v9012 = vunpack.c.l.b16 %v8868
      %v9013 = vunpack.c.l.b16 %v8869
      %v9014 = vunpack.c.l.b16 %v8870
      %v9015 = vunpack.c.l.b16 %v8871
      %v9016 = vunpack.c.l.b16 %v8872
      %v9017 = vunpack.c.l.b16 %v8873
      %v9018 = vunpack.c.l.b16 %v8874
      %v9019 = vunpack.c.l.b16 %v8875
      %v9020 = vunpack.c.l.b16 %v8876
      %v9021 = vunpack.c.l.b16 %v8877
      %v9022 = vunpack.c.l.b16 %v8878
      %v9023 = vunpack.c.l.b16 %v8879
      %v9024 = vunpack.c.l.b16 %v8880
      %v9025 = vunpack.c.l.b16 %v8881
      %v9026 = vunpack.c.l.b16 %v8882
      %v9027 = vunpack.c.l.b16 %v8883
      %v9028 = vunpack.c.l.b16 %v8884
      %v9029 = vunpack.c.l.b16 %v8885
      %v9030 = vunpack.c.l.b16 %v8886
      %v9031 = vunpack.c.l.b16 %v8887
      %v9032 = vunpack.c.l.b16 %v8888
      %v9033 = vunpack.c.l.b16 %v8889
      %v9034 = vunpack.c.l.b16 %v8890
      %v9035 = vunpack.c.l.b16 %v8891
      %v9036 = vunpack.c.l.b16 %v8892
      %v9037 = vunpack.c.l.b16 %v8893
      %v9038 = vunpack.c.l.b16 %v8894
      %v9039 = vunpack.c.l.b16 %v8895
      %v9040 = vunpack.c.l.b16 %v8896
      %v9041 = vunpack.c.l.b16 %v8897
      %v9042 = vpack.c.b16 %v8971, %v8970
      %v9043 = vpack.c.b16 %v8973, %v8972
      %v9044 = vpack.c.b16 %v8975, %v8974
      %v9045 = vpack.c.b16 %v8977, %v8976
      %v9046 = vpack.c.b16 %v8979, %v8978
      %v9047 = vpack.c.b16 %v8981, %v8980
      %v9048 = vpack.c.b16 %v8983, %v8982
      %v9049 = vpack.c.b16 %v8985, %v8984
      %v9050 = vpack.c.b16 %v8987, %v8986
      %v9051 = vpack.c.b16 %v8989, %v8988
      %v9052 = vpack.c.b16 %v8991, %v8990
      %v9053 = vpack.c.b16 %v8993, %v8992
      %v9054 = vpack.c.b16 %v8995, %v8994
      %v9055 = vpack.c.b16 %v8997, %v8996
      %v9056 = vpack.c.b16 %v8999, %v8998
      %v9057 = vpack.c.b16 %v9001, %v9000
      %v9058 = vpack.c.b16 %v9003, %v9002
      %v9059 = vpack.c.b16 %v9005, %v9004
      %v9060 = vpack.c.b16 %v9007, %v9006
      %v9061 = vpack.c.b16 %v9009, %v9008
      %v9062 = vpack.c.b16 %v9011, %v9010
      %v9063 = vpack.c.b16 %v9013, %v9012
      %v9064 = vpack.c.b16 %v9015, %v9014
      %v9065 = vpack.c.b16 %v9017, %v9016
      %v9066 = vpack.c.b16 %v9019, %v9018
      %v9067 = vpack.c.b16 %v9021, %v9020
      %v9068 = vpack.c.b16 %v9023, %v9022
      %v9069 = vpack.c.b16 %v9025, %v9024
      %v9070 = vpack.c.b16 %v9027, %v9026
      %v9071 = vpack.c.b16 %v9029, %v9028
      %v9072 = vpack.c.b16 %v9031, %v9030
      %v9073 = vpack.c.b16 %v9033, %v9032
      %v9074 = vpack.c.b16 %v9035, %v9034
      %v9075 = vpack.c.b16 %v9037, %v9036
      %v9076 = vpack.c.b16 %v9039, %v9038
      %v9077 = vpack.c.b16 %v9041, %v9040
      %v9115 = vsel %vm1414, %v8750, 0
      %v9118 = vsel %vm1414, %v8755, 0
      %v9121 = vsel %vm1414, %v8760, 0
      %v9124 = vsel %vm1414, %v8765, 0
      %v9127 = vsel %vm1414, %v8770, 0
      %v9130 = vsel %vm1414, %v8775, 0
      %v9133 = vsel %vm1414, %v8780, 0
      %v9136 = vsel %vm1414, %v8785, 0
      %v9139 = vsel %vm1414, %v8790, 0
      %v9142 = vsel %vm1414, %v8795, 0
      %v9145 = vsel %vm1414, %v8800, 0
      %v9148 = vsel %vm1414, %v8805, 0
      %v9151 = vsel %vm1414, %v8810, 0
      %v9154 = vsel %vm1414, %v8815, 0
      %v9157 = vsel %vm1414, %v8820, 0
      %v9160 = vsel %vm1414, %v8825, 0
      %9162 = vmatprep.subr.bf16.mxu0 0
      %9163 = vmatpush1.bf16.msra.mxu0 %v9042
      %9164 = vmatprep.subr.bf16.mxu0 0
      %9165 = vmatpush1.bf16.msra.mxu0 %v9043
      %9166 = vmatprep.subr.bf16.mxu0 0
      %9167 = vmatpush1.bf16.msra.mxu0 %v9044
      %9168 = vmatprep.subr.bf16.mxu0 0
      %9169 = vmatpush1.bf16.msra.mxu0 %v9045
      %9170 = vmatprep.subr.bf16.mxu0 0
      %9171 = vmatpush1.bf16.msra.mxu0 %v9046
      %9172 = vmatprep.subr.bf16.mxu0 0
      %9173 = vmatpush1.bf16.msra.mxu0 %v9047
      %9174 = vmatprep.subr.bf16.mxu0 0
      %9175 = vmatpush1.bf16.msra.mxu0 %v9048
      %9176 = vmatprep.subr.bf16.mxu0 0
      %9177 = vmatpush1.bf16.msra.mxu0 %v9049
      %9178 = vmatprep.subr.bf16.mxu0 0
      %9179 = vmatpush1.bf16.msra.mxu0 %v9050
      %9180 = vmatprep.subr.bf16.mxu0 0
      %9181 = vmatpush1.bf16.msra.mxu0 %v9051
      %9182 = vmatprep.subr.bf16.mxu0 0
      %9183 = vmatpush1.bf16.msra.mxu0 %v9052
      %9184 = vmatprep.subr.bf16.mxu0 0
      %9185 = vmatpush1.bf16.msra.mxu0 %v9053
      %9186 = vmatprep.subr.bf16.mxu0 0
      %9187 = vmatpush1.bf16.msra.mxu0 %v9054
      %9188 = vmatprep.subr.bf16.mxu0 0
      %9189 = vmatpush1.bf16.msra.mxu0 %v9055
      %9190 = vmatprep.subr.bf16.mxu0 0
      %9191 = vmatpush1.bf16.msra.mxu0 %v9056
      %9192 = vmatprep.subr.bf16.mxu0 0
      %9193 = vmatpush1.bf16.msra.mxu0 %v9057
      %9194 = vmatprep.mubr.bf16.mxu0 %v8747
      %9195 = vmatmul.mubr.bf16.gmra.mrb[0].mxu0 %v8746
      %v9196 = vpop.f32.mrb[0].mxu0
      %v9197 = vadd.f32 0.0, %v9196
      %v9198 = vpop.f32.mrb[0].mxu0
      %v9199 = vpop.f32.mrb[0].mxu0
      %v9200 = vadd.f32 0.0, %v9199
      %v9201 = vpop.f32.mrb[0].mxu0
      %9202 = vmatprep.mubr.bf16.mxu0 %v8752
      %9203 = vmatmul.mubr.bf16.gmra.mrb[0].mxu0 %v8751
      %v9204 = vpop.f32.mrb[0].mxu0
      %v9205 = vadd.f32 0.0, %v9204
      %v9206 = vpop.f32.mrb[0].mxu0
      %v9207 = vpop.f32.mrb[0].mxu0
      %v9208 = vadd.f32 0.0, %v9207
      %v9209 = vpop.f32.mrb[0].mxu0
      %9210 = vmatprep.mubr.bf16.mxu0 %v8757
      %9211 = vmatmul.mubr.bf16.gmra.mrb[0].mxu0 %v8756
      %v9212 = vpop.f32.mrb[0].mxu0
      %v9213 = vadd.f32 0.0, %v9212
      %v9214 = vpop.f32.mrb[0].mxu0
      %v9215 = vpop.f32.mrb[0].mxu0
      %v9216 = vadd.f32 0.0, %v9215
      %v9217 = vpop.f32.mrb[0].mxu0
      %9218 = vmatprep.mubr.bf16.mxu0 %v8762
      %9219 = vmatmul.mubr.bf16.gmra.mrb[0].mxu0 %v8761
      %v9220 = vpop.f32.mrb[0].mxu0
      %v9221 = vadd.f32 0.0, %v9220
      %v9222 = vpop.f32.mrb[0].mxu0
      %v9223 = vpop.f32.mrb[0].mxu0
      %v9224 = vadd.f32 0.0, %v9223
      %v9225 = vpop.f32.mrb[0].mxu0
      %9226 = vmatprep.mubr.bf16.mxu0 %v8767
      %9227 = vmatmul.mubr.bf16.gmra.mrb[0].mxu0 %v8766
      %v9228 = vpop.f32.mrb[0].mxu0
      %v9229 = vadd.f32 0.0, %v9228
      %v9230 = vpop.f32.mrb[0].mxu0
      %v9231 = vpop.f32.mrb[0].mxu0
      %v9232 = vadd.f32 0.0, %v9231
      %v9233 = vpop.f32.mrb[0].mxu0
      %9234 = vmatprep.mubr.bf16.mxu0 %v8772
      %9235 = vmatmul.mubr.bf16.gmra.mrb[0].mxu0 %v8771
      %v9236 = vpop.f32.mrb[0].mxu0
      %v9237 = vadd.f32 0.0, %v9236
      %v9238 = vpop.f32.mrb[0].mxu0
      %v9239 = vpop.f32.mrb[0].mxu0
      %v9240 = vadd.f32 0.0, %v9239
      %v9241 = vpop.f32.mrb[0].mxu0
      %9242 = vmatprep.mubr.bf16.mxu0 %v8777
      %9243 = vmatmul.mubr.bf16.gmra.mrb[0].mxu0 %v8776
      %v9244 = vpop.f32.mrb[0].mxu0
      %v9245 = vadd.f32 0.0, %v9244
      %v9246 = vpop.f32.mrb[0].mxu0
      %v9247 = vpop.f32.mrb[0].mxu0
      %v9248 = vadd.f32 0.0, %v9247
      %v9249 = vpop.f32.mrb[0].mxu0
      %9250 = vmatprep.mubr.bf16.mxu0 %v8782
      %9251 = vmatmul.mubr.bf16.gmra.mrb[0].mxu0 %v8781
      %v9252 = vpop.f32.mrb[0].mxu0
      %v9253 = vadd.f32 0.0, %v9252
      %v9254 = vpop.f32.mrb[0].mxu0
      %v9255 = vpop.f32.mrb[0].mxu0
      %v9256 = vadd.f32 0.0, %v9255
      %v9257 = vpop.f32.mrb[0].mxu0
      %9258 = vmatprep.mubr.bf16.mxu0 %v8787
      %9259 = vmatmul.mubr.bf16.gmra.mrb[0].mxu0 %v8786
      %v9260 = vpop.f32.mrb[0].mxu0
      %v9261 = vadd.f32 0.0, %v9260
      %v9262 = vpop.f32.mrb[0].mxu0
      %v9263 = vpop.f32.mrb[0].mxu0
      %v9264 = vadd.f32 0.0, %v9263
      %v9265 = vpop.f32.mrb[0].mxu0
      %9266 = vmatprep.mubr.bf16.mxu0 %v8792
      %9267 = vmatmul.mubr.bf16.gmra.mrb[0].mxu0 %v8791
      %v9268 = vpop.f32.mrb[0].mxu0
      %v9269 = vadd.f32 0.0, %v9268
      %v9270 = vpop.f32.mrb[0].mxu0
      %v9271 = vpop.f32.mrb[0].mxu0
      %v9272 = vadd.f32 0.0, %v9271
      %v9273 = vpop.f32.mrb[0].mxu0
      %9274 = vmatprep.mubr.bf16.mxu0 %v8797
      %9275 = vmatmul.mubr.bf16.gmra.mrb[0].mxu0 %v8796
      %v9276 = vpop.f32.mrb[0].mxu0
      %v9277 = vadd.f32 0.0, %v9276
      %v9278 = vpop.f32.mrb[0].mxu0
      %v9279 = vpop.f32.mrb[0].mxu0
      %v9280 = vadd.f32 0.0, %v9279
      %v9281 = vpop.f32.mrb[0].mxu0
      %9282 = vmatprep.mubr.bf16.mxu0 %v8802
      %9283 = vmatmul.mubr.bf16.gmra.mrb[0].mxu0 %v8801
      %v9284 = vpop.f32.mrb[0].mxu0
      %v9285 = vadd.f32 0.0, %v9284
      %v9286 = vpop.f32.mrb[0].mxu0
      %v9287 = vpop.f32.mrb[0].mxu0
      %v9288 = vadd.f32 0.0, %v9287
      %v9289 = vpop.f32.mrb[0].mxu0
      %9290 = vmatprep.mubr.bf16.mxu0 %v8807
      %9291 = vmatmul.mubr.bf16.gmra.mrb[0].mxu0 %v8806
      %v9292 = vpop.f32.mrb[0].mxu0
      %v9293 = vadd.f32 0.0, %v9292
      %v9294 = vpop.f32.mrb[0].mxu0
      %v9295 = vpop.f32.mrb[0].mxu0
      %v9296 = vadd.f32 0.0, %v9295
      %v9297 = vpop.f32.mrb[0].mxu0
      %9298 = vmatprep.mubr.bf16.mxu0 %v8812
      %9299 = vmatmul.mubr.bf16.gmra.mrb[0].mxu0 %v8811
      %v9300 = vpop.f32.mrb[0].mxu0
      %v9301 = vadd.f32 0.0, %v9300
      %v9302 = vpop.f32.mrb[0].mxu0
      %v9303 = vpop.f32.mrb[0].mxu0
      %v9304 = vadd.f32 0.0, %v9303
      %v9305 = vpop.f32.mrb[0].mxu0
      %9306 = vmatprep.mubr.bf16.mxu0 %v8817
      %9307 = vmatmul.mubr.bf16.gmra.mrb[0].mxu0 %v8816
      %v9308 = vpop.f32.mrb[0].mxu0
      %v9309 = vadd.f32 0.0, %v9308
      %v9310 = vpop.f32.mrb[0].mxu0
      %v9311 = vpop.f32.mrb[0].mxu0
      %v9312 = vadd.f32 0.0, %v9311
      %v9313 = vpop.f32.mrb[0].mxu0
      %9314 = vmatprep.mubr.bf16.mxu0 %v8822
      %9315 = vmatmul.mubr.bf16.gmra.mrb[0].mxu0 %v8821
      %v9316 = vpop.f32.mrb[0].mxu0
      %v9317 = vadd.f32 0.0, %v9316
      %v9318 = vpop.f32.mrb[0].mxu0
      %v9319 = vpop.f32.mrb[0].mxu0
      %v9320 = vadd.f32 0.0, %v9319
      %v9321 = vpop.f32.mrb[0].mxu0
      %9322 = vdwg.mxu0
      %9323 = vmatprep.subr.bf16.mxu0 0
      %9324 = vmatpush1.bf16.msra.mxu0 %v9058
      %9325 = vmatprep.subr.bf16.mxu0 0
      %9326 = vmatpush1.bf16.msra.mxu0 %v9059
      %9327 = vmatprep.subr.bf16.mxu0 0
      %9328 = vmatpush1.bf16.msra.mxu0 %v9060
      %9329 = vmatprep.subr.bf16.mxu0 0
      %9330 = vmatpush1.bf16.msra.mxu0 %v9061
      %9331 = vmatprep.subr.bf16.mxu0 0
      %9332 = vmatpush1.bf16.msra.mxu0 %v9062
      %9333 = vmatprep.subr.bf16.mxu0 0
      %9334 = vmatpush1.bf16.msra.mxu0 %v9063
      %9335 = vmatprep.subr.bf16.mxu0 0
      %9336 = vmatpush1.bf16.msra.mxu0 %v9064
      %9337 = vmatprep.subr.bf16.mxu0 0
      %9338 = vmatpush1.bf16.msra.mxu0 %v9065
      %9339 = vmatprep.subr.bf16.mxu0 0
      %9340 = vmatpush1.bf16.msra.mxu0 %v9066
      %9341 = vmatprep.subr.bf16.mxu0 0
      %9342 = vmatpush1.bf16.msra.mxu0 %v9067
      %9343 = vmatprep.subr.bf16.mxu0 0
      %9344 = vmatpush1.bf16.msra.mxu0 %v9068
      %9345 = vmatprep.subr.bf16.mxu0 0
      %9346 = vmatpush1.bf16.msra.mxu0 %v9069
      %9347 = vmatprep.subr.bf16.mxu0 0
      %9348 = vmatpush1.bf16.msra.mxu0 %v9070
      %9349 = vmatprep.subr.bf16.mxu0 0
      %9350 = vmatpush1.bf16.msra.mxu0 %v9071
      %9351 = vmatprep.subr.bf16.mxu0 0
      %9352 = vmatpush1.bf16.msra.mxu0 %v9072
      %9353 = vmatprep.subr.bf16.mxu0 0
      %9354 = vmatpush1.bf16.msra.mxu0 %v9073
      %9355 = vmatprep.mubr.bf16.mxu0 %v8749
      %9356 = vmatmul.mubr.bf16.gmra.mrb[0].mxu0 %v8748
      %v9357 = vpop.f32.mrb[0].mxu0
      %v9358 = vadd.f32 %v9197, %v9357
      %v9359 = vpop.f32.mrb[0].mxu0
      %v9360 = vpop.f32.mrb[0].mxu0
      %v9361 = vadd.f32 %v9200, %v9360
      %v9362 = vpop.f32.mrb[0].mxu0
      %9363 = vmatprep.mubr.bf16.mxu0 %v8754
      %9364 = vmatmul.mubr.bf16.gmra.mrb[0].mxu0 %v8753
      %v9365 = vpop.f32.mrb[0].mxu0
      %v9366 = vadd.f32 %v9205, %v9365
      %v9367 = vpop.f32.mrb[0].mxu0
      %v9368 = vpop.f32.mrb[0].mxu0
      %v9369 = vadd.f32 %v9208, %v9368
      %v9370 = vpop.f32.mrb[0].mxu0
      %9371 = vmatprep.mubr.bf16.mxu0 %v8759
      %9372 = vmatmul.mubr.bf16.gmra.mrb[0].mxu0 %v8758
      %v9373 = vpop.f32.mrb[0].mxu0
      %v9374 = vadd.f32 %v9213, %v9373
      %v9375 = vpop.f32.mrb[0].mxu0
      %v9376 = vpop.f32.mrb[0].mxu0
      %v9377 = vadd.f32 %v9216, %v9376
      %v9378 = vpop.f32.mrb[0].mxu0
      %9379 = vmatprep.mubr.bf16.mxu0 %v8764
      %9380 = vmatmul.mubr.bf16.gmra.mrb[0].mxu0 %v8763
      %v9381 = vpop.f32.mrb[0].mxu0
      %v9382 = vadd.f32 %v9221, %v9381
      %v9383 = vpop.f32.mrb[0].mxu0
      %v9384 = vpop.f32.mrb[0].mxu0
      %v9385 = vadd.f32 %v9224, %v9384
      %v9386 = vpop.f32.mrb[0].mxu0
      %9387 = vmatprep.mubr.bf16.mxu0 %v8769
      %9388 = vmatmul.mubr.bf16.gmra.mrb[0].mxu0 %v8768
      %v9389 = vpop.f32.mrb[0].mxu0
      %v9390 = vadd.f32 %v9229, %v9389
      %v9391 = vpop.f32.mrb[0].mxu0
      %v9392 = vpop.f32.mrb[0].mxu0
      %v9393 = vadd.f32 %v9232, %v9392
      %v9394 = vpop.f32.mrb[0].mxu0
      %9395 = vmatprep.mubr.bf16.mxu0 %v8774
      %9396 = vmatmul.mubr.bf16.gmra.mrb[0].mxu0 %v8773
      %v9397 = vpop.f32.mrb[0].mxu0
      %v9398 = vadd.f32 %v9237, %v9397
      %v9399 = vpop.f32.mrb[0].mxu0
      %v9400 = vpop.f32.mrb[0].mxu0
      %v9401 = vadd.f32 %v9240, %v9400
      %v9402 = vpop.f32.mrb[0].mxu0
      %9403 = vmatprep.mubr.bf16.mxu0 %v8779
      %9404 = vmatmul.mubr.bf16.gmra.mrb[0].mxu0 %v8778
      %v9405 = vpop.f32.mrb[0].mxu0
      %v9406 = vadd.f32 %v9245, %v9405
      %v9407 = vpop.f32.mrb[0].mxu0
      %v9408 = vpop.f32.mrb[0].mxu0
      %v9409 = vadd.f32 %v9248, %v9408
      %v9410 = vpop.f32.mrb[0].mxu0
      %9411 = vmatprep.mubr.bf16.mxu0 %v8784
      %9412 = vmatmul.mubr.bf16.gmra.mrb[0].mxu0 %v8783
      %v9413 = vpop.f32.mrb[0].mxu0
      %v9414 = vadd.f32 %v9253, %v9413
      %v9415 = vpop.f32.mrb[0].mxu0
      %v9416 = vpop.f32.mrb[0].mxu0
      %v9417 = vadd.f32 %v9256, %v9416
      %v9418 = vpop.f32.mrb[0].mxu0
      %9419 = vmatprep.mubr.bf16.mxu0 %v8789
      %9420 = vmatmul.mubr.bf16.gmra.mrb[0].mxu0 %v8788
      %v9421 = vpop.f32.mrb[0].mxu0
      %v9422 = vadd.f32 %v9261, %v9421
      %v9423 = vpop.f32.mrb[0].mxu0
      %v9424 = vpop.f32.mrb[0].mxu0
      %v9425 = vadd.f32 %v9264, %v9424
      %v9426 = vpop.f32.mrb[0].mxu0
      %9427 = vmatprep.mubr.bf16.mxu0 %v8794
      %9428 = vmatmul.mubr.bf16.gmra.mrb[0].mxu0 %v8793
      %v9429 = vpop.f32.mrb[0].mxu0
      %v9430 = vadd.f32 %v9269, %v9429
      %v9431 = vpop.f32.mrb[0].mxu0
      %v9432 = vpop.f32.mrb[0].mxu0
      %v9433 = vadd.f32 %v9272, %v9432
      %v9434 = vpop.f32.mrb[0].mxu0
      %9435 = vmatprep.mubr.bf16.mxu0 %v8799
      %9436 = vmatmul.mubr.bf16.gmra.mrb[0].mxu0 %v8798
      %v9437 = vpop.f32.mrb[0].mxu0
      %v9438 = vadd.f32 %v9277, %v9437
      %v9439 = vpop.f32.mrb[0].mxu0
      %v9440 = vpop.f32.mrb[0].mxu0
      %v9441 = vadd.f32 %v9280, %v9440
      %v9442 = vpop.f32.mrb[0].mxu0
      %9443 = vmatprep.mubr.bf16.mxu0 %v8804
      %9444 = vmatmul.mubr.bf16.gmra.mrb[0].mxu0 %v8803
      %v9445 = vpop.f32.mrb[0].mxu0
      %v9446 = vadd.f32 %v9285, %v9445
      %v9447 = vpop.f32.mrb[0].mxu0
      %v9448 = vpop.f32.mrb[0].mxu0
      %v9449 = vadd.f32 %v9288, %v9448
      %v9450 = vpop.f32.mrb[0].mxu0
      %9451 = vmatprep.mubr.bf16.mxu0 %v8809
      %9452 = vmatmul.mubr.bf16.gmra.mrb[0].mxu0 %v8808
      %v9453 = vpop.f32.mrb[0].mxu0
      %v9454 = vadd.f32 %v9293, %v9453
      %v9455 = vpop.f32.mrb[0].mxu0
      %v9456 = vpop.f32.mrb[0].mxu0
      %v9457 = vadd.f32 %v9296, %v9456
      %v9458 = vpop.f32.mrb[0].mxu0
      %9459 = vmatprep.mubr.bf16.mxu0 %v8814
      %9460 = vmatmul.mubr.bf16.gmra.mrb[0].mxu0 %v8813
      %v9461 = vpop.f32.mrb[0].mxu0
      %v9462 = vadd.f32 %v9301, %v9461
      %v9463 = vpop.f32.mrb[0].mxu0
      %v9464 = vpop.f32.mrb[0].mxu0
      %v9465 = vadd.f32 %v9304, %v9464
      %v9466 = vpop.f32.mrb[0].mxu0
      %9467 = vmatprep.mubr.bf16.mxu0 %v8819
      %9468 = vmatmul.mubr.bf16.gmra.mrb[0].mxu0 %v8818
      %v9469 = vpop.f32.mrb[0].mxu0
      %v9470 = vadd.f32 %v9309, %v9469
      %v9471 = vpop.f32.mrb[0].mxu0
      %v9472 = vpop.f32.mrb[0].mxu0
      %v9473 = vadd.f32 %v9312, %v9472
      %v9474 = vpop.f32.mrb[0].mxu0
      %9475 = vmatprep.mubr.bf16.mxu0 %v8824
      %9476 = vmatmul.mubr.bf16.gmra.mrb[0].mxu0 %v8823
      %v9477 = vpop.f32.mrb[0].mxu0
      %v9478 = vadd.f32 %v9317, %v9477
      %v9479 = vpop.f32.mrb[0].mxu0
      %v9480 = vpop.f32.mrb[0].mxu0
      %v9481 = vadd.f32 %v9320, %v9480
      %v9482 = vpop.f32.mrb[0].mxu0
      %9483 = vdwg.mxu0
      %9484 = vmatprep.subr.bf16.mxu0 0
      %9485 = vmatpush1.bf16.msra.mxu0 %v9074
      %9486 = vmatprep.subr.bf16.mxu0 0
      %9487 = vmatpush1.bf16.msra.mxu0 %v9075
      %9488 = vmatprep.subr.bf16.mxu0 0
      %9489 = vmatpush1.bf16.msra.mxu0 %v9076
      %9490 = vmatprep.subr.bf16.mxu0 0
      %9491 = vmatpush1.bf16.msra.mxu0 %v9077
      %9492 = vmatprep.subr.bf16.mxu0 0
      %9493 = vmatpush1.bf16.msra.mxu0 0
      %9494 = vmatprep.subr.bf16.mxu0 0
      %9495 = vmatpush1.bf16.msra.mxu0 0
      %9496 = vmatprep.subr.bf16.mxu0 0
      %9497 = vmatpush1.bf16.msra.mxu0 0
      %9498 = vmatprep.subr.bf16.mxu0 0
      %9499 = vmatpush1.bf16.msra.mxu0 0
      %9500 = vmatprep.subr.bf16.mxu0 0
      %9501 = vmatpush1.bf16.msra.mxu0 0
      %9502 = vmatprep.subr.bf16.mxu0 0
      %9503 = vmatpush1.bf16.msra.mxu0 0
      %9504 = vmatprep.subr.bf16.mxu0 0
      %9505 = vmatpush1.bf16.msra.mxu0 0
      %9506 = vmatprep.subr.bf16.mxu0 0
      %9507 = vmatpush1.bf16.msra.mxu0 0
      %9508 = vmatprep.subr.bf16.mxu0 0
      %9509 = vmatpush1.bf16.msra.mxu0 0
      %9510 = vmatprep.subr.bf16.mxu0 0
      %9511 = vmatpush1.bf16.msra.mxu0 0
      %9512 = vmatprep.subr.bf16.mxu0 0
      %9513 = vmatpush1.bf16.msra.mxu0 0
      %9514 = vmatprep.subr.bf16.mxu0 0
      %9515 = vmatpush1.bf16.msra.mxu0 0
      %9516 = vmatprep.mubr.bf16.mxu0 0
      %9517 = vmatmul.mubr.bf16.gmra.mrb[0].mxu0 %v9115
      %v9518 = vpop.f32.mrb[0].mxu0
      %v9519 = vadd.f32 %v9358, %v9518
      %v9520 = vpop.f32.mrb[0].mxu0
      %v9521 = vpop.f32.mrb[0].mxu0
      %v9522 = vadd.f32 %v9361, %v9521
      %v9523 = vpop.f32.mrb[0].mxu0
      %9524 = vmatprep.mubr.bf16.mxu0 0
      %9525 = vmatmul.mubr.bf16.gmra.mrb[0].mxu0 %v9118
      %v9526 = vpop.f32.mrb[0].mxu0
      %v9527 = vadd.f32 %v9366, %v9526
      %v9528 = vpop.f32.mrb[0].mxu0
      %v9529 = vpop.f32.mrb[0].mxu0
      %v9530 = vadd.f32 %v9369, %v9529
      %v9531 = vpop.f32.mrb[0].mxu0
      %9532 = vmatprep.mubr.bf16.mxu0 0
      %9533 = vmatmul.mubr.bf16.gmra.mrb[0].mxu0 %v9121
      %v9534 = vpop.f32.mrb[0].mxu0
      %v9535 = vadd.f32 %v9374, %v9534
      %v9536 = vpop.f32.mrb[0].mxu0
      %v9537 = vpop.f32.mrb[0].mxu0
      %v9538 = vadd.f32 %v9377, %v9537
      %v9539 = vpop.f32.mrb[0].mxu0
      %9540 = vmatprep.mubr.bf16.mxu0 0
      %9541 = vmatmul.mubr.bf16.gmra.mrb[0].mxu0 %v9124
      %v9542 = vpop.f32.mrb[0].mxu0
      %v9543 = vadd.f32 %v9382, %v9542
      %v9544 = vpop.f32.mrb[0].mxu0
      %v9545 = vpop.f32.mrb[0].mxu0
      %v9546 = vadd.f32 %v9385, %v9545
      %v9547 = vpop.f32.mrb[0].mxu0
      %9548 = vmatprep.mubr.bf16.mxu0 0
      %9549 = vmatmul.mubr.bf16.gmra.mrb[0].mxu0 %v9127
      %v9550 = vpop.f32.mrb[0].mxu0
      %v9551 = vadd.f32 %v9390, %v9550
      %v9552 = vpop.f32.mrb[0].mxu0
      %v9553 = vpop.f32.mrb[0].mxu0
      %v9554 = vadd.f32 %v9393, %v9553
      %v9555 = vpop.f32.mrb[0].mxu0
      %9556 = vmatprep.mubr.bf16.mxu0 0
      %9557 = vmatmul.mubr.bf16.gmra.mrb[0].mxu0 %v9130
      %v9558 = vpop.f32.mrb[0].mxu0
      %v9559 = vadd.f32 %v9398, %v9558
      %v9560 = vpop.f32.mrb[0].mxu0
      %v9561 = vpop.f32.mrb[0].mxu0
      %v9562 = vadd.f32 %v9401, %v9561
      %v9563 = vpop.f32.mrb[0].mxu0
      %9564 = vmatprep.mubr.bf16.mxu0 0
      %9565 = vmatmul.mubr.bf16.gmra.mrb[0].mxu0 %v9133
      %v9566 = vpop.f32.mrb[0].mxu0
      %v9567 = vadd.f32 %v9406, %v9566
      %v9568 = vpop.f32.mrb[0].mxu0
      %v9569 = vpop.f32.mrb[0].mxu0
      %v9570 = vadd.f32 %v9409, %v9569
      %v9571 = vpop.f32.mrb[0].mxu0
      %9572 = vmatprep.mubr.bf16.mxu0 0
      %9573 = vmatmul.mubr.bf16.gmra.mrb[0].mxu0 %v9136
      %v9574 = vpop.f32.mrb[0].mxu0
      %v9575 = vadd.f32 %v9414, %v9574
      %v9576 = vpop.f32.mrb[0].mxu0
      %v9577 = vpop.f32.mrb[0].mxu0
      %v9578 = vadd.f32 %v9417, %v9577
      %v9579 = vpop.f32.mrb[0].mxu0
      %9580 = vmatprep.mubr.bf16.mxu0 0
      %9581 = vmatmul.mubr.bf16.gmra.mrb[0].mxu0 %v9139
      %v9582 = vpop.f32.mrb[0].mxu0
      %v9583 = vadd.f32 %v9422, %v9582
      %v9584 = vpop.f32.mrb[0].mxu0
      %v9585 = vpop.f32.mrb[0].mxu0
      %v9586 = vadd.f32 %v9425, %v9585
      %v9587 = vpop.f32.mrb[0].mxu0
      %9588 = vmatprep.mubr.bf16.mxu0 0
      %9589 = vmatmul.mubr.bf16.gmra.mrb[0].mxu0 %v9142
      %v9590 = vpop.f32.mrb[0].mxu0
      %v9591 = vadd.f32 %v9430, %v9590
      %v9592 = vpop.f32.mrb[0].mxu0
      %v9593 = vpop.f32.mrb[0].mxu0
      %v9594 = vadd.f32 %v9433, %v9593
      %v9595 = vpop.f32.mrb[0].mxu0
      %9596 = vmatprep.mubr.bf16.mxu0 0
      %9597 = vmatmul.mubr.bf16.gmra.mrb[0].mxu0 %v9145
      %v9598 = vpop.f32.mrb[0].mxu0
      %v9599 = vadd.f32 %v9438, %v9598
      %v9600 = vpop.f32.mrb[0].mxu0
      %v9601 = vpop.f32.mrb[0].mxu0
      %v9602 = vadd.f32 %v9441, %v9601
      %v9603 = vpop.f32.mrb[0].mxu0
      %9604 = vmatprep.mubr.bf16.mxu0 0
      %9605 = vmatmul.mubr.bf16.gmra.mrb[0].mxu0 %v9148
      %v9606 = vpop.f32.mrb[0].mxu0
      %v9607 = vadd.f32 %v9446, %v9606
      %v9608 = vpop.f32.mrb[0].mxu0
      %v9609 = vpop.f32.mrb[0].mxu0
      %v9610 = vadd.f32 %v9449, %v9609
      %v9611 = vpop.f32.mrb[0].mxu0
      %9612 = vmatprep.mubr.bf16.mxu0 0
      %9613 = vmatmul.mubr.bf16.gmra.mrb[0].mxu0 %v9151
      %v9614 = vpop.f32.mrb[0].mxu0
      %v9615 = vadd.f32 %v9454, %v9614
      %v9616 = vpop.f32.mrb[0].mxu0
      %v9617 = vpop.f32.mrb[0].mxu0
      %v9618 = vadd.f32 %v9457, %v9617
      %v9619 = vpop.f32.mrb[0].mxu0
      %9620 = vmatprep.mubr.bf16.mxu0 0
      %9621 = vmatmul.mubr.bf16.gmra.mrb[0].mxu0 %v9154
      %v9622 = vpop.f32.mrb[0].mxu0
      %v9623 = vadd.f32 %v9462, %v9622
      %v9624 = vpop.f32.mrb[0].mxu0
      %v9625 = vpop.f32.mrb[0].mxu0
      %v9626 = vadd.f32 %v9465, %v9625
      %v9627 = vpop.f32.mrb[0].mxu0
      %9628 = vmatprep.mubr.bf16.mxu0 0
      %9629 = vmatmul.mubr.bf16.gmra.mrb[0].mxu0 %v9157
      %v9630 = vpop.f32.mrb[0].mxu0
      %v9631 = vadd.f32 %v9470, %v9630
      %v9632 = vpop.f32.mrb[0].mxu0
      %v9633 = vpop.f32.mrb[0].mxu0
      %v9634 = vadd.f32 %v9473, %v9633
      %v9635 = vpop.f32.mrb[0].mxu0
      %9636 = vmatprep.mubr.bf16.mxu0 0
      %9637 = vmatmul.mubr.bf16.gmra.mrb[0].mxu0 %v9160
      %v9638 = vpop.f32.mrb[0].mxu0
      %v9639 = vadd.f32 %v9478, %v9638
      %v9640 = vpop.f32.mrb[0].mxu0
      %v9641 = vpop.f32.mrb[0].mxu0
      %v9642 = vadd.f32 %v9481, %v9641
      %v9643 = vpop.f32.mrb[0].mxu0
      %9644 = vdwg.mxu0
      %v9645 = vlaneseq
      %v9646 = vshrl.u32 %v9645, 7
      %v9647 = vsub.s32 2, %v9646
      %v9648 = vrot.slane %v1285, %v9647
      %v9649 = vmul.f32 %v9519, %v9648
      %v9650 = vmul.f32 %v9522, %v9648
      %v9651 = vmul.f32 %v9527, %v9648
      %v9652 = vmul.f32 %v9530, %v9648
      %v9653 = vmul.f32 %v9535, %v9648
      %v9654 = vmul.f32 %v9538, %v9648
      %v9655 = vmul.f32 %v9543, %v9648
      %v9656 = vmul.f32 %v9546, %v9648
      %v9657 = vmul.f32 %v9551, %v9648
      %v9658 = vmul.f32 %v9554, %v9648
      %v9659 = vmul.f32 %v9559, %v9648
      %v9660 = vmul.f32 %v9562, %v9648
      %v9661 = vmul.f32 %v9567, %v9648
      %v9662 = vmul.f32 %v9570, %v9648
      %v9663 = vmul.f32 %v9575, %v9648
      %v9664 = vmul.f32 %v9578, %v9648
      %v9665 = vmul.f32 %v9583, %v9648
      %v9666 = vmul.f32 %v9586, %v9648
      %v9667 = vmul.f32 %v9591, %v9648
      %v9668 = vmul.f32 %v9594, %v9648
      %v9669 = vmul.f32 %v9599, %v9648
      %v9670 = vmul.f32 %v9602, %v9648
      %v9671 = vmul.f32 %v9607, %v9648
      %v9672 = vmul.f32 %v9610, %v9648
      %v9673 = vmul.f32 %v9615, %v9648
      %v9674 = vmul.f32 %v9618, %v9648
      %v9675 = vmul.f32 %v9623, %v9648
      %v9676 = vmul.f32 %v9626, %v9648
      %v9677 = vmul.f32 %v9631, %v9648
      %v9678 = vmul.f32 %v9634, %v9648
      %v9679 = vmul.f32 %v9639, %v9648
      %v9680 = vmul.f32 %v9642, %v9648
      %v9681 = vlaneseq
      %v9682 = vshrl.u32 %v9681, 7
      %v9683 = vsub.s32 3, %v9682
      %v9684 = vrot.slane %v1285, %v9683
      %v9685 = vadd.f32 %v9649, %v9684
      %v9686 = vadd.f32 %v9650, %v9684
      %v9687 = vadd.f32 %v9651, %v9684
      %v9688 = vadd.f32 %v9652, %v9684
      %v9689 = vadd.f32 %v9653, %v9684
      %v9690 = vadd.f32 %v9654, %v9684
      %v9691 = vadd.f32 %v9655, %v9684
      %v9692 = vadd.f32 %v9656, %v9684
      %v9693 = vadd.f32 %v9657, %v9684
      %v9694 = vadd.f32 %v9658, %v9684
      %v9695 = vadd.f32 %v9659, %v9684
      %v9696 = vadd.f32 %v9660, %v9684
      %v9697 = vadd.f32 %v9661, %v9684
      %v9698 = vadd.f32 %v9662, %v9684
      %v9699 = vadd.f32 %v9663, %v9684
      %v9700 = vadd.f32 %v9664, %v9684
      %v9701 = vadd.f32 %v9665, %v9684
      %v9702 = vadd.f32 %v9666, %v9684
      %v9703 = vadd.f32 %v9667, %v9684
      %v9704 = vadd.f32 %v9668, %v9684
      %v9705 = vadd.f32 %v9669, %v9684
      %v9706 = vadd.f32 %v9670, %v9684
      %v9707 = vadd.f32 %v9671, %v9684
      %v9708 = vadd.f32 %v9672, %v9684
      %v9709 = vadd.f32 %v9673, %v9684
      %v9710 = vadd.f32 %v9674, %v9684
      %v9711 = vadd.f32 %v9675, %v9684
      %v9712 = vadd.f32 %v9676, %v9684
      %v9713 = vadd.f32 %v9677, %v9684
      %v9714 = vadd.f32 %v9678, %v9684
      %v9715 = vadd.f32 %v9679, %v9684
      %v9716 = vadd.f32 %v9680, %v9684
      %v9717 = vld [vmem:[%s5] sm:$0xf]
      %v9718 = vld [vmem:[%s5 + $0x4] sm:$0xf]
      %v9719 = vld [vmem:[%s5 + $0x8] sm:$0xf]
      %v9720 = vld [vmem:[%s5 + $0xc] sm:$0xf]
      %v9721 = vld [vmem:[%s5 + $0x10] sm:$0xf]
      %v9722 = vld [vmem:[%s5 + $0x14] sm:$0xf]
      %v9723 = vld [vmem:[%s5 + $0x18] sm:$0xf]
      %v9724 = vld [vmem:[%s5 + $0x1c] sm:$0xf]
      %v9725 = vpack.c.bf16 %v9686, %v9685
      %v9726 = vpack.c.bf16 %v9688, %v9687
      %v9727 = vpack.c.bf16 %v9690, %v9689
      %v9728 = vpack.c.bf16 %v9692, %v9691
      %v9729 = vpack.c.bf16 %v9694, %v9693
      %v9730 = vpack.c.bf16 %v9696, %v9695
      %v9731 = vpack.c.bf16 %v9698, %v9697
      %v9732 = vpack.c.bf16 %v9700, %v9699
      %v9733 = vpack.c.bf16 %v9702, %v9701
      %v9734 = vpack.c.bf16 %v9704, %v9703
      %v9735 = vpack.c.bf16 %v9706, %v9705
      %v9736 = vpack.c.bf16 %v9708, %v9707
      %v9737 = vpack.c.bf16 %v9710, %v9709
      %v9738 = vpack.c.bf16 %v9712, %v9711
      %v9739 = vpack.c.bf16 %v9714, %v9713
      %v9740 = vpack.c.bf16 %v9716, %v9715
      %v9749 = vunpack.c.l.b16 %v9717
      %v9750 = vunpack.c.l.b16 %v9718
      %v9751 = vunpack.c.l.b16 %v9719
      %v9752 = vunpack.c.l.b16 %v9720
      %v9753 = vunpack.c.l.b16 %v9721
      %v9754 = vunpack.c.l.b16 %v9722
      %v9755 = vunpack.c.l.b16 %v9723
      %v9756 = vunpack.c.l.b16 %v9724
      %v9757 = vpack.c.b16 %v9750, %v9749
      %v9758 = vpack.c.b16 %v9752, %v9751
      %v9759 = vpack.c.b16 %v9754, %v9753
      %v9760 = vpack.c.b16 %v9756, %v9755
      %v9762 = vsel %vm1414, %v9757, 0
      %v9765 = vsel %vm1414, %v9758, 0
      %v9768 = vsel %vm1414, %v9759, 0
      %v9771 = vsel %vm1414, %v9760, 0
      %v9774 = vsel %vm1414, %v9725, 0
      %v9777 = vsel %vm1414, %v9726, 0
      %v9780 = vsel %vm1414, %v9727, 0
      %v9783 = vsel %vm1414, %v9728, 0
      %v9786 = vsel %vm1414, %v9729, 0
      %v9789 = vsel %vm1414, %v9730, 0
      %v9792 = vsel %vm1414, %v9731, 0
      %v9795 = vsel %vm1414, %v9732, 0
      %v9798 = vsel %vm1414, %v9733, 0
      %v9801 = vsel %vm1414, %v9734, 0
      %v9804 = vsel %vm1414, %v9735, 0
      %v9807 = vsel %vm1414, %v9736, 0
      %v9810 = vsel %vm1414, %v9737, 0
      %v9813 = vsel %vm1414, %v9738, 0
      %v9816 = vsel %vm1414, %v9739, 0
      %v9819 = vsel %vm1414, %v9740, 0
      %9821 = vmatprep.subr.bf16.mxu0 0
      %9822 = vmatpush1.bf16.xpose.msra.mxu0 %v9774
      %9823 = vmatprep.subr.bf16.mxu0 0
      %9824 = vmatpush1.bf16.xpose.msra.mxu0 %v9777
      %9825 = vmatprep.subr.bf16.mxu0 0
      %9826 = vmatpush1.bf16.xpose.msra.mxu0 %v9780
      %9827 = vmatprep.subr.bf16.mxu0 0
      %9828 = vmatpush1.bf16.xpose.msra.mxu0 %v9783
      %9829 = vmatprep.subr.bf16.mxu0 0
      %9830 = vmatpush1.bf16.xpose.msra.mxu0 %v9786
      %9831 = vmatprep.subr.bf16.mxu0 0
      %9832 = vmatpush1.bf16.xpose.msra.mxu0 %v9789
      %9833 = vmatprep.subr.bf16.mxu0 0
      %9834 = vmatpush1.bf16.xpose.msra.mxu0 %v9792
      %9835 = vmatprep.subr.bf16.mxu0 0
      %9836 = vmatpush1.bf16.xpose.msra.mxu0 %v9795
      %9837 = vmatprep.subr.bf16.mxu0 0
      %9838 = vmatpush1.bf16.xpose.msra.mxu0 %v9798
      %9839 = vmatprep.subr.bf16.mxu0 0
      %9840 = vmatpush1.bf16.xpose.msra.mxu0 %v9801
      %9841 = vmatprep.subr.bf16.mxu0 0
      %9842 = vmatpush1.bf16.xpose.msra.mxu0 %v9804
      %9843 = vmatprep.subr.bf16.mxu0 0
      %9844 = vmatpush1.bf16.xpose.msra.mxu0 %v9807
      %9845 = vmatprep.subr.bf16.mxu0 0
      %9846 = vmatpush1.bf16.xpose.msra.mxu0 %v9810
      %9847 = vmatprep.subr.bf16.mxu0 0
      %9848 = vmatpush1.bf16.xpose.msra.mxu0 %v9813
      %9849 = vmatprep.subr.bf16.mxu0 0
      %9850 = vmatpush1.bf16.xpose.msra.mxu0 %v9816
      %9851 = vmatprep.subr.bf16.mxu0 0
      %9852 = vmatpush1.bf16.xpose.msra.mxu0 %v9819
      %9853 = vmatprep.mubr.bf16.mxu0 0
      %9854 = vmatmul.mubr.bf16.gmra.mrb[0].mxu0 %v9762
      %v9855 = vpop.f32.mrb[0].mxu0
      %v9856 = vadd.f32 %v375, %v9855
      %v9857 = vpop.f32.mrb[0].mxu0
      %v9858 = vadd.f32 %v376, %v9857
      %v9859 = vpop.f32.mrb[0].mxu0
      %v9860 = vadd.f32 %v377, %v9859
      %v9861 = vpop.f32.mrb[0].mxu0
      %v9862 = vadd.f32 %v378, %v9861
      %9863 = vmatprep.mubr.bf16.mxu0 0
      %9864 = vmatmul.mubr.bf16.gmra.mrb[0].mxu0 %v9765
      %v9865 = vpop.f32.mrb[0].mxu0
      %v9866 = vadd.f32 %v379, %v9865
      %v9867 = vpop.f32.mrb[0].mxu0
      %v9868 = vadd.f32 %v380, %v9867
      %v9869 = vpop.f32.mrb[0].mxu0
      %v9870 = vadd.f32 %v381, %v9869
      %v9871 = vpop.f32.mrb[0].mxu0
      %v9872 = vadd.f32 %v382, %v9871
      %9873 = vmatprep.mubr.bf16.mxu0 0
      %9874 = vmatmul.mubr.bf16.gmra.mrb[0].mxu0 %v9768
      %v9875 = vpop.f32.mrb[0].mxu0
      %v9876 = vadd.f32 %v383, %v9875
      %v9877 = vpop.f32.mrb[0].mxu0
      %v9878 = vadd.f32 %v384, %v9877
      %v9879 = vpop.f32.mrb[0].mxu0
      %v9880 = vadd.f32 %v385, %v9879
      %v9881 = vpop.f32.mrb[0].mxu0
      %v9882 = vadd.f32 %v386, %v9881
      %9883 = vmatprep.mubr.bf16.mxu0 0
      %9884 = vmatmul.mubr.bf16.gmra.mrb[0].mxu0 %v9771
      %v9885 = vpop.f32.mrb[0].mxu0
      %v9886 = vadd.f32 %v387, %v9885
      %v9887 = vpop.f32.mrb[0].mxu0
      %v9888 = vadd.f32 %v388, %v9887
      %v9889 = vpop.f32.mrb[0].mxu0
      %v9890 = vadd.f32 %v389, %v9889
      %v9891 = vpop.f32.mrb[0].mxu0
      %v9892 = vadd.f32 %v390, %v9891
      %9893 = vdwg.mxu0
      %v9894 = vmax.f32 %v9856, 0.0
      %v9895 = vmax.f32 %v9858, 0.0
      %v9896 = vmax.f32 %v9860, 0.0
      %v9897 = vmax.f32 %v9862, 0.0
      %v9898 = vmax.f32 %v9866, 0.0
      %v9899 = vmax.f32 %v9868, 0.0
      %v9900 = vmax.f32 %v9870, 0.0
      %v9901 = vmax.f32 %v9872, 0.0
      %v9902 = vmax.f32 %v9876, 0.0
      %v9903 = vmax.f32 %v9878, 0.0
      %v9904 = vmax.f32 %v9880, 0.0
      %v9905 = vmax.f32 %v9882, 0.0
      %v9906 = vmax.f32 %v9886, 0.0
      %v9907 = vmax.f32 %v9888, 0.0
      %v9908 = vmax.f32 %v9890, 0.0
      %v9909 = vmax.f32 %v9892, 0.0
      %9910 = vst [vmem:[%s251] sm:$0xff] %v9894
      %9911 = vst [vmem:[%s251 + $0x8] sm:$0xff] %v9895
      %9912 = vst [vmem:[%s251 + $0x10] sm:$0xff] %v9896
      %9913 = vst [vmem:[%s251 + $0x18] sm:$0xff] %v9897
      %9914 = vst [vmem:[%s251 + $0x20] sm:$0xff] %v9898
      %9915 = vst [vmem:[%s251 + $0x28] sm:$0xff] %v9899
      %9916 = vst [vmem:[%s251 + $0x30] sm:$0xff] %v9900
      %9917 = vst [vmem:[%s251 + $0x38] sm:$0xff] %v9901
      %9918 = vst [vmem:[%s251 + $0x40] sm:$0xff] %v9902
      %9919 = vst [vmem:[%s251 + $0x48] sm:$0xff] %v9903
      %9920 = vst [vmem:[%s251 + $0x50] sm:$0xff] %v9904
      %9921 = vst [vmem:[%s251 + $0x58] sm:$0xff] %v9905
      %9922 = vst [vmem:[%s251 + $0x60] sm:$0xff] %v9906
      %9923 = vst [vmem:[%s251 + $0x68] sm:$0xff] %v9907
      %9924 = vst [vmem:[%s251 + $0x70] sm:$0xff] %v9908
      %9925 = vst [vmem:[%s251 + $0x78] sm:$0xff] %v9909
      %p9926 = scmp.lt.s32.totalorder %s17, 1
      %s9927 = scalar_select %p9926, %s17, 1
      %s9928 = smul.addr %s9927, 16
      %s9929 = smul.addr %s9928, 8
      %s9930 = scalar_lea.vmem %s6, %s9929
      // Predicated region
      $region45: #{identity_block2_forward.1} parent=43 // pred_check
        %p9931 = pneg %p166
      $region46: #{identity_block2_forward.1} parent=43 // pred_check_branch
        %9933 = sbr.rel (%p9931) target = $region48
      $region47: #{identity_block2_forward.1} parent=43 // pred_region
        _
      $region48: #{identity_block2_forward.1} parent=43 // pred_fallthru
        _
    $region44: #{identity_block2_forward.1} parent=5 // pred_fallthru
      _
    %p9934 = scmp.le.s32.totalorder 2, %s12
    // Predicated region
    $region49: #{identity_block2_forward.1} parent=5 // pred_check
      %p9935 = pneg %p9934
    $region50: #{identity_block2_forward.1} parent=5 // pred_check_branch
      %9937 = sbr.rel (%p9935) target = $region52
    $region51: #{identity_block2_forward.1} parent=5 // pred_region
      %s9938 = ssub.s32 %s12, 2
      // Predicated region
      $region53: #{identity_block2_forward.1} parent=51 // pred_check
        %p9939 = pneg %p172
      $region54: #{identity_block2_forward.1} parent=51 // pred_check_branch
        %9941 = sbr.rel (%p9939) target = $region56
      $region55: #{identity_block2_forward.1} parent=51 // pred_region
        %p9942 = scmp.lt.s32.totalorder %s18, 1
        %s9943 = scalar_select %p9942, %s18, 1
        %s9944 = smul.addr %s9943, 16
        %s9945 = smul.addr %s9944, 8
        %s9946 = scalar_lea.vmem %s6, %s9945
      $region56: #{identity_block2_forward.1} parent=51 // pred_fallthru
        _
    $region52: #{identity_block2_forward.1} parent=5 // pred_fallthru
      _
  $region6: #{identity_block2_forward.1} parent=0 // loop_footer
    %s16 = sadd.s32 1, %s12
  $region7: #{identity_block2_forward.1} parent=0 // loop_footer_branch
    %11 = sbr.rel target = $region3
  $region8: #{identity_block2_forward.1} parent=0 // loop_exit
    _

</llo_original>
